<compile_context>
chip_gen: v7x
topology: tpu7x:2x2x1
jax: 0.10.0
libtpu: 0.0.40
codegen_flags: <defaults>
</compile_context>

<pallas_src>
import jax
import jax.numpy as jnp
from jax.experimental import pallas as pl
from jax.experimental.pallas import tpu as pltpu

# --- tiny Pegasus config (synthetic, lane-dense small shapes) ---
VOCAB = 128
D_MODEL = 128
N_HEADS = 4
D_KV = 32            # per-head dim (N_HEADS * D_KV == D_MODEL)
D_FF = 256
EPS = 1e-5
NEG = -1e9


# ----------------------------- in-kernel helpers -----------------------------
def _layernorm(x, g, b):
    mu = jnp.mean(x, axis=-1, keepdims=True)
    xc = x - mu
    var = jnp.mean(xc * xc, axis=-1, keepdims=True)
    return xc * jax.lax.rsqrt(var + EPS) * g + b


def _gelu(x):
    # tanh-approx GELU (EUP tanh slot); HF Pegasus uses exact erf GELU — tiny deviation.
    return 0.5 * x * (1.0 + jnp.tanh(0.7978845608028654 * (x + 0.044715 * x * x * x)))


def _softmax_rows(s):
    m = jnp.max(s, axis=-1, keepdims=True)
    p = jnp.exp(s - m)
    return p * pl.reciprocal(jnp.sum(p, axis=-1, keepdims=True), approx=True)


def _mha_heads(x_q, kv_src, bias, wqkv_ref, bqkv_ref, wo3_ref, bo_ref):
    """Multi-head attention over all heads in one grid step.

    Heads are addressed by leading-dim indexing of pre-split weights
    (wqkv: [3H, D, Dk] = q heads | k heads | v heads; wo3: [H, Dk, D]), so the
    kernel does no lane slicing and no lane-axis concatenation; the output
    projection is accumulated per head into one f32 buffer.
    bias: additive mask, [1, Skv] (padding) or [Sq, Skv] (causal).
    """
    scale = D_KV ** -0.5
    out = jnp.zeros((x_q.shape[0], D_MODEL), jnp.float32)
    for hh in range(N_HEADS):                                   # small, unrolled
        qh = (jnp.dot(x_q, wqkv_ref[hh], preferred_element_type=jnp.float32)
              + bqkv_ref[hh]) * scale                            # [Sq, Dk]
        kh = (jnp.dot(kv_src, wqkv_ref[N_HEADS + hh], preferred_element_type=jnp.float32)
              + bqkv_ref[N_HEADS + hh])                          # [Skv, Dk]
        vh = (jnp.dot(kv_src, wqkv_ref[2 * N_HEADS + hh], preferred_element_type=jnp.float32)
              + bqkv_ref[2 * N_HEADS + hh])                      # [Skv, Dk]
        s = jax.lax.dot_general(qh, kh, (((1,), (1,)), ((), ())),
                                preferred_element_type=jnp.float32) + bias
        p = _softmax_rows(s)
        ctx = jnp.dot(p, vh, preferred_element_type=jnp.float32)            # [Sq, Dk]
        out = out + jnp.dot(ctx, wo3_ref[hh], preferred_element_type=jnp.float32)
    return out + bo_ref[...]


def _ffn(h, lng, lnb, w1, b1, w2, b2):
    x = _layernorm(h, lng, lnb)
    z = _gelu(jnp.dot(x, w1, preferred_element_type=jnp.float32) + b1)
    return h + jnp.dot(z, w2, preferred_element_type=jnp.float32) + b2


# -------------------------- fused encoder-layer kernel --------------------------
def _encoder_layer_kernel(h_ref, mask_ref,
                          a_lng, a_lnb, a_wqkv, a_bqkv, a_wo3, a_bo,
                          f_lng, f_lnb, w1, b1, w2, b2,
                          lnf_g, lnf_b,
                          o_ref):
    h = h_ref[0]                                       # [Se, D] residual stream
    bias = mask_ref[0]                                 # [1, Se] additive padding mask
    # self-attention sublayer (pre-LN)
    x = _layernorm(h, a_lng[...], a_lnb[...])
    h = h + _mha_heads(x, x, bias, a_wqkv, a_bqkv, a_wo3, a_bo)
    # FFN sublayer (pre-LN) + encoder-stack final LN, all fused
    h = _ffn(h, f_lng[...], f_lnb[...], w1[...], b1[...], w2[...], b2[...])
    o_ref[0] = _layernorm(h, lnf_g[...], lnf_b[...])   # lane-dense [Se, 128] store


# -------------------------- fused decoder-layer kernel --------------------------
def _decoder_layer_kernel(hd_ref, enc_ref, encmask_ref,
                          s_lng, s_lnb, s_wqkv, s_bqkv, s_wo3, s_bo,
                          c_lng, c_lnb, c_wqkv, c_bqkv, c_wo3, c_bo,
                          f_lng, f_lnb, w1, b1, w2, b2,
                          lnf_g, lnf_b, embT_ref,
                          logits_ref):
    hd = hd_ref[0]                                     # [Sd, D]
    enc = enc_ref[0]                                   # [Se, D]
    enc_bias = encmask_ref[0]                          # [1, Se]
    Sd = hd.shape[0]
    # causal mask built in-kernel (no HBM mask tensor)
    qi = jax.lax.broadcasted_iota(jnp.int32, (Sd, Sd), 0)
    ki = jax.lax.broadcasted_iota(jnp.int32, (Sd, Sd), 1)
    causal_bias = jnp.where(ki > qi, NEG, 0.0).astype(jnp.float32)

    # masked self-attention sublayer
    x = _layernorm(hd, s_lng[...], s_lnb[...])
    hd = hd + _mha_heads(x, x, causal_bias, s_wqkv, s_bqkv, s_wo3, s_bo)
    # cross-attention sublayer (KV from encoder output, padding mask)
    x = _layernorm(hd, c_lng[...], c_lnb[...])
    hd = hd + _mha_heads(x, enc, enc_bias, c_wqkv, c_bqkv, c_wo3, c_bo)
    # FFN sublayer + decoder-stack final LN
    hd = _ffn(hd, f_lng[...], f_lnb[...], w1[...], b1[...], w2[...], b2[...])
    x = _layernorm(hd, lnf_g[...], lnf_b[...])
    # tied LM head: plain [Sd,D] x [D,V] dot (embedding pre-transposed in wrapper)
    logits_ref[0] = jnp.dot(x, embT_ref[...], preferred_element_type=jnp.float32)


# ------------------------------- wrappers -------------------------------
def _const_spec(shape):
    return pl.BlockSpec(shape, lambda *_: (0,) * len(shape))


def _bytes(*arrays):
    return int(sum(a.size * a.dtype.itemsize for a in arrays))


def encoder_layer(h, enc_mask_add, pa, pf, lnf_g, lnf_b):
    B, Se, D = h.shape
    consts = (pa["ln_g"], pa["ln_b"], pa["wqkv"], pa["bqkv"], pa["wo3"], pa["bo"],
              pf["ln_g"], pf["ln_b"], pf["w1"], pf["b1"], pf["w2"], pf["b2"],
              lnf_g, lnf_b)
    flops = B * (8 * Se * D * D + 4 * Se * Se * D + 4 * Se * D * D_FF)
    trans = B * (N_HEADS * Se * Se + Se * D_FF + 4 * Se)
    bytes_acc = _bytes(h, enc_mask_add, *consts) + B * Se * D * 4
    return pl.pallas_call(
        _encoder_layer_kernel,
        out_shape=jax.ShapeDtypeStruct((B, Se, D), jnp.float32),
        grid=(B,),
        in_specs=[pl.BlockSpec((1, Se, D), lambda b: (b, 0, 0)),
                  pl.BlockSpec((1, 1, Se), lambda b: (b, 0, 0))]
                 + [_const_spec(c.shape) for c in consts],
        out_specs=pl.BlockSpec((1, Se, D), lambda b: (b, 0, 0)),
        compiler_params=pltpu.CompilerParams(dimension_semantics=("parallel",)),
        cost_estimate=pl.CostEstimate(flops=flops, transcendentals=trans,
                                      bytes_accessed=bytes_acc),
    )(h, enc_mask_add, *consts)


def decoder_layer(hd, enc_out, enc_mask_add, psa, pca, pf, lnf_g, lnf_b, embT):
    B, Sd, D = hd.shape
    Se = enc_out.shape[1]
    V = embT.shape[1]
    consts = (psa["ln_g"], psa["ln_b"], psa["wqkv"], psa["bqkv"], psa["wo3"], psa["bo"],
              pca["ln_g"], pca["ln_b"], pca["wqkv"], pca["bqkv"], pca["wo3"], pca["bo"],
              pf["ln_g"], pf["ln_b"], pf["w1"], pf["b1"], pf["w2"], pf["b2"],
              lnf_g, lnf_b, embT)
    flops = B * (8 * Sd * D * D + 4 * Sd * Sd * D            # self-attn
                 + 2 * Sd * D * D + 6 * Se * D * D + 4 * Sd * Se * D  # cross-attn
                 + 4 * Sd * D * D_FF                          # FFN
                 + 2 * Sd * D * V)                            # LM head
    trans = B * (N_HEADS * (Sd * Sd + Sd * Se) + Sd * D_FF + 6 * Sd)
    bytes_acc = _bytes(hd, enc_out, enc_mask_add, *consts) + B * Sd * V * 4
    return pl.pallas_call(
        _decoder_layer_kernel,
        out_shape=jax.ShapeDtypeStruct((B, Sd, V), jnp.float32),
        grid=(B,),
        in_specs=[pl.BlockSpec((1, Sd, D), lambda b: (b, 0, 0)),
                  pl.BlockSpec((1, Se, D), lambda b: (b, 0, 0)),
                  pl.BlockSpec((1, 1, Se), lambda b: (b, 0, 0))]
                 + [_const_spec(c.shape) for c in consts],
        out_specs=pl.BlockSpec((1, Sd, V), lambda b: (b, 0, 0)),
        compiler_params=pltpu.CompilerParams(dimension_semantics=("parallel",)),
        cost_estimate=pl.CostEstimate(flops=flops, transcendentals=trans,
                                      bytes_accessed=bytes_acc),
    )(hd, enc_out, enc_mask_add, *consts)


# ----------------------- glue (plain JAX, not a hot path) -----------------------
def sinusoidal_positions(n_pos, dim):
    pos = jnp.arange(n_pos, dtype=jnp.float32)[:, None]
    j = jnp.arange(dim)
    angle = pos / jnp.power(10000.0, (2 * (j // 2)).astype(jnp.float32) / dim)[None, :]
    return jnp.concatenate([jnp.sin(angle[:, 0::2]), jnp.cos(angle[:, 1::2])], axis=-1)


def init_params(key):
    keys = iter(jax.random.split(key, 24))
    nrm = lambda shape: (0.02 * jax.random.normal(next(keys), shape)).astype(jnp.float32)
    zeros = lambda *s: jnp.zeros(s, jnp.float32)
    ones = lambda *s: jnp.ones(s, jnp.float32)

    def attn_p():
        # Dense per-projection weights, head-split in the wrapper (free layout
        # plumbing, never touches the kernel): wqkv = [q heads | k heads | v heads].
        split_in = lambda w: w.reshape(D_MODEL, N_HEADS, D_KV).transpose(1, 0, 2)  # [H,D,Dk]
        wq, wk, wv = nrm((D_MODEL, D_MODEL)), nrm((D_MODEL, D_MODEL)), nrm((D_MODEL, D_MODEL))
        wo = nrm((D_MODEL, D_MODEL))
        return {"ln_g": ones(1, D_MODEL), "ln_b": zeros(1, D_MODEL),
                "wqkv": jnp.concatenate([split_in(wq), split_in(wk), split_in(wv)], axis=0),
                "bqkv": zeros(3 * N_HEADS, 1, D_KV),
                "wo3": wo.reshape(N_HEADS, D_KV, D_MODEL),
                "bo": zeros(1, D_MODEL)}

    def ffn_p():
        return {"ln_g": ones(1, D_MODEL), "ln_b": zeros(1, D_MODEL),
                "w1": nrm((D_MODEL, D_FF)), "b1": zeros(1, D_FF),
                "w2": nrm((D_FF, D_MODEL)), "b2": zeros(1, D_MODEL)}

    return {
        "embed": nrm((VOCAB, D_MODEL)),
        "enc": {"attn": attn_p(), "ffn": ffn_p(),
                "lnf_g": ones(1, D_MODEL), "lnf_b": zeros(1, D_MODEL)},
        "dec": {"self_attn": attn_p(), "cross_attn": attn_p(), "ffn": ffn_p(),
                "lnf_g": ones(1, D_MODEL), "lnf_b": zeros(1, D_MODEL)},
    }


def pegasus_forward(params, input_ids, attention_mask, decoder_input_ids):
    """Teacher-forced Pegasus forward: returns LM logits [B, Sd, VOCAB]."""
    B, Se = input_ids.shape
    Sd = decoder_input_ids.shape[1]
    emb_scale = float(D_MODEL) ** 0.5
    pos = sinusoidal_positions(max(Se, Sd), D_MODEL)

    # additive padding mask, kept un-broadcast ([B,1,Se]); causal mask is in-kernel
    enc_mask_add = (1.0 - attention_mask.astype(jnp.float32))[:, None, :] * NEG

    pe, pd = params["enc"], params["dec"]
    # ---------------- encoder (1 layer, fully fused in one launch) ----------------
    h = params["embed"][input_ids] * emb_scale + pos[:Se][None]            # [B,Se,D]
    enc_out = encoder_layer(h, enc_mask_add, pe["attn"], pe["ffn"],
                            pe["lnf_g"], pe["lnf_b"])                      # [B,Se,D]

    # ---------------- decoder (1 layer + tied LM head, one launch) ----------------
    hd = params["embed"][decoder_input_ids] * emb_scale + pos[:Sd][None]
    embT = jnp.transpose(params["embed"])                                  # [D, V] once
    logits = decoder_layer(hd, enc_out, enc_mask_add, pd["self_attn"], pd["cross_attn"],
                           pd["ffn"], pd["lnf_g"], pd["lnf_b"], embT)
    return logits                                                          # [B,Sd,VOCAB]


if __name__ == "__main__":
    key = jax.random.PRNGKey(0)
    kp, k1, k2 = jax.random.split(key, 3)

    B, Se, Sd = 2, 8, 8
    params = init_params(kp)
    input_ids = jax.random.randint(k1, (B, Se), 0, VOCAB, dtype=jnp.int32)
    decoder_input_ids = jax.random.randint(k2, (B, Sd), 0, VOCAB, dtype=jnp.int32)
    attention_mask = jnp.ones((B, Se), jnp.int32).at[1, 6:].set(0)  # batch 1 has padding

    fwd = jax.jit(pegasus_forward)
    logits = fwd(params, input_ids, attention_mask, decoder_input_ids)
    logits = jax.block_until_ready(logits)
    assert logits.shape == (B, Sd, VOCAB)
    assert bool(jnp.all(jnp.isfinite(logits)))
    print("KERNEL_OK")
</pallas_src>

<mosaic_0001>
module attributes {stable_mosaic.version = 11 : i64} {
  func.func @_decoder_layer_kernel(%arg0: i32, %arg1: memref<1x8x128xf32, #tpu.memory_space<vmem>>, %arg2: memref<1x8x128xf32, #tpu.memory_space<vmem>>, %arg3: memref<1x1x8xf32, #tpu.memory_space<vmem>>, %arg4: memref<1x128xf32, #tpu.memory_space<vmem>>, %arg5: memref<1x128xf32, #tpu.memory_space<vmem>>, %arg6: memref<12x128x32xf32, #tpu.memory_space<vmem>>, %arg7: memref<12x1x32xf32, #tpu.memory_space<vmem>>, %arg8: memref<4x32x128xf32, #tpu.memory_space<vmem>>, %arg9: memref<1x128xf32, #tpu.memory_space<vmem>>, %arg10: memref<1x128xf32, #tpu.memory_space<vmem>>, %arg11: memref<1x128xf32, #tpu.memory_space<vmem>>, %arg12: memref<12x128x32xf32, #tpu.memory_space<vmem>>, %arg13: memref<12x1x32xf32, #tpu.memory_space<vmem>>, %arg14: memref<4x32x128xf32, #tpu.memory_space<vmem>>, %arg15: memref<1x128xf32, #tpu.memory_space<vmem>>, %arg16: memref<1x128xf32, #tpu.memory_space<vmem>>, %arg17: memref<1x128xf32, #tpu.memory_space<vmem>>, %arg18: memref<128x256xf32, #tpu.memory_space<vmem>>, %arg19: memref<1x256xf32, #tpu.memory_space<vmem>>, %arg20: memref<256x128xf32, #tpu.memory_space<vmem>>, %arg21: memref<1x128xf32, #tpu.memory_space<vmem>>, %arg22: memref<1x128xf32, #tpu.memory_space<vmem>>, %arg23: memref<1x128xf32, #tpu.memory_space<vmem>>, %arg24: memref<128x128xf32, #tpu.memory_space<vmem>>, %arg25: memref<1x8x128xf32, #tpu.memory_space<vmem>>) attributes {dimension_semantics = [#tpu.dimension_semantics<parallel>], iteration_bounds = array<i64: 2>, scalar_prefetch = 0 : i64, scratch_operands = 0 : i64, tpu.core_type = #tpu.core_type<tc>, window_params = [{transform_indices = @transform_0, window_bounds = array<i64: 1, 8, 128>}, {transform_indices = @transform_1, window_bounds = array<i64: 1, 8, 128>}, {transform_indices = @transform_2, window_bounds = array<i64: 1, 1, 8>}, {pipeline_mode = #tpu.pipeline_mode<synchronous>, transform_indices = @transform_3, window_bounds = array<i64: 1, 128>}, {pipeline_mode = #tpu.pipeline_mode<synchronous>, transform_indices = @transform_4, window_bounds = array<i64: 1, 128>}, {pipeline_mode = #tpu.pipeline_mode<synchronous>, transform_indices = @transform_5, window_bounds = array<i64: 12, 128, 32>}, {pipeline_mode = #tpu.pipeline_mode<synchronous>, transform_indices = @transform_6, window_bounds = array<i64: 12, 1, 32>}, {pipeline_mode = #tpu.pipeline_mode<synchronous>, transform_indices = @transform_7, window_bounds = array<i64: 4, 32, 128>}, {pipeline_mode = #tpu.pipeline_mode<synchronous>, transform_indices = @transform_8, window_bounds = array<i64: 1, 128>}, {pipeline_mode = #tpu.pipeline_mode<synchronous>, transform_indices = @transform_9, window_bounds = array<i64: 1, 128>}, {pipeline_mode = #tpu.pipeline_mode<synchronous>, transform_indices = @transform_10, window_bounds = array<i64: 1, 128>}, {pipeline_mode = #tpu.pipeline_mode<synchronous>, transform_indices = @transform_11, window_bounds = array<i64: 12, 128, 32>}, {pipeline_mode = #tpu.pipeline_mode<synchronous>, transform_indices = @transform_12, window_bounds = array<i64: 12, 1, 32>}, {pipeline_mode = #tpu.pipeline_mode<synchronous>, transform_indices = @transform_13, window_bounds = array<i64: 4, 32, 128>}, {pipeline_mode = #tpu.pipeline_mode<synchronous>, transform_indices = @transform_14, window_bounds = array<i64: 1, 128>}, {pipeline_mode = #tpu.pipeline_mode<synchronous>, transform_indices = @transform_15, window_bounds = array<i64: 1, 128>}, {pipeline_mode = #tpu.pipeline_mode<synchronous>, transform_indices = @transform_16, window_bounds = array<i64: 1, 128>}, {pipeline_mode = #tpu.pipeline_mode<synchronous>, transform_indices = @transform_17, window_bounds = array<i64: 128, 256>}, {pipeline_mode = #tpu.pipeline_mode<synchronous>, transform_indices = @transform_18, window_bounds = array<i64: 1, 256>}, {pipeline_mode = #tpu.pipeline_mode<synchronous>, transform_indices = @transform_19, window_bounds = array<i64: 256, 128>}, {pipeline_mode = #tpu.pipeline_mode<synchronous>, transform_indices = @transform_20, window_bounds = array<i64: 1, 128>}, {pipeline_mode = #tpu.pipeline_mode<synchronous>, transform_indices = @transform_21, window_bounds = array<i64: 1, 128>}, {pipeline_mode = #tpu.pipeline_mode<synchronous>, transform_indices = @transform_22, window_bounds = array<i64: 1, 128>}, {pipeline_mode = #tpu.pipeline_mode<synchronous>, transform_indices = @transform_23, window_bounds = array<i64: 128, 128>}, {transform_indices = @transform_24, window_bounds = array<i64: 1, 8, 128>}]} {
    %c0 = arith.constant 0 : index
    %c0_0 = arith.constant 0 : index
    %c0_1 = arith.constant 0 : index
    %0 = vector.load %arg1[%c0, %c0_0, %c0_1] : memref<1x8x128xf32, #tpu.memory_space<vmem>>, vector<1x8x128xf32>
    %1 = vector.shape_cast %0 : vector<1x8x128xf32> to vector<8x128xf32>
    %c0_2 = arith.constant 0 : index
    %c0_3 = arith.constant 0 : index
    %c0_4 = arith.constant 0 : index
    %2 = vector.load %arg2[%c0_2, %c0_3, %c0_4] : memref<1x8x128xf32, #tpu.memory_space<vmem>>, vector<1x8x128xf32>
    %3 = vector.shape_cast %2 : vector<1x8x128xf32> to vector<8x128xf32>
    %c0_5 = arith.constant 0 : index
    %c0_6 = arith.constant 0 : index
    %c0_7 = arith.constant 0 : index
    %4 = vector.load %arg3[%c0_5, %c0_6, %c0_7] : memref<1x1x8xf32, #tpu.memory_space<vmem>>, vector<1x1x8xf32>
    %5 = vector.shape_cast %4 : vector<1x1x8xf32> to vector<1x8xf32>
    %6 = tpu.iota {dimensions = array<i32: 0>} : vector<8x8xi32>
    %7 = tpu.iota {dimensions = array<i32: 1>} : vector<8x8xi32>
    %8 = arith.cmpi sgt, %7, %6 : vector<8x8xi32>
    %cst = arith.constant -1.000000e+09 : f32
    %cst_8 = arith.constant 0.000000e+00 : f32
    %9 = vector.broadcast %cst : f32 to vector<8x8xf32>
    %10 = vector.broadcast %cst_8 : f32 to vector<8x8xf32>
    %11 = arith.select %8, %9, %10 : vector<8x8xi1>, vector<8x8xf32>
    %c0_9 = arith.constant 0 : index
    %c0_10 = arith.constant 0 : index
    %12 = vector.load %arg4[%c0_9, %c0_10] : memref<1x128xf32, #tpu.memory_space<vmem>>, vector<1x128xf32>
    %c0_11 = arith.constant 0 : index
    %c0_12 = arith.constant 0 : index
    %13 = vector.load %arg5[%c0_11, %c0_12] : memref<1x128xf32, #tpu.memory_space<vmem>>, vector<1x128xf32>
    %cst_13 = arith.constant dense<0.000000e+00> : vector<8xf32>
    %14 = vector.multi_reduction <add>, %1, %cst_13 [1] : vector<8x128xf32> to vector<8xf32>
    %15 = vector.shape_cast %14 : vector<8xf32> to vector<8x1xf32>
    %cst_14 = arith.constant 1.280000e+02 : f32
    %16 = vector.broadcast %cst_14 : f32 to vector<8x1xf32>
    %17 = arith.divf %15, %16 : vector<8x1xf32>
    %18 = vector.broadcast %17 : vector<8x1xf32> to vector<8x128xf32>
    %19 = arith.subf %1, %18 : vector<8x128xf32>
    %20 = arith.mulf %19, %19 : vector<8x128xf32>
    %cst_15 = arith.constant dense<0.000000e+00> : vector<8xf32>
    %21 = vector.multi_reduction <add>, %20, %cst_15 [1] : vector<8x128xf32> to vector<8xf32>
    %22 = vector.shape_cast %21 : vector<8xf32> to vector<8x1xf32>
    %cst_16 = arith.constant 1.280000e+02 : f32
    %23 = vector.broadcast %cst_16 : f32 to vector<8x1xf32>
    %24 = arith.divf %22, %23 : vector<8x1xf32>
    %cst_17 = arith.constant 9.99999974E-6 : f32
    %25 = vector.broadcast %cst_17 : f32 to vector<8x1xf32>
    %26 = arith.addf %24, %25 : vector<8x1xf32>
    %27 = math.rsqrt %26 : vector<8x1xf32>
    %28 = vector.broadcast %27 : vector<8x1xf32> to vector<8x128xf32>
    %29 = arith.mulf %19, %28 : vector<8x128xf32>
    %30 = vector.broadcast %12 : vector<1x128xf32> to vector<8x128xf32>
    %31 = arith.mulf %29, %30 : vector<8x128xf32>
    %32 = vector.broadcast %13 : vector<1x128xf32> to vector<8x128xf32>
    %33 = arith.addf %31, %32 : vector<8x128xf32>
    %cst_18 = arith.constant 0.000000e+00 : f32
    %34 = vector.broadcast %cst_18 : f32 to vector<8x128xf32>
    %c0_19 = arith.constant 0 : index
    %c0_20 = arith.constant 0 : index
    %c0_21 = arith.constant 0 : index
    %35 = vector.load %arg6[%c0_19, %c0_20, %c0_21] : memref<12x128x32xf32, #tpu.memory_space<vmem>>, vector<1x128x32xf32>
    %36 = vector.shape_cast %35 : vector<1x128x32xf32> to vector<128x32xf32>
    %cst_22 = arith.constant dense<0.000000e+00> : vector<8x32xf32>
    %37 = tpu.matmul %33, %36, %cst_22 {dimension_numbers = #tpu.dot_dimension_numbers<[1], [0], [0], [1], [0, 0, 1, 1], [], []>} : vector<8x128xf32>, vector<128x32xf32>, vector<8x32xf32> -> vector<8x32xf32>
    %c0_23 = arith.constant 0 : index
    %c0_24 = arith.constant 0 : index
    %c0_25 = arith.constant 0 : index
    %38 = vector.load %arg7[%c0_23, %c0_24, %c0_25] : memref<12x1x32xf32, #tpu.memory_space<vmem>>, vector<1x1x32xf32>
    %39 = vector.shape_cast %38 : vector<1x1x32xf32> to vector<1x32xf32>
    %40 = vector.broadcast %39 : vector<1x32xf32> to vector<8x32xf32>
    %41 = arith.addf %37, %40 : vector<8x32xf32>
    %cst_26 = arith.constant 0.176776692 : f32
    %42 = vector.broadcast %cst_26 : f32 to vector<8x32xf32>
    %43 = arith.mulf %41, %42 : vector<8x32xf32>
    %c4 = arith.constant 4 : index
    %c0_27 = arith.constant 0 : index
    %c0_28 = arith.constant 0 : index
    %44 = vector.load %arg6[%c4, %c0_27, %c0_28] : memref<12x128x32xf32, #tpu.memory_space<vmem>>, vector<1x128x32xf32>
    %45 = vector.shape_cast %44 : vector<1x128x32xf32> to vector<128x32xf32>
    %cst_29 = arith.constant dense<0.000000e+00> : vector<8x32xf32>
    %46 = tpu.matmul %33, %45, %cst_29 {dimension_numbers = #tpu.dot_dimension_numbers<[1], [0], [0], [1], [0, 0, 1, 1], [], []>} : vector<8x128xf32>, vector<128x32xf32>, vector<8x32xf32> -> vector<8x32xf32>
    %c4_30 = arith.constant 4 : index
    %c0_31 = arith.constant 0 : index
    %c0_32 = arith.constant 0 : index
    %47 = vector.load %arg7[%c4_30, %c0_31, %c0_32] : memref<12x1x32xf32, #tpu.memory_space<vmem>>, vector<1x1x32xf32>
    %48 = vector.shape_cast %47 : vector<1x1x32xf32> to vector<1x32xf32>
    %49 = vector.broadcast %48 : vector<1x32xf32> to vector<8x32xf32>
    %50 = arith.addf %46, %49 : vector<8x32xf32>
    %c8 = arith.constant 8 : index
    %c0_33 = arith.constant 0 : index
    %c0_34 = arith.constant 0 : index
    %51 = vector.load %arg6[%c8, %c0_33, %c0_34] : memref<12x128x32xf32, #tpu.memory_space<vmem>>, vector<1x128x32xf32>
    %52 = vector.shape_cast %51 : vector<1x128x32xf32> to vector<128x32xf32>
    %cst_35 = arith.constant dense<0.000000e+00> : vector<8x32xf32>
    %53 = tpu.matmul %33, %52, %cst_35 {dimension_numbers = #tpu.dot_dimension_numbers<[1], [0], [0], [1], [0, 0, 1, 1], [], []>} : vector<8x128xf32>, vector<128x32xf32>, vector<8x32xf32> -> vector<8x32xf32>
    %c8_36 = arith.constant 8 : index
    %c0_37 = arith.constant 0 : index
    %c0_38 = arith.constant 0 : index
    %54 = vector.load %arg7[%c8_36, %c0_37, %c0_38] : memref<12x1x32xf32, #tpu.memory_space<vmem>>, vector<1x1x32xf32>
    %55 = vector.shape_cast %54 : vector<1x1x32xf32> to vector<1x32xf32>
    %56 = vector.broadcast %55 : vector<1x32xf32> to vector<8x32xf32>
    %57 = arith.addf %53, %56 : vector<8x32xf32>
    %cst_39 = arith.constant dense<0.000000e+00> : vector<8x8xf32>
    %58 = tpu.matmul %43, %50, %cst_39 {dimension_numbers = #tpu.dot_dimension_numbers<[1], [1], [0], [0], [0, 0, 1, 0], [], []>} : vector<8x32xf32>, vector<8x32xf32>, vector<8x8xf32> -> vector<8x8xf32>
    %59 = arith.addf %58, %11 : vector<8x8xf32>
    %cst_40 = arith.constant dense<0xFF800000> : vector<8xf32>
    %60 = vector.multi_reduction <maximumf>, %59, %cst_40 [1] : vector<8x8xf32> to vector<8xf32>
    %61 = vector.shape_cast %60 : vector<8xf32> to vector<8x1xf32>
    %62 = vector.broadcast %61 : vector<8x1xf32> to vector<8x8xf32>
    %63 = arith.subf %59, %62 : vector<8x8xf32>
    %64 = math.exp %63 : vector<8x8xf32>
    %cst_41 = arith.constant dense<0.000000e+00> : vector<8xf32>
    %65 = vector.multi_reduction <add>, %64, %cst_41 [1] : vector<8x8xf32> to vector<8xf32>
    %66 = vector.shape_cast %65 : vector<8xf32> to vector<8x1xf32>
    %67 = tpu.reciprocal %66 {approx = true} : vector<8x1xf32> -> vector<8x1xf32>
    %68 = vector.broadcast %67 : vector<8x1xf32> to vector<8x8xf32>
    %69 = arith.mulf %64, %68 : vector<8x8xf32>
    %cst_42 = arith.constant dense<0.000000e+00> : vector<8x32xf32>
    %70 = tpu.matmul %69, %57, %cst_42 {dimension_numbers = #tpu.dot_dimension_numbers<[1], [0], [0], [1], [0, 0, 1, 1], [], []>} : vector<8x8xf32>, vector<8x32xf32>, vector<8x32xf32> -> vector<8x32xf32>
    %c0_43 = arith.constant 0 : index
    %c0_44 = arith.constant 0 : index
    %c0_45 = arith.constant 0 : index
    %71 = vector.load %arg8[%c0_43, %c0_44, %c0_45] : memref<4x32x128xf32, #tpu.memory_space<vmem>>, vector<1x32x128xf32>
    %72 = vector.shape_cast %71 : vector<1x32x128xf32> to vector<32x128xf32>
    %cst_46 = arith.constant dense<0.000000e+00> : vector<8x128xf32>
    %73 = tpu.matmul %70, %72, %cst_46 {dimension_numbers = #tpu.dot_dimension_numbers<[1], [0], [0], [1], [0, 0, 1, 1], [], []>} : vector<8x32xf32>, vector<32x128xf32>, vector<8x128xf32> -> vector<8x128xf32>
    %74 = arith.addf %34, %73 : vector<8x128xf32>
    %c1 = arith.constant 1 : index
    %c0_47 = arith.constant 0 : index
    %c0_48 = arith.constant 0 : index
    %75 = vector.load %arg6[%c1, %c0_47, %c0_48] : memref<12x128x32xf32, #tpu.memory_space<vmem>>, vector<1x128x32xf32>
    %76 = vector.shape_cast %75 : vector<1x128x32xf32> to vector<128x32xf32>
    %cst_49 = arith.constant dense<0.000000e+00> : vector<8x32xf32>
    %77 = tpu.matmul %33, %76, %cst_49 {dimension_numbers = #tpu.dot_dimension_numbers<[1], [0], [0], [1], [0, 0, 1, 1], [], []>} : vector<8x128xf32>, vector<128x32xf32>, vector<8x32xf32> -> vector<8x32xf32>
    %c1_50 = arith.constant 1 : index
    %c0_51 = arith.constant 0 : index
    %c0_52 = arith.constant 0 : index
    %78 = vector.load %arg7[%c1_50, %c0_51, %c0_52] : memref<12x1x32xf32, #tpu.memory_space<vmem>>, vector<1x1x32xf32>
    %79 = vector.shape_cast %78 : vector<1x1x32xf32> to vector<1x32xf32>
    %80 = vector.broadcast %79 : vector<1x32xf32> to vector<8x32xf32>
    %81 = arith.addf %77, %80 : vector<8x32xf32>
    %cst_53 = arith.constant 0.176776692 : f32
    %82 = vector.broadcast %cst_53 : f32 to vector<8x32xf32>
    %83 = arith.mulf %81, %82 : vector<8x32xf32>
    %c5 = arith.constant 5 : index
    %c0_54 = arith.constant 0 : index
    %c0_55 = arith.constant 0 : index
    %84 = vector.load %arg6[%c5, %c0_54, %c0_55] : memref<12x128x32xf32, #tpu.memory_space<vmem>>, vector<1x128x32xf32>
    %85 = vector.shape_cast %84 : vector<1x128x32xf32> to vector<128x32xf32>
    %cst_56 = arith.constant dense<0.000000e+00> : vector<8x32xf32>
    %86 = tpu.matmul %33, %85, %cst_56 {dimension_numbers = #tpu.dot_dimension_numbers<[1], [0], [0], [1], [0, 0, 1, 1], [], []>} : vector<8x128xf32>, vector<128x32xf32>, vector<8x32xf32> -> vector<8x32xf32>
    %c5_57 = arith.constant 5 : index
    %c0_58 = arith.constant 0 : index
    %c0_59 = arith.constant 0 : index
    %87 = vector.load %arg7[%c5_57, %c0_58, %c0_59] : memref<12x1x32xf32, #tpu.memory_space<vmem>>, vector<1x1x32xf32>
    %88 = vector.shape_cast %87 : vector<1x1x32xf32> to vector<1x32xf32>
    %89 = vector.broadcast %88 : vector<1x32xf32> to vector<8x32xf32>
    %90 = arith.addf %86, %89 : vector<8x32xf32>
    %c9 = arith.constant 9 : index
    %c0_60 = arith.constant 0 : index
    %c0_61 = arith.constant 0 : index
    %91 = vector.load %arg6[%c9, %c0_60, %c0_61] : memref<12x128x32xf32, #tpu.memory_space<vmem>>, vector<1x128x32xf32>
    %92 = vector.shape_cast %91 : vector<1x128x32xf32> to vector<128x32xf32>
    %cst_62 = arith.constant dense<0.000000e+00> : vector<8x32xf32>
    %93 = tpu.matmul %33, %92, %cst_62 {dimension_numbers = #tpu.dot_dimension_numbers<[1], [0], [0], [1], [0, 0, 1, 1], [], []>} : vector<8x128xf32>, vector<128x32xf32>, vector<8x32xf32> -> vector<8x32xf32>
    %c9_63 = arith.constant 9 : index
    %c0_64 = arith.constant 0 : index
    %c0_65 = arith.constant 0 : index
    %94 = vector.load %arg7[%c9_63, %c0_64, %c0_65] : memref<12x1x32xf32, #tpu.memory_space<vmem>>, vector<1x1x32xf32>
    %95 = vector.shape_cast %94 : vector<1x1x32xf32> to vector<1x32xf32>
    %96 = vector.broadcast %95 : vector<1x32xf32> to vector<8x32xf32>
    %97 = arith.addf %93, %96 : vector<8x32xf32>
    %cst_66 = arith.constant dense<0.000000e+00> : vector<8x8xf32>
    %98 = tpu.matmul %83, %90, %cst_66 {dimension_numbers = #tpu.dot_dimension_numbers<[1], [1], [0], [0], [0, 0, 1, 0], [], []>} : vector<8x32xf32>, vector<8x32xf32>, vector<8x8xf32> -> vector<8x8xf32>
    %99 = arith.addf %98, %11 : vector<8x8xf32>
    %cst_67 = arith.constant dense<0xFF800000> : vector<8xf32>
    %100 = vector.multi_reduction <maximumf>, %99, %cst_67 [1] : vector<8x8xf32> to vector<8xf32>
    %101 = vector.shape_cast %100 : vector<8xf32> to vector<8x1xf32>
    %102 = vector.broadcast %101 : vector<8x1xf32> to vector<8x8xf32>
    %103 = arith.subf %99, %102 : vector<8x8xf32>
    %104 = math.exp %103 : vector<8x8xf32>
    %cst_68 = arith.constant dense<0.000000e+00> : vector<8xf32>
    %105 = vector.multi_reduction <add>, %104, %cst_68 [1] : vector<8x8xf32> to vector<8xf32>
    %106 = vector.shape_cast %105 : vector<8xf32> to vector<8x1xf32>
    %107 = tpu.reciprocal %106 {approx = true} : vector<8x1xf32> -> vector<8x1xf32>
    %108 = vector.broadcast %107 : vector<8x1xf32> to vector<8x8xf32>
    %109 = arith.mulf %104, %108 : vector<8x8xf32>
    %cst_69 = arith.constant dense<0.000000e+00> : vector<8x32xf32>
    %110 = tpu.matmul %109, %97, %cst_69 {dimension_numbers = #tpu.dot_dimension_numbers<[1], [0], [0], [1], [0, 0, 1, 1], [], []>} : vector<8x8xf32>, vector<8x32xf32>, vector<8x32xf32> -> vector<8x32xf32>
    %c1_70 = arith.constant 1 : index
    %c0_71 = arith.constant 0 : index
    %c0_72 = arith.constant 0 : index
    %111 = vector.load %arg8[%c1_70, %c0_71, %c0_72] : memref<4x32x128xf32, #tpu.memory_space<vmem>>, vector<1x32x128xf32>
    %112 = vector.shape_cast %111 : vector<1x32x128xf32> to vector<32x128xf32>
    %cst_73 = arith.constant dense<0.000000e+00> : vector<8x128xf32>
    %113 = tpu.matmul %110, %112, %cst_73 {dimension_numbers = #tpu.dot_dimension_numbers<[1], [0], [0], [1], [0, 0, 1, 1], [], []>} : vector<8x32xf32>, vector<32x128xf32>, vector<8x128xf32> -> vector<8x128xf32>
    %114 = arith.addf %74, %113 : vector<8x128xf32>
    %c2 = arith.constant 2 : index
    %c0_74 = arith.constant 0 : index
    %c0_75 = arith.constant 0 : index
    %115 = vector.load %arg6[%c2, %c0_74, %c0_75] : memref<12x128x32xf32, #tpu.memory_space<vmem>>, vector<1x128x32xf32>
    %116 = vector.shape_cast %115 : vector<1x128x32xf32> to vector<128x32xf32>
    %cst_76 = arith.constant dense<0.000000e+00> : vector<8x32xf32>
    %117 = tpu.matmul %33, %116, %cst_76 {dimension_numbers = #tpu.dot_dimension_numbers<[1], [0], [0], [1], [0, 0, 1, 1], [], []>} : vector<8x128xf32>, vector<128x32xf32>, vector<8x32xf32> -> vector<8x32xf32>
    %c2_77 = arith.constant 2 : index
    %c0_78 = arith.constant 0 : index
    %c0_79 = arith.constant 0 : index
    %118 = vector.load %arg7[%c2_77, %c0_78, %c0_79] : memref<12x1x32xf32, #tpu.memory_space<vmem>>, vector<1x1x32xf32>
    %119 = vector.shape_cast %118 : vector<1x1x32xf32> to vector<1x32xf32>
    %120 = vector.broadcast %119 : vector<1x32xf32> to vector<8x32xf32>
    %121 = arith.addf %117, %120 : vector<8x32xf32>
    %cst_80 = arith.constant 0.176776692 : f32
    %122 = vector.broadcast %cst_80 : f32 to vector<8x32xf32>
    %123 = arith.mulf %121, %122 : vector<8x32xf32>
    %c6 = arith.constant 6 : index
    %c0_81 = arith.constant 0 : index
    %c0_82 = arith.constant 0 : index
    %124 = vector.load %arg6[%c6, %c0_81, %c0_82] : memref<12x128x32xf32, #tpu.memory_space<vmem>>, vector<1x128x32xf32>
    %125 = vector.shape_cast %124 : vector<1x128x32xf32> to vector<128x32xf32>
    %cst_83 = arith.constant dense<0.000000e+00> : vector<8x32xf32>
    %126 = tpu.matmul %33, %125, %cst_83 {dimension_numbers = #tpu.dot_dimension_numbers<[1], [0], [0], [1], [0, 0, 1, 1], [], []>} : vector<8x128xf32>, vector<128x32xf32>, vector<8x32xf32> -> vector<8x32xf32>
    %c6_84 = arith.constant 6 : index
    %c0_85 = arith.constant 0 : index
    %c0_86 = arith.constant 0 : index
    %127 = vector.load %arg7[%c6_84, %c0_85, %c0_86] : memref<12x1x32xf32, #tpu.memory_space<vmem>>, vector<1x1x32xf32>
    %128 = vector.shape_cast %127 : vector<1x1x32xf32> to vector<1x32xf32>
    %129 = vector.broadcast %128 : vector<1x32xf32> to vector<8x32xf32>
    %130 = arith.addf %126, %129 : vector<8x32xf32>
    %c10 = arith.constant 10 : index
    %c0_87 = arith.constant 0 : index
    %c0_88 = arith.constant 0 : index
    %131 = vector.load %arg6[%c10, %c0_87, %c0_88] : memref<12x128x32xf32, #tpu.memory_space<vmem>>, vector<1x128x32xf32>
    %132 = vector.shape_cast %131 : vector<1x128x32xf32> to vector<128x32xf32>
    %cst_89 = arith.constant dense<0.000000e+00> : vector<8x32xf32>
    %133 = tpu.matmul %33, %132, %cst_89 {dimension_numbers = #tpu.dot_dimension_numbers<[1], [0], [0], [1], [0, 0, 1, 1], [], []>} : vector<8x128xf32>, vector<128x32xf32>, vector<8x32xf32> -> vector<8x32xf32>
    %c10_90 = arith.constant 10 : index
    %c0_91 = arith.constant 0 : index
    %c0_92 = arith.constant 0 : index
    %134 = vector.load %arg7[%c10_90, %c0_91, %c0_92] : memref<12x1x32xf32, #tpu.memory_space<vmem>>, vector<1x1x32xf32>
    %135 = vector.shape_cast %134 : vector<1x1x32xf32> to vector<1x32xf32>
    %136 = vector.broadcast %135 : vector<1x32xf32> to vector<8x32xf32>
    %137 = arith.addf %133, %136 : vector<8x32xf32>
    %cst_93 = arith.constant dense<0.000000e+00> : vector<8x8xf32>
    %138 = tpu.matmul %123, %130, %cst_93 {dimension_numbers = #tpu.dot_dimension_numbers<[1], [1], [0], [0], [0, 0, 1, 0], [], []>} : vector<8x32xf32>, vector<8x32xf32>, vector<8x8xf32> -> vector<8x8xf32>
    %139 = arith.addf %138, %11 : vector<8x8xf32>
    %cst_94 = arith.constant dense<0xFF800000> : vector<8xf32>
    %140 = vector.multi_reduction <maximumf>, %139, %cst_94 [1] : vector<8x8xf32> to vector<8xf32>
    %141 = vector.shape_cast %140 : vector<8xf32> to vector<8x1xf32>
    %142 = vector.broadcast %141 : vector<8x1xf32> to vector<8x8xf32>
    %143 = arith.subf %139, %142 : vector<8x8xf32>
    %144 = math.exp %143 : vector<8x8xf32>
    %cst_95 = arith.constant dense<0.000000e+00> : vector<8xf32>
    %145 = vector.multi_reduction <add>, %144, %cst_95 [1] : vector<8x8xf32> to vector<8xf32>
    %146 = vector.shape_cast %145 : vector<8xf32> to vector<8x1xf32>
    %147 = tpu.reciprocal %146 {approx = true} : vector<8x1xf32> -> vector<8x1xf32>
    %148 = vector.broadcast %147 : vector<8x1xf32> to vector<8x8xf32>
    %149 = arith.mulf %144, %148 : vector<8x8xf32>
    %cst_96 = arith.constant dense<0.000000e+00> : vector<8x32xf32>
    %150 = tpu.matmul %149, %137, %cst_96 {dimension_numbers = #tpu.dot_dimension_numbers<[1], [0], [0], [1], [0, 0, 1, 1], [], []>} : vector<8x8xf32>, vector<8x32xf32>, vector<8x32xf32> -> vector<8x32xf32>
    %c2_97 = arith.constant 2 : index
    %c0_98 = arith.constant 0 : index
    %c0_99 = arith.constant 0 : index
    %151 = vector.load %arg8[%c2_97, %c0_98, %c0_99] : memref<4x32x128xf32, #tpu.memory_space<vmem>>, vector<1x32x128xf32>
    %152 = vector.shape_cast %151 : vector<1x32x128xf32> to vector<32x128xf32>
    %cst_100 = arith.constant dense<0.000000e+00> : vector<8x128xf32>
    %153 = tpu.matmul %150, %152, %cst_100 {dimension_numbers = #tpu.dot_dimension_numbers<[1], [0], [0], [1], [0, 0, 1, 1], [], []>} : vector<8x32xf32>, vector<32x128xf32>, vector<8x128xf32> -> vector<8x128xf32>
    %154 = arith.addf %114, %153 : vector<8x128xf32>
    %c3 = arith.constant 3 : index
    %c0_101 = arith.constant 0 : index
    %c0_102 = arith.constant 0 : index
    %155 = vector.load %arg6[%c3, %c0_101, %c0_102] : memref<12x128x32xf32, #tpu.memory_space<vmem>>, vector<1x128x32xf32>
    %156 = vector.shape_cast %155 : vector<1x128x32xf32> to vector<128x32xf32>
    %cst_103 = arith.constant dense<0.000000e+00> : vector<8x32xf32>
    %157 = tpu.matmul %33, %156, %cst_103 {dimension_numbers = #tpu.dot_dimension_numbers<[1], [0], [0], [1], [0, 0, 1, 1], [], []>} : vector<8x128xf32>, vector<128x32xf32>, vector<8x32xf32> -> vector<8x32xf32>
    %c3_104 = arith.constant 3 : index
    %c0_105 = arith.constant 0 : index
    %c0_106 = arith.constant 0 : index
    %158 = vector.load %arg7[%c3_104, %c0_105, %c0_106] : memref<12x1x32xf32, #tpu.memory_space<vmem>>, vector<1x1x32xf32>
    %159 = vector.shape_cast %158 : vector<1x1x32xf32> to vector<1x32xf32>
    %160 = vector.broadcast %159 : vector<1x32xf32> to vector<8x32xf32>
    %161 = arith.addf %157, %160 : vector<8x32xf32>
    %cst_107 = arith.constant 0.176776692 : f32
    %162 = vector.broadcast %cst_107 : f32 to vector<8x32xf32>
    %163 = arith.mulf %161, %162 : vector<8x32xf32>
    %c7 = arith.constant 7 : index
    %c0_108 = arith.constant 0 : index
    %c0_109 = arith.constant 0 : index
    %164 = vector.load %arg6[%c7, %c0_108, %c0_109] : memref<12x128x32xf32, #tpu.memory_space<vmem>>, vector<1x128x32xf32>
    %165 = vector.shape_cast %164 : vector<1x128x32xf32> to vector<128x32xf32>
    %cst_110 = arith.constant dense<0.000000e+00> : vector<8x32xf32>
    %166 = tpu.matmul %33, %165, %cst_110 {dimension_numbers = #tpu.dot_dimension_numbers<[1], [0], [0], [1], [0, 0, 1, 1], [], []>} : vector<8x128xf32>, vector<128x32xf32>, vector<8x32xf32> -> vector<8x32xf32>
    %c7_111 = arith.constant 7 : index
    %c0_112 = arith.constant 0 : index
    %c0_113 = arith.constant 0 : index
    %167 = vector.load %arg7[%c7_111, %c0_112, %c0_113] : memref<12x1x32xf32, #tpu.memory_space<vmem>>, vector<1x1x32xf32>
    %168 = vector.shape_cast %167 : vector<1x1x32xf32> to vector<1x32xf32>
    %169 = vector.broadcast %168 : vector<1x32xf32> to vector<8x32xf32>
    %170 = arith.addf %166, %169 : vector<8x32xf32>
    %c11 = arith.constant 11 : index
    %c0_114 = arith.constant 0 : index
    %c0_115 = arith.constant 0 : index
    %171 = vector.load %arg6[%c11, %c0_114, %c0_115] : memref<12x128x32xf32, #tpu.memory_space<vmem>>, vector<1x128x32xf32>
    %172 = vector.shape_cast %171 : vector<1x128x32xf32> to vector<128x32xf32>
    %cst_116 = arith.constant dense<0.000000e+00> : vector<8x32xf32>
    %173 = tpu.matmul %33, %172, %cst_116 {dimension_numbers = #tpu.dot_dimension_numbers<[1], [0], [0], [1], [0, 0, 1, 1], [], []>} : vector<8x128xf32>, vector<128x32xf32>, vector<8x32xf32> -> vector<8x32xf32>
    %c11_117 = arith.constant 11 : index
    %c0_118 = arith.constant 0 : index
    %c0_119 = arith.constant 0 : index
    %174 = vector.load %arg7[%c11_117, %c0_118, %c0_119] : memref<12x1x32xf32, #tpu.memory_space<vmem>>, vector<1x1x32xf32>
    %175 = vector.shape_cast %174 : vector<1x1x32xf32> to vector<1x32xf32>
    %176 = vector.broadcast %175 : vector<1x32xf32> to vector<8x32xf32>
    %177 = arith.addf %173, %176 : vector<8x32xf32>
    %cst_120 = arith.constant dense<0.000000e+00> : vector<8x8xf32>
    %178 = tpu.matmul %163, %170, %cst_120 {dimension_numbers = #tpu.dot_dimension_numbers<[1], [1], [0], [0], [0, 0, 1, 0], [], []>} : vector<8x32xf32>, vector<8x32xf32>, vector<8x8xf32> -> vector<8x8xf32>
    %179 = arith.addf %178, %11 : vector<8x8xf32>
    %cst_121 = arith.constant dense<0xFF800000> : vector<8xf32>
    %180 = vector.multi_reduction <maximumf>, %179, %cst_121 [1] : vector<8x8xf32> to vector<8xf32>
    %181 = vector.shape_cast %180 : vector<8xf32> to vector<8x1xf32>
    %182 = vector.broadcast %181 : vector<8x1xf32> to vector<8x8xf32>
    %183 = arith.subf %179, %182 : vector<8x8xf32>
    %184 = math.exp %183 : vector<8x8xf32>
    %cst_122 = arith.constant dense<0.000000e+00> : vector<8xf32>
    %185 = vector.multi_reduction <add>, %184, %cst_122 [1] : vector<8x8xf32> to vector<8xf32>
    %186 = vector.shape_cast %185 : vector<8xf32> to vector<8x1xf32>
    %187 = tpu.reciprocal %186 {approx = true} : vector<8x1xf32> -> vector<8x1xf32>
    %188 = vector.broadcast %187 : vector<8x1xf32> to vector<8x8xf32>
    %189 = arith.mulf %184, %188 : vector<8x8xf32>
    %cst_123 = arith.constant dense<0.000000e+00> : vector<8x32xf32>
    %190 = tpu.matmul %189, %177, %cst_123 {dimension_numbers = #tpu.dot_dimension_numbers<[1], [0], [0], [1], [0, 0, 1, 1], [], []>} : vector<8x8xf32>, vector<8x32xf32>, vector<8x32xf32> -> vector<8x32xf32>
    %c3_124 = arith.constant 3 : index
    %c0_125 = arith.constant 0 : index
    %c0_126 = arith.constant 0 : index
    %191 = vector.load %arg8[%c3_124, %c0_125, %c0_126] : memref<4x32x128xf32, #tpu.memory_space<vmem>>, vector<1x32x128xf32>
    %192 = vector.shape_cast %191 : vector<1x32x128xf32> to vector<32x128xf32>
    %cst_127 = arith.constant dense<0.000000e+00> : vector<8x128xf32>
    %193 = tpu.matmul %190, %192, %cst_127 {dimension_numbers = #tpu.dot_dimension_numbers<[1], [0], [0], [1], [0, 0, 1, 1], [], []>} : vector<8x32xf32>, vector<32x128xf32>, vector<8x128xf32> -> vector<8x128xf32>
    %194 = arith.addf %154, %193 : vector<8x128xf32>
    %c0_128 = arith.constant 0 : index
    %c0_129 = arith.constant 0 : index
    %195 = vector.load %arg9[%c0_128, %c0_129] : memref<1x128xf32, #tpu.memory_space<vmem>>, vector<1x128xf32>
    %196 = vector.broadcast %195 : vector<1x128xf32> to vector<8x128xf32>
    %197 = arith.addf %194, %196 : vector<8x128xf32>
    %198 = arith.addf %1, %197 : vector<8x128xf32>
    %c0_130 = arith.constant 0 : index
    %c0_131 = arith.constant 0 : index
    %199 = vector.load %arg10[%c0_130, %c0_131] : memref<1x128xf32, #tpu.memory_space<vmem>>, vector<1x128xf32>
    %c0_132 = arith.constant 0 : index
    %c0_133 = arith.constant 0 : index
    %200 = vector.load %arg11[%c0_132, %c0_133] : memref<1x128xf32, #tpu.memory_space<vmem>>, vector<1x128xf32>
    %cst_134 = arith.constant dense<0.000000e+00> : vector<8xf32>
    %201 = vector.multi_reduction <add>, %198, %cst_134 [1] : vector<8x128xf32> to vector<8xf32>
    %202 = vector.shape_cast %201 : vector<8xf32> to vector<8x1xf32>
    %cst_135 = arith.constant 1.280000e+02 : f32
    %203 = vector.broadcast %cst_135 : f32 to vector<8x1xf32>
    %204 = arith.divf %202, %203 : vector<8x1xf32>
    %205 = vector.broadcast %204 : vector<8x1xf32> to vector<8x128xf32>
    %206 = arith.subf %198, %205 : vector<8x128xf32>
    %207 = arith.mulf %206, %206 : vector<8x128xf32>
    %cst_136 = arith.constant dense<0.000000e+00> : vector<8xf32>
    %208 = vector.multi_reduction <add>, %207, %cst_136 [1] : vector<8x128xf32> to vector<8xf32>
    %209 = vector.shape_cast %208 : vector<8xf32> to vector<8x1xf32>
    %cst_137 = arith.constant 1.280000e+02 : f32
    %210 = vector.broadcast %cst_137 : f32 to vector<8x1xf32>
    %211 = arith.divf %209, %210 : vector<8x1xf32>
    %cst_138 = arith.constant 9.99999974E-6 : f32
    %212 = vector.broadcast %cst_138 : f32 to vector<8x1xf32>
    %213 = arith.addf %211, %212 : vector<8x1xf32>
    %214 = math.rsqrt %213 : vector<8x1xf32>
    %215 = vector.broadcast %214 : vector<8x1xf32> to vector<8x128xf32>
    %216 = arith.mulf %206, %215 : vector<8x128xf32>
    %217 = vector.broadcast %199 : vector<1x128xf32> to vector<8x128xf32>
    %218 = arith.mulf %216, %217 : vector<8x128xf32>
    %219 = vector.broadcast %200 : vector<1x128xf32> to vector<8x128xf32>
    %220 = arith.addf %218, %219 : vector<8x128xf32>
    %cst_139 = arith.constant 0.000000e+00 : f32
    %221 = vector.broadcast %cst_139 : f32 to vector<8x128xf32>
    %c0_140 = arith.constant 0 : index
    %c0_141 = arith.constant 0 : index
    %c0_142 = arith.constant 0 : index
    %222 = vector.load %arg12[%c0_140, %c0_141, %c0_142] : memref<12x128x32xf32, #tpu.memory_space<vmem>>, vector<1x128x32xf32>
    %223 = vector.shape_cast %222 : vector<1x128x32xf32> to vector<128x32xf32>
    %cst_143 = arith.constant dense<0.000000e+00> : vector<8x32xf32>
    %224 = tpu.matmul %220, %223, %cst_143 {dimension_numbers = #tpu.dot_dimension_numbers<[1], [0], [0], [1], [0, 0, 1, 1], [], []>} : vector<8x128xf32>, vector<128x32xf32>, vector<8x32xf32> -> vector<8x32xf32>
    %c0_144 = arith.constant 0 : index
    %c0_145 = arith.constant 0 : index
    %c0_146 = arith.constant 0 : index
    %225 = vector.load %arg13[%c0_144, %c0_145, %c0_146] : memref<12x1x32xf32, #tpu.memory_space<vmem>>, vector<1x1x32xf32>
    %226 = vector.shape_cast %225 : vector<1x1x32xf32> to vector<1x32xf32>
    %227 = vector.broadcast %226 : vector<1x32xf32> to vector<8x32xf32>
    %228 = arith.addf %224, %227 : vector<8x32xf32>
    %cst_147 = arith.constant 0.176776692 : f32
    %229 = vector.broadcast %cst_147 : f32 to vector<8x32xf32>
    %230 = arith.mulf %228, %229 : vector<8x32xf32>
    %c4_148 = arith.constant 4 : index
    %c0_149 = arith.constant 0 : index
    %c0_150 = arith.constant 0 : index
    %231 = vector.load %arg12[%c4_148, %c0_149, %c0_150] : memref<12x128x32xf32, #tpu.memory_space<vmem>>, vector<1x128x32xf32>
    %232 = vector.shape_cast %231 : vector<1x128x32xf32> to vector<128x32xf32>
    %cst_151 = arith.constant dense<0.000000e+00> : vector<8x32xf32>
    %233 = tpu.matmul %3, %232, %cst_151 {dimension_numbers = #tpu.dot_dimension_numbers<[1], [0], [0], [1], [0, 0, 1, 1], [], []>} : vector<8x128xf32>, vector<128x32xf32>, vector<8x32xf32> -> vector<8x32xf32>
    %c4_152 = arith.constant 4 : index
    %c0_153 = arith.constant 0 : index
    %c0_154 = arith.constant 0 : index
    %234 = vector.load %arg13[%c4_152, %c0_153, %c0_154] : memref<12x1x32xf32, #tpu.memory_space<vmem>>, vector<1x1x32xf32>
    %235 = vector.shape_cast %234 : vector<1x1x32xf32> to vector<1x32xf32>
    %236 = vector.broadcast %235 : vector<1x32xf32> to vector<8x32xf32>
    %237 = arith.addf %233, %236 : vector<8x32xf32>
    %c8_155 = arith.constant 8 : index
    %c0_156 = arith.constant 0 : index
    %c0_157 = arith.constant 0 : index
    %238 = vector.load %arg12[%c8_155, %c0_156, %c0_157] : memref<12x128x32xf32, #tpu.memory_space<vmem>>, vector<1x128x32xf32>
    %239 = vector.shape_cast %238 : vector<1x128x32xf32> to vector<128x32xf32>
    %cst_158 = arith.constant dense<0.000000e+00> : vector<8x32xf32>
    %240 = tpu.matmul %3, %239, %cst_158 {dimension_numbers = #tpu.dot_dimension_numbers<[1], [0], [0], [1], [0, 0, 1, 1], [], []>} : vector<8x128xf32>, vector<128x32xf32>, vector<8x32xf32> -> vector<8x32xf32>
    %c8_159 = arith.constant 8 : index
    %c0_160 = arith.constant 0 : index
    %c0_161 = arith.constant 0 : index
    %241 = vector.load %arg13[%c8_159, %c0_160, %c0_161] : memref<12x1x32xf32, #tpu.memory_space<vmem>>, vector<1x1x32xf32>
    %242 = vector.shape_cast %241 : vector<1x1x32xf32> to vector<1x32xf32>
    %243 = vector.broadcast %242 : vector<1x32xf32> to vector<8x32xf32>
    %244 = arith.addf %240, %243 : vector<8x32xf32>
    %cst_162 = arith.constant dense<0.000000e+00> : vector<8x8xf32>
    %245 = tpu.matmul %230, %237, %cst_162 {dimension_numbers = #tpu.dot_dimension_numbers<[1], [1], [0], [0], [0, 0, 1, 0], [], []>} : vector<8x32xf32>, vector<8x32xf32>, vector<8x8xf32> -> vector<8x8xf32>
    %246 = vector.broadcast %5 : vector<1x8xf32> to vector<8x8xf32>
    %247 = arith.addf %245, %246 : vector<8x8xf32>
    %cst_163 = arith.constant dense<0xFF800000> : vector<8xf32>
    %248 = vector.multi_reduction <maximumf>, %247, %cst_163 [1] : vector<8x8xf32> to vector<8xf32>
    %249 = vector.shape_cast %248 : vector<8xf32> to vector<8x1xf32>
    %250 = vector.broadcast %249 : vector<8x1xf32> to vector<8x8xf32>
    %251 = arith.subf %247, %250 : vector<8x8xf32>
    %252 = math.exp %251 : vector<8x8xf32>
    %cst_164 = arith.constant dense<0.000000e+00> : vector<8xf32>
    %253 = vector.multi_reduction <add>, %252, %cst_164 [1] : vector<8x8xf32> to vector<8xf32>
    %254 = vector.shape_cast %253 : vector<8xf32> to vector<8x1xf32>
    %255 = tpu.reciprocal %254 {approx = true} : vector<8x1xf32> -> vector<8x1xf32>
    %256 = vector.broadcast %255 : vector<8x1xf32> to vector<8x8xf32>
    %257 = arith.mulf %252, %256 : vector<8x8xf32>
    %cst_165 = arith.constant dense<0.000000e+00> : vector<8x32xf32>
    %258 = tpu.matmul %257, %244, %cst_165 {dimension_numbers = #tpu.dot_dimension_numbers<[1], [0], [0], [1], [0, 0, 1, 1], [], []>} : vector<8x8xf32>, vector<8x32xf32>, vector<8x32xf32> -> vector<8x32xf32>
    %c0_166 = arith.constant 0 : index
    %c0_167 = arith.constant 0 : index
    %c0_168 = arith.constant 0 : index
    %259 = vector.load %arg14[%c0_166, %c0_167, %c0_168] : memref<4x32x128xf32, #tpu.memory_space<vmem>>, vector<1x32x128xf32>
    %260 = vector.shape_cast %259 : vector<1x32x128xf32> to vector<32x128xf32>
    %cst_169 = arith.constant dense<0.000000e+00> : vector<8x128xf32>
    %261 = tpu.matmul %258, %260, %cst_169 {dimension_numbers = #tpu.dot_dimension_numbers<[1], [0], [0], [1], [0, 0, 1, 1], [], []>} : vector<8x32xf32>, vector<32x128xf32>, vector<8x128xf32> -> vector<8x128xf32>
    %262 = arith.addf %221, %261 : vector<8x128xf32>
    %c1_170 = arith.constant 1 : index
    %c0_171 = arith.constant 0 : index
    %c0_172 = arith.constant 0 : index
    %263 = vector.load %arg12[%c1_170, %c0_171, %c0_172] : memref<12x128x32xf32, #tpu.memory_space<vmem>>, vector<1x128x32xf32>
    %264 = vector.shape_cast %263 : vector<1x128x32xf32> to vector<128x32xf32>
    %cst_173 = arith.constant dense<0.000000e+00> : vector<8x32xf32>
    %265 = tpu.matmul %220, %264, %cst_173 {dimension_numbers = #tpu.dot_dimension_numbers<[1], [0], [0], [1], [0, 0, 1, 1], [], []>} : vector<8x128xf32>, vector<128x32xf32>, vector<8x32xf32> -> vector<8x32xf32>
    %c1_174 = arith.constant 1 : index
    %c0_175 = arith.constant 0 : index
    %c0_176 = arith.constant 0 : index
    %266 = vector.load %arg13[%c1_174, %c0_175, %c0_176] : memref<12x1x32xf32, #tpu.memory_space<vmem>>, vector<1x1x32xf32>
    %267 = vector.shape_cast %266 : vector<1x1x32xf32> to vector<1x32xf32>
    %268 = vector.broadcast %267 : vector<1x32xf32> to vector<8x32xf32>
    %269 = arith.addf %265, %268 : vector<8x32xf32>
    %cst_177 = arith.constant 0.176776692 : f32
    %270 = vector.broadcast %cst_177 : f32 to vector<8x32xf32>
    %271 = arith.mulf %269, %270 : vector<8x32xf32>
    %c5_178 = arith.constant 5 : index
    %c0_179 = arith.constant 0 : index
    %c0_180 = arith.constant 0 : index
    %272 = vector.load %arg12[%c5_178, %c0_179, %c0_180] : memref<12x128x32xf32, #tpu.memory_space<vmem>>, vector<1x128x32xf32>
    %273 = vector.shape_cast %272 : vector<1x128x32xf32> to vector<128x32xf32>
    %cst_181 = arith.constant dense<0.000000e+00> : vector<8x32xf32>
    %274 = tpu.matmul %3, %273, %cst_181 {dimension_numbers = #tpu.dot_dimension_numbers<[1], [0], [0], [1], [0, 0, 1, 1], [], []>} : vector<8x128xf32>, vector<128x32xf32>, vector<8x32xf32> -> vector<8x32xf32>
    %c5_182 = arith.constant 5 : index
    %c0_183 = arith.constant 0 : index
    %c0_184 = arith.constant 0 : index
    %275 = vector.load %arg13[%c5_182, %c0_183, %c0_184] : memref<12x1x32xf32, #tpu.memory_space<vmem>>, vector<1x1x32xf32>
    %276 = vector.shape_cast %275 : vector<1x1x32xf32> to vector<1x32xf32>
    %277 = vector.broadcast %276 : vector<1x32xf32> to vector<8x32xf32>
    %278 = arith.addf %274, %277 : vector<8x32xf32>
    %c9_185 = arith.constant 9 : index
    %c0_186 = arith.constant 0 : index
    %c0_187 = arith.constant 0 : index
    %279 = vector.load %arg12[%c9_185, %c0_186, %c0_187] : memref<12x128x32xf32, #tpu.memory_space<vmem>>, vector<1x128x32xf32>
    %280 = vector.shape_cast %279 : vector<1x128x32xf32> to vector<128x32xf32>
    %cst_188 = arith.constant dense<0.000000e+00> : vector<8x32xf32>
    %281 = tpu.matmul %3, %280, %cst_188 {dimension_numbers = #tpu.dot_dimension_numbers<[1], [0], [0], [1], [0, 0, 1, 1], [], []>} : vector<8x128xf32>, vector<128x32xf32>, vector<8x32xf32> -> vector<8x32xf32>
    %c9_189 = arith.constant 9 : index
    %c0_190 = arith.constant 0 : index
    %c0_191 = arith.constant 0 : index
    %282 = vector.load %arg13[%c9_189, %c0_190, %c0_191] : memref<12x1x32xf32, #tpu.memory_space<vmem>>, vector<1x1x32xf32>
    %283 = vector.shape_cast %282 : vector<1x1x32xf32> to vector<1x32xf32>
    %284 = vector.broadcast %283 : vector<1x32xf32> to vector<8x32xf32>
    %285 = arith.addf %281, %284 : vector<8x32xf32>
    %cst_192 = arith.constant dense<0.000000e+00> : vector<8x8xf32>
    %286 = tpu.matmul %271, %278, %cst_192 {dimension_numbers = #tpu.dot_dimension_numbers<[1], [1], [0], [0], [0, 0, 1, 0], [], []>} : vector<8x32xf32>, vector<8x32xf32>, vector<8x8xf32> -> vector<8x8xf32>
    %287 = vector.broadcast %5 : vector<1x8xf32> to vector<8x8xf32>
    %288 = arith.addf %286, %287 : vector<8x8xf32>
    %cst_193 = arith.constant dense<0xFF800000> : vector<8xf32>
    %289 = vector.multi_reduction <maximumf>, %288, %cst_193 [1] : vector<8x8xf32> to vector<8xf32>
    %290 = vector.shape_cast %289 : vector<8xf32> to vector<8x1xf32>
    %291 = vector.broadcast %290 : vector<8x1xf32> to vector<8x8xf32>
    %292 = arith.subf %288, %291 : vector<8x8xf32>
    %293 = math.exp %292 : vector<8x8xf32>
    %cst_194 = arith.constant dense<0.000000e+00> : vector<8xf32>
    %294 = vector.multi_reduction <add>, %293, %cst_194 [1] : vector<8x8xf32> to vector<8xf32>
    %295 = vector.shape_cast %294 : vector<8xf32> to vector<8x1xf32>
    %296 = tpu.reciprocal %295 {approx = true} : vector<8x1xf32> -> vector<8x1xf32>
    %297 = vector.broadcast %296 : vector<8x1xf32> to vector<8x8xf32>
    %298 = arith.mulf %293, %297 : vector<8x8xf32>
    %cst_195 = arith.constant dense<0.000000e+00> : vector<8x32xf32>
    %299 = tpu.matmul %298, %285, %cst_195 {dimension_numbers = #tpu.dot_dimension_numbers<[1], [0], [0], [1], [0, 0, 1, 1], [], []>} : vector<8x8xf32>, vector<8x32xf32>, vector<8x32xf32> -> vector<8x32xf32>
    %c1_196 = arith.constant 1 : index
    %c0_197 = arith.constant 0 : index
    %c0_198 = arith.constant 0 : index
    %300 = vector.load %arg14[%c1_196, %c0_197, %c0_198] : memref<4x32x128xf32, #tpu.memory_space<vmem>>, vector<1x32x128xf32>
    %301 = vector.shape_cast %300 : vector<1x32x128xf32> to vector<32x128xf32>
    %cst_199 = arith.constant dense<0.000000e+00> : vector<8x128xf32>
    %302 = tpu.matmul %299, %301, %cst_199 {dimension_numbers = #tpu.dot_dimension_numbers<[1], [0], [0], [1], [0, 0, 1, 1], [], []>} : vector<8x32xf32>, vector<32x128xf32>, vector<8x128xf32> -> vector<8x128xf32>
    %303 = arith.addf %262, %302 : vector<8x128xf32>
    %c2_200 = arith.constant 2 : index
    %c0_201 = arith.constant 0 : index
    %c0_202 = arith.constant 0 : index
    %304 = vector.load %arg12[%c2_200, %c0_201, %c0_202] : memref<12x128x32xf32, #tpu.memory_space<vmem>>, vector<1x128x32xf32>
    %305 = vector.shape_cast %304 : vector<1x128x32xf32> to vector<128x32xf32>
    %cst_203 = arith.constant dense<0.000000e+00> : vector<8x32xf32>
    %306 = tpu.matmul %220, %305, %cst_203 {dimension_numbers = #tpu.dot_dimension_numbers<[1], [0], [0], [1], [0, 0, 1, 1], [], []>} : vector<8x128xf32>, vector<128x32xf32>, vector<8x32xf32> -> vector<8x32xf32>
    %c2_204 = arith.constant 2 : index
    %c0_205 = arith.constant 0 : index
    %c0_206 = arith.constant 0 : index
    %307 = vector.load %arg13[%c2_204, %c0_205, %c0_206] : memref<12x1x32xf32, #tpu.memory_space<vmem>>, vector<1x1x32xf32>
    %308 = vector.shape_cast %307 : vector<1x1x32xf32> to vector<1x32xf32>
    %309 = vector.broadcast %308 : vector<1x32xf32> to vector<8x32xf32>
    %310 = arith.addf %306, %309 : vector<8x32xf32>
    %cst_207 = arith.constant 0.176776692 : f32
    %311 = vector.broadcast %cst_207 : f32 to vector<8x32xf32>
    %312 = arith.mulf %310, %311 : vector<8x32xf32>
    %c6_208 = arith.constant 6 : index
    %c0_209 = arith.constant 0 : index
    %c0_210 = arith.constant 0 : index
    %313 = vector.load %arg12[%c6_208, %c0_209, %c0_210] : memref<12x128x32xf32, #tpu.memory_space<vmem>>, vector<1x128x32xf32>
    %314 = vector.shape_cast %313 : vector<1x128x32xf32> to vector<128x32xf32>
    %cst_211 = arith.constant dense<0.000000e+00> : vector<8x32xf32>
    %315 = tpu.matmul %3, %314, %cst_211 {dimension_numbers = #tpu.dot_dimension_numbers<[1], [0], [0], [1], [0, 0, 1, 1], [], []>} : vector<8x128xf32>, vector<128x32xf32>, vector<8x32xf32> -> vector<8x32xf32>
    %c6_212 = arith.constant 6 : index
    %c0_213 = arith.constant 0 : index
    %c0_214 = arith.constant 0 : index
    %316 = vector.load %arg13[%c6_212, %c0_213, %c0_214] : memref<12x1x32xf32, #tpu.memory_space<vmem>>, vector<1x1x32xf32>
    %317 = vector.shape_cast %316 : vector<1x1x32xf32> to vector<1x32xf32>
    %318 = vector.broadcast %317 : vector<1x32xf32> to vector<8x32xf32>
    %319 = arith.addf %315, %318 : vector<8x32xf32>
    %c10_215 = arith.constant 10 : index
    %c0_216 = arith.constant 0 : index
    %c0_217 = arith.constant 0 : index
    %320 = vector.load %arg12[%c10_215, %c0_216, %c0_217] : memref<12x128x32xf32, #tpu.memory_space<vmem>>, vector<1x128x32xf32>
    %321 = vector.shape_cast %320 : vector<1x128x32xf32> to vector<128x32xf32>
    %cst_218 = arith.constant dense<0.000000e+00> : vector<8x32xf32>
    %322 = tpu.matmul %3, %321, %cst_218 {dimension_numbers = #tpu.dot_dimension_numbers<[1], [0], [0], [1], [0, 0, 1, 1], [], []>} : vector<8x128xf32>, vector<128x32xf32>, vector<8x32xf32> -> vector<8x32xf32>
    %c10_219 = arith.constant 10 : index
    %c0_220 = arith.constant 0 : index
    %c0_221 = arith.constant 0 : index
    %323 = vector.load %arg13[%c10_219, %c0_220, %c0_221] : memref<12x1x32xf32, #tpu.memory_space<vmem>>, vector<1x1x32xf32>
    %324 = vector.shape_cast %323 : vector<1x1x32xf32> to vector<1x32xf32>
    %325 = vector.broadcast %324 : vector<1x32xf32> to vector<8x32xf32>
    %326 = arith.addf %322, %325 : vector<8x32xf32>
    %cst_222 = arith.constant dense<0.000000e+00> : vector<8x8xf32>
    %327 = tpu.matmul %312, %319, %cst_222 {dimension_numbers = #tpu.dot_dimension_numbers<[1], [1], [0], [0], [0, 0, 1, 0], [], []>} : vector<8x32xf32>, vector<8x32xf32>, vector<8x8xf32> -> vector<8x8xf32>
    %328 = vector.broadcast %5 : vector<1x8xf32> to vector<8x8xf32>
    %329 = arith.addf %327, %328 : vector<8x8xf32>
    %cst_223 = arith.constant dense<0xFF800000> : vector<8xf32>
    %330 = vector.multi_reduction <maximumf>, %329, %cst_223 [1] : vector<8x8xf32> to vector<8xf32>
    %331 = vector.shape_cast %330 : vector<8xf32> to vector<8x1xf32>
    %332 = vector.broadcast %331 : vector<8x1xf32> to vector<8x8xf32>
    %333 = arith.subf %329, %332 : vector<8x8xf32>
    %334 = math.exp %333 : vector<8x8xf32>
    %cst_224 = arith.constant dense<0.000000e+00> : vector<8xf32>
    %335 = vector.multi_reduction <add>, %334, %cst_224 [1] : vector<8x8xf32> to vector<8xf32>
    %336 = vector.shape_cast %335 : vector<8xf32> to vector<8x1xf32>
    %337 = tpu.reciprocal %336 {approx = true} : vector<8x1xf32> -> vector<8x1xf32>
    %338 = vector.broadcast %337 : vector<8x1xf32> to vector<8x8xf32>
    %339 = arith.mulf %334, %338 : vector<8x8xf32>
    %cst_225 = arith.constant dense<0.000000e+00> : vector<8x32xf32>
    %340 = tpu.matmul %339, %326, %cst_225 {dimension_numbers = #tpu.dot_dimension_numbers<[1], [0], [0], [1], [0, 0, 1, 1], [], []>} : vector<8x8xf32>, vector<8x32xf32>, vector<8x32xf32> -> vector<8x32xf32>
    %c2_226 = arith.constant 2 : index
    %c0_227 = arith.constant 0 : index
    %c0_228 = arith.constant 0 : index
    %341 = vector.load %arg14[%c2_226, %c0_227, %c0_228] : memref<4x32x128xf32, #tpu.memory_space<vmem>>, vector<1x32x128xf32>
    %342 = vector.shape_cast %341 : vector<1x32x128xf32> to vector<32x128xf32>
    %cst_229 = arith.constant dense<0.000000e+00> : vector<8x128xf32>
    %343 = tpu.matmul %340, %342, %cst_229 {dimension_numbers = #tpu.dot_dimension_numbers<[1], [0], [0], [1], [0, 0, 1, 1], [], []>} : vector<8x32xf32>, vector<32x128xf32>, vector<8x128xf32> -> vector<8x128xf32>
    %344 = arith.addf %303, %343 : vector<8x128xf32>
    %c3_230 = arith.constant 3 : index
    %c0_231 = arith.constant 0 : index
    %c0_232 = arith.constant 0 : index
    %345 = vector.load %arg12[%c3_230, %c0_231, %c0_232] : memref<12x128x32xf32, #tpu.memory_space<vmem>>, vector<1x128x32xf32>
    %346 = vector.shape_cast %345 : vector<1x128x32xf32> to vector<128x32xf32>
    %cst_233 = arith.constant dense<0.000000e+00> : vector<8x32xf32>
    %347 = tpu.matmul %220, %346, %cst_233 {dimension_numbers = #tpu.dot_dimension_numbers<[1], [0], [0], [1], [0, 0, 1, 1], [], []>} : vector<8x128xf32>, vector<128x32xf32>, vector<8x32xf32> -> vector<8x32xf32>
    %c3_234 = arith.constant 3 : index
    %c0_235 = arith.constant 0 : index
    %c0_236 = arith.constant 0 : index
    %348 = vector.load %arg13[%c3_234, %c0_235, %c0_236] : memref<12x1x32xf32, #tpu.memory_space<vmem>>, vector<1x1x32xf32>
    %349 = vector.shape_cast %348 : vector<1x1x32xf32> to vector<1x32xf32>
    %350 = vector.broadcast %349 : vector<1x32xf32> to vector<8x32xf32>
    %351 = arith.addf %347, %350 : vector<8x32xf32>
    %cst_237 = arith.constant 0.176776692 : f32
    %352 = vector.broadcast %cst_237 : f32 to vector<8x32xf32>
    %353 = arith.mulf %351, %352 : vector<8x32xf32>
    %c7_238 = arith.constant 7 : index
    %c0_239 = arith.constant 0 : index
    %c0_240 = arith.constant 0 : index
    %354 = vector.load %arg12[%c7_238, %c0_239, %c0_240] : memref<12x128x32xf32, #tpu.memory_space<vmem>>, vector<1x128x32xf32>
    %355 = vector.shape_cast %354 : vector<1x128x32xf32> to vector<128x32xf32>
    %cst_241 = arith.constant dense<0.000000e+00> : vector<8x32xf32>
    %356 = tpu.matmul %3, %355, %cst_241 {dimension_numbers = #tpu.dot_dimension_numbers<[1], [0], [0], [1], [0, 0, 1, 1], [], []>} : vector<8x128xf32>, vector<128x32xf32>, vector<8x32xf32> -> vector<8x32xf32>
    %c7_242 = arith.constant 7 : index
    %c0_243 = arith.constant 0 : index
    %c0_244 = arith.constant 0 : index
    %357 = vector.load %arg13[%c7_242, %c0_243, %c0_244] : memref<12x1x32xf32, #tpu.memory_space<vmem>>, vector<1x1x32xf32>
    %358 = vector.shape_cast %357 : vector<1x1x32xf32> to vector<1x32xf32>
    %359 = vector.broadcast %358 : vector<1x32xf32> to vector<8x32xf32>
    %360 = arith.addf %356, %359 : vector<8x32xf32>
    %c11_245 = arith.constant 11 : index
    %c0_246 = arith.constant 0 : index
    %c0_247 = arith.constant 0 : index
    %361 = vector.load %arg12[%c11_245, %c0_246, %c0_247] : memref<12x128x32xf32, #tpu.memory_space<vmem>>, vector<1x128x32xf32>
    %362 = vector.shape_cast %361 : vector<1x128x32xf32> to vector<128x32xf32>
    %cst_248 = arith.constant dense<0.000000e+00> : vector<8x32xf32>
    %363 = tpu.matmul %3, %362, %cst_248 {dimension_numbers = #tpu.dot_dimension_numbers<[1], [0], [0], [1], [0, 0, 1, 1], [], []>} : vector<8x128xf32>, vector<128x32xf32>, vector<8x32xf32> -> vector<8x32xf32>
    %c11_249 = arith.constant 11 : index
    %c0_250 = arith.constant 0 : index
    %c0_251 = arith.constant 0 : index
    %364 = vector.load %arg13[%c11_249, %c0_250, %c0_251] : memref<12x1x32xf32, #tpu.memory_space<vmem>>, vector<1x1x32xf32>
    %365 = vector.shape_cast %364 : vector<1x1x32xf32> to vector<1x32xf32>
    %366 = vector.broadcast %365 : vector<1x32xf32> to vector<8x32xf32>
    %367 = arith.addf %363, %366 : vector<8x32xf32>
    %cst_252 = arith.constant dense<0.000000e+00> : vector<8x8xf32>
    %368 = tpu.matmul %353, %360, %cst_252 {dimension_numbers = #tpu.dot_dimension_numbers<[1], [1], [0], [0], [0, 0, 1, 0], [], []>} : vector<8x32xf32>, vector<8x32xf32>, vector<8x8xf32> -> vector<8x8xf32>
    %369 = vector.broadcast %5 : vector<1x8xf32> to vector<8x8xf32>
    %370 = arith.addf %368, %369 : vector<8x8xf32>
    %cst_253 = arith.constant dense<0xFF800000> : vector<8xf32>
    %371 = vector.multi_reduction <maximumf>, %370, %cst_253 [1] : vector<8x8xf32> to vector<8xf32>
    %372 = vector.shape_cast %371 : vector<8xf32> to vector<8x1xf32>
    %373 = vector.broadcast %372 : vector<8x1xf32> to vector<8x8xf32>
    %374 = arith.subf %370, %373 : vector<8x8xf32>
    %375 = math.exp %374 : vector<8x8xf32>
    %cst_254 = arith.constant dense<0.000000e+00> : vector<8xf32>
    %376 = vector.multi_reduction <add>, %375, %cst_254 [1] : vector<8x8xf32> to vector<8xf32>
    %377 = vector.shape_cast %376 : vector<8xf32> to vector<8x1xf32>
    %378 = tpu.reciprocal %377 {approx = true} : vector<8x1xf32> -> vector<8x1xf32>
    %379 = vector.broadcast %378 : vector<8x1xf32> to vector<8x8xf32>
    %380 = arith.mulf %375, %379 : vector<8x8xf32>
    %cst_255 = arith.constant dense<0.000000e+00> : vector<8x32xf32>
    %381 = tpu.matmul %380, %367, %cst_255 {dimension_numbers = #tpu.dot_dimension_numbers<[1], [0], [0], [1], [0, 0, 1, 1], [], []>} : vector<8x8xf32>, vector<8x32xf32>, vector<8x32xf32> -> vector<8x32xf32>
    %c3_256 = arith.constant 3 : index
    %c0_257 = arith.constant 0 : index
    %c0_258 = arith.constant 0 : index
    %382 = vector.load %arg14[%c3_256, %c0_257, %c0_258] : memref<4x32x128xf32, #tpu.memory_space<vmem>>, vector<1x32x128xf32>
    %383 = vector.shape_cast %382 : vector<1x32x128xf32> to vector<32x128xf32>
    %cst_259 = arith.constant dense<0.000000e+00> : vector<8x128xf32>
    %384 = tpu.matmul %381, %383, %cst_259 {dimension_numbers = #tpu.dot_dimension_numbers<[1], [0], [0], [1], [0, 0, 1, 1], [], []>} : vector<8x32xf32>, vector<32x128xf32>, vector<8x128xf32> -> vector<8x128xf32>
    %385 = arith.addf %344, %384 : vector<8x128xf32>
    %c0_260 = arith.constant 0 : index
    %c0_261 = arith.constant 0 : index
    %386 = vector.load %arg15[%c0_260, %c0_261] : memref<1x128xf32, #tpu.memory_space<vmem>>, vector<1x128xf32>
    %387 = vector.broadcast %386 : vector<1x128xf32> to vector<8x128xf32>
    %388 = arith.addf %385, %387 : vector<8x128xf32>
    %389 = arith.addf %198, %388 : vector<8x128xf32>
    %c0_262 = arith.constant 0 : index
    %c0_263 = arith.constant 0 : index
    %390 = vector.load %arg16[%c0_262, %c0_263] : memref<1x128xf32, #tpu.memory_space<vmem>>, vector<1x128xf32>
    %c0_264 = arith.constant 0 : index
    %c0_265 = arith.constant 0 : index
    %391 = vector.load %arg17[%c0_264, %c0_265] : memref<1x128xf32, #tpu.memory_space<vmem>>, vector<1x128xf32>
    %c0_266 = arith.constant 0 : index
    %c0_267 = arith.constant 0 : index
    %392 = vector.load %arg18[%c0_266, %c0_267] : memref<128x256xf32, #tpu.memory_space<vmem>>, vector<128x256xf32>
    %c0_268 = arith.constant 0 : index
    %c0_269 = arith.constant 0 : index
    %393 = vector.load %arg19[%c0_268, %c0_269] : memref<1x256xf32, #tpu.memory_space<vmem>>, vector<1x256xf32>
    %c0_270 = arith.constant 0 : index
    %c0_271 = arith.constant 0 : index
    %394 = vector.load %arg20[%c0_270, %c0_271] : memref<256x128xf32, #tpu.memory_space<vmem>>, vector<256x128xf32>
    %c0_272 = arith.constant 0 : index
    %c0_273 = arith.constant 0 : index
    %395 = vector.load %arg21[%c0_272, %c0_273] : memref<1x128xf32, #tpu.memory_space<vmem>>, vector<1x128xf32>
    %cst_274 = arith.constant dense<0.000000e+00> : vector<8xf32>
    %396 = vector.multi_reduction <add>, %389, %cst_274 [1] : vector<8x128xf32> to vector<8xf32>
    %397 = vector.shape_cast %396 : vector<8xf32> to vector<8x1xf32>
    %cst_275 = arith.constant 1.280000e+02 : f32
    %398 = vector.broadcast %cst_275 : f32 to vector<8x1xf32>
    %399 = arith.divf %397, %398 : vector<8x1xf32>
    %400 = vector.broadcast %399 : vector<8x1xf32> to vector<8x128xf32>
    %401 = arith.subf %389, %400 : vector<8x128xf32>
    %402 = arith.mulf %401, %401 : vector<8x128xf32>
    %cst_276 = arith.constant dense<0.000000e+00> : vector<8xf32>
    %403 = vector.multi_reduction <add>, %402, %cst_276 [1] : vector<8x128xf32> to vector<8xf32>
    %404 = vector.shape_cast %403 : vector<8xf32> to vector<8x1xf32>
    %cst_277 = arith.constant 1.280000e+02 : f32
    %405 = vector.broadcast %cst_277 : f32 to vector<8x1xf32>
    %406 = arith.divf %404, %405 : vector<8x1xf32>
    %cst_278 = arith.constant 9.99999974E-6 : f32
    %407 = vector.broadcast %cst_278 : f32 to vector<8x1xf32>
    %408 = arith.addf %406, %407 : vector<8x1xf32>
    %409 = math.rsqrt %408 : vector<8x1xf32>
    %410 = vector.broadcast %409 : vector<8x1xf32> to vector<8x128xf32>
    %411 = arith.mulf %401, %410 : vector<8x128xf32>
    %412 = vector.broadcast %390 : vector<1x128xf32> to vector<8x128xf32>
    %413 = arith.mulf %411, %412 : vector<8x128xf32>
    %414 = vector.broadcast %391 : vector<1x128xf32> to vector<8x128xf32>
    %415 = arith.addf %413, %414 : vector<8x128xf32>
    %cst_279 = arith.constant dense<0.000000e+00> : vector<8x256xf32>
    %416 = tpu.matmul %415, %392, %cst_279 {dimension_numbers = #tpu.dot_dimension_numbers<[1], [0], [0], [1], [0, 0, 1, 1], [], []>} : vector<8x128xf32>, vector<128x256xf32>, vector<8x256xf32> -> vector<8x256xf32>
    %417 = vector.broadcast %393 : vector<1x256xf32> to vector<8x256xf32>
    %418 = arith.addf %416, %417 : vector<8x256xf32>
    %cst_280 = arith.constant 5.000000e-01 : f32
    %419 = vector.broadcast %cst_280 : f32 to vector<8x256xf32>
    %420 = arith.mulf %419, %418 : vector<8x256xf32>
    %cst_281 = arith.constant 4.471500e-02 : f32
    %421 = vector.broadcast %cst_281 : f32 to vector<8x256xf32>
    %422 = arith.mulf %421, %418 : vector<8x256xf32>
    %423 = arith.mulf %422, %418 : vector<8x256xf32>
    %424 = arith.mulf %423, %418 : vector<8x256xf32>
    %425 = arith.addf %418, %424 : vector<8x256xf32>
    %cst_282 = arith.constant 0.797884583 : f32
    %426 = vector.broadcast %cst_282 : f32 to vector<8x256xf32>
    %427 = arith.mulf %426, %425 : vector<8x256xf32>
    %428 = math.tanh %427 : vector<8x256xf32>
    %cst_283 = arith.constant 1.000000e+00 : f32
    %429 = vector.broadcast %cst_283 : f32 to vector<8x256xf32>
    %430 = arith.addf %429, %428 : vector<8x256xf32>
    %431 = arith.mulf %420, %430 : vector<8x256xf32>
    %cst_284 = arith.constant dense<0.000000e+00> : vector<8x128xf32>
    %432 = tpu.matmul %431, %394, %cst_284 {dimension_numbers = #tpu.dot_dimension_numbers<[1], [0], [0], [1], [0, 0, 1, 1], [], []>} : vector<8x256xf32>, vector<256x128xf32>, vector<8x128xf32> -> vector<8x128xf32>
    %433 = arith.addf %389, %432 : vector<8x128xf32>
    %434 = vector.broadcast %395 : vector<1x128xf32> to vector<8x128xf32>
    %435 = arith.addf %433, %434 : vector<8x128xf32>
    %c0_285 = arith.constant 0 : index
    %c0_286 = arith.constant 0 : index
    %436 = vector.load %arg22[%c0_285, %c0_286] : memref<1x128xf32, #tpu.memory_space<vmem>>, vector<1x128xf32>
    %c0_287 = arith.constant 0 : index
    %c0_288 = arith.constant 0 : index
    %437 = vector.load %arg23[%c0_287, %c0_288] : memref<1x128xf32, #tpu.memory_space<vmem>>, vector<1x128xf32>
    %cst_289 = arith.constant dense<0.000000e+00> : vector<8xf32>
    %438 = vector.multi_reduction <add>, %435, %cst_289 [1] : vector<8x128xf32> to vector<8xf32>
    %439 = vector.shape_cast %438 : vector<8xf32> to vector<8x1xf32>
    %cst_290 = arith.constant 1.280000e+02 : f32
    %440 = vector.broadcast %cst_290 : f32 to vector<8x1xf32>
    %441 = arith.divf %439, %440 : vector<8x1xf32>
    %442 = vector.broadcast %441 : vector<8x1xf32> to vector<8x128xf32>
    %443 = arith.subf %435, %442 : vector<8x128xf32>
    %444 = arith.mulf %443, %443 : vector<8x128xf32>
    %cst_291 = arith.constant dense<0.000000e+00> : vector<8xf32>
    %445 = vector.multi_reduction <add>, %444, %cst_291 [1] : vector<8x128xf32> to vector<8xf32>
    %446 = vector.shape_cast %445 : vector<8xf32> to vector<8x1xf32>
    %cst_292 = arith.constant 1.280000e+02 : f32
    %447 = vector.broadcast %cst_292 : f32 to vector<8x1xf32>
    %448 = arith.divf %446, %447 : vector<8x1xf32>
    %cst_293 = arith.constant 9.99999974E-6 : f32
    %449 = vector.broadcast %cst_293 : f32 to vector<8x1xf32>
    %450 = arith.addf %448, %449 : vector<8x1xf32>
    %451 = math.rsqrt %450 : vector<8x1xf32>
    %452 = vector.broadcast %451 : vector<8x1xf32> to vector<8x128xf32>
    %453 = arith.mulf %443, %452 : vector<8x128xf32>
    %454 = vector.broadcast %436 : vector<1x128xf32> to vector<8x128xf32>
    %455 = arith.mulf %453, %454 : vector<8x128xf32>
    %456 = vector.broadcast %437 : vector<1x128xf32> to vector<8x128xf32>
    %457 = arith.addf %455, %456 : vector<8x128xf32>
    %c0_294 = arith.constant 0 : index
    %c0_295 = arith.constant 0 : index
    %458 = vector.load %arg24[%c0_294, %c0_295] : memref<128x128xf32, #tpu.memory_space<vmem>>, vector<128x128xf32>
    %cst_296 = arith.constant dense<0.000000e+00> : vector<8x128xf32>
    %459 = tpu.matmul %457, %458, %cst_296 {dimension_numbers = #tpu.dot_dimension_numbers<[1], [0], [0], [1], [0, 0, 1, 1], [], []>} : vector<8x128xf32>, vector<128x128xf32>, vector<8x128xf32> -> vector<8x128xf32>
    %c0_297 = arith.constant 0 : index
    %c0_298 = arith.constant 0 : index
    %c0_299 = arith.constant 0 : index
    %460 = vector.load %arg25[%c0_297, %c0_298, %c0_299] : memref<1x8x128xf32, #tpu.memory_space<vmem>>, vector<1x8x128xf32>
    %461 = vector.shape_cast %460 : vector<1x8x128xf32> to vector<8x128xf32>
    %462 = vector.shape_cast %459 : vector<8x128xf32> to vector<1x8x128xf32>
    tpu.vector_store %arg25[%c0_297, %c0_298, %c0_299], %462 {strides = array<i32>} : memref<1x8x128xf32, #tpu.memory_space<vmem>>, vector<1x8x128xf32>,
    return
  }
  func.func @transform_0(%arg0: i32) -> (i32, i32, i32) {
    %c0_i32 = arith.constant 0 : i32
    %c0_i32_0 = arith.constant 0 : i32
    %c0_i32_1 = arith.constant 0 : i32
    return %arg0, %c0_i32, %c0_i32_0 : i32, i32, i32
  }
  func.func @transform_1(%arg0: i32) -> (i32, i32, i32) {
    %c0_i32 = arith.constant 0 : i32
    %c0_i32_0 = arith.constant 0 : i32
    %c0_i32_1 = arith.constant 0 : i32
    return %arg0, %c0_i32, %c0_i32_0 : i32, i32, i32
  }
  func.func @transform_2(%arg0: i32) -> (i32, i32, i32) {
    %c0_i32 = arith.constant 0 : i32
    %c0_i32_0 = arith.constant 0 : i32
    %c0_i32_1 = arith.constant 0 : i32
    return %arg0, %c0_i32, %c0_i32_0 : i32, i32, i32
  }
  func.func @transform_3(%arg0: i32) -> (i32, i32) {
    %c0_i32 = arith.constant 0 : i32
    %c0_i32_0 = arith.constant 0 : i32
    %c0_i32_1 = arith.constant 0 : i32
    return %c0_i32, %c0_i32_0 : i32, i32
  }
  func.func @transform_4(%arg0: i32) -> (i32, i32) {
    %c0_i32 = arith.constant 0 : i32
    %c0_i32_0 = arith.constant 0 : i32
    %c0_i32_1 = arith.constant 0 : i32
    return %c0_i32, %c0_i32_0 : i32, i32
  }
  func.func @transform_5(%arg0: i32) -> (i32, i32, i32) {
    %c0_i32 = arith.constant 0 : i32
    %c0_i32_0 = arith.constant 0 : i32
    %c0_i32_1 = arith.constant 0 : i32
    %c0_i32_2 = arith.constant 0 : i32
    return %c0_i32, %c0_i32_0, %c0_i32_1 : i32, i32, i32
  }
  func.func @transform_6(%arg0: i32) -> (i32, i32, i32) {
    %c0_i32 = arith.constant 0 : i32
    %c0_i32_0 = arith.constant 0 : i32
    %c0_i32_1 = arith.constant 0 : i32
    %c0_i32_2 = arith.constant 0 : i32
    return %c0_i32, %c0_i32_0, %c0_i32_1 : i32, i32, i32
  }
  func.func @transform_7(%arg0: i32) -> (i32, i32, i32) {
    %c0_i32 = arith.constant 0 : i32
    %c0_i32_0 = arith.constant 0 : i32
    %c0_i32_1 = arith.constant 0 : i32
    %c0_i32_2 = arith.constant 0 : i32
    return %c0_i32, %c0_i32_0, %c0_i32_1 : i32, i32, i32
  }
  func.func @transform_8(%arg0: i32) -> (i32, i32) {
    %c0_i32 = arith.constant 0 : i32
    %c0_i32_0 = arith.constant 0 : i32
    %c0_i32_1 = arith.constant 0 : i32
    return %c0_i32, %c0_i32_0 : i32, i32
  }
  func.func @transform_9(%arg0: i32) -> (i32, i32) {
    %c0_i32 = arith.constant 0 : i32
    %c0_i32_0 = arith.constant 0 : i32
    %c0_i32_1 = arith.constant 0 : i32
    return %c0_i32, %c0_i32_0 : i32, i32
  }
  func.func @transform_10(%arg0: i32) -> (i32, i32) {
    %c0_i32 = arith.constant 0 : i32
    %c0_i32_0 = arith.constant 0 : i32
    %c0_i32_1 = arith.constant 0 : i32
    return %c0_i32, %c0_i32_0 : i32, i32
  }
  func.func @transform_11(%arg0: i32) -> (i32, i32, i32) {
    %c0_i32 = arith.constant 0 : i32
    %c0_i32_0 = arith.constant 0 : i32
    %c0_i32_1 = arith.constant 0 : i32
    %c0_i32_2 = arith.constant 0 : i32
    return %c0_i32, %c0_i32_0, %c0_i32_1 : i32, i32, i32
  }
  func.func @transform_12(%arg0: i32) -> (i32, i32, i32) {
    %c0_i32 = arith.constant 0 : i32
    %c0_i32_0 = arith.constant 0 : i32
    %c0_i32_1 = arith.constant 0 : i32
    %c0_i32_2 = arith.constant 0 : i32
    return %c0_i32, %c0_i32_0, %c0_i32_1 : i32, i32, i32
  }
  func.func @transform_13(%arg0: i32) -> (i32, i32, i32) {
    %c0_i32 = arith.constant 0 : i32
    %c0_i32_0 = arith.constant 0 : i32
    %c0_i32_1 = arith.constant 0 : i32
    %c0_i32_2 = arith.constant 0 : i32
    return %c0_i32, %c0_i32_0, %c0_i32_1 : i32, i32, i32
  }
  func.func @transform_14(%arg0: i32) -> (i32, i32) {
    %c0_i32 = arith.constant 0 : i32
    %c0_i32_0 = arith.constant 0 : i32
    %c0_i32_1 = arith.constant 0 : i32
    return %c0_i32, %c0_i32_0 : i32, i32
  }
  func.func @transform_15(%arg0: i32) -> (i32, i32) {
    %c0_i32 = arith.constant 0 : i32
    %c0_i32_0 = arith.constant 0 : i32
    %c0_i32_1 = arith.constant 0 : i32
    return %c0_i32, %c0_i32_0 : i32, i32
  }
  func.func @transform_16(%arg0: i32) -> (i32, i32) {
    %c0_i32 = arith.constant 0 : i32
    %c0_i32_0 = arith.constant 0 : i32
    %c0_i32_1 = arith.constant 0 : i32
    return %c0_i32, %c0_i32_0 : i32, i32
  }
  func.func @transform_17(%arg0: i32) -> (i32, i32) {
    %c0_i32 = arith.constant 0 : i32
    %c0_i32_0 = arith.constant 0 : i32
    %c0_i32_1 = arith.constant 0 : i32
    return %c0_i32, %c0_i32_0 : i32, i32
  }
  func.func @transform_18(%arg0: i32) -> (i32, i32) {
    %c0_i32 = arith.constant 0 : i32
    %c0_i32_0 = arith.constant 0 : i32
    %c0_i32_1 = arith.constant 0 : i32
    return %c0_i32, %c0_i32_0 : i32, i32
  }
  func.func @transform_19(%arg0: i32) -> (i32, i32) {
    %c0_i32 = arith.constant 0 : i32
    %c0_i32_0 = arith.constant 0 : i32
    %c0_i32_1 = arith.constant 0 : i32
    return %c0_i32, %c0_i32_0 : i32, i32
  }
  func.func @transform_20(%arg0: i32) -> (i32, i32) {
    %c0_i32 = arith.constant 0 : i32
    %c0_i32_0 = arith.constant 0 : i32
    %c0_i32_1 = arith.constant 0 : i32
    return %c0_i32, %c0_i32_0 : i32, i32
  }
  func.func @transform_21(%arg0: i32) -> (i32, i32) {
    %c0_i32 = arith.constant 0 : i32
    %c0_i32_0 = arith.constant 0 : i32
    %c0_i32_1 = arith.constant 0 : i32
    return %c0_i32, %c0_i32_0 : i32, i32
  }
  func.func @transform_22(%arg0: i32) -> (i32, i32) {
    %c0_i32 = arith.constant 0 : i32
    %c0_i32_0 = arith.constant 0 : i32
    %c0_i32_1 = arith.constant 0 : i32
    return %c0_i32, %c0_i32_0 : i32, i32
  }
  func.func @transform_23(%arg0: i32) -> (i32, i32) {
    %c0_i32 = arith.constant 0 : i32
    %c0_i32_0 = arith.constant 0 : i32
    %c0_i32_1 = arith.constant 0 : i32
    return %c0_i32, %c0_i32_0 : i32, i32
  }
  func.func @transform_24(%arg0: i32) -> (i32, i32, i32) {
    %c0_i32 = arith.constant 0 : i32
    %c0_i32_0 = arith.constant 0 : i32
    %c0_i32_1 = arith.constant 0 : i32
    return %arg0, %c0_i32, %c0_i32_0 : i32, i32, i32
  }
}

module attributes {stable_mosaic.version = 11 : i64} {
  func.func @_encoder_layer_kernel(%arg0: i32, %arg1: memref<1x8x128xf32, #tpu.memory_space<vmem>>, %arg2: memref<1x1x8xf32, #tpu.memory_space<vmem>>, %arg3: memref<1x128xf32, #tpu.memory_space<vmem>>, %arg4: memref<1x128xf32, #tpu.memory_space<vmem>>, %arg5: memref<12x128x32xf32, #tpu.memory_space<vmem>>, %arg6: memref<12x1x32xf32, #tpu.memory_space<vmem>>, %arg7: memref<4x32x128xf32, #tpu.memory_space<vmem>>, %arg8: memref<1x128xf32, #tpu.memory_space<vmem>>, %arg9: memref<1x128xf32, #tpu.memory_space<vmem>>, %arg10: memref<1x128xf32, #tpu.memory_space<vmem>>, %arg11: memref<128x256xf32, #tpu.memory_space<vmem>>, %arg12: memref<1x256xf32, #tpu.memory_space<vmem>>, %arg13: memref<256x128xf32, #tpu.memory_space<vmem>>, %arg14: memref<1x128xf32, #tpu.memory_space<vmem>>, %arg15: memref<1x128xf32, #tpu.memory_space<vmem>>, %arg16: memref<1x128xf32, #tpu.memory_space<vmem>>, %arg17: memref<1x8x128xf32, #tpu.memory_space<vmem>>) attributes {dimension_semantics = [#tpu.dimension_semantics<parallel>], iteration_bounds = array<i64: 2>, scalar_prefetch = 0 : i64, scratch_operands = 0 : i64, tpu.core_type = #tpu.core_type<tc>, window_params = [{transform_indices = @transform_0, window_bounds = array<i64: 1, 8, 128>}, {transform_indices = @transform_1, window_bounds = array<i64: 1, 1, 8>}, {pipeline_mode = #tpu.pipeline_mode<synchronous>, transform_indices = @transform_2, window_bounds = array<i64: 1, 128>}, {pipeline_mode = #tpu.pipeline_mode<synchronous>, transform_indices = @transform_3, window_bounds = array<i64: 1, 128>}, {pipeline_mode = #tpu.pipeline_mode<synchronous>, transform_indices = @transform_4, window_bounds = array<i64: 12, 128, 32>}, {pipeline_mode = #tpu.pipeline_mode<synchronous>, transform_indices = @transform_5, window_bounds = array<i64: 12, 1, 32>}, {pipeline_mode = #tpu.pipeline_mode<synchronous>, transform_indices = @transform_6, window_bounds = array<i64: 4, 32, 128>}, {pipeline_mode = #tpu.pipeline_mode<synchronous>, transform_indices = @transform_7, window_bounds = array<i64: 1, 128>}, {pipeline_mode = #tpu.pipeline_mode<synchronous>, transform_indices = @transform_8, window_bounds = array<i64: 1, 128>}, {pipeline_mode = #tpu.pipeline_mode<synchronous>, transform_indices = @transform_9, window_bounds = array<i64: 1, 128>}, {pipeline_mode = #tpu.pipeline_mode<synchronous>, transform_indices = @transform_10, window_bounds = array<i64: 128, 256>}, {pipeline_mode = #tpu.pipeline_mode<synchronous>, transform_indices = @transform_11, window_bounds = array<i64: 1, 256>}, {pipeline_mode = #tpu.pipeline_mode<synchronous>, transform_indices = @transform_12, window_bounds = array<i64: 256, 128>}, {pipeline_mode = #tpu.pipeline_mode<synchronous>, transform_indices = @transform_13, window_bounds = array<i64: 1, 128>}, {pipeline_mode = #tpu.pipeline_mode<synchronous>, transform_indices = @transform_14, window_bounds = array<i64: 1, 128>}, {pipeline_mode = #tpu.pipeline_mode<synchronous>, transform_indices = @transform_15, window_bounds = array<i64: 1, 128>}, {transform_indices = @transform_16, window_bounds = array<i64: 1, 8, 128>}]} {
    %c0 = arith.constant 0 : index
    %c0_0 = arith.constant 0 : index
    %c0_1 = arith.constant 0 : index
    %0 = vector.load %arg1[%c0, %c0_0, %c0_1] : memref<1x8x128xf32, #tpu.memory_space<vmem>>, vector<1x8x128xf32>
    %1 = vector.shape_cast %0 : vector<1x8x128xf32> to vector<8x128xf32>
    %c0_2 = arith.constant 0 : index
    %c0_3 = arith.constant 0 : index
    %c0_4 = arith.constant 0 : index
    %2 = vector.load %arg2[%c0_2, %c0_3, %c0_4] : memref<1x1x8xf32, #tpu.memory_space<vmem>>, vector<1x1x8xf32>
    %3 = vector.shape_cast %2 : vector<1x1x8xf32> to vector<1x8xf32>
    %c0_5 = arith.constant 0 : index
    %c0_6 = arith.constant 0 : index
    %4 = vector.load %arg3[%c0_5, %c0_6] : memref<1x128xf32, #tpu.memory_space<vmem>>, vector<1x128xf32>
    %c0_7 = arith.constant 0 : index
    %c0_8 = arith.constant 0 : index
    %5 = vector.load %arg4[%c0_7, %c0_8] : memref<1x128xf32, #tpu.memory_space<vmem>>, vector<1x128xf32>
    %cst = arith.constant dense<0.000000e+00> : vector<8xf32>
    %6 = vector.multi_reduction <add>, %1, %cst [1] : vector<8x128xf32> to vector<8xf32>
    %7 = vector.shape_cast %6 : vector<8xf32> to vector<8x1xf32>
    %cst_9 = arith.constant 1.280000e+02 : f32
    %8 = vector.broadcast %cst_9 : f32 to vector<8x1xf32>
    %9 = arith.divf %7, %8 : vector<8x1xf32>
    %10 = vector.broadcast %9 : vector<8x1xf32> to vector<8x128xf32>
    %11 = arith.subf %1, %10 : vector<8x128xf32>
    %12 = arith.mulf %11, %11 : vector<8x128xf32>
    %cst_10 = arith.constant dense<0.000000e+00> : vector<8xf32>
    %13 = vector.multi_reduction <add>, %12, %cst_10 [1] : vector<8x128xf32> to vector<8xf32>
    %14 = vector.shape_cast %13 : vector<8xf32> to vector<8x1xf32>
    %cst_11 = arith.constant 1.280000e+02 : f32
    %15 = vector.broadcast %cst_11 : f32 to vector<8x1xf32>
    %16 = arith.divf %14, %15 : vector<8x1xf32>
    %cst_12 = arith.constant 9.99999974E-6 : f32
    %17 = vector.broadcast %cst_12 : f32 to vector<8x1xf32>
    %18 = arith.addf %16, %17 : vector<8x1xf32>
    %19 = math.rsqrt %18 : vector<8x1xf32>
    %20 = vector.broadcast %19 : vector<8x1xf32> to vector<8x128xf32>
    %21 = arith.mulf %11, %20 : vector<8x128xf32>
    %22 = vector.broadcast %4 : vector<1x128xf32> to vector<8x128xf32>
    %23 = arith.mulf %21, %22 : vector<8x128xf32>
    %24 = vector.broadcast %5 : vector<1x128xf32> to vector<8x128xf32>
    %25 = arith.addf %23, %24 : vector<8x128xf32>
    %cst_13 = arith.constant 0.000000e+00 : f32
    %26 = vector.broadcast %cst_13 : f32 to vector<8x128xf32>
    %c0_14 = arith.constant 0 : index
    %c0_15 = arith.constant 0 : index
    %c0_16 = arith.constant 0 : index
    %27 = vector.load %arg5[%c0_14, %c0_15, %c0_16] : memref<12x128x32xf32, #tpu.memory_space<vmem>>, vector<1x128x32xf32>
    %28 = vector.shape_cast %27 : vector<1x128x32xf32> to vector<128x32xf32>
    %cst_17 = arith.constant dense<0.000000e+00> : vector<8x32xf32>
    %29 = tpu.matmul %25, %28, %cst_17 {dimension_numbers = #tpu.dot_dimension_numbers<[1], [0], [0], [1], [0, 0, 1, 1], [], []>} : vector<8x128xf32>, vector<128x32xf32>, vector<8x32xf32> -> vector<8x32xf32>
    %c0_18 = arith.constant 0 : index
    %c0_19 = arith.constant 0 : index
    %c0_20 = arith.constant 0 : index
    %30 = vector.load %arg6[%c0_18, %c0_19, %c0_20] : memref<12x1x32xf32, #tpu.memory_space<vmem>>, vector<1x1x32xf32>
    %31 = vector.shape_cast %30 : vector<1x1x32xf32> to vector<1x32xf32>
    %32 = vector.broadcast %31 : vector<1x32xf32> to vector<8x32xf32>
    %33 = arith.addf %29, %32 : vector<8x32xf32>
    %cst_21 = arith.constant 0.176776692 : f32
    %34 = vector.broadcast %cst_21 : f32 to vector<8x32xf32>
    %35 = arith.mulf %33, %34 : vector<8x32xf32>
    %c4 = arith.constant 4 : index
    %c0_22 = arith.constant 0 : index
    %c0_23 = arith.constant 0 : index
    %36 = vector.load %arg5[%c4, %c0_22, %c0_23] : memref<12x128x32xf32, #tpu.memory_space<vmem>>, vector<1x128x32xf32>
    %37 = vector.shape_cast %36 : vector<1x128x32xf32> to vector<128x32xf32>
    %cst_24 = arith.constant dense<0.000000e+00> : vector<8x32xf32>
    %38 = tpu.matmul %25, %37, %cst_24 {dimension_numbers = #tpu.dot_dimension_numbers<[1], [0], [0], [1], [0, 0, 1, 1], [], []>} : vector<8x128xf32>, vector<128x32xf32>, vector<8x32xf32> -> vector<8x32xf32>
    %c4_25 = arith.constant 4 : index
    %c0_26 = arith.constant 0 : index
    %c0_27 = arith.constant 0 : index
    %39 = vector.load %arg6[%c4_25, %c0_26, %c0_27] : memref<12x1x32xf32, #tpu.memory_space<vmem>>, vector<1x1x32xf32>
    %40 = vector.shape_cast %39 : vector<1x1x32xf32> to vector<1x32xf32>
    %41 = vector.broadcast %40 : vector<1x32xf32> to vector<8x32xf32>
    %42 = arith.addf %38, %41 : vector<8x32xf32>
    %c8 = arith.constant 8 : index
    %c0_28 = arith.constant 0 : index
    %c0_29 = arith.constant 0 : index
    %43 = vector.load %arg5[%c8, %c0_28, %c0_29] : memref<12x128x32xf32, #tpu.memory_space<vmem>>, vector<1x128x32xf32>
    %44 = vector.shape_cast %43 : vector<1x128x32xf32> to vector<128x32xf32>
    %cst_30 = arith.constant dense<0.000000e+00> : vector<8x32xf32>
    %45 = tpu.matmul %25, %44, %cst_30 {dimension_numbers = #tpu.dot_dimension_numbers<[1], [0], [0], [1], [0, 0, 1, 1], [], []>} : vector<8x128xf32>, vector<128x32xf32>, vector<8x32xf32> -> vector<8x32xf32>
    %c8_31 = arith.constant 8 : index
    %c0_32 = arith.constant 0 : index
    %c0_33 = arith.constant 0 : index
    %46 = vector.load %arg6[%c8_31, %c0_32, %c0_33] : memref<12x1x32xf32, #tpu.memory_space<vmem>>, vector<1x1x32xf32>
    %47 = vector.shape_cast %46 : vector<1x1x32xf32> to vector<1x32xf32>
    %48 = vector.broadcast %47 : vector<1x32xf32> to vector<8x32xf32>
    %49 = arith.addf %45, %48 : vector<8x32xf32>
    %cst_34 = arith.constant dense<0.000000e+00> : vector<8x8xf32>
    %50 = tpu.matmul %35, %42, %cst_34 {dimension_numbers = #tpu.dot_dimension_numbers<[1], [1], [0], [0], [0, 0, 1, 0], [], []>} : vector<8x32xf32>, vector<8x32xf32>, vector<8x8xf32> -> vector<8x8xf32>
    %51 = vector.broadcast %3 : vector<1x8xf32> to vector<8x8xf32>
    %52 = arith.addf %50, %51 : vector<8x8xf32>
    %cst_35 = arith.constant dense<0xFF800000> : vector<8xf32>
    %53 = vector.multi_reduction <maximumf>, %52, %cst_35 [1] : vector<8x8xf32> to vector<8xf32>
    %54 = vector.shape_cast %53 : vector<8xf32> to vector<8x1xf32>
    %55 = vector.broadcast %54 : vector<8x1xf32> to vector<8x8xf32>
    %56 = arith.subf %52, %55 : vector<8x8xf32>
    %57 = math.exp %56 : vector<8x8xf32>
    %cst_36 = arith.constant dense<0.000000e+00> : vector<8xf32>
    %58 = vector.multi_reduction <add>, %57, %cst_36 [1] : vector<8x8xf32> to vector<8xf32>
    %59 = vector.shape_cast %58 : vector<8xf32> to vector<8x1xf32>
    %60 = tpu.reciprocal %59 {approx = true} : vector<8x1xf32> -> vector<8x1xf32>
    %61 = vector.broadcast %60 : vector<8x1xf32> to vector<8x8xf32>
    %62 = arith.mulf %57, %61 : vector<8x8xf32>
    %cst_37 = arith.constant dense<0.000000e+00> : vector<8x32xf32>
    %63 = tpu.matmul %62, %49, %cst_37 {dimension_numbers = #tpu.dot_dimension_numbers<[1], [0], [0], [1], [0, 0, 1, 1], [], []>} : vector<8x8xf32>, vector<8x32xf32>, vector<8x32xf32> -> vector<8x32xf32>
    %c0_38 = arith.constant 0 : index
    %c0_39 = arith.constant 0 : index
    %c0_40 = arith.constant 0 : index
    %64 = vector.load %arg7[%c0_38, %c0_39, %c0_40] : memref<4x32x128xf32, #tpu.memory_space<vmem>>, vector<1x32x128xf32>
    %65 = vector.shape_cast %64 : vector<1x32x128xf32> to vector<32x128xf32>
    %cst_41 = arith.constant dense<0.000000e+00> : vector<8x128xf32>
    %66 = tpu.matmul %63, %65, %cst_41 {dimension_numbers = #tpu.dot_dimension_numbers<[1], [0], [0], [1], [0, 0, 1, 1], [], []>} : vector<8x32xf32>, vector<32x128xf32>, vector<8x128xf32> -> vector<8x128xf32>
    %67 = arith.addf %26, %66 : vector<8x128xf32>
    %c1 = arith.constant 1 : index
    %c0_42 = arith.constant 0 : index
    %c0_43 = arith.constant 0 : index
    %68 = vector.load %arg5[%c1, %c0_42, %c0_43] : memref<12x128x32xf32, #tpu.memory_space<vmem>>, vector<1x128x32xf32>
    %69 = vector.shape_cast %68 : vector<1x128x32xf32> to vector<128x32xf32>
    %cst_44 = arith.constant dense<0.000000e+00> : vector<8x32xf32>
    %70 = tpu.matmul %25, %69, %cst_44 {dimension_numbers = #tpu.dot_dimension_numbers<[1], [0], [0], [1], [0, 0, 1, 1], [], []>} : vector<8x128xf32>, vector<128x32xf32>, vector<8x32xf32> -> vector<8x32xf32>
    %c1_45 = arith.constant 1 : index
    %c0_46 = arith.constant 0 : index
    %c0_47 = arith.constant 0 : index
    %71 = vector.load %arg6[%c1_45, %c0_46, %c0_47] : memref<12x1x32xf32, #tpu.memory_space<vmem>>, vector<1x1x32xf32>
    %72 = vector.shape_cast %71 : vector<1x1x32xf32> to vector<1x32xf32>
    %73 = vector.broadcast %72 : vector<1x32xf32> to vector<8x32xf32>
    %74 = arith.addf %70, %73 : vector<8x32xf32>
    %cst_48 = arith.constant 0.176776692 : f32
    %75 = vector.broadcast %cst_48 : f32 to vector<8x32xf32>
    %76 = arith.mulf %74, %75 : vector<8x32xf32>
    %c5 = arith.constant 5 : index
    %c0_49 = arith.constant 0 : index
    %c0_50 = arith.constant 0 : index
    %77 = vector.load %arg5[%c5, %c0_49, %c0_50] : memref<12x128x32xf32, #tpu.memory_space<vmem>>, vector<1x128x32xf32>
    %78 = vector.shape_cast %77 : vector<1x128x32xf32> to vector<128x32xf32>
    %cst_51 = arith.constant dense<0.000000e+00> : vector<8x32xf32>
    %79 = tpu.matmul %25, %78, %cst_51 {dimension_numbers = #tpu.dot_dimension_numbers<[1], [0], [0], [1], [0, 0, 1, 1], [], []>} : vector<8x128xf32>, vector<128x32xf32>, vector<8x32xf32> -> vector<8x32xf32>
    %c5_52 = arith.constant 5 : index
    %c0_53 = arith.constant 0 : index
    %c0_54 = arith.constant 0 : index
    %80 = vector.load %arg6[%c5_52, %c0_53, %c0_54] : memref<12x1x32xf32, #tpu.memory_space<vmem>>, vector<1x1x32xf32>
    %81 = vector.shape_cast %80 : vector<1x1x32xf32> to vector<1x32xf32>
    %82 = vector.broadcast %81 : vector<1x32xf32> to vector<8x32xf32>
    %83 = arith.addf %79, %82 : vector<8x32xf32>
    %c9 = arith.constant 9 : index
    %c0_55 = arith.constant 0 : index
    %c0_56 = arith.constant 0 : index
    %84 = vector.load %arg5[%c9, %c0_55, %c0_56] : memref<12x128x32xf32, #tpu.memory_space<vmem>>, vector<1x128x32xf32>
    %85 = vector.shape_cast %84 : vector<1x128x32xf32> to vector<128x32xf32>
    %cst_57 = arith.constant dense<0.000000e+00> : vector<8x32xf32>
    %86 = tpu.matmul %25, %85, %cst_57 {dimension_numbers = #tpu.dot_dimension_numbers<[1], [0], [0], [1], [0, 0, 1, 1], [], []>} : vector<8x128xf32>, vector<128x32xf32>, vector<8x32xf32> -> vector<8x32xf32>
    %c9_58 = arith.constant 9 : index
    %c0_59 = arith.constant 0 : index
    %c0_60 = arith.constant 0 : index
    %87 = vector.load %arg6[%c9_58, %c0_59, %c0_60] : memref<12x1x32xf32, #tpu.memory_space<vmem>>, vector<1x1x32xf32>
    %88 = vector.shape_cast %87 : vector<1x1x32xf32> to vector<1x32xf32>
    %89 = vector.broadcast %88 : vector<1x32xf32> to vector<8x32xf32>
    %90 = arith.addf %86, %89 : vector<8x32xf32>
    %cst_61 = arith.constant dense<0.000000e+00> : vector<8x8xf32>
    %91 = tpu.matmul %76, %83, %cst_61 {dimension_numbers = #tpu.dot_dimension_numbers<[1], [1], [0], [0], [0, 0, 1, 0], [], []>} : vector<8x32xf32>, vector<8x32xf32>, vector<8x8xf32> -> vector<8x8xf32>
    %92 = vector.broadcast %3 : vector<1x8xf32> to vector<8x8xf32>
    %93 = arith.addf %91, %92 : vector<8x8xf32>
    %cst_62 = arith.constant dense<0xFF800000> : vector<8xf32>
    %94 = vector.multi_reduction <maximumf>, %93, %cst_62 [1] : vector<8x8xf32> to vector<8xf32>
    %95 = vector.shape_cast %94 : vector<8xf32> to vector<8x1xf32>
    %96 = vector.broadcast %95 : vector<8x1xf32> to vector<8x8xf32>
    %97 = arith.subf %93, %96 : vector<8x8xf32>
    %98 = math.exp %97 : vector<8x8xf32>
    %cst_63 = arith.constant dense<0.000000e+00> : vector<8xf32>
    %99 = vector.multi_reduction <add>, %98, %cst_63 [1] : vector<8x8xf32> to vector<8xf32>
    %100 = vector.shape_cast %99 : vector<8xf32> to vector<8x1xf32>
    %101 = tpu.reciprocal %100 {approx = true} : vector<8x1xf32> -> vector<8x1xf32>
    %102 = vector.broadcast %101 : vector<8x1xf32> to vector<8x8xf32>
    %103 = arith.mulf %98, %102 : vector<8x8xf32>
    %cst_64 = arith.constant dense<0.000000e+00> : vector<8x32xf32>
    %104 = tpu.matmul %103, %90, %cst_64 {dimension_numbers = #tpu.dot_dimension_numbers<[1], [0], [0], [1], [0, 0, 1, 1], [], []>} : vector<8x8xf32>, vector<8x32xf32>, vector<8x32xf32> -> vector<8x32xf32>
    %c1_65 = arith.constant 1 : index
    %c0_66 = arith.constant 0 : index
    %c0_67 = arith.constant 0 : index
    %105 = vector.load %arg7[%c1_65, %c0_66, %c0_67] : memref<4x32x128xf32, #tpu.memory_space<vmem>>, vector<1x32x128xf32>
    %106 = vector.shape_cast %105 : vector<1x32x128xf32> to vector<32x128xf32>
    %cst_68 = arith.constant dense<0.000000e+00> : vector<8x128xf32>
    %107 = tpu.matmul %104, %106, %cst_68 {dimension_numbers = #tpu.dot_dimension_numbers<[1], [0], [0], [1], [0, 0, 1, 1], [], []>} : vector<8x32xf32>, vector<32x128xf32>, vector<8x128xf32> -> vector<8x128xf32>
    %108 = arith.addf %67, %107 : vector<8x128xf32>
    %c2 = arith.constant 2 : index
    %c0_69 = arith.constant 0 : index
    %c0_70 = arith.constant 0 : index
    %109 = vector.load %arg5[%c2, %c0_69, %c0_70] : memref<12x128x32xf32, #tpu.memory_space<vmem>>, vector<1x128x32xf32>
    %110 = vector.shape_cast %109 : vector<1x128x32xf32> to vector<128x32xf32>
    %cst_71 = arith.constant dense<0.000000e+00> : vector<8x32xf32>
    %111 = tpu.matmul %25, %110, %cst_71 {dimension_numbers = #tpu.dot_dimension_numbers<[1], [0], [0], [1], [0, 0, 1, 1], [], []>} : vector<8x128xf32>, vector<128x32xf32>, vector<8x32xf32> -> vector<8x32xf32>
    %c2_72 = arith.constant 2 : index
    %c0_73 = arith.constant 0 : index
    %c0_74 = arith.constant 0 : index
    %112 = vector.load %arg6[%c2_72, %c0_73, %c0_74] : memref<12x1x32xf32, #tpu.memory_space<vmem>>, vector<1x1x32xf32>
    %113 = vector.shape_cast %112 : vector<1x1x32xf32> to vector<1x32xf32>
    %114 = vector.broadcast %113 : vector<1x32xf32> to vector<8x32xf32>
    %115 = arith.addf %111, %114 : vector<8x32xf32>
    %cst_75 = arith.constant 0.176776692 : f32
    %116 = vector.broadcast %cst_75 : f32 to vector<8x32xf32>
    %117 = arith.mulf %115, %116 : vector<8x32xf32>
    %c6 = arith.constant 6 : index
    %c0_76 = arith.constant 0 : index
    %c0_77 = arith.constant 0 : index
    %118 = vector.load %arg5[%c6, %c0_76, %c0_77] : memref<12x128x32xf32, #tpu.memory_space<vmem>>, vector<1x128x32xf32>
    %119 = vector.shape_cast %118 : vector<1x128x32xf32> to vector<128x32xf32>
    %cst_78 = arith.constant dense<0.000000e+00> : vector<8x32xf32>
    %120 = tpu.matmul %25, %119, %cst_78 {dimension_numbers = #tpu.dot_dimension_numbers<[1], [0], [0], [1], [0, 0, 1, 1], [], []>} : vector<8x128xf32>, vector<128x32xf32>, vector<8x32xf32> -> vector<8x32xf32>
    %c6_79 = arith.constant 6 : index
    %c0_80 = arith.constant 0 : index
    %c0_81 = arith.constant 0 : index
    %121 = vector.load %arg6[%c6_79, %c0_80, %c0_81] : memref<12x1x32xf32, #tpu.memory_space<vmem>>, vector<1x1x32xf32>
    %122 = vector.shape_cast %121 : vector<1x1x32xf32> to vector<1x32xf32>
    %123 = vector.broadcast %122 : vector<1x32xf32> to vector<8x32xf32>
    %124 = arith.addf %120, %123 : vector<8x32xf32>
    %c10 = arith.constant 10 : index
    %c0_82 = arith.constant 0 : index
    %c0_83 = arith.constant 0 : index
    %125 = vector.load %arg5[%c10, %c0_82, %c0_83] : memref<12x128x32xf32, #tpu.memory_space<vmem>>, vector<1x128x32xf32>
    %126 = vector.shape_cast %125 : vector<1x128x32xf32> to vector<128x32xf32>
    %cst_84 = arith.constant dense<0.000000e+00> : vector<8x32xf32>
    %127 = tpu.matmul %25, %126, %cst_84 {dimension_numbers = #tpu.dot_dimension_numbers<[1], [0], [0], [1], [0, 0, 1, 1], [], []>} : vector<8x128xf32>, vector<128x32xf32>, vector<8x32xf32> -> vector<8x32xf32>
    %c10_85 = arith.constant 10 : index
    %c0_86 = arith.constant 0 : index
    %c0_87 = arith.constant 0 : index
    %128 = vector.load %arg6[%c10_85, %c0_86, %c0_87] : memref<12x1x32xf32, #tpu.memory_space<vmem>>, vector<1x1x32xf32>
    %129 = vector.shape_cast %128 : vector<1x1x32xf32> to vector<1x32xf32>
    %130 = vector.broadcast %129 : vector<1x32xf32> to vector<8x32xf32>
    %131 = arith.addf %127, %130 : vector<8x32xf32>
    %cst_88 = arith.constant dense<0.000000e+00> : vector<8x8xf32>
    %132 = tpu.matmul %117, %124, %cst_88 {dimension_numbers = #tpu.dot_dimension_numbers<[1], [1], [0], [0], [0, 0, 1, 0], [], []>} : vector<8x32xf32>, vector<8x32xf32>, vector<8x8xf32> -> vector<8x8xf32>
    %133 = vector.broadcast %3 : vector<1x8xf32> to vector<8x8xf32>
    %134 = arith.addf %132, %133 : vector<8x8xf32>
    %cst_89 = arith.constant dense<0xFF800000> : vector<8xf32>
    %135 = vector.multi_reduction <maximumf>, %134, %cst_89 [1] : vector<8x8xf32> to vector<8xf32>
    %136 = vector.shape_cast %135 : vector<8xf32> to vector<8x1xf32>
    %137 = vector.broadcast %136 : vector<8x1xf32> to vector<8x8xf32>
    %138 = arith.subf %134, %137 : vector<8x8xf32>
    %139 = math.exp %138 : vector<8x8xf32>
    %cst_90 = arith.constant dense<0.000000e+00> : vector<8xf32>
    %140 = vector.multi_reduction <add>, %139, %cst_90 [1] : vector<8x8xf32> to vector<8xf32>
    %141 = vector.shape_cast %140 : vector<8xf32> to vector<8x1xf32>
    %142 = tpu.reciprocal %141 {approx = true} : vector<8x1xf32> -> vector<8x1xf32>
    %143 = vector.broadcast %142 : vector<8x1xf32> to vector<8x8xf32>
    %144 = arith.mulf %139, %143 : vector<8x8xf32>
    %cst_91 = arith.constant dense<0.000000e+00> : vector<8x32xf32>
    %145 = tpu.matmul %144, %131, %cst_91 {dimension_numbers = #tpu.dot_dimension_numbers<[1], [0], [0], [1], [0, 0, 1, 1], [], []>} : vector<8x8xf32>, vector<8x32xf32>, vector<8x32xf32> -> vector<8x32xf32>
    %c2_92 = arith.constant 2 : index
    %c0_93 = arith.constant 0 : index
    %c0_94 = arith.constant 0 : index
    %146 = vector.load %arg7[%c2_92, %c0_93, %c0_94] : memref<4x32x128xf32, #tpu.memory_space<vmem>>, vector<1x32x128xf32>
    %147 = vector.shape_cast %146 : vector<1x32x128xf32> to vector<32x128xf32>
    %cst_95 = arith.constant dense<0.000000e+00> : vector<8x128xf32>
    %148 = tpu.matmul %145, %147, %cst_95 {dimension_numbers = #tpu.dot_dimension_numbers<[1], [0], [0], [1], [0, 0, 1, 1], [], []>} : vector<8x32xf32>, vector<32x128xf32>, vector<8x128xf32> -> vector<8x128xf32>
    %149 = arith.addf %108, %148 : vector<8x128xf32>
    %c3 = arith.constant 3 : index
    %c0_96 = arith.constant 0 : index
    %c0_97 = arith.constant 0 : index
    %150 = vector.load %arg5[%c3, %c0_96, %c0_97] : memref<12x128x32xf32, #tpu.memory_space<vmem>>, vector<1x128x32xf32>
    %151 = vector.shape_cast %150 : vector<1x128x32xf32> to vector<128x32xf32>
    %cst_98 = arith.constant dense<0.000000e+00> : vector<8x32xf32>
    %152 = tpu.matmul %25, %151, %cst_98 {dimension_numbers = #tpu.dot_dimension_numbers<[1], [0], [0], [1], [0, 0, 1, 1], [], []>} : vector<8x128xf32>, vector<128x32xf32>, vector<8x32xf32> -> vector<8x32xf32>
    %c3_99 = arith.constant 3 : index
    %c0_100 = arith.constant 0 : index
    %c0_101 = arith.constant 0 : index
    %153 = vector.load %arg6[%c3_99, %c0_100, %c0_101] : memref<12x1x32xf32, #tpu.memory_space<vmem>>, vector<1x1x32xf32>
    %154 = vector.shape_cast %153 : vector<1x1x32xf32> to vector<1x32xf32>
    %155 = vector.broadcast %154 : vector<1x32xf32> to vector<8x32xf32>
    %156 = arith.addf %152, %155 : vector<8x32xf32>
    %cst_102 = arith.constant 0.176776692 : f32
    %157 = vector.broadcast %cst_102 : f32 to vector<8x32xf32>
    %158 = arith.mulf %156, %157 : vector<8x32xf32>
    %c7 = arith.constant 7 : index
    %c0_103 = arith.constant 0 : index
    %c0_104 = arith.constant 0 : index
    %159 = vector.load %arg5[%c7, %c0_103, %c0_104] : memref<12x128x32xf32, #tpu.memory_space<vmem>>, vector<1x128x32xf32>
    %160 = vector.shape_cast %159 : vector<1x128x32xf32> to vector<128x32xf32>
    %cst_105 = arith.constant dense<0.000000e+00> : vector<8x32xf32>
    %161 = tpu.matmul %25, %160, %cst_105 {dimension_numbers = #tpu.dot_dimension_numbers<[1], [0], [0], [1], [0, 0, 1, 1], [], []>} : vector<8x128xf32>, vector<128x32xf32>, vector<8x32xf32> -> vector<8x32xf32>
    %c7_106 = arith.constant 7 : index
    %c0_107 = arith.constant 0 : index
    %c0_108 = arith.constant 0 : index
    %162 = vector.load %arg6[%c7_106, %c0_107, %c0_108] : memref<12x1x32xf32, #tpu.memory_space<vmem>>, vector<1x1x32xf32>
    %163 = vector.shape_cast %162 : vector<1x1x32xf32> to vector<1x32xf32>
    %164 = vector.broadcast %163 : vector<1x32xf32> to vector<8x32xf32>
    %165 = arith.addf %161, %164 : vector<8x32xf32>
    %c11 = arith.constant 11 : index
    %c0_109 = arith.constant 0 : index
    %c0_110 = arith.constant 0 : index
    %166 = vector.load %arg5[%c11, %c0_109, %c0_110] : memref<12x128x32xf32, #tpu.memory_space<vmem>>, vector<1x128x32xf32>
    %167 = vector.shape_cast %166 : vector<1x128x32xf32> to vector<128x32xf32>
    %cst_111 = arith.constant dense<0.000000e+00> : vector<8x32xf32>
    %168 = tpu.matmul %25, %167, %cst_111 {dimension_numbers = #tpu.dot_dimension_numbers<[1], [0], [0], [1], [0, 0, 1, 1], [], []>} : vector<8x128xf32>, vector<128x32xf32>, vector<8x32xf32> -> vector<8x32xf32>
    %c11_112 = arith.constant 11 : index
    %c0_113 = arith.constant 0 : index
    %c0_114 = arith.constant 0 : index
    %169 = vector.load %arg6[%c11_112, %c0_113, %c0_114] : memref<12x1x32xf32, #tpu.memory_space<vmem>>, vector<1x1x32xf32>
    %170 = vector.shape_cast %169 : vector<1x1x32xf32> to vector<1x32xf32>
    %171 = vector.broadcast %170 : vector<1x32xf32> to vector<8x32xf32>
    %172 = arith.addf %168, %171 : vector<8x32xf32>
    %cst_115 = arith.constant dense<0.000000e+00> : vector<8x8xf32>
    %173 = tpu.matmul %158, %165, %cst_115 {dimension_numbers = #tpu.dot_dimension_numbers<[1], [1], [0], [0], [0, 0, 1, 0], [], []>} : vector<8x32xf32>, vector<8x32xf32>, vector<8x8xf32> -> vector<8x8xf32>
    %174 = vector.broadcast %3 : vector<1x8xf32> to vector<8x8xf32>
    %175 = arith.addf %173, %174 : vector<8x8xf32>
    %cst_116 = arith.constant dense<0xFF800000> : vector<8xf32>
    %176 = vector.multi_reduction <maximumf>, %175, %cst_116 [1] : vector<8x8xf32> to vector<8xf32>
    %177 = vector.shape_cast %176 : vector<8xf32> to vector<8x1xf32>
    %178 = vector.broadcast %177 : vector<8x1xf32> to vector<8x8xf32>
    %179 = arith.subf %175, %178 : vector<8x8xf32>
    %180 = math.exp %179 : vector<8x8xf32>
    %cst_117 = arith.constant dense<0.000000e+00> : vector<8xf32>
    %181 = vector.multi_reduction <add>, %180, %cst_117 [1] : vector<8x8xf32> to vector<8xf32>
    %182 = vector.shape_cast %181 : vector<8xf32> to vector<8x1xf32>
    %183 = tpu.reciprocal %182 {approx = true} : vector<8x1xf32> -> vector<8x1xf32>
    %184 = vector.broadcast %183 : vector<8x1xf32> to vector<8x8xf32>
    %185 = arith.mulf %180, %184 : vector<8x8xf32>
    %cst_118 = arith.constant dense<0.000000e+00> : vector<8x32xf32>
    %186 = tpu.matmul %185, %172, %cst_118 {dimension_numbers = #tpu.dot_dimension_numbers<[1], [0], [0], [1], [0, 0, 1, 1], [], []>} : vector<8x8xf32>, vector<8x32xf32>, vector<8x32xf32> -> vector<8x32xf32>
    %c3_119 = arith.constant 3 : index
    %c0_120 = arith.constant 0 : index
    %c0_121 = arith.constant 0 : index
    %187 = vector.load %arg7[%c3_119, %c0_120, %c0_121] : memref<4x32x128xf32, #tpu.memory_space<vmem>>, vector<1x32x128xf32>
    %188 = vector.shape_cast %187 : vector<1x32x128xf32> to vector<32x128xf32>
    %cst_122 = arith.constant dense<0.000000e+00> : vector<8x128xf32>
    %189 = tpu.matmul %186, %188, %cst_122 {dimension_numbers = #tpu.dot_dimension_numbers<[1], [0], [0], [1], [0, 0, 1, 1], [], []>} : vector<8x32xf32>, vector<32x128xf32>, vector<8x128xf32> -> vector<8x128xf32>
    %190 = arith.addf %149, %189 : vector<8x128xf32>
    %c0_123 = arith.constant 0 : index
    %c0_124 = arith.constant 0 : index
    %191 = vector.load %arg8[%c0_123, %c0_124] : memref<1x128xf32, #tpu.memory_space<vmem>>, vector<1x128xf32>
    %192 = vector.broadcast %191 : vector<1x128xf32> to vector<8x128xf32>
    %193 = arith.addf %190, %192 : vector<8x128xf32>
    %194 = arith.addf %1, %193 : vector<8x128xf32>
    %c0_125 = arith.constant 0 : index
    %c0_126 = arith.constant 0 : index
    %195 = vector.load %arg9[%c0_125, %c0_126] : memref<1x128xf32, #tpu.memory_space<vmem>>, vector<1x128xf32>
    %c0_127 = arith.constant 0 : index
    %c0_128 = arith.constant 0 : index
    %196 = vector.load %arg10[%c0_127, %c0_128] : memref<1x128xf32, #tpu.memory_space<vmem>>, vector<1x128xf32>
    %c0_129 = arith.constant 0 : index
    %c0_130 = arith.constant 0 : index
    %197 = vector.load %arg11[%c0_129, %c0_130] : memref<128x256xf32, #tpu.memory_space<vmem>>, vector<128x256xf32>
    %c0_131 = arith.constant 0 : index
    %c0_132 = arith.constant 0 : index
    %198 = vector.load %arg12[%c0_131, %c0_132] : memref<1x256xf32, #tpu.memory_space<vmem>>, vector<1x256xf32>
    %c0_133 = arith.constant 0 : index
    %c0_134 = arith.constant 0 : index
    %199 = vector.load %arg13[%c0_133, %c0_134] : memref<256x128xf32, #tpu.memory_space<vmem>>, vector<256x128xf32>
    %c0_135 = arith.constant 0 : index
    %c0_136 = arith.constant 0 : index
    %200 = vector.load %arg14[%c0_135, %c0_136] : memref<1x128xf32, #tpu.memory_space<vmem>>, vector<1x128xf32>
    %cst_137 = arith.constant dense<0.000000e+00> : vector<8xf32>
    %201 = vector.multi_reduction <add>, %194, %cst_137 [1] : vector<8x128xf32> to vector<8xf32>
    %202 = vector.shape_cast %201 : vector<8xf32> to vector<8x1xf32>
    %cst_138 = arith.constant 1.280000e+02 : f32
    %203 = vector.broadcast %cst_138 : f32 to vector<8x1xf32>
    %204 = arith.divf %202, %203 : vector<8x1xf32>
    %205 = vector.broadcast %204 : vector<8x1xf32> to vector<8x128xf32>
    %206 = arith.subf %194, %205 : vector<8x128xf32>
    %207 = arith.mulf %206, %206 : vector<8x128xf32>
    %cst_139 = arith.constant dense<0.000000e+00> : vector<8xf32>
    %208 = vector.multi_reduction <add>, %207, %cst_139 [1] : vector<8x128xf32> to vector<8xf32>
    %209 = vector.shape_cast %208 : vector<8xf32> to vector<8x1xf32>
    %cst_140 = arith.constant 1.280000e+02 : f32
    %210 = vector.broadcast %cst_140 : f32 to vector<8x1xf32>
    %211 = arith.divf %209, %210 : vector<8x1xf32>
    %cst_141 = arith.constant 9.99999974E-6 : f32
    %212 = vector.broadcast %cst_141 : f32 to vector<8x1xf32>
    %213 = arith.addf %211, %212 : vector<8x1xf32>
    %214 = math.rsqrt %213 : vector<8x1xf32>
    %215 = vector.broadcast %214 : vector<8x1xf32> to vector<8x128xf32>
    %216 = arith.mulf %206, %215 : vector<8x128xf32>
    %217 = vector.broadcast %195 : vector<1x128xf32> to vector<8x128xf32>
    %218 = arith.mulf %216, %217 : vector<8x128xf32>
    %219 = vector.broadcast %196 : vector<1x128xf32> to vector<8x128xf32>
    %220 = arith.addf %218, %219 : vector<8x128xf32>
    %cst_142 = arith.constant dense<0.000000e+00> : vector<8x256xf32>
    %221 = tpu.matmul %220, %197, %cst_142 {dimension_numbers = #tpu.dot_dimension_numbers<[1], [0], [0], [1], [0, 0, 1, 1], [], []>} : vector<8x128xf32>, vector<128x256xf32>, vector<8x256xf32> -> vector<8x256xf32>
    %222 = vector.broadcast %198 : vector<1x256xf32> to vector<8x256xf32>
    %223 = arith.addf %221, %222 : vector<8x256xf32>
    %cst_143 = arith.constant 5.000000e-01 : f32
    %224 = vector.broadcast %cst_143 : f32 to vector<8x256xf32>
    %225 = arith.mulf %224, %223 : vector<8x256xf32>
    %cst_144 = arith.constant 4.471500e-02 : f32
    %226 = vector.broadcast %cst_144 : f32 to vector<8x256xf32>
    %227 = arith.mulf %226, %223 : vector<8x256xf32>
    %228 = arith.mulf %227, %223 : vector<8x256xf32>
    %229 = arith.mulf %228, %223 : vector<8x256xf32>
    %230 = arith.addf %223, %229 : vector<8x256xf32>
    %cst_145 = arith.constant 0.797884583 : f32
    %231 = vector.broadcast %cst_145 : f32 to vector<8x256xf32>
    %232 = arith.mulf %231, %230 : vector<8x256xf32>
    %233 = math.tanh %232 : vector<8x256xf32>
    %cst_146 = arith.constant 1.000000e+00 : f32
    %234 = vector.broadcast %cst_146 : f32 to vector<8x256xf32>
    %235 = arith.addf %234, %233 : vector<8x256xf32>
    %236 = arith.mulf %225, %235 : vector<8x256xf32>
    %cst_147 = arith.constant dense<0.000000e+00> : vector<8x128xf32>
    %237 = tpu.matmul %236, %199, %cst_147 {dimension_numbers = #tpu.dot_dimension_numbers<[1], [0], [0], [1], [0, 0, 1, 1], [], []>} : vector<8x256xf32>, vector<256x128xf32>, vector<8x128xf32> -> vector<8x128xf32>
    %238 = arith.addf %194, %237 : vector<8x128xf32>
    %239 = vector.broadcast %200 : vector<1x128xf32> to vector<8x128xf32>
    %240 = arith.addf %238, %239 : vector<8x128xf32>
    %c0_148 = arith.constant 0 : index
    %c0_149 = arith.constant 0 : index
    %241 = vector.load %arg15[%c0_148, %c0_149] : memref<1x128xf32, #tpu.memory_space<vmem>>, vector<1x128xf32>
    %c0_150 = arith.constant 0 : index
    %c0_151 = arith.constant 0 : index
    %242 = vector.load %arg16[%c0_150, %c0_151] : memref<1x128xf32, #tpu.memory_space<vmem>>, vector<1x128xf32>
    %cst_152 = arith.constant dense<0.000000e+00> : vector<8xf32>
    %243 = vector.multi_reduction <add>, %240, %cst_152 [1] : vector<8x128xf32> to vector<8xf32>
    %244 = vector.shape_cast %243 : vector<8xf32> to vector<8x1xf32>
    %cst_153 = arith.constant 1.280000e+02 : f32
    %245 = vector.broadcast %cst_153 : f32 to vector<8x1xf32>
    %246 = arith.divf %244, %245 : vector<8x1xf32>
    %247 = vector.broadcast %246 : vector<8x1xf32> to vector<8x128xf32>
    %248 = arith.subf %240, %247 : vector<8x128xf32>
    %249 = arith.mulf %248, %248 : vector<8x128xf32>
    %cst_154 = arith.constant dense<0.000000e+00> : vector<8xf32>
    %250 = vector.multi_reduction <add>, %249, %cst_154 [1] : vector<8x128xf32> to vector<8xf32>
    %251 = vector.shape_cast %250 : vector<8xf32> to vector<8x1xf32>
    %cst_155 = arith.constant 1.280000e+02 : f32
    %252 = vector.broadcast %cst_155 : f32 to vector<8x1xf32>
    %253 = arith.divf %251, %252 : vector<8x1xf32>
    %cst_156 = arith.constant 9.99999974E-6 : f32
    %254 = vector.broadcast %cst_156 : f32 to vector<8x1xf32>
    %255 = arith.addf %253, %254 : vector<8x1xf32>
    %256 = math.rsqrt %255 : vector<8x1xf32>
    %257 = vector.broadcast %256 : vector<8x1xf32> to vector<8x128xf32>
    %258 = arith.mulf %248, %257 : vector<8x128xf32>
    %259 = vector.broadcast %241 : vector<1x128xf32> to vector<8x128xf32>
    %260 = arith.mulf %258, %259 : vector<8x128xf32>
    %261 = vector.broadcast %242 : vector<1x128xf32> to vector<8x128xf32>
    %262 = arith.addf %260, %261 : vector<8x128xf32>
    %c0_157 = arith.constant 0 : index
    %c0_158 = arith.constant 0 : index
    %c0_159 = arith.constant 0 : index
    %263 = vector.load %arg17[%c0_157, %c0_158, %c0_159] : memref<1x8x128xf32, #tpu.memory_space<vmem>>, vector<1x8x128xf32>
    %264 = vector.shape_cast %263 : vector<1x8x128xf32> to vector<8x128xf32>
    %265 = vector.shape_cast %262 : vector<8x128xf32> to vector<1x8x128xf32>
    tpu.vector_store %arg17[%c0_157, %c0_158, %c0_159], %265 {strides = array<i32>} : memref<1x8x128xf32, #tpu.memory_space<vmem>>, vector<1x8x128xf32>,
    return
  }
  func.func @transform_0(%arg0: i32) -> (i32, i32, i32) {
    %c0_i32 = arith.constant 0 : i32
    %c0_i32_0 = arith.constant 0 : i32
    %c0_i32_1 = arith.constant 0 : i32
    return %arg0, %c0_i32, %c0_i32_0 : i32, i32, i32
  }
  func.func @transform_1(%arg0: i32) -> (i32, i32, i32) {
    %c0_i32 = arith.constant 0 : i32
    %c0_i32_0 = arith.constant 0 : i32
    %c0_i32_1 = arith.constant 0 : i32
    return %arg0, %c0_i32, %c0_i32_0 : i32, i32, i32
  }
  func.func @transform_2(%arg0: i32) -> (i32, i32) {
    %c0_i32 = arith.constant 0 : i32
    %c0_i32_0 = arith.constant 0 : i32
    %c0_i32_1 = arith.constant 0 : i32
    return %c0_i32, %c0_i32_0 : i32, i32
  }
  func.func @transform_3(%arg0: i32) -> (i32, i32) {
    %c0_i32 = arith.constant 0 : i32
    %c0_i32_0 = arith.constant 0 : i32
    %c0_i32_1 = arith.constant 0 : i32
    return %c0_i32, %c0_i32_0 : i32, i32
  }
  func.func @transform_4(%arg0: i32) -> (i32, i32, i32) {
    %c0_i32 = arith.constant 0 : i32
    %c0_i32_0 = arith.constant 0 : i32
    %c0_i32_1 = arith.constant 0 : i32
    %c0_i32_2 = arith.constant 0 : i32
    return %c0_i32, %c0_i32_0, %c0_i32_1 : i32, i32, i32
  }
  func.func @transform_5(%arg0: i32) -> (i32, i32, i32) {
    %c0_i32 = arith.constant 0 : i32
    %c0_i32_0 = arith.constant 0 : i32
    %c0_i32_1 = arith.constant 0 : i32
    %c0_i32_2 = arith.constant 0 : i32
    return %c0_i32, %c0_i32_0, %c0_i32_1 : i32, i32, i32
  }
  func.func @transform_6(%arg0: i32) -> (i32, i32, i32) {
    %c0_i32 = arith.constant 0 : i32
    %c0_i32_0 = arith.constant 0 : i32
    %c0_i32_1 = arith.constant 0 : i32
    %c0_i32_2 = arith.constant 0 : i32
    return %c0_i32, %c0_i32_0, %c0_i32_1 : i32, i32, i32
  }
  func.func @transform_7(%arg0: i32) -> (i32, i32) {
    %c0_i32 = arith.constant 0 : i32
    %c0_i32_0 = arith.constant 0 : i32
    %c0_i32_1 = arith.constant 0 : i32
    return %c0_i32, %c0_i32_0 : i32, i32
  }
  func.func @transform_8(%arg0: i32) -> (i32, i32) {
    %c0_i32 = arith.constant 0 : i32
    %c0_i32_0 = arith.constant 0 : i32
    %c0_i32_1 = arith.constant 0 : i32
    return %c0_i32, %c0_i32_0 : i32, i32
  }
  func.func @transform_9(%arg0: i32) -> (i32, i32) {
    %c0_i32 = arith.constant 0 : i32
    %c0_i32_0 = arith.constant 0 : i32
    %c0_i32_1 = arith.constant 0 : i32
    return %c0_i32, %c0_i32_0 : i32, i32
  }
  func.func @transform_10(%arg0: i32) -> (i32, i32) {
    %c0_i32 = arith.constant 0 : i32
    %c0_i32_0 = arith.constant 0 : i32
    %c0_i32_1 = arith.constant 0 : i32
    return %c0_i32, %c0_i32_0 : i32, i32
  }
  func.func @transform_11(%arg0: i32) -> (i32, i32) {
    %c0_i32 = arith.constant 0 : i32
    %c0_i32_0 = arith.constant 0 : i32
    %c0_i32_1 = arith.constant 0 : i32
    return %c0_i32, %c0_i32_0 : i32, i32
  }
  func.func @transform_12(%arg0: i32) -> (i32, i32) {
    %c0_i32 = arith.constant 0 : i32
    %c0_i32_0 = arith.constant 0 : i32
    %c0_i32_1 = arith.constant 0 : i32
    return %c0_i32, %c0_i32_0 : i32, i32
  }
  func.func @transform_13(%arg0: i32) -> (i32, i32) {
    %c0_i32 = arith.constant 0 : i32
    %c0_i32_0 = arith.constant 0 : i32
    %c0_i32_1 = arith.constant 0 : i32
    return %c0_i32, %c0_i32_0 : i32, i32
  }
  func.func @transform_14(%arg0: i32) -> (i32, i32) {
    %c0_i32 = arith.constant 0 : i32
    %c0_i32_0 = arith.constant 0 : i32
    %c0_i32_1 = arith.constant 0 : i32
    return %c0_i32, %c0_i32_0 : i32, i32
  }
  func.func @transform_15(%arg0: i32) -> (i32, i32) {
    %c0_i32 = arith.constant 0 : i32
    %c0_i32_0 = arith.constant 0 : i32
    %c0_i32_1 = arith.constant 0 : i32
    return %c0_i32, %c0_i32_0 : i32, i32
  }
  func.func @transform_16(%arg0: i32) -> (i32, i32, i32) {
    %c0_i32 = arith.constant 0 : i32
    %c0_i32_0 = arith.constant 0 : i32
    %c0_i32_1 = arith.constant 0 : i32
    return %arg0, %c0_i32, %c0_i32_0 : i32, i32, i32
  }
}

</mosaic_0001>

<llo_original>
// kernel: cos.1
$region0: #{cos.1}
  #allocation0 [shape = 's32[1]{0}', space=sflag, size = 0x4, scoped, tag = 'scoped memory for cos.1']
  %s0 = inlined_call_operand.vmem [shape: f32[8,64], index: 0, kind: input, shape index: {}]
  %s1 = inlined_call_operand.vmem [shape: f32[8,64], index: 1, kind: output, shape index: {}]
  %v2 = vld [vmem:[%s0] sm:$0xff]
  %v3 = vand.u32 2147483647, %v2
  %vm4 = vcmp.le.f32.partialorder %v3, 0.7853982
  %vm5 = vcmp.lt.s32.totalorder %v2, 0
  %v6 = vand.u32 %v2, 2139095040
  %v7 = vshrl.u32 %v6, 23
  %v8 = vsub.s32 %v7, 127
  %v9 = vand.u32 2147483647, %v2
  %v10 = vand.u32 %v9, 8388607
  %v11 = vor.u32 %v10, 8388608
  %v12 = vsub.s32 0, %v11
  %v13 = vadd.s32 %v8, 1
  %vm14 = vcmp.gt.s32.totalorder %v13, 0
  %v15 = vsel %vm14, %v13, 0
  %v16 = vshrl.u32 %v15, 5
  %v17 = vand.u32 %v15, 31
  %v18 = vsub.s32 32, %v17
  %v19 = vshrl.u32 683565275, %v18
  %v20 = vshll.u32 683565275, %v17
  %v21 = vshrl.u32 2475754826, %v18
  %v22 = vor.u32 %v20, %v21
  %v23 = vshll.u32 2475754826, %v17
  %v24 = vshrl.u32 2131351028, %v18
  %v25 = vor.u32 %v23, %v24
  %v26 = vshll.u32 2131351028, %v17
  %v27 = vshrl.u32 2102212464, %v18
  %v28 = vor.u32 %v26, %v27
  %v29 = vshll.u32 2102212464, %v17
  %v30 = vshrl.u32 920167782, %v18
  %v31 = vor.u32 %v29, %v30
  %v32 = vshll.u32 920167782, %v17
  %v33 = vshrl.u32 1326507024, %v18
  %v34 = vor.u32 %v32, %v33
  %vm35 = vcmp.lt.s32.totalorder %v16, 1
  %vm36 = vcmp.lt.s32.totalorder %v16, 2
  %vm37 = vcmp.lt.s32.totalorder %v16, 3
  %vm38 = vcmp.lt.s32.totalorder %v16, 4
  %v39 = vsel %vm35, %v19, %v22
  %v40 = vsel %vm38, %v28, 2102212464
  %v41 = vsel %vm37, %v25, %v40
  %v42 = vsel %vm36, %v39, %v41
  %v43 = vsel %vm35, %v22, %v25
  %v44 = vsel %vm38, %v31, 920167782
  %v45 = vsel %vm37, %v28, %v44
  %v46 = vsel %vm36, %v43, %v45
  %v47 = vsel %vm35, %v25, %v28
  %v48 = vsel %vm38, %v34, 1326507024
  %v49 = vsel %vm37, %v31, %v48
  %v50 = vsel %vm36, %v47, %v49
  %v51 = vshll.u32 %v11, 8
  %v52 = vmul.u32.u64.compose %v51, %v50
  %v53 = vextract.low.u32 %v52
  %v54 = vextract.high.u32 %v52
  %v55 = vmul.u32.u64.compose %v51, %v46
  %v56 = vextract.low.u32 %v55
  %v57 = vextract.high.u32 %v55
  %v58 = vmul.u32 %v51, %v42
  %v59 = vadd.s32 %v54, %v56
  %vm60 = vc.u32 %v54, %v56
  %v61 = vadd.s32 %v57, 1
  %v62 = vsel %vm60, %v61, %v57
  %v63 = vadd.s32 %v58, %v62
  %v64 = vadd.s32 %v63, 536870912
  %v65 = vshrl.u32 %v64, 30
  %v66 = vshll.u32 %v65, 30
  %v67 = vsub.s32 %v63, %v66
  %vm68 = vcmp.lt.s32.totalorder %v67, 0
  %v69 = vsub.s32 0, %v67
  %v70 = vsel %vm68, %v69, %v67
  %v71 = vclz %v70
  %v72 = vsub.s32 %v71, 2
  %vm73 = vcmp.gt.s32.totalorder 0, %v72
  %v74 = vsel %vm73, 0, %v72
  %v75 = vsub.s32 32, %v74
  %v76 = vshll.u32 %v67, %v74
  %v77 = vshrl.u32 %v59, %v75
  %v78 = vor.u32 %v76, %v77
  %v79 = vsub.s32 4294967266, %v74
  %v80 = vadd.s32 %v79, 127
  %v81 = vshll.u32 %v80, 23
  %v82 = vor.u32 4788187, %v81
  %v83 = vand.u32 2147483647, %v82
  %v85 = vcvt.s32.f32 %v78
  %v86 = vmul.f32 %v85, %v83
  %v87 = vxor.u32 %v86, 2147483648
  %v88 = vsel %vm5, %v87, %v86
  %v89 = vsub.s32 4, %v65
  %v90 = vsel %vm5, %v89, %v65
  %v91 = vsel %vm4, %v2, %v88
  %v92 = vsel %vm4, 0, %v90
  %v93 = vcosq.f32.pop %v91
  %v94 = vsinq.f32.pop %v91
  %vm95 = vweird.f32 %v2
  %v96 = vand.u32 %v92, 3
  %vm97 = vcmp.lt.s32.totalorder %v96, 2
  %vm98 = vcmp.eq.s32.totalorder %v96, 0
  %v99 = vxor.u32 %v94, 2147483648
  %v100 = vsel %vm98, %v93, %v99
  %vm101 = vcmp.eq.s32.totalorder %v96, 2
  %v102 = vxor.u32 %v93, 2147483648
  %v103 = vsel %vm101, %v102, %v94
  %v104 = vsel %vm97, %v100, %v103
  %v105 = vsel %vm95, nan, %v104
  %106 = vst [vmem:[%s1] sm:$0xff] %v105

// kernel: sin.1
$region0: #{sin.1}
  #allocation0 [shape = 's32[1]{0}', space=sflag, size = 0x4, scoped, tag = 'scoped memory for sin.1']
  %s0 = inlined_call_operand.vmem [shape: f32[8,64], index: 0, kind: input, shape index: {}]
  %s1 = inlined_call_operand.vmem [shape: f32[8,64], index: 1, kind: output, shape index: {}]
  %v2 = vld [vmem:[%s0] sm:$0xff]
  %v3 = vand.u32 2147483647, %v2
  %vm4 = vcmp.le.f32.partialorder %v3, 0.7853982
  %vm5 = vcmp.lt.s32.totalorder %v2, 0
  %v6 = vand.u32 %v2, 2139095040
  %v7 = vshrl.u32 %v6, 23
  %v8 = vsub.s32 %v7, 127
  %v9 = vand.u32 2147483647, %v2
  %v10 = vand.u32 %v9, 8388607
  %v11 = vor.u32 %v10, 8388608
  %v12 = vsub.s32 0, %v11
  %v13 = vadd.s32 %v8, 1
  %vm14 = vcmp.gt.s32.totalorder %v13, 0
  %v15 = vsel %vm14, %v13, 0
  %v16 = vshrl.u32 %v15, 5
  %v17 = vand.u32 %v15, 31
  %v18 = vsub.s32 32, %v17
  %v19 = vshrl.u32 683565275, %v18
  %v20 = vshll.u32 683565275, %v17
  %v21 = vshrl.u32 2475754826, %v18
  %v22 = vor.u32 %v20, %v21
  %v23 = vshll.u32 2475754826, %v17
  %v24 = vshrl.u32 2131351028, %v18
  %v25 = vor.u32 %v23, %v24
  %v26 = vshll.u32 2131351028, %v17
  %v27 = vshrl.u32 2102212464, %v18
  %v28 = vor.u32 %v26, %v27
  %v29 = vshll.u32 2102212464, %v17
  %v30 = vshrl.u32 920167782, %v18
  %v31 = vor.u32 %v29, %v30
  %v32 = vshll.u32 920167782, %v17
  %v33 = vshrl.u32 1326507024, %v18
  %v34 = vor.u32 %v32, %v33
  %vm35 = vcmp.lt.s32.totalorder %v16, 1
  %vm36 = vcmp.lt.s32.totalorder %v16, 2
  %vm37 = vcmp.lt.s32.totalorder %v16, 3
  %vm38 = vcmp.lt.s32.totalorder %v16, 4
  %v39 = vsel %vm35, %v19, %v22
  %v40 = vsel %vm38, %v28, 2102212464
  %v41 = vsel %vm37, %v25, %v40
  %v42 = vsel %vm36, %v39, %v41
  %v43 = vsel %vm35, %v22, %v25
  %v44 = vsel %vm38, %v31, 920167782
  %v45 = vsel %vm37, %v28, %v44
  %v46 = vsel %vm36, %v43, %v45
  %v47 = vsel %vm35, %v25, %v28
  %v48 = vsel %vm38, %v34, 1326507024
  %v49 = vsel %vm37, %v31, %v48
  %v50 = vsel %vm36, %v47, %v49
  %v51 = vshll.u32 %v11, 8
  %v52 = vmul.u32.u64.compose %v51, %v50
  %v53 = vextract.low.u32 %v52
  %v54 = vextract.high.u32 %v52
  %v55 = vmul.u32.u64.compose %v51, %v46
  %v56 = vextract.low.u32 %v55
  %v57 = vextract.high.u32 %v55
  %v58 = vmul.u32 %v51, %v42
  %v59 = vadd.s32 %v54, %v56
  %vm60 = vc.u32 %v54, %v56
  %v61 = vadd.s32 %v57, 1
  %v62 = vsel %vm60, %v61, %v57
  %v63 = vadd.s32 %v58, %v62
  %v64 = vadd.s32 %v63, 536870912
  %v65 = vshrl.u32 %v64, 30
  %v66 = vshll.u32 %v65, 30
  %v67 = vsub.s32 %v63, %v66
  %vm68 = vcmp.lt.s32.totalorder %v67, 0
  %v69 = vsub.s32 0, %v67
  %v70 = vsel %vm68, %v69, %v67
  %v71 = vclz %v70
  %v72 = vsub.s32 %v71, 2
  %vm73 = vcmp.gt.s32.totalorder 0, %v72
  %v74 = vsel %vm73, 0, %v72
  %v75 = vsub.s32 32, %v74
  %v76 = vshll.u32 %v67, %v74
  %v77 = vshrl.u32 %v59, %v75
  %v78 = vor.u32 %v76, %v77
  %v79 = vsub.s32 4294967266, %v74
  %v80 = vadd.s32 %v79, 127
  %v81 = vshll.u32 %v80, 23
  %v82 = vor.u32 4788187, %v81
  %v83 = vand.u32 2147483647, %v82
  %v85 = vcvt.s32.f32 %v78
  %v86 = vmul.f32 %v85, %v83
  %v87 = vxor.u32 %v86, 2147483648
  %v88 = vsel %vm5, %v87, %v86
  %v89 = vsub.s32 4, %v65
  %v90 = vsel %vm5, %v89, %v65
  %v91 = vsel %vm4, %v2, %v88
  %v92 = vsel %vm4, 0, %v90
  %v93 = vcosq.f32.pop %v91
  %v94 = vsinq.f32.pop %v91
  %vm95 = vweird.f32 %v2
  %v96 = vadd.s32 %v92, 3
  %v97 = vand.u32 %v96, 3
  %vm98 = vcmp.lt.s32.totalorder %v97, 2
  %vm99 = vcmp.eq.s32.totalorder %v97, 0
  %v100 = vxor.u32 %v94, 2147483648
  %v101 = vsel %vm99, %v93, %v100
  %vm102 = vcmp.eq.s32.totalorder %v97, 2
  %v103 = vxor.u32 %v93, 2147483648
  %v104 = vsel %vm102, %v103, %v94
  %v105 = vsel %vm98, %v101, %v104
  %v106 = vsel %vm95, nan, %v105
  %107 = vst [vmem:[%s1] sm:$0xff] %v106

// kernel: pegasus_forward.2
$region0: #{pegasus_forward.2}
  #allocation0 [shape = 'u32[]', space=smem, size = 0x4, offset = 0x4, fixed_abs, tag = 'smem constant byte address 0x4 - core index']
  #allocation1 [shape = 'u32[144,128]{1,0:T(1,128)}', space=vmem, size = 0x12000, scoped, tag = 'internal scratch']
  %s0 = inlined_call_operand.vmem [shape: f32[2,8,128], index: 0, kind: input, shape index: {}]
  %s1 = inlined_call_operand.vmem [shape: f32[2,1,8], index: 1, kind: input, shape index: {}]
  %s2 = inlined_call_operand.vmem [shape: f32[1,128], index: 2, kind: input, shape index: {}]
  %s3 = inlined_call_operand.vmem [shape: f32[1,128], index: 3, kind: input, shape index: {}]
  %s4 = inlined_call_operand.vmem [shape: f32[12,128,32], index: 4, kind: input, shape index: {}]
  %s5 = inlined_call_operand.vmem [shape: f32[12,1,32], index: 5, kind: input, shape index: {}]
  %s6 = inlined_call_operand.vmem [shape: f32[4,32,128], index: 6, kind: input, shape index: {}]
  %s7 = inlined_call_operand.vmem [shape: f32[1,128], index: 7, kind: input, shape index: {}]
  %s8 = inlined_call_operand.vmem [shape: f32[1,128], index: 8, kind: input, shape index: {}]
  %s9 = inlined_call_operand.vmem [shape: f32[1,128], index: 9, kind: input, shape index: {}]
  %s10 = inlined_call_operand.vmem [shape: f32[128,256], index: 10, kind: input, shape index: {}]
  %s11 = inlined_call_operand.vmem [shape: f32[1,256], index: 11, kind: input, shape index: {}]
  %s12 = inlined_call_operand.vmem [shape: f32[256,128], index: 12, kind: input, shape index: {}]
  %s13 = inlined_call_operand.vmem [shape: f32[1,128], index: 13, kind: input, shape index: {}]
  %s14 = inlined_call_operand.vmem [shape: f32[1,128], index: 14, kind: input, shape index: {}]
  %s15 = inlined_call_operand.vmem [shape: f32[1,128], index: 15, kind: input, shape index: {}]
  %s16 = inlined_call_operand.vmem [shape: f32[2,8,128], index: 16, kind: output, shape index: {}]
  %s17 = sld [smem:[#allocation0]]
  $region97: #{pegasus_forward.2} parent=0
    _
  %s19 = ssub.s32 1, %s17
  %s20 = scalar_select 0, %s19, %s17
  loop: start=0, step=1, limit=4
  $region2: #{pegasus_forward.2} parent=0 // loop_pre_header
    _
  $region3: #{pegasus_forward.2} parent=0 // loop_header
    %s22 = sphi 0, %s26
    %p23 = scmp.ge.s32.totalorder %s22, 4
    %s32 = sphi 0, %s34
    %s35 = sphi 0, %s32
    %s36 = sphi 0, %s35
    %s52 = sphi 0, %s36
    %s58 = sphi 0, %s60
    %s61 = sphi 0, %s58
    %s62 = sphi 0, %s61
    %s78 = sphi 0, %s62
    %s82 = sphi 0, %s82
    %s84 = sphi 0, %s82
    %s85 = sphi 0, %s84
    %s99 = sphi 0, %s85
    %s103 = sphi 0, %s103
    %s105 = sphi 0, %s103
    %s106 = sphi 0, %s105
    %s120 = sphi 0, %s106
    %s124 = sphi 0, %s124
    %s126 = sphi 0, %s124
    %s127 = sphi 0, %s126
    %s141 = sphi 0, %s127
    %s145 = sphi 0, %s145
    %s147 = sphi 0, %s145
    %s148 = sphi 0, %s147
    %s162 = sphi 0, %s148
    %s166 = sphi 0, %s166
    %s168 = sphi 0, %s166
    %s169 = sphi 0, %s168
    %s183 = sphi 0, %s169
    %s187 = sphi 0, %s187
    %s189 = sphi 0, %s187
    %s190 = sphi 0, %s189
    %s204 = sphi 0, %s190
    %s208 = sphi 0, %s208
    %s210 = sphi 0, %s208
    %s211 = sphi 0, %s210
    %s225 = sphi 0, %s211
    %s229 = sphi 0, %s229
    %s231 = sphi 0, %s229
    %s232 = sphi 0, %s231
    %s246 = sphi 0, %s232
    %s250 = sphi 0, %s250
    %s252 = sphi 0, %s250
    %s253 = sphi 0, %s252
    %s267 = sphi 0, %s253
    %s271 = sphi 0, %s271
    %s273 = sphi 0, %s271
    %s274 = sphi 0, %s273
    %s288 = sphi 0, %s274
    %s292 = sphi 0, %s292
    %s294 = sphi 0, %s292
    %s295 = sphi 0, %s294
    %s309 = sphi 0, %s295
    %s313 = sphi 0, %s313
    %s315 = sphi 0, %s313
    %s316 = sphi 0, %s315
    %s330 = sphi 0, %s316
    %s334 = sphi 0, %s334
    %s336 = sphi 0, %s334
    %s337 = sphi 0, %s336
    %s351 = sphi 0, %s337
    %s355 = sphi 0, %s355
    %s357 = sphi 0, %s355
    %s358 = sphi 0, %s357
    %s372 = sphi 0, %s358
    %s378 = sphi 0, %s380
    %s381 = sphi 0, %s378
    %s382 = sphi 0, %s381
    %s398 = sphi 0, %s382
  $region4: #{pegasus_forward.2} parent=0 // loop_header_branch
    %25 = sbr.rel (%p23) target = $region8
  $region5: #{pegasus_forward.2} parent=0 // loop_body
    %s27 = ssub.s32 %s22, 1
    %s28 = ssub.s32 %s22, 2
    %s29 = sadd.s32 %s22, 1
    %s30 = ssub.s32 %s22, %s29
    %p31 = scmp.eq.s32.totalorder %s30, 0
    %s33 = sadd.s32 %s32, 1
    %s34 = scalar_select %p31, %s32, %s33
    %p37 = pneg %p31
    %p38 = scmp.eq.s32.totalorder %s22, 1
    %p39 = por %p37, %p38
    %p40 = scmp.ne.s32.totalorder %s32, %s35
    %p41 = scmp.eq.s32.totalorder %s22, 0
    %p42 = por %p40, %p41
    %p43 = scmp.ne.s32.totalorder %s32, %s35
    %p44 = scmp.eq.s32.totalorder %s27, 1
    %p45 = por %p43, %p44
    %p46 = scmp.ne.s32.totalorder %s35, %s36
    %p47 = scmp.eq.s32.totalorder %s27, 0
    %p48 = por %p46, %p47
    %p49 = scmp.ne.s32.totalorder %s35, %s36
    %p50 = scmp.eq.s32.totalorder %s28, 1
    %p51 = por %p49, %p50
    %p53 = scmp.ne.s32.totalorder %s36, %s52
    %p54 = scmp.eq.s32.totalorder %s28, 0
    %p55 = por %p53, %p54
    %s56 = ssub.s32 %s22, %s29
    %p57 = scmp.eq.s32.totalorder %s56, 0
    %s59 = sadd.s32 %s58, 1
    %s60 = scalar_select %p57, %s58, %s59
    %p63 = pneg %p57
    %p64 = scmp.eq.s32.totalorder %s22, 1
    %p65 = por %p63, %p64
    %p66 = scmp.ne.s32.totalorder %s58, %s61
    %p67 = scmp.eq.s32.totalorder %s22, 0
    %p68 = por %p66, %p67
    %p69 = scmp.ne.s32.totalorder %s58, %s61
    %p70 = scmp.eq.s32.totalorder %s27, 1
    %p71 = por %p69, %p70
    %p72 = scmp.ne.s32.totalorder %s61, %s62
    %p73 = scmp.eq.s32.totalorder %s27, 0
    %p74 = por %p72, %p73
    %p75 = scmp.ne.s32.totalorder %s61, %s62
    %p76 = scmp.eq.s32.totalorder %s28, 1
    %p77 = por %p75, %p76
    %p79 = scmp.ne.s32.totalorder %s62, %s78
    %p80 = scmp.eq.s32.totalorder %s28, 0
    %p81 = por %p79, %p80
    %s83 = sadd.s32 %s82, 1
    %p86 = scmp.eq.s32.totalorder %s22, 1
    %p87 = scmp.ne.s32.totalorder %s82, %s84
    %p88 = scmp.eq.s32.totalorder %s22, 0
    %p89 = por %p87, %p88
    %p90 = scmp.ne.s32.totalorder %s82, %s84
    %p91 = scmp.eq.s32.totalorder %s27, 1
    %p92 = por %p90, %p91
    %p93 = scmp.ne.s32.totalorder %s84, %s85
    %p94 = scmp.eq.s32.totalorder %s27, 0
    %p95 = por %p93, %p94
    %p96 = scmp.ne.s32.totalorder %s84, %s85
    %p97 = scmp.eq.s32.totalorder %s28, 1
    %p98 = por %p96, %p97
    %p100 = scmp.ne.s32.totalorder %s85, %s99
    %p101 = scmp.eq.s32.totalorder %s28, 0
    %p102 = por %p100, %p101
    %s104 = sadd.s32 %s103, 1
    %p107 = scmp.eq.s32.totalorder %s22, 1
    %p108 = scmp.ne.s32.totalorder %s103, %s105
    %p109 = scmp.eq.s32.totalorder %s22, 0
    %p110 = por %p108, %p109
    %p111 = scmp.ne.s32.totalorder %s103, %s105
    %p112 = scmp.eq.s32.totalorder %s27, 1
    %p113 = por %p111, %p112
    %p114 = scmp.ne.s32.totalorder %s105, %s106
    %p115 = scmp.eq.s32.totalorder %s27, 0
    %p116 = por %p114, %p115
    %p117 = scmp.ne.s32.totalorder %s105, %s106
    %p118 = scmp.eq.s32.totalorder %s28, 1
    %p119 = por %p117, %p118
    %p121 = scmp.ne.s32.totalorder %s106, %s120
    %p122 = scmp.eq.s32.totalorder %s28, 0
    %p123 = por %p121, %p122
    %s125 = sadd.s32 %s124, 1
    %p128 = scmp.eq.s32.totalorder %s22, 1
    %p129 = scmp.ne.s32.totalorder %s124, %s126
    %p130 = scmp.eq.s32.totalorder %s22, 0
    %p131 = por %p129, %p130
    %p132 = scmp.ne.s32.totalorder %s124, %s126
    %p133 = scmp.eq.s32.totalorder %s27, 1
    %p134 = por %p132, %p133
    %p135 = scmp.ne.s32.totalorder %s126, %s127
    %p136 = scmp.eq.s32.totalorder %s27, 0
    %p137 = por %p135, %p136
    %p138 = scmp.ne.s32.totalorder %s126, %s127
    %p139 = scmp.eq.s32.totalorder %s28, 1
    %p140 = por %p138, %p139
    %p142 = scmp.ne.s32.totalorder %s127, %s141
    %p143 = scmp.eq.s32.totalorder %s28, 0
    %p144 = por %p142, %p143
    %s146 = sadd.s32 %s145, 1
    %p149 = scmp.eq.s32.totalorder %s22, 1
    %p150 = scmp.ne.s32.totalorder %s145, %s147
    %p151 = scmp.eq.s32.totalorder %s22, 0
    %p152 = por %p150, %p151
    %p153 = scmp.ne.s32.totalorder %s145, %s147
    %p154 = scmp.eq.s32.totalorder %s27, 1
    %p155 = por %p153, %p154
    %p156 = scmp.ne.s32.totalorder %s147, %s148
    %p157 = scmp.eq.s32.totalorder %s27, 0
    %p158 = por %p156, %p157
    %p159 = scmp.ne.s32.totalorder %s147, %s148
    %p160 = scmp.eq.s32.totalorder %s28, 1
    %p161 = por %p159, %p160
    %p163 = scmp.ne.s32.totalorder %s148, %s162
    %p164 = scmp.eq.s32.totalorder %s28, 0
    %p165 = por %p163, %p164
    %s167 = sadd.s32 %s166, 1
    %p170 = scmp.eq.s32.totalorder %s22, 1
    %p171 = scmp.ne.s32.totalorder %s166, %s168
    %p172 = scmp.eq.s32.totalorder %s22, 0
    %p173 = por %p171, %p172
    %p174 = scmp.ne.s32.totalorder %s166, %s168
    %p175 = scmp.eq.s32.totalorder %s27, 1
    %p176 = por %p174, %p175
    %p177 = scmp.ne.s32.totalorder %s168, %s169
    %p178 = scmp.eq.s32.totalorder %s27, 0
    %p179 = por %p177, %p178
    %p180 = scmp.ne.s32.totalorder %s168, %s169
    %p181 = scmp.eq.s32.totalorder %s28, 1
    %p182 = por %p180, %p181
    %p184 = scmp.ne.s32.totalorder %s169, %s183
    %p185 = scmp.eq.s32.totalorder %s28, 0
    %p186 = por %p184, %p185
    %s188 = sadd.s32 %s187, 1
    %p191 = scmp.eq.s32.totalorder %s22, 1
    %p192 = scmp.ne.s32.totalorder %s187, %s189
    %p193 = scmp.eq.s32.totalorder %s22, 0
    %p194 = por %p192, %p193
    %p195 = scmp.ne.s32.totalorder %s187, %s189
    %p196 = scmp.eq.s32.totalorder %s27, 1
    %p197 = por %p195, %p196
    %p198 = scmp.ne.s32.totalorder %s189, %s190
    %p199 = scmp.eq.s32.totalorder %s27, 0
    %p200 = por %p198, %p199
    %p201 = scmp.ne.s32.totalorder %s189, %s190
    %p202 = scmp.eq.s32.totalorder %s28, 1
    %p203 = por %p201, %p202
    %p205 = scmp.ne.s32.totalorder %s190, %s204
    %p206 = scmp.eq.s32.totalorder %s28, 0
    %p207 = por %p205, %p206
    %s209 = sadd.s32 %s208, 1
    %p212 = scmp.eq.s32.totalorder %s22, 1
    %p213 = scmp.ne.s32.totalorder %s208, %s210
    %p214 = scmp.eq.s32.totalorder %s22, 0
    %p215 = por %p213, %p214
    %p216 = scmp.ne.s32.totalorder %s208, %s210
    %p217 = scmp.eq.s32.totalorder %s27, 1
    %p218 = por %p216, %p217
    %p219 = scmp.ne.s32.totalorder %s210, %s211
    %p220 = scmp.eq.s32.totalorder %s27, 0
    %p221 = por %p219, %p220
    %p222 = scmp.ne.s32.totalorder %s210, %s211
    %p223 = scmp.eq.s32.totalorder %s28, 1
    %p224 = por %p222, %p223
    %p226 = scmp.ne.s32.totalorder %s211, %s225
    %p227 = scmp.eq.s32.totalorder %s28, 0
    %p228 = por %p226, %p227
    %s230 = sadd.s32 %s229, 1
    %p233 = scmp.eq.s32.totalorder %s22, 1
    %p234 = scmp.ne.s32.totalorder %s229, %s231
    %p235 = scmp.eq.s32.totalorder %s22, 0
    %p236 = por %p234, %p235
    %p237 = scmp.ne.s32.totalorder %s229, %s231
    %p238 = scmp.eq.s32.totalorder %s27, 1
    %p239 = por %p237, %p238
    %p240 = scmp.ne.s32.totalorder %s231, %s232
    %p241 = scmp.eq.s32.totalorder %s27, 0
    %p242 = por %p240, %p241
    %p243 = scmp.ne.s32.totalorder %s231, %s232
    %p244 = scmp.eq.s32.totalorder %s28, 1
    %p245 = por %p243, %p244
    %p247 = scmp.ne.s32.totalorder %s232, %s246
    %p248 = scmp.eq.s32.totalorder %s28, 0
    %p249 = por %p247, %p248
    %s251 = sadd.s32 %s250, 1
    %p254 = scmp.eq.s32.totalorder %s22, 1
    %p255 = scmp.ne.s32.totalorder %s250, %s252
    %p256 = scmp.eq.s32.totalorder %s22, 0
    %p257 = por %p255, %p256
    %p258 = scmp.ne.s32.totalorder %s250, %s252
    %p259 = scmp.eq.s32.totalorder %s27, 1
    %p260 = por %p258, %p259
    %p261 = scmp.ne.s32.totalorder %s252, %s253
    %p262 = scmp.eq.s32.totalorder %s27, 0
    %p263 = por %p261, %p262
    %p264 = scmp.ne.s32.totalorder %s252, %s253
    %p265 = scmp.eq.s32.totalorder %s28, 1
    %p266 = por %p264, %p265
    %p268 = scmp.ne.s32.totalorder %s253, %s267
    %p269 = scmp.eq.s32.totalorder %s28, 0
    %p270 = por %p268, %p269
    %s272 = sadd.s32 %s271, 1
    %p275 = scmp.eq.s32.totalorder %s22, 1
    %p276 = scmp.ne.s32.totalorder %s271, %s273
    %p277 = scmp.eq.s32.totalorder %s22, 0
    %p278 = por %p276, %p277
    %p279 = scmp.ne.s32.totalorder %s271, %s273
    %p280 = scmp.eq.s32.totalorder %s27, 1
    %p281 = por %p279, %p280
    %p282 = scmp.ne.s32.totalorder %s273, %s274
    %p283 = scmp.eq.s32.totalorder %s27, 0
    %p284 = por %p282, %p283
    %p285 = scmp.ne.s32.totalorder %s273, %s274
    %p286 = scmp.eq.s32.totalorder %s28, 1
    %p287 = por %p285, %p286
    %p289 = scmp.ne.s32.totalorder %s274, %s288
    %p290 = scmp.eq.s32.totalorder %s28, 0
    %p291 = por %p289, %p290
    %s293 = sadd.s32 %s292, 1
    %p296 = scmp.eq.s32.totalorder %s22, 1
    %p297 = scmp.ne.s32.totalorder %s292, %s294
    %p298 = scmp.eq.s32.totalorder %s22, 0
    %p299 = por %p297, %p298
    %p300 = scmp.ne.s32.totalorder %s292, %s294
    %p301 = scmp.eq.s32.totalorder %s27, 1
    %p302 = por %p300, %p301
    %p303 = scmp.ne.s32.totalorder %s294, %s295
    %p304 = scmp.eq.s32.totalorder %s27, 0
    %p305 = por %p303, %p304
    %p306 = scmp.ne.s32.totalorder %s294, %s295
    %p307 = scmp.eq.s32.totalorder %s28, 1
    %p308 = por %p306, %p307
    %p310 = scmp.ne.s32.totalorder %s295, %s309
    %p311 = scmp.eq.s32.totalorder %s28, 0
    %p312 = por %p310, %p311
    %s314 = sadd.s32 %s313, 1
    %p317 = scmp.eq.s32.totalorder %s22, 1
    %p318 = scmp.ne.s32.totalorder %s313, %s315
    %p319 = scmp.eq.s32.totalorder %s22, 0
    %p320 = por %p318, %p319
    %p321 = scmp.ne.s32.totalorder %s313, %s315
    %p322 = scmp.eq.s32.totalorder %s27, 1
    %p323 = por %p321, %p322
    %p324 = scmp.ne.s32.totalorder %s315, %s316
    %p325 = scmp.eq.s32.totalorder %s27, 0
    %p326 = por %p324, %p325
    %p327 = scmp.ne.s32.totalorder %s315, %s316
    %p328 = scmp.eq.s32.totalorder %s28, 1
    %p329 = por %p327, %p328
    %p331 = scmp.ne.s32.totalorder %s316, %s330
    %p332 = scmp.eq.s32.totalorder %s28, 0
    %p333 = por %p331, %p332
    %s335 = sadd.s32 %s334, 1
    %p338 = scmp.eq.s32.totalorder %s22, 1
    %p339 = scmp.ne.s32.totalorder %s334, %s336
    %p340 = scmp.eq.s32.totalorder %s22, 0
    %p341 = por %p339, %p340
    %p342 = scmp.ne.s32.totalorder %s334, %s336
    %p343 = scmp.eq.s32.totalorder %s27, 1
    %p344 = por %p342, %p343
    %p345 = scmp.ne.s32.totalorder %s336, %s337
    %p346 = scmp.eq.s32.totalorder %s27, 0
    %p347 = por %p345, %p346
    %p348 = scmp.ne.s32.totalorder %s336, %s337
    %p349 = scmp.eq.s32.totalorder %s28, 1
    %p350 = por %p348, %p349
    %p352 = scmp.ne.s32.totalorder %s337, %s351
    %p353 = scmp.eq.s32.totalorder %s28, 0
    %p354 = por %p352, %p353
    %s356 = sadd.s32 %s355, 1
    %p359 = scmp.eq.s32.totalorder %s22, 1
    %p360 = scmp.ne.s32.totalorder %s355, %s357
    %p361 = scmp.eq.s32.totalorder %s22, 0
    %p362 = por %p360, %p361
    %p363 = scmp.ne.s32.totalorder %s355, %s357
    %p364 = scmp.eq.s32.totalorder %s27, 1
    %p365 = por %p363, %p364
    %p366 = scmp.ne.s32.totalorder %s357, %s358
    %p367 = scmp.eq.s32.totalorder %s27, 0
    %p368 = por %p366, %p367
    %p369 = scmp.ne.s32.totalorder %s357, %s358
    %p370 = scmp.eq.s32.totalorder %s28, 1
    %p371 = por %p369, %p370
    %p373 = scmp.ne.s32.totalorder %s358, %s372
    %p374 = scmp.eq.s32.totalorder %s28, 0
    %p375 = por %p373, %p374
    %s376 = ssub.s32 %s22, %s29
    %p377 = scmp.eq.s32.totalorder %s376, 0
    %s379 = sadd.s32 %s378, 1
    %s380 = scalar_select %p377, %s378, %s379
    %p383 = pneg %p377
    %p384 = scmp.eq.s32.totalorder %s22, 1
    %p385 = por %p383, %p384
    %p386 = scmp.ne.s32.totalorder %s378, %s381
    %p387 = scmp.eq.s32.totalorder %s22, 0
    %p388 = por %p386, %p387
    %p389 = scmp.ne.s32.totalorder %s378, %s381
    %p390 = scmp.eq.s32.totalorder %s27, 1
    %p391 = por %p389, %p390
    %p392 = scmp.ne.s32.totalorder %s381, %s382
    %p393 = scmp.eq.s32.totalorder %s27, 0
    %p394 = por %p392, %p393
    %p395 = scmp.ne.s32.totalorder %s381, %s382
    %p396 = scmp.eq.s32.totalorder %s28, 1
    %p397 = por %p395, %p396
    %p399 = scmp.ne.s32.totalorder %s382, %s398
    %p400 = scmp.eq.s32.totalorder %s28, 0
    %p401 = por %p399, %p400
    %p402 = scmp.le.s32.totalorder 1, %s22
    %p403 = scmp.lt.s32.totalorder %s22, 3
    %p404 = pnand %p402, %p403
    %p405 = pneg %p404
    // Predicated region
    $region9: #{pegasus_forward.2} parent=5 // pred_check
      _
    $region10: #{pegasus_forward.2} parent=5 // pred_check_branch
      %407 = sbr.rel (%p404) target = $region12
    $region11: #{pegasus_forward.2} parent=5 // pred_region
      %s408 = ssub.s32 %s22, 1
      // Predicated region
      $region13: #{pegasus_forward.2} parent=11 // pred_check
        %p409 = pneg %p95
      $region14: #{pegasus_forward.2} parent=11 // pred_check_branch
        %411 = sbr.rel (%p409) target = $region16
      $region15: #{pegasus_forward.2} parent=11 // pred_region
        _
      $region16: #{pegasus_forward.2} parent=11 // pred_fallthru
        _
      // Predicated region
      $region17: #{pegasus_forward.2} parent=11 // pred_check
        %p412 = pneg %p116
      $region18: #{pegasus_forward.2} parent=11 // pred_check_branch
        %414 = sbr.rel (%p412) target = $region20
      $region19: #{pegasus_forward.2} parent=11 // pred_region
        _
      $region20: #{pegasus_forward.2} parent=11 // pred_fallthru
        _
      // Predicated region
      $region21: #{pegasus_forward.2} parent=11 // pred_check
        %p415 = pneg %p137
      $region22: #{pegasus_forward.2} parent=11 // pred_check_branch
        %417 = sbr.rel (%p415) target = $region24
      $region23: #{pegasus_forward.2} parent=11 // pred_region
        _
      $region24: #{pegasus_forward.2} parent=11 // pred_fallthru
        _
      // Predicated region
      $region25: #{pegasus_forward.2} parent=11 // pred_check
        %p418 = pneg %p158
      $region26: #{pegasus_forward.2} parent=11 // pred_check_branch
        %420 = sbr.rel (%p418) target = $region28
      $region27: #{pegasus_forward.2} parent=11 // pred_region
        _
      $region28: #{pegasus_forward.2} parent=11 // pred_fallthru
        _
      // Predicated region
      $region29: #{pegasus_forward.2} parent=11 // pred_check
        %p421 = pneg %p179
      $region30: #{pegasus_forward.2} parent=11 // pred_check_branch
        %423 = sbr.rel (%p421) target = $region32
      $region31: #{pegasus_forward.2} parent=11 // pred_region
        _
      $region32: #{pegasus_forward.2} parent=11 // pred_fallthru
        _
      // Predicated region
      $region33: #{pegasus_forward.2} parent=11 // pred_check
        %p424 = pneg %p200
      $region34: #{pegasus_forward.2} parent=11 // pred_check_branch
        %426 = sbr.rel (%p424) target = $region36
      $region35: #{pegasus_forward.2} parent=11 // pred_region
        _
      $region36: #{pegasus_forward.2} parent=11 // pred_fallthru
        _
      // Predicated region
      $region37: #{pegasus_forward.2} parent=11 // pred_check
        %p427 = pneg %p221
      $region38: #{pegasus_forward.2} parent=11 // pred_check_branch
        %429 = sbr.rel (%p427) target = $region40
      $region39: #{pegasus_forward.2} parent=11 // pred_region
        _
      $region40: #{pegasus_forward.2} parent=11 // pred_fallthru
        _
      // Predicated region
      $region41: #{pegasus_forward.2} parent=11 // pred_check
        %p430 = pneg %p242
      $region42: #{pegasus_forward.2} parent=11 // pred_check_branch
        %432 = sbr.rel (%p430) target = $region44
      $region43: #{pegasus_forward.2} parent=11 // pred_region
        _
      $region44: #{pegasus_forward.2} parent=11 // pred_fallthru
        _
      // Predicated region
      $region45: #{pegasus_forward.2} parent=11 // pred_check
        %p433 = pneg %p263
      $region46: #{pegasus_forward.2} parent=11 // pred_check_branch
        %435 = sbr.rel (%p433) target = $region48
      $region47: #{pegasus_forward.2} parent=11 // pred_region
        _
      $region48: #{pegasus_forward.2} parent=11 // pred_fallthru
        _
      // Predicated region
      $region49: #{pegasus_forward.2} parent=11 // pred_check
        %p436 = pneg %p284
      $region50: #{pegasus_forward.2} parent=11 // pred_check_branch
        %438 = sbr.rel (%p436) target = $region52
      $region51: #{pegasus_forward.2} parent=11 // pred_region
        _
      $region52: #{pegasus_forward.2} parent=11 // pred_fallthru
        _
      // Predicated region
      $region53: #{pegasus_forward.2} parent=11 // pred_check
        %p439 = pneg %p305
      $region54: #{pegasus_forward.2} parent=11 // pred_check_branch
        %441 = sbr.rel (%p439) target = $region56
      $region55: #{pegasus_forward.2} parent=11 // pred_region
        _
      $region56: #{pegasus_forward.2} parent=11 // pred_fallthru
        _
      // Predicated region
      $region57: #{pegasus_forward.2} parent=11 // pred_check
        %p442 = pneg %p326
      $region58: #{pegasus_forward.2} parent=11 // pred_check_branch
        %444 = sbr.rel (%p442) target = $region60
      $region59: #{pegasus_forward.2} parent=11 // pred_region
        _
      $region60: #{pegasus_forward.2} parent=11 // pred_fallthru
        _
      // Predicated region
      $region61: #{pegasus_forward.2} parent=11 // pred_check
        %p445 = pneg %p347
      $region62: #{pegasus_forward.2} parent=11 // pred_check_branch
        %447 = sbr.rel (%p445) target = $region64
      $region63: #{pegasus_forward.2} parent=11 // pred_region
        _
      $region64: #{pegasus_forward.2} parent=11 // pred_fallthru
        _
      // Predicated region
      $region65: #{pegasus_forward.2} parent=11 // pred_check
        %p448 = pneg %p368
      $region66: #{pegasus_forward.2} parent=11 // pred_check_branch
        %450 = sbr.rel (%p448) target = $region68
      $region67: #{pegasus_forward.2} parent=11 // pred_region
        _
      $region68: #{pegasus_forward.2} parent=11 // pred_fallthru
        _
    $region12: #{pegasus_forward.2} parent=5 // pred_fallthru
      _
    %p451 = scmp.lt.s32.totalorder %s22, 2
    // Predicated region
    $region69: #{pegasus_forward.2} parent=5 // pred_check
      %p452 = pneg %p451
    $region70: #{pegasus_forward.2} parent=5 // pred_check_branch
      %454 = sbr.rel (%p452) target = $region72
    $region71: #{pegasus_forward.2} parent=5 // pred_region
      // Predicated region
      $region73: #{pegasus_forward.2} parent=71 // pred_check
        %p455 = pneg %p42
      $region74: #{pegasus_forward.2} parent=71 // pred_check_branch
        %457 = sbr.rel (%p455) target = $region76
      $region75: #{pegasus_forward.2} parent=71 // pred_region
        %p458 = scmp.lt.s32.totalorder %s22, 1
        %s459 = scalar_select %p458, %s22, 1
        %s460 = smul.addr %s459, 8
        %s461 = scalar_lea.vmem %s0, %s460
      $region76: #{pegasus_forward.2} parent=71 // pred_fallthru
        _
      // Predicated region
      $region77: #{pegasus_forward.2} parent=71 // pred_check
        %p462 = pneg %p68
      $region78: #{pegasus_forward.2} parent=71 // pred_check_branch
        %464 = sbr.rel (%p462) target = $region80
      $region79: #{pegasus_forward.2} parent=71 // pred_region
        %p465 = scmp.lt.s32.totalorder %s22, 1
        %s466 = scalar_select %p465, %s22, 1
        %s467 = scalar_lea.vmem %s1, %s466
      $region80: #{pegasus_forward.2} parent=71 // pred_fallthru
        _
    $region72: #{pegasus_forward.2} parent=5 // pred_fallthru
      _
    %p468 = scmp.le.s32.totalorder 1, %s22
    %p469 = scmp.lt.s32.totalorder %s22, 3
    %p470 = pnand %p468, %p469
    %p471 = pneg %p470
    // Predicated region
    $region81: #{pegasus_forward.2} parent=5 // pred_check
      _
    $region82: #{pegasus_forward.2} parent=5 // pred_check_branch
      %473 = sbr.rel (%p470) target = $region84
    $region83: #{pegasus_forward.2} parent=5 // pred_region
      %s474 = ssub.s32 %s22, 1
      %p475 = scmp.lt.s32.totalorder %s27, 1
      %s476 = scalar_select %p475, %s27, 1
      %s477 = smul.addr %s476, 8
      %s478 = scalar_lea.vmem %s0, %s477
      %p479 = pneg %p48
      %p480 = pneg %p45
      %p481 = scmp.lt.s32.totalorder %s27, 1
      %s482 = scalar_select %p481, %s27, 1
      %s483 = scalar_lea.vmem %s1, %s482
      %p484 = pneg %p74
      %p485 = pneg %p71
      %p486 = pneg %p95
      %p487 = pneg %p92
      %p488 = pneg %p116
      %p489 = pneg %p113
      %p490 = pneg %p137
      %p491 = pneg %p134
      %p492 = pneg %p158
      %p493 = pneg %p155
      %p494 = pneg %p179
      %p495 = pneg %p176
      %p496 = pneg %p200
      %p497 = pneg %p197
      %p498 = pneg %p221
      %p499 = pneg %p218
      %p500 = pneg %p242
      %p501 = pneg %p239
      %p502 = pneg %p263
      %p503 = pneg %p260
      %p504 = pneg %p284
      %p505 = pneg %p281
      %p506 = pneg %p305
      %p507 = pneg %p302
      %p508 = pneg %p326
      %p509 = pneg %p323
      %p510 = pneg %p347
      %p511 = pneg %p344
      %p512 = pneg %p368
      %p513 = pneg %p365
      %p514 = pneg %p394
      %p515 = pneg %p391
      %p516 = scmp.lt.s32.totalorder %s27, 1
      %s517 = scalar_select %p516, %s27, 1
      %s518 = smul.addr %s517, 8
      %s519 = scalar_lea.vmem %s16, %s518
      %p520 = scmp.lt.s32.totalorder %s27, 1
      %s521 = scalar_select %p520, %s27, 1
      %s522 = smul.addr %s521, 8
      %s523 = scalar_lea.vmem %s0, %s522
      %p524 = scmp.lt.s32.totalorder %s27, 1
      %s525 = scalar_select %p524, %s27, 1
      %s526 = scalar_lea.vmem %s1, %s525
      %p527 = scmp.lt.s32.totalorder %s27, 1
      %s528 = scalar_select %p527, %s27, 1
      %s529 = smul.addr %s528, 8
      %s530 = scalar_lea.vmem %s16, %s529
      %v531 = vld [vmem:[%s523] sm:$0xff]
      %v532 = vld [vmem:[%s526] sm:$0x1]
      %v533 = vld [vmem:[%s2] sm:$0x1]
      %v534 = vld [vmem:[%s3] sm:$0x1]
      %535 = vadd.xlane.f32.xlu0 %v531
      %v536 = vpop.xlane.xlu0 %535
      %v537 = vrcp.pop 128.0
      %v538 = vmul.f32 %v536, %v537
      %v539 = vsub.f32 %v531, %v538
      %v540 = vmul.f32 %v539, %v539
      %541 = vadd.xlane.f32.xlu0 %v540
      %v542 = vpop.xlane.xlu0 %541
      %v543 = vmul.f32 %v542, %v537
      %v544 = vadd.f32 %v543, 1e-05
      %v545 = vrsqrt.pop %v544
      %v546 = vmul.f32 %v539, %v545
      %v548 = vlaneseq
      %v549 = vshrl.u32 %v548, 7
      %v550 = vsub.s32 0, %v549
      %v551 = vrot.slane %v533, %v550
      %v553 = vmul.f32 %v546, %v551
      %v555 = vlaneseq
      %v556 = vshrl.u32 %v555, 7
      %v557 = vsub.s32 0, %v556
      %v558 = vrot.slane %v534, %v557
      %v560 = vadd.f32 %v553, %v558
      %v561 = vld [vmem:[%s4] sm:$0xff]
      %v562 = vld [vmem:[%s4 + $0x8] sm:$0xff]
      %v563 = vld [vmem:[%s4 + $0x10] sm:$0xff]
      %v564 = vld [vmem:[%s4 + $0x18] sm:$0xff]
      %v565 = vld [vmem:[%s4 + $0x20] sm:$0xff]
      %v566 = vld [vmem:[%s4 + $0x28] sm:$0xff]
      %v567 = vld [vmem:[%s4 + $0x30] sm:$0xff]
      %v568 = vld [vmem:[%s4 + $0x38] sm:$0xff]
      %v569 = vld [vmem:[%s4 + $0x40] sm:$0xff]
      %v570 = vld [vmem:[%s4 + $0x48] sm:$0xff]
      %v571 = vld [vmem:[%s4 + $0x50] sm:$0xff]
      %v572 = vld [vmem:[%s4 + $0x58] sm:$0xff]
      %v573 = vld [vmem:[%s4 + $0x60] sm:$0xff]
      %v574 = vld [vmem:[%s4 + $0x68] sm:$0xff]
      %v575 = vld [vmem:[%s4 + $0x70] sm:$0xff]
      %v576 = vld [vmem:[%s4 + $0x78] sm:$0xff]
      %v577 = vld [vmem:[%s5] sm:$0x1]
      %v579 = vlaneseq
      %v580 = vshrl.u32 %v579, 7
      %v581 = vsub.s32 0, %v580
      %v582 = vrot.slane %v577, %v581
      %584 = vmatprep.subr.mxu0 0.0
      %585 = vmatpush1.msra.mxu0 %v561
      %586 = vmatprep.subr.mxu0 0.0
      %587 = vmatpush1.msra.mxu0 %v562
      %588 = vmatprep.subr.mxu0 0.0
      %589 = vmatpush1.msra.mxu0 %v563
      %590 = vmatprep.subr.mxu0 0.0
      %591 = vmatpush1.msra.mxu0 %v564
      %592 = vmatprep.subr.mxu0 0.0
      %593 = vmatpush1.msra.mxu0 %v565
      %594 = vmatprep.subr.mxu0 0.0
      %595 = vmatpush1.msra.mxu0 %v566
      %596 = vmatprep.subr.mxu0 0.0
      %597 = vmatpush1.msra.mxu0 %v567
      %598 = vmatprep.subr.mxu0 0.0
      %599 = vmatpush1.msra.mxu0 %v568
      %600 = vmatprep.subr.mxu0 0.0
      %601 = vmatpush1.msra.mxu0 %v569
      %602 = vmatprep.subr.mxu0 0.0
      %603 = vmatpush1.msra.mxu0 %v570
      %604 = vmatprep.subr.mxu0 0.0
      %605 = vmatpush1.msra.mxu0 %v571
      %606 = vmatprep.subr.mxu0 0.0
      %607 = vmatpush1.msra.mxu0 %v572
      %608 = vmatprep.subr.mxu0 0.0
      %609 = vmatpush1.msra.mxu0 %v573
      %610 = vmatprep.subr.mxu0 0.0
      %611 = vmatpush1.msra.mxu0 %v574
      %612 = vmatprep.subr.mxu0 0.0
      %613 = vmatpush1.msra.mxu0 %v575
      %614 = vmatprep.subr.mxu0 0.0
      %615 = vmatpush1.msra.mxu0 %v576
      %616 = vmatprep.subr.mxu0 0.0
      %617 = vmatpush1.msra.mxu0 0.0
      %618 = vmatprep.subr.mxu0 0.0
      %619 = vmatpush1.msra.mxu0 0.0
      %620 = vmatprep.subr.mxu0 0.0
      %621 = vmatpush1.msra.mxu0 0.0
      %622 = vmatprep.subr.mxu0 0.0
      %623 = vmatpush1.msra.mxu0 0.0
      %624 = vmatprep.subr.mxu0 0.0
      %625 = vmatpush1.msra.mxu0 0.0
      %626 = vmatprep.subr.mxu0 0.0
      %627 = vmatpush1.msra.mxu0 0.0
      %628 = vmatprep.subr.mxu0 0.0
      %629 = vmatpush1.msra.mxu0 0.0
      %630 = vmatprep.subr.mxu0 0.0
      %631 = vmatpush1.msra.mxu0 0.0
      %632 = vmatprep.subr.mxu0 0.0
      %633 = vmatpush1.msra.mxu0 0.0
      %634 = vmatprep.subr.mxu0 0.0
      %635 = vmatpush1.msra.mxu0 0.0
      %636 = vmatprep.subr.mxu0 0.0
      %637 = vmatpush1.msra.mxu0 0.0
      %638 = vmatprep.subr.mxu0 0.0
      %639 = vmatpush1.msra.mxu0 0.0
      %640 = vmatprep.subr.mxu0 0.0
      %641 = vmatpush1.msra.mxu0 0.0
      %642 = vmatprep.subr.mxu0 0.0
      %643 = vmatpush1.msra.mxu0 0.0
      %644 = vmatprep.subr.mxu0 0.0
      %645 = vmatpush1.msra.mxu0 0.0
      %646 = vmatprep.subr.mxu0 0.0
      %647 = vmatpush1.msra.mxu0 0.0
      %648 = vmatprep.mubr.f32.mxu0 0.0
      %649 = vmatmul.mubr.f32.gmra.mrb[0].mxu0 %v560
      %v650 = vpop.f32.mrb[0].mxu0
      %v651 = vadd.f32 %v582, %v650
      %v652 = vpop.f32.mrb[0].mxu0
      %653 = vdwg.mxu0
      %v654 = vmul.f32 %v651, 0.17677669
      %s655 = scalar_lea.vmem %s4, 512
      %v656 = vld [vmem:[%s655] sm:$0xff]
      %v657 = vld [vmem:[%s655 + $0x8] sm:$0xff]
      %v658 = vld [vmem:[%s655 + $0x10] sm:$0xff]
      %v659 = vld [vmem:[%s655 + $0x18] sm:$0xff]
      %v660 = vld [vmem:[%s655 + $0x20] sm:$0xff]
      %v661 = vld [vmem:[%s655 + $0x28] sm:$0xff]
      %v662 = vld [vmem:[%s655 + $0x30] sm:$0xff]
      %v663 = vld [vmem:[%s655 + $0x38] sm:$0xff]
      %v664 = vld [vmem:[%s655 + $0x40] sm:$0xff]
      %v665 = vld [vmem:[%s655 + $0x48] sm:$0xff]
      %v666 = vld [vmem:[%s655 + $0x50] sm:$0xff]
      %v667 = vld [vmem:[%s655 + $0x58] sm:$0xff]
      %v668 = vld [vmem:[%s655 + $0x60] sm:$0xff]
      %v669 = vld [vmem:[%s655 + $0x68] sm:$0xff]
      %v670 = vld [vmem:[%s655 + $0x70] sm:$0xff]
      %v671 = vld [vmem:[%s655 + $0x78] sm:$0xff]
      %s672 = scalar_lea.vmem %s5, 4
      %v673 = vld [vmem:[%s672] sm:$0x1]
      %v675 = vlaneseq
      %v676 = vshrl.u32 %v675, 7
      %v677 = vsub.s32 0, %v676
      %v678 = vrot.slane %v673, %v677
      %680 = vmatprep.subr.mxu0 0.0
      %681 = vmatpush1.msra.mxu0 %v656
      %682 = vmatprep.subr.mxu0 0.0
      %683 = vmatpush1.msra.mxu0 %v657
      %684 = vmatprep.subr.mxu0 0.0
      %685 = vmatpush1.msra.mxu0 %v658
      %686 = vmatprep.subr.mxu0 0.0
      %687 = vmatpush1.msra.mxu0 %v659
      %688 = vmatprep.subr.mxu0 0.0
      %689 = vmatpush1.msra.mxu0 %v660
      %690 = vmatprep.subr.mxu0 0.0
      %691 = vmatpush1.msra.mxu0 %v661
      %692 = vmatprep.subr.mxu0 0.0
      %693 = vmatpush1.msra.mxu0 %v662
      %694 = vmatprep.subr.mxu0 0.0
      %695 = vmatpush1.msra.mxu0 %v663
      %696 = vmatprep.subr.mxu0 0.0
      %697 = vmatpush1.msra.mxu0 %v664
      %698 = vmatprep.subr.mxu0 0.0
      %699 = vmatpush1.msra.mxu0 %v665
      %700 = vmatprep.subr.mxu0 0.0
      %701 = vmatpush1.msra.mxu0 %v666
      %702 = vmatprep.subr.mxu0 0.0
      %703 = vmatpush1.msra.mxu0 %v667
      %704 = vmatprep.subr.mxu0 0.0
      %705 = vmatpush1.msra.mxu0 %v668
      %706 = vmatprep.subr.mxu0 0.0
      %707 = vmatpush1.msra.mxu0 %v669
      %708 = vmatprep.subr.mxu0 0.0
      %709 = vmatpush1.msra.mxu0 %v670
      %710 = vmatprep.subr.mxu0 0.0
      %711 = vmatpush1.msra.mxu0 %v671
      %712 = vmatprep.subr.mxu0 0.0
      %713 = vmatpush1.msra.mxu0 0.0
      %714 = vmatprep.subr.mxu0 0.0
      %715 = vmatpush1.msra.mxu0 0.0
      %716 = vmatprep.subr.mxu0 0.0
      %717 = vmatpush1.msra.mxu0 0.0
      %718 = vmatprep.subr.mxu0 0.0
      %719 = vmatpush1.msra.mxu0 0.0
      %720 = vmatprep.subr.mxu0 0.0
      %721 = vmatpush1.msra.mxu0 0.0
      %722 = vmatprep.subr.mxu0 0.0
      %723 = vmatpush1.msra.mxu0 0.0
      %724 = vmatprep.subr.mxu0 0.0
      %725 = vmatpush1.msra.mxu0 0.0
      %726 = vmatprep.subr.mxu0 0.0
      %727 = vmatpush1.msra.mxu0 0.0
      %728 = vmatprep.subr.mxu0 0.0
      %729 = vmatpush1.msra.mxu0 0.0
      %730 = vmatprep.subr.mxu0 0.0
      %731 = vmatpush1.msra.mxu0 0.0
      %732 = vmatprep.subr.mxu0 0.0
      %733 = vmatpush1.msra.mxu0 0.0
      %734 = vmatprep.subr.mxu0 0.0
      %735 = vmatpush1.msra.mxu0 0.0
      %736 = vmatprep.subr.mxu0 0.0
      %737 = vmatpush1.msra.mxu0 0.0
      %738 = vmatprep.subr.mxu0 0.0
      %739 = vmatpush1.msra.mxu0 0.0
      %740 = vmatprep.subr.mxu0 0.0
      %741 = vmatpush1.msra.mxu0 0.0
      %742 = vmatprep.subr.mxu0 0.0
      %743 = vmatpush1.msra.mxu0 0.0
      %744 = vmatprep.mubr.f32.mxu0 0.0
      %745 = vmatmul.mubr.f32.gmra.mrb[0].mxu0 %v560
      %v746 = vpop.f32.mrb[0].mxu0
      %v747 = vadd.f32 %v678, %v746
      %v748 = vpop.f32.mrb[0].mxu0
      %749 = vdwg.mxu0
      %s750 = scalar_lea.vmem %s4, 1024
      %v751 = vld [vmem:[%s750] sm:$0xff]
      %v752 = vld [vmem:[%s750 + $0x8] sm:$0xff]
      %v753 = vld [vmem:[%s750 + $0x10] sm:$0xff]
      %v754 = vld [vmem:[%s750 + $0x18] sm:$0xff]
      %v755 = vld [vmem:[%s750 + $0x20] sm:$0xff]
      %v756 = vld [vmem:[%s750 + $0x28] sm:$0xff]
      %v757 = vld [vmem:[%s750 + $0x30] sm:$0xff]
      %v758 = vld [vmem:[%s750 + $0x38] sm:$0xff]
      %v759 = vld [vmem:[%s750 + $0x40] sm:$0xff]
      %v760 = vld [vmem:[%s750 + $0x48] sm:$0xff]
      %v761 = vld [vmem:[%s750 + $0x50] sm:$0xff]
      %v762 = vld [vmem:[%s750 + $0x58] sm:$0xff]
      %v763 = vld [vmem:[%s750 + $0x60] sm:$0xff]
      %v764 = vld [vmem:[%s750 + $0x68] sm:$0xff]
      %v765 = vld [vmem:[%s750 + $0x70] sm:$0xff]
      %v766 = vld [vmem:[%s750 + $0x78] sm:$0xff]
      %s767 = scalar_lea.vmem %s5, 8
      %v768 = vld [vmem:[%s767] sm:$0x1]
      %v770 = vlaneseq
      %v771 = vshrl.u32 %v770, 7
      %v772 = vsub.s32 0, %v771
      %v773 = vrot.slane %v768, %v772
      %775 = vmatprep.subr.mxu0 0.0
      %776 = vmatpush1.msra.mxu0 %v751
      %777 = vmatprep.subr.mxu0 0.0
      %778 = vmatpush1.msra.mxu0 %v752
      %779 = vmatprep.subr.mxu0 0.0
      %780 = vmatpush1.msra.mxu0 %v753
      %781 = vmatprep.subr.mxu0 0.0
      %782 = vmatpush1.msra.mxu0 %v754
      %783 = vmatprep.subr.mxu0 0.0
      %784 = vmatpush1.msra.mxu0 %v755
      %785 = vmatprep.subr.mxu0 0.0
      %786 = vmatpush1.msra.mxu0 %v756
      %787 = vmatprep.subr.mxu0 0.0
      %788 = vmatpush1.msra.mxu0 %v757
      %789 = vmatprep.subr.mxu0 0.0
      %790 = vmatpush1.msra.mxu0 %v758
      %791 = vmatprep.subr.mxu0 0.0
      %792 = vmatpush1.msra.mxu0 %v759
      %793 = vmatprep.subr.mxu0 0.0
      %794 = vmatpush1.msra.mxu0 %v760
      %795 = vmatprep.subr.mxu0 0.0
      %796 = vmatpush1.msra.mxu0 %v761
      %797 = vmatprep.subr.mxu0 0.0
      %798 = vmatpush1.msra.mxu0 %v762
      %799 = vmatprep.subr.mxu0 0.0
      %800 = vmatpush1.msra.mxu0 %v763
      %801 = vmatprep.subr.mxu0 0.0
      %802 = vmatpush1.msra.mxu0 %v764
      %803 = vmatprep.subr.mxu0 0.0
      %804 = vmatpush1.msra.mxu0 %v765
      %805 = vmatprep.subr.mxu0 0.0
      %806 = vmatpush1.msra.mxu0 %v766
      %807 = vmatprep.subr.mxu0 0.0
      %808 = vmatpush1.msra.mxu0 0.0
      %809 = vmatprep.subr.mxu0 0.0
      %810 = vmatpush1.msra.mxu0 0.0
      %811 = vmatprep.subr.mxu0 0.0
      %812 = vmatpush1.msra.mxu0 0.0
      %813 = vmatprep.subr.mxu0 0.0
      %814 = vmatpush1.msra.mxu0 0.0
      %815 = vmatprep.subr.mxu0 0.0
      %816 = vmatpush1.msra.mxu0 0.0
      %817 = vmatprep.subr.mxu0 0.0
      %818 = vmatpush1.msra.mxu0 0.0
      %819 = vmatprep.subr.mxu0 0.0
      %820 = vmatpush1.msra.mxu0 0.0
      %821 = vmatprep.subr.mxu0 0.0
      %822 = vmatpush1.msra.mxu0 0.0
      %823 = vmatprep.subr.mxu0 0.0
      %824 = vmatpush1.msra.mxu0 0.0
      %825 = vmatprep.subr.mxu0 0.0
      %826 = vmatpush1.msra.mxu0 0.0
      %827 = vmatprep.subr.mxu0 0.0
      %828 = vmatpush1.msra.mxu0 0.0
      %829 = vmatprep.subr.mxu0 0.0
      %830 = vmatpush1.msra.mxu0 0.0
      %831 = vmatprep.subr.mxu0 0.0
      %832 = vmatpush1.msra.mxu0 0.0
      %833 = vmatprep.subr.mxu0 0.0
      %834 = vmatpush1.msra.mxu0 0.0
      %835 = vmatprep.subr.mxu0 0.0
      %836 = vmatpush1.msra.mxu0 0.0
      %837 = vmatprep.subr.mxu0 0.0
      %838 = vmatpush1.msra.mxu0 0.0
      %839 = vmatprep.mubr.f32.mxu0 0.0
      %840 = vmatmul.mubr.f32.gmra.mrb[0].mxu0 %v560
      %v841 = vpop.f32.mrb[0].mxu0
      %v842 = vadd.f32 %v773, %v841
      %v843 = vpop.f32.mrb[0].mxu0
      %844 = vdwg.mxu0
      %v846 = vlaneseq
      %v847 = vshrl.u32 %v846, 7
      %v848 = vsub.s32 0, %v847
      %v849 = vrot.slane %v532, %v848
      %vm851 = vcmask 261120
      %v853 = vsel %vm851, %v654, 0
      %v856 = vsel %vm851, %v747, 0
      %858 = vmatprep.subr.mxu0 0.0
      %859 = vmatpush1.xpose.msra.mxu0 %v856
      %860 = vmatprep.subr.mxu0 0.0
      %861 = vmatpush1.xpose.msra.mxu0 0.0
      %862 = vmatprep.subr.mxu0 0.0
      %863 = vmatpush1.xpose.msra.mxu0 0.0
      %864 = vmatprep.subr.mxu0 0.0
      %865 = vmatpush1.xpose.msra.mxu0 0.0
      %866 = vmatprep.subr.mxu0 0.0
      %867 = vmatpush1.xpose.msra.mxu0 0.0
      %868 = vmatprep.subr.mxu0 0.0
      %869 = vmatpush1.xpose.msra.mxu0 0.0
      %870 = vmatprep.subr.mxu0 0.0
      %871 = vmatpush1.xpose.msra.mxu0 0.0
      %872 = vmatprep.subr.mxu0 0.0
      %873 = vmatpush1.xpose.msra.mxu0 0.0
      %874 = vmatprep.subr.mxu0 0.0
      %875 = vmatpush1.xpose.msra.mxu0 0.0
      %876 = vmatprep.subr.mxu0 0.0
      %877 = vmatpush1.xpose.msra.mxu0 0.0
      %878 = vmatprep.subr.mxu0 0.0
      %879 = vmatpush1.xpose.msra.mxu0 0.0
      %880 = vmatprep.subr.mxu0 0.0
      %881 = vmatpush1.xpose.msra.mxu0 0.0
      %882 = vmatprep.subr.mxu0 0.0
      %883 = vmatpush1.xpose.msra.mxu0 0.0
      %884 = vmatprep.subr.mxu0 0.0
      %885 = vmatpush1.xpose.msra.mxu0 0.0
      %886 = vmatprep.subr.mxu0 0.0
      %887 = vmatpush1.xpose.msra.mxu0 0.0
      %888 = vmatprep.subr.mxu0 0.0
      %889 = vmatpush1.xpose.msra.mxu0 0.0
      %890 = vmatprep.subr.mxu0 0.0
      %891 = vmatpush1.xpose.msra.mxu0 0.0
      %892 = vmatprep.subr.mxu0 0.0
      %893 = vmatpush1.xpose.msra.mxu0 0.0
      %894 = vmatprep.subr.mxu0 0.0
      %895 = vmatpush1.xpose.msra.mxu0 0.0
      %896 = vmatprep.subr.mxu0 0.0
      %897 = vmatpush1.xpose.msra.mxu0 0.0
      %898 = vmatprep.subr.mxu0 0.0
      %899 = vmatpush1.xpose.msra.mxu0 0.0
      %900 = vmatprep.subr.mxu0 0.0
      %901 = vmatpush1.xpose.msra.mxu0 0.0
      %902 = vmatprep.subr.mxu0 0.0
      %903 = vmatpush1.xpose.msra.mxu0 0.0
      %904 = vmatprep.subr.mxu0 0.0
      %905 = vmatpush1.xpose.msra.mxu0 0.0
      %906 = vmatprep.subr.mxu0 0.0
      %907 = vmatpush1.xpose.msra.mxu0 0.0
      %908 = vmatprep.subr.mxu0 0.0
      %909 = vmatpush1.xpose.msra.mxu0 0.0
      %910 = vmatprep.subr.mxu0 0.0
      %911 = vmatpush1.xpose.msra.mxu0 0.0
      %912 = vmatprep.subr.mxu0 0.0
      %913 = vmatpush1.xpose.msra.mxu0 0.0
      %914 = vmatprep.subr.mxu0 0.0
      %915 = vmatpush1.xpose.msra.mxu0 0.0
      %916 = vmatprep.subr.mxu0 0.0
      %917 = vmatpush1.xpose.msra.mxu0 0.0
      %918 = vmatprep.subr.mxu0 0.0
      %919 = vmatpush1.xpose.msra.mxu0 0.0
      %920 = vmatprep.subr.mxu0 0.0
      %921 = vmatpush1.xpose.msra.mxu0 0.0
      %922 = vmatprep.mubr.f32.mxu0 0.0
      %923 = vmatmul.mubr.f32.gmra.mrb[0].mxu0 %v853
      %v924 = vpop.f32.mrb[0].mxu0
      %v925 = vadd.f32 %v849, %v924
      %v926 = vpop.f32.mrb[0].mxu0
      %927 = vdwg.mxu0
      %vm928 = vcmask 64512
      %v929 = vsel %vm928, %v925, -inf
      %930 = vmax.xlane.f32.xlu0 %v929
      %v931 = vpop.xlane.xlu0 %930
      %v932 = vsub.f32 %v925, %v931
      %v933 = vmul.f32 %v932, 1.442695
      %v934 = vpow.pop %v933
      %v935 = vsel %vm928, %v934, 0.0
      %936 = vadd.xlane.f32.xlu0 %v935
      %v937 = vpop.xlane.xlu0 %936
      %v938 = vrcp.pop %v937
      %v939 = vmul.f32 %v934, %v938
      %v941 = vsel %vm928, %v939, 0
      %943 = vmatprep.subr.mxu0 0.0
      %944 = vmatpush1.msra.mxu0 %v842
      %945 = vmatprep.subr.mxu0 0.0
      %946 = vmatpush1.msra.mxu0 0.0
      %947 = vmatprep.subr.mxu0 0.0
      %948 = vmatpush1.msra.mxu0 0.0
      %949 = vmatprep.subr.mxu0 0.0
      %950 = vmatpush1.msra.mxu0 0.0
      %951 = vmatprep.subr.mxu0 0.0
      %952 = vmatpush1.msra.mxu0 0.0
      %953 = vmatprep.subr.mxu0 0.0
      %954 = vmatpush1.msra.mxu0 0.0
      %955 = vmatprep.subr.mxu0 0.0
      %956 = vmatpush1.msra.mxu0 0.0
      %957 = vmatprep.subr.mxu0 0.0
      %958 = vmatpush1.msra.mxu0 0.0
      %959 = vmatprep.subr.mxu0 0.0
      %960 = vmatpush1.msra.mxu0 0.0
      %961 = vmatprep.subr.mxu0 0.0
      %962 = vmatpush1.msra.mxu0 0.0
      %963 = vmatprep.subr.mxu0 0.0
      %964 = vmatpush1.msra.mxu0 0.0
      %965 = vmatprep.subr.mxu0 0.0
      %966 = vmatpush1.msra.mxu0 0.0
      %967 = vmatprep.subr.mxu0 0.0
      %968 = vmatpush1.msra.mxu0 0.0
      %969 = vmatprep.subr.mxu0 0.0
      %970 = vmatpush1.msra.mxu0 0.0
      %971 = vmatprep.subr.mxu0 0.0
      %972 = vmatpush1.msra.mxu0 0.0
      %973 = vmatprep.subr.mxu0 0.0
      %974 = vmatpush1.msra.mxu0 0.0
      %975 = vmatprep.subr.mxu0 0.0
      %976 = vmatpush1.msra.mxu0 0.0
      %977 = vmatprep.subr.mxu0 0.0
      %978 = vmatpush1.msra.mxu0 0.0
      %979 = vmatprep.subr.mxu0 0.0
      %980 = vmatpush1.msra.mxu0 0.0
      %981 = vmatprep.subr.mxu0 0.0
      %982 = vmatpush1.msra.mxu0 0.0
      %983 = vmatprep.subr.mxu0 0.0
      %984 = vmatpush1.msra.mxu0 0.0
      %985 = vmatprep.subr.mxu0 0.0
      %986 = vmatpush1.msra.mxu0 0.0
      %987 = vmatprep.subr.mxu0 0.0
      %988 = vmatpush1.msra.mxu0 0.0
      %989 = vmatprep.subr.mxu0 0.0
      %990 = vmatpush1.msra.mxu0 0.0
      %991 = vmatprep.subr.mxu0 0.0
      %992 = vmatpush1.msra.mxu0 0.0
      %993 = vmatprep.subr.mxu0 0.0
      %994 = vmatpush1.msra.mxu0 0.0
      %995 = vmatprep.subr.mxu0 0.0
      %996 = vmatpush1.msra.mxu0 0.0
      %997 = vmatprep.subr.mxu0 0.0
      %998 = vmatpush1.msra.mxu0 0.0
      %999 = vmatprep.subr.mxu0 0.0
      %1000 = vmatpush1.msra.mxu0 0.0
      %1001 = vmatprep.subr.mxu0 0.0
      %1002 = vmatpush1.msra.mxu0 0.0
      %1003 = vmatprep.subr.mxu0 0.0
      %1004 = vmatpush1.msra.mxu0 0.0
      %1005 = vmatprep.subr.mxu0 0.0
      %1006 = vmatpush1.msra.mxu0 0.0
      %1007 = vmatprep.mubr.f32.mxu0 0.0
      %1008 = vmatmul.mubr.f32.gmra.mrb[0].mxu0 %v941
      %v1009 = vpop.f32.mrb[0].mxu0
      %v1010 = vadd.f32 0.0, %v1009
      %v1011 = vpop.f32.mrb[0].mxu0
      %1012 = vdwg.mxu0
      %v1013 = vld [vmem:[%s6] sm:$0xff]
      %v1014 = vld [vmem:[%s6 + $0x8] sm:$0xff]
      %v1015 = vld [vmem:[%s6 + $0x10] sm:$0xff]
      %v1016 = vld [vmem:[%s6 + $0x18] sm:$0xff]
      %s1017 = scalar_lea.vmem %s4, 128
      %v1018 = vld [vmem:[%s1017] sm:$0xff]
      %v1019 = vld [vmem:[%s1017 + $0x8] sm:$0xff]
      %v1020 = vld [vmem:[%s1017 + $0x10] sm:$0xff]
      %v1021 = vld [vmem:[%s1017 + $0x18] sm:$0xff]
      %v1022 = vld [vmem:[%s1017 + $0x20] sm:$0xff]
      %v1023 = vld [vmem:[%s1017 + $0x28] sm:$0xff]
      %v1024 = vld [vmem:[%s1017 + $0x30] sm:$0xff]
      %v1025 = vld [vmem:[%s1017 + $0x38] sm:$0xff]
      %v1026 = vld [vmem:[%s1017 + $0x40] sm:$0xff]
      %v1027 = vld [vmem:[%s1017 + $0x48] sm:$0xff]
      %v1028 = vld [vmem:[%s1017 + $0x50] sm:$0xff]
      %v1029 = vld [vmem:[%s1017 + $0x58] sm:$0xff]
      %v1030 = vld [vmem:[%s1017 + $0x60] sm:$0xff]
      %v1031 = vld [vmem:[%s1017 + $0x68] sm:$0xff]
      %v1032 = vld [vmem:[%s1017 + $0x70] sm:$0xff]
      %v1033 = vld [vmem:[%s1017 + $0x78] sm:$0xff]
      %s1034 = scalar_lea.vmem %s5, 1
      %v1035 = vld [vmem:[%s1034] sm:$0x1]
      %v1037 = vlaneseq
      %v1038 = vshrl.u32 %v1037, 7
      %v1039 = vsub.s32 0, %v1038
      %v1040 = vrot.slane %v1035, %v1039
      %1042 = vmatprep.subr.mxu0 0.0
      %1043 = vmatpush1.msra.mxu0 %v1018
      %1044 = vmatprep.subr.mxu0 0.0
      %1045 = vmatpush1.msra.mxu0 %v1019
      %1046 = vmatprep.subr.mxu0 0.0
      %1047 = vmatpush1.msra.mxu0 %v1020
      %1048 = vmatprep.subr.mxu0 0.0
      %1049 = vmatpush1.msra.mxu0 %v1021
      %1050 = vmatprep.subr.mxu0 0.0
      %1051 = vmatpush1.msra.mxu0 %v1022
      %1052 = vmatprep.subr.mxu0 0.0
      %1053 = vmatpush1.msra.mxu0 %v1023
      %1054 = vmatprep.subr.mxu0 0.0
      %1055 = vmatpush1.msra.mxu0 %v1024
      %1056 = vmatprep.subr.mxu0 0.0
      %1057 = vmatpush1.msra.mxu0 %v1025
      %1058 = vmatprep.subr.mxu0 0.0
      %1059 = vmatpush1.msra.mxu0 %v1026
      %1060 = vmatprep.subr.mxu0 0.0
      %1061 = vmatpush1.msra.mxu0 %v1027
      %1062 = vmatprep.subr.mxu0 0.0
      %1063 = vmatpush1.msra.mxu0 %v1028
      %1064 = vmatprep.subr.mxu0 0.0
      %1065 = vmatpush1.msra.mxu0 %v1029
      %1066 = vmatprep.subr.mxu0 0.0
      %1067 = vmatpush1.msra.mxu0 %v1030
      %1068 = vmatprep.subr.mxu0 0.0
      %1069 = vmatpush1.msra.mxu0 %v1031
      %1070 = vmatprep.subr.mxu0 0.0
      %1071 = vmatpush1.msra.mxu0 %v1032
      %1072 = vmatprep.subr.mxu0 0.0
      %1073 = vmatpush1.msra.mxu0 %v1033
      %1074 = vmatprep.subr.mxu0 0.0
      %1075 = vmatpush1.msra.mxu0 0.0
      %1076 = vmatprep.subr.mxu0 0.0
      %1077 = vmatpush1.msra.mxu0 0.0
      %1078 = vmatprep.subr.mxu0 0.0
      %1079 = vmatpush1.msra.mxu0 0.0
      %1080 = vmatprep.subr.mxu0 0.0
      %1081 = vmatpush1.msra.mxu0 0.0
      %1082 = vmatprep.subr.mxu0 0.0
      %1083 = vmatpush1.msra.mxu0 0.0
      %1084 = vmatprep.subr.mxu0 0.0
      %1085 = vmatpush1.msra.mxu0 0.0
      %1086 = vmatprep.subr.mxu0 0.0
      %1087 = vmatpush1.msra.mxu0 0.0
      %1088 = vmatprep.subr.mxu0 0.0
      %1089 = vmatpush1.msra.mxu0 0.0
      %1090 = vmatprep.subr.mxu0 0.0
      %1091 = vmatpush1.msra.mxu0 0.0
      %1092 = vmatprep.subr.mxu0 0.0
      %1093 = vmatpush1.msra.mxu0 0.0
      %1094 = vmatprep.subr.mxu0 0.0
      %1095 = vmatpush1.msra.mxu0 0.0
      %1096 = vmatprep.subr.mxu0 0.0
      %1097 = vmatpush1.msra.mxu0 0.0
      %1098 = vmatprep.subr.mxu0 0.0
      %1099 = vmatpush1.msra.mxu0 0.0
      %1100 = vmatprep.subr.mxu0 0.0
      %1101 = vmatpush1.msra.mxu0 0.0
      %1102 = vmatprep.subr.mxu0 0.0
      %1103 = vmatpush1.msra.mxu0 0.0
      %1104 = vmatprep.subr.mxu0 0.0
      %1105 = vmatpush1.msra.mxu0 0.0
      %1106 = vmatprep.mubr.f32.mxu0 0.0
      %1107 = vmatmul.mubr.f32.gmra.mrb[0].mxu0 %v560
      %v1108 = vpop.f32.mrb[0].mxu0
      %v1109 = vadd.f32 %v1040, %v1108
      %v1110 = vpop.f32.mrb[0].mxu0
      %1111 = vdwg.mxu0
      %v1112 = vmul.f32 %v1109, 0.17677669
      %s1113 = scalar_lea.vmem %s4, 640
      %v1114 = vld [vmem:[%s1113] sm:$0xff]
      %v1115 = vld [vmem:[%s1113 + $0x8] sm:$0xff]
      %v1116 = vld [vmem:[%s1113 + $0x10] sm:$0xff]
      %v1117 = vld [vmem:[%s1113 + $0x18] sm:$0xff]
      %v1118 = vld [vmem:[%s1113 + $0x20] sm:$0xff]
      %v1119 = vld [vmem:[%s1113 + $0x28] sm:$0xff]
      %v1120 = vld [vmem:[%s1113 + $0x30] sm:$0xff]
      %v1121 = vld [vmem:[%s1113 + $0x38] sm:$0xff]
      %v1122 = vld [vmem:[%s1113 + $0x40] sm:$0xff]
      %v1123 = vld [vmem:[%s1113 + $0x48] sm:$0xff]
      %v1124 = vld [vmem:[%s1113 + $0x50] sm:$0xff]
      %v1125 = vld [vmem:[%s1113 + $0x58] sm:$0xff]
      %v1126 = vld [vmem:[%s1113 + $0x60] sm:$0xff]
      %v1127 = vld [vmem:[%s1113 + $0x68] sm:$0xff]
      %v1128 = vld [vmem:[%s1113 + $0x70] sm:$0xff]
      %v1129 = vld [vmem:[%s1113 + $0x78] sm:$0xff]
      %s1130 = scalar_lea.vmem %s5, 5
      %v1131 = vld [vmem:[%s1130] sm:$0x1]
      %v1133 = vlaneseq
      %v1134 = vshrl.u32 %v1133, 7
      %v1135 = vsub.s32 0, %v1134
      %v1136 = vrot.slane %v1131, %v1135
      %1138 = vmatprep.subr.mxu0 0.0
      %1139 = vmatpush1.msra.mxu0 %v1114
      %1140 = vmatprep.subr.mxu0 0.0
      %1141 = vmatpush1.msra.mxu0 %v1115
      %1142 = vmatprep.subr.mxu0 0.0
      %1143 = vmatpush1.msra.mxu0 %v1116
      %1144 = vmatprep.subr.mxu0 0.0
      %1145 = vmatpush1.msra.mxu0 %v1117
      %1146 = vmatprep.subr.mxu0 0.0
      %1147 = vmatpush1.msra.mxu0 %v1118
      %1148 = vmatprep.subr.mxu0 0.0
      %1149 = vmatpush1.msra.mxu0 %v1119
      %1150 = vmatprep.subr.mxu0 0.0
      %1151 = vmatpush1.msra.mxu0 %v1120
      %1152 = vmatprep.subr.mxu0 0.0
      %1153 = vmatpush1.msra.mxu0 %v1121
      %1154 = vmatprep.subr.mxu0 0.0
      %1155 = vmatpush1.msra.mxu0 %v1122
      %1156 = vmatprep.subr.mxu0 0.0
      %1157 = vmatpush1.msra.mxu0 %v1123
      %1158 = vmatprep.subr.mxu0 0.0
      %1159 = vmatpush1.msra.mxu0 %v1124
      %1160 = vmatprep.subr.mxu0 0.0
      %1161 = vmatpush1.msra.mxu0 %v1125
      %1162 = vmatprep.subr.mxu0 0.0
      %1163 = vmatpush1.msra.mxu0 %v1126
      %1164 = vmatprep.subr.mxu0 0.0
      %1165 = vmatpush1.msra.mxu0 %v1127
      %1166 = vmatprep.subr.mxu0 0.0
      %1167 = vmatpush1.msra.mxu0 %v1128
      %1168 = vmatprep.subr.mxu0 0.0
      %1169 = vmatpush1.msra.mxu0 %v1129
      %1170 = vmatprep.subr.mxu0 0.0
      %1171 = vmatpush1.msra.mxu0 0.0
      %1172 = vmatprep.subr.mxu0 0.0
      %1173 = vmatpush1.msra.mxu0 0.0
      %1174 = vmatprep.subr.mxu0 0.0
      %1175 = vmatpush1.msra.mxu0 0.0
      %1176 = vmatprep.subr.mxu0 0.0
      %1177 = vmatpush1.msra.mxu0 0.0
      %1178 = vmatprep.subr.mxu0 0.0
      %1179 = vmatpush1.msra.mxu0 0.0
      %1180 = vmatprep.subr.mxu0 0.0
      %1181 = vmatpush1.msra.mxu0 0.0
      %1182 = vmatprep.subr.mxu0 0.0
      %1183 = vmatpush1.msra.mxu0 0.0
      %1184 = vmatprep.subr.mxu0 0.0
      %1185 = vmatpush1.msra.mxu0 0.0
      %1186 = vmatprep.subr.mxu0 0.0
      %1187 = vmatpush1.msra.mxu0 0.0
      %1188 = vmatprep.subr.mxu0 0.0
      %1189 = vmatpush1.msra.mxu0 0.0
      %1190 = vmatprep.subr.mxu0 0.0
      %1191 = vmatpush1.msra.mxu0 0.0
      %1192 = vmatprep.subr.mxu0 0.0
      %1193 = vmatpush1.msra.mxu0 0.0
      %1194 = vmatprep.subr.mxu0 0.0
      %1195 = vmatpush1.msra.mxu0 0.0
      %1196 = vmatprep.subr.mxu0 0.0
      %1197 = vmatpush1.msra.mxu0 0.0
      %1198 = vmatprep.subr.mxu0 0.0
      %1199 = vmatpush1.msra.mxu0 0.0
      %1200 = vmatprep.subr.mxu0 0.0
      %1201 = vmatpush1.msra.mxu0 0.0
      %1202 = vmatprep.mubr.f32.mxu0 0.0
      %1203 = vmatmul.mubr.f32.gmra.mrb[0].mxu0 %v560
      %v1204 = vpop.f32.mrb[0].mxu0
      %v1205 = vadd.f32 %v1136, %v1204
      %v1206 = vpop.f32.mrb[0].mxu0
      %1207 = vdwg.mxu0
      %s1208 = scalar_lea.vmem %s4, 1152
      %v1209 = vld [vmem:[%s1208] sm:$0xff]
      %v1210 = vld [vmem:[%s1208 + $0x8] sm:$0xff]
      %v1211 = vld [vmem:[%s1208 + $0x10] sm:$0xff]
      %v1212 = vld [vmem:[%s1208 + $0x18] sm:$0xff]
      %v1213 = vld [vmem:[%s1208 + $0x20] sm:$0xff]
      %v1214 = vld [vmem:[%s1208 + $0x28] sm:$0xff]
      %v1215 = vld [vmem:[%s1208 + $0x30] sm:$0xff]
      %v1216 = vld [vmem:[%s1208 + $0x38] sm:$0xff]
      %v1217 = vld [vmem:[%s1208 + $0x40] sm:$0xff]
      %v1218 = vld [vmem:[%s1208 + $0x48] sm:$0xff]
      %v1219 = vld [vmem:[%s1208 + $0x50] sm:$0xff]
      %v1220 = vld [vmem:[%s1208 + $0x58] sm:$0xff]
      %v1221 = vld [vmem:[%s1208 + $0x60] sm:$0xff]
      %v1222 = vld [vmem:[%s1208 + $0x68] sm:$0xff]
      %v1223 = vld [vmem:[%s1208 + $0x70] sm:$0xff]
      %v1224 = vld [vmem:[%s1208 + $0x78] sm:$0xff]
      %s1225 = scalar_lea.vmem %s5, 9
      %v1226 = vld [vmem:[%s1225] sm:$0x1]
      %v1228 = vlaneseq
      %v1229 = vshrl.u32 %v1228, 7
      %v1230 = vsub.s32 0, %v1229
      %v1231 = vrot.slane %v1226, %v1230
      %1233 = vmatprep.subr.mxu0 0.0
      %1234 = vmatpush1.msra.mxu0 %v1209
      %1235 = vmatprep.subr.mxu0 0.0
      %1236 = vmatpush1.msra.mxu0 %v1210
      %1237 = vmatprep.subr.mxu0 0.0
      %1238 = vmatpush1.msra.mxu0 %v1211
      %1239 = vmatprep.subr.mxu0 0.0
      %1240 = vmatpush1.msra.mxu0 %v1212
      %1241 = vmatprep.subr.mxu0 0.0
      %1242 = vmatpush1.msra.mxu0 %v1213
      %1243 = vmatprep.subr.mxu0 0.0
      %1244 = vmatpush1.msra.mxu0 %v1214
      %1245 = vmatprep.subr.mxu0 0.0
      %1246 = vmatpush1.msra.mxu0 %v1215
      %1247 = vmatprep.subr.mxu0 0.0
      %1248 = vmatpush1.msra.mxu0 %v1216
      %1249 = vmatprep.subr.mxu0 0.0
      %1250 = vmatpush1.msra.mxu0 %v1217
      %1251 = vmatprep.subr.mxu0 0.0
      %1252 = vmatpush1.msra.mxu0 %v1218
      %1253 = vmatprep.subr.mxu0 0.0
      %1254 = vmatpush1.msra.mxu0 %v1219
      %1255 = vmatprep.subr.mxu0 0.0
      %1256 = vmatpush1.msra.mxu0 %v1220
      %1257 = vmatprep.subr.mxu0 0.0
      %1258 = vmatpush1.msra.mxu0 %v1221
      %1259 = vmatprep.subr.mxu0 0.0
      %1260 = vmatpush1.msra.mxu0 %v1222
      %1261 = vmatprep.subr.mxu0 0.0
      %1262 = vmatpush1.msra.mxu0 %v1223
      %1263 = vmatprep.subr.mxu0 0.0
      %1264 = vmatpush1.msra.mxu0 %v1224
      %1265 = vmatprep.subr.mxu0 0.0
      %1266 = vmatpush1.msra.mxu0 0.0
      %1267 = vmatprep.subr.mxu0 0.0
      %1268 = vmatpush1.msra.mxu0 0.0
      %1269 = vmatprep.subr.mxu0 0.0
      %1270 = vmatpush1.msra.mxu0 0.0
      %1271 = vmatprep.subr.mxu0 0.0
      %1272 = vmatpush1.msra.mxu0 0.0
      %1273 = vmatprep.subr.mxu0 0.0
      %1274 = vmatpush1.msra.mxu0 0.0
      %1275 = vmatprep.subr.mxu0 0.0
      %1276 = vmatpush1.msra.mxu0 0.0
      %1277 = vmatprep.subr.mxu0 0.0
      %1278 = vmatpush1.msra.mxu0 0.0
      %1279 = vmatprep.subr.mxu0 0.0
      %1280 = vmatpush1.msra.mxu0 0.0
      %1281 = vmatprep.subr.mxu0 0.0
      %1282 = vmatpush1.msra.mxu0 0.0
      %1283 = vmatprep.subr.mxu0 0.0
      %1284 = vmatpush1.msra.mxu0 0.0
      %1285 = vmatprep.subr.mxu0 0.0
      %1286 = vmatpush1.msra.mxu0 0.0
      %1287 = vmatprep.subr.mxu0 0.0
      %1288 = vmatpush1.msra.mxu0 0.0
      %1289 = vmatprep.subr.mxu0 0.0
      %1290 = vmatpush1.msra.mxu0 0.0
      %1291 = vmatprep.subr.mxu0 0.0
      %1292 = vmatpush1.msra.mxu0 0.0
      %1293 = vmatprep.subr.mxu0 0.0
      %1294 = vmatpush1.msra.mxu0 0.0
      %1295 = vmatprep.subr.mxu0 0.0
      %1296 = vmatpush1.msra.mxu0 0.0
      %1297 = vmatprep.mubr.f32.mxu0 0.0
      %1298 = vmatmul.mubr.f32.gmra.mrb[0].mxu0 %v560
      %v1299 = vpop.f32.mrb[0].mxu0
      %v1300 = vadd.f32 %v1231, %v1299
      %v1301 = vpop.f32.mrb[0].mxu0
      %1302 = vdwg.mxu0
      %v1304 = vsel %vm851, %v1112, 0
      %v1307 = vsel %vm851, %v1205, 0
      %1309 = vmatprep.subr.mxu0 0.0
      %1310 = vmatpush1.xpose.msra.mxu0 %v1307
      %1311 = vmatprep.subr.mxu0 0.0
      %1312 = vmatpush1.xpose.msra.mxu0 0.0
      %1313 = vmatprep.subr.mxu0 0.0
      %1314 = vmatpush1.xpose.msra.mxu0 0.0
      %1315 = vmatprep.subr.mxu0 0.0
      %1316 = vmatpush1.xpose.msra.mxu0 0.0
      %1317 = vmatprep.subr.mxu0 0.0
      %1318 = vmatpush1.xpose.msra.mxu0 0.0
      %1319 = vmatprep.subr.mxu0 0.0
      %1320 = vmatpush1.xpose.msra.mxu0 0.0
      %1321 = vmatprep.subr.mxu0 0.0
      %1322 = vmatpush1.xpose.msra.mxu0 0.0
      %1323 = vmatprep.subr.mxu0 0.0
      %1324 = vmatpush1.xpose.msra.mxu0 0.0
      %1325 = vmatprep.subr.mxu0 0.0
      %1326 = vmatpush1.xpose.msra.mxu0 0.0
      %1327 = vmatprep.subr.mxu0 0.0
      %1328 = vmatpush1.xpose.msra.mxu0 0.0
      %1329 = vmatprep.subr.mxu0 0.0
      %1330 = vmatpush1.xpose.msra.mxu0 0.0
      %1331 = vmatprep.subr.mxu0 0.0
      %1332 = vmatpush1.xpose.msra.mxu0 0.0
      %1333 = vmatprep.subr.mxu0 0.0
      %1334 = vmatpush1.xpose.msra.mxu0 0.0
      %1335 = vmatprep.subr.mxu0 0.0
      %1336 = vmatpush1.xpose.msra.mxu0 0.0
      %1337 = vmatprep.subr.mxu0 0.0
      %1338 = vmatpush1.xpose.msra.mxu0 0.0
      %1339 = vmatprep.subr.mxu0 0.0
      %1340 = vmatpush1.xpose.msra.mxu0 0.0
      %1341 = vmatprep.subr.mxu0 0.0
      %1342 = vmatpush1.xpose.msra.mxu0 0.0
      %1343 = vmatprep.subr.mxu0 0.0
      %1344 = vmatpush1.xpose.msra.mxu0 0.0
      %1345 = vmatprep.subr.mxu0 0.0
      %1346 = vmatpush1.xpose.msra.mxu0 0.0
      %1347 = vmatprep.subr.mxu0 0.0
      %1348 = vmatpush1.xpose.msra.mxu0 0.0
      %1349 = vmatprep.subr.mxu0 0.0
      %1350 = vmatpush1.xpose.msra.mxu0 0.0
      %1351 = vmatprep.subr.mxu0 0.0
      %1352 = vmatpush1.xpose.msra.mxu0 0.0
      %1353 = vmatprep.subr.mxu0 0.0
      %1354 = vmatpush1.xpose.msra.mxu0 0.0
      %1355 = vmatprep.subr.mxu0 0.0
      %1356 = vmatpush1.xpose.msra.mxu0 0.0
      %1357 = vmatprep.subr.mxu0 0.0
      %1358 = vmatpush1.xpose.msra.mxu0 0.0
      %1359 = vmatprep.subr.mxu0 0.0
      %1360 = vmatpush1.xpose.msra.mxu0 0.0
      %1361 = vmatprep.subr.mxu0 0.0
      %1362 = vmatpush1.xpose.msra.mxu0 0.0
      %1363 = vmatprep.subr.mxu0 0.0
      %1364 = vmatpush1.xpose.msra.mxu0 0.0
      %1365 = vmatprep.subr.mxu0 0.0
      %1366 = vmatpush1.xpose.msra.mxu0 0.0
      %1367 = vmatprep.subr.mxu0 0.0
      %1368 = vmatpush1.xpose.msra.mxu0 0.0
      %1369 = vmatprep.subr.mxu0 0.0
      %1370 = vmatpush1.xpose.msra.mxu0 0.0
      %1371 = vmatprep.subr.mxu0 0.0
      %1372 = vmatpush1.xpose.msra.mxu0 0.0
      %1373 = vmatprep.mubr.f32.mxu0 0.0
      %1374 = vmatmul.mubr.f32.gmra.mrb[0].mxu0 %v1304
      %v1375 = vpop.f32.mrb[0].mxu0
      %v1376 = vadd.f32 %v849, %v1375
      %v1377 = vpop.f32.mrb[0].mxu0
      %1378 = vdwg.mxu0
      %v1379 = vsel %vm928, %v1376, -inf
      %1380 = vmax.xlane.f32.xlu0 %v1379
      %v1381 = vpop.xlane.xlu0 %1380
      %v1382 = vsub.f32 %v1376, %v1381
      %v1383 = vmul.f32 %v1382, 1.442695
      %v1384 = vpow.pop %v1383
      %v1385 = vsel %vm928, %v1384, 0.0
      %1386 = vadd.xlane.f32.xlu0 %v1385
      %v1387 = vpop.xlane.xlu0 %1386
      %v1388 = vrcp.pop %v1387
      %v1389 = vmul.f32 %v1384, %v1388
      %v1391 = vsel %vm928, %v1389, 0
      %1393 = vmatprep.subr.mxu0 0.0
      %1394 = vmatpush1.msra.mxu0 %v1300
      %1395 = vmatprep.subr.mxu0 0.0
      %1396 = vmatpush1.msra.mxu0 0.0
      %1397 = vmatprep.subr.mxu0 0.0
      %1398 = vmatpush1.msra.mxu0 0.0
      %1399 = vmatprep.subr.mxu0 0.0
      %1400 = vmatpush1.msra.mxu0 0.0
      %1401 = vmatprep.subr.mxu0 0.0
      %1402 = vmatpush1.msra.mxu0 0.0
      %1403 = vmatprep.subr.mxu0 0.0
      %1404 = vmatpush1.msra.mxu0 0.0
      %1405 = vmatprep.subr.mxu0 0.0
      %1406 = vmatpush1.msra.mxu0 0.0
      %1407 = vmatprep.subr.mxu0 0.0
      %1408 = vmatpush1.msra.mxu0 0.0
      %1409 = vmatprep.subr.mxu0 0.0
      %1410 = vmatpush1.msra.mxu0 0.0
      %1411 = vmatprep.subr.mxu0 0.0
      %1412 = vmatpush1.msra.mxu0 0.0
      %1413 = vmatprep.subr.mxu0 0.0
      %1414 = vmatpush1.msra.mxu0 0.0
      %1415 = vmatprep.subr.mxu0 0.0
      %1416 = vmatpush1.msra.mxu0 0.0
      %1417 = vmatprep.subr.mxu0 0.0
      %1418 = vmatpush1.msra.mxu0 0.0
      %1419 = vmatprep.subr.mxu0 0.0
      %1420 = vmatpush1.msra.mxu0 0.0
      %1421 = vmatprep.subr.mxu0 0.0
      %1422 = vmatpush1.msra.mxu0 0.0
      %1423 = vmatprep.subr.mxu0 0.0
      %1424 = vmatpush1.msra.mxu0 0.0
      %1425 = vmatprep.subr.mxu0 0.0
      %1426 = vmatpush1.msra.mxu0 0.0
      %1427 = vmatprep.subr.mxu0 0.0
      %1428 = vmatpush1.msra.mxu0 0.0
      %1429 = vmatprep.subr.mxu0 0.0
      %1430 = vmatpush1.msra.mxu0 0.0
      %1431 = vmatprep.subr.mxu0 0.0
      %1432 = vmatpush1.msra.mxu0 0.0
      %1433 = vmatprep.subr.mxu0 0.0
      %1434 = vmatpush1.msra.mxu0 0.0
      %1435 = vmatprep.subr.mxu0 0.0
      %1436 = vmatpush1.msra.mxu0 0.0
      %1437 = vmatprep.subr.mxu0 0.0
      %1438 = vmatpush1.msra.mxu0 0.0
      %1439 = vmatprep.subr.mxu0 0.0
      %1440 = vmatpush1.msra.mxu0 0.0
      %1441 = vmatprep.subr.mxu0 0.0
      %1442 = vmatpush1.msra.mxu0 0.0
      %1443 = vmatprep.subr.mxu0 0.0
      %1444 = vmatpush1.msra.mxu0 0.0
      %1445 = vmatprep.subr.mxu0 0.0
      %1446 = vmatpush1.msra.mxu0 0.0
      %1447 = vmatprep.subr.mxu0 0.0
      %1448 = vmatpush1.msra.mxu0 0.0
      %1449 = vmatprep.subr.mxu0 0.0
      %1450 = vmatpush1.msra.mxu0 0.0
      %1451 = vmatprep.subr.mxu0 0.0
      %1452 = vmatpush1.msra.mxu0 0.0
      %1453 = vmatprep.subr.mxu0 0.0
      %1454 = vmatpush1.msra.mxu0 0.0
      %1455 = vmatprep.subr.mxu0 0.0
      %1456 = vmatpush1.msra.mxu0 0.0
      %1457 = vmatprep.mubr.f32.mxu0 0.0
      %1458 = vmatmul.mubr.f32.gmra.mrb[0].mxu0 %v1391
      %v1459 = vpop.f32.mrb[0].mxu0
      %v1460 = vadd.f32 0.0, %v1459
      %v1461 = vpop.f32.mrb[0].mxu0
      %1462 = vdwg.mxu0
      %s1463 = scalar_lea.vmem %s6, 32
      %v1464 = vld [vmem:[%s1463] sm:$0xff]
      %v1465 = vld [vmem:[%s1463 + $0x8] sm:$0xff]
      %v1466 = vld [vmem:[%s1463 + $0x10] sm:$0xff]
      %v1467 = vld [vmem:[%s1463 + $0x18] sm:$0xff]
      %v1469 = vsel %vm851, %v1460, 0
      %1471 = vmatprep.subr.mxu0 0.0
      %1472 = vmatpush1.msra.mxu0 %v1464
      %1473 = vmatprep.subr.mxu0 0.0
      %1474 = vmatpush1.msra.mxu0 %v1465
      %1475 = vmatprep.subr.mxu0 0.0
      %1476 = vmatpush1.msra.mxu0 %v1466
      %1477 = vmatprep.subr.mxu0 0.0
      %1478 = vmatpush1.msra.mxu0 %v1467
      %1479 = vmatprep.subr.mxu0 0.0
      %1480 = vmatpush1.msra.mxu0 0.0
      %1481 = vmatprep.subr.mxu0 0.0
      %1482 = vmatpush1.msra.mxu0 0.0
      %1483 = vmatprep.subr.mxu0 0.0
      %1484 = vmatpush1.msra.mxu0 0.0
      %1485 = vmatprep.subr.mxu0 0.0
      %1486 = vmatpush1.msra.mxu0 0.0
      %1487 = vmatprep.subr.mxu0 0.0
      %1488 = vmatpush1.msra.mxu0 0.0
      %1489 = vmatprep.subr.mxu0 0.0
      %1490 = vmatpush1.msra.mxu0 0.0
      %1491 = vmatprep.subr.mxu0 0.0
      %1492 = vmatpush1.msra.mxu0 0.0
      %1493 = vmatprep.subr.mxu0 0.0
      %1494 = vmatpush1.msra.mxu0 0.0
      %1495 = vmatprep.subr.mxu0 0.0
      %1496 = vmatpush1.msra.mxu0 0.0
      %1497 = vmatprep.subr.mxu0 0.0
      %1498 = vmatpush1.msra.mxu0 0.0
      %1499 = vmatprep.subr.mxu0 0.0
      %1500 = vmatpush1.msra.mxu0 0.0
      %1501 = vmatprep.subr.mxu0 0.0
      %1502 = vmatpush1.msra.mxu0 0.0
      %1503 = vmatprep.subr.mxu0 0.0
      %1504 = vmatpush1.msra.mxu0 0.0
      %1505 = vmatprep.subr.mxu0 0.0
      %1506 = vmatpush1.msra.mxu0 0.0
      %1507 = vmatprep.subr.mxu0 0.0
      %1508 = vmatpush1.msra.mxu0 0.0
      %1509 = vmatprep.subr.mxu0 0.0
      %1510 = vmatpush1.msra.mxu0 0.0
      %1511 = vmatprep.subr.mxu0 0.0
      %1512 = vmatpush1.msra.mxu0 0.0
      %1513 = vmatprep.subr.mxu0 0.0
      %1514 = vmatpush1.msra.mxu0 0.0
      %1515 = vmatprep.subr.mxu0 0.0
      %1516 = vmatpush1.msra.mxu0 0.0
      %1517 = vmatprep.subr.mxu0 0.0
      %1518 = vmatpush1.msra.mxu0 0.0
      %1519 = vmatprep.subr.mxu0 0.0
      %1520 = vmatpush1.msra.mxu0 0.0
      %1521 = vmatprep.subr.mxu0 0.0
      %1522 = vmatpush1.msra.mxu0 0.0
      %1523 = vmatprep.subr.mxu0 0.0
      %1524 = vmatpush1.msra.mxu0 0.0
      %1525 = vmatprep.subr.mxu0 0.0
      %1526 = vmatpush1.msra.mxu0 0.0
      %1527 = vmatprep.subr.mxu0 0.0
      %1528 = vmatpush1.msra.mxu0 0.0
      %1529 = vmatprep.subr.mxu0 0.0
      %1530 = vmatpush1.msra.mxu0 0.0
      %1531 = vmatprep.subr.mxu0 0.0
      %1532 = vmatpush1.msra.mxu0 0.0
      %1533 = vmatprep.subr.mxu0 0.0
      %1534 = vmatpush1.msra.mxu0 0.0
      %1535 = vmatprep.mubr.f32.mxu0 0.0
      %1536 = vmatmul.mubr.f32.gmra.mrb[0].mxu0 %v1469
      %v1537 = vpop.f32.mrb[0].mxu0
      %v1538 = vadd.f32 0.0, %v1537
      %v1539 = vpop.f32.mrb[0].mxu0
      %1540 = vdwg.mxu0
      %v1542 = vsel %vm851, %v1010, 0
      %1544 = vmatprep.subr.mxu0 0.0
      %1545 = vmatpush1.msra.mxu0 %v1013
      %1546 = vmatprep.subr.mxu0 0.0
      %1547 = vmatpush1.msra.mxu0 %v1014
      %1548 = vmatprep.subr.mxu0 0.0
      %1549 = vmatpush1.msra.mxu0 %v1015
      %1550 = vmatprep.subr.mxu0 0.0
      %1551 = vmatpush1.msra.mxu0 %v1016
      %1552 = vmatprep.subr.mxu0 0.0
      %1553 = vmatpush1.msra.mxu0 0.0
      %1554 = vmatprep.subr.mxu0 0.0
      %1555 = vmatpush1.msra.mxu0 0.0
      %1556 = vmatprep.subr.mxu0 0.0
      %1557 = vmatpush1.msra.mxu0 0.0
      %1558 = vmatprep.subr.mxu0 0.0
      %1559 = vmatpush1.msra.mxu0 0.0
      %1560 = vmatprep.subr.mxu0 0.0
      %1561 = vmatpush1.msra.mxu0 0.0
      %1562 = vmatprep.subr.mxu0 0.0
      %1563 = vmatpush1.msra.mxu0 0.0
      %1564 = vmatprep.subr.mxu0 0.0
      %1565 = vmatpush1.msra.mxu0 0.0
      %1566 = vmatprep.subr.mxu0 0.0
      %1567 = vmatpush1.msra.mxu0 0.0
      %1568 = vmatprep.subr.mxu0 0.0
      %1569 = vmatpush1.msra.mxu0 0.0
      %1570 = vmatprep.subr.mxu0 0.0
      %1571 = vmatpush1.msra.mxu0 0.0
      %1572 = vmatprep.subr.mxu0 0.0
      %1573 = vmatpush1.msra.mxu0 0.0
      %1574 = vmatprep.subr.mxu0 0.0
      %1575 = vmatpush1.msra.mxu0 0.0
      %1576 = vmatprep.subr.mxu0 0.0
      %1577 = vmatpush1.msra.mxu0 0.0
      %1578 = vmatprep.subr.mxu0 0.0
      %1579 = vmatpush1.msra.mxu0 0.0
      %1580 = vmatprep.subr.mxu0 0.0
      %1581 = vmatpush1.msra.mxu0 0.0
      %1582 = vmatprep.subr.mxu0 0.0
      %1583 = vmatpush1.msra.mxu0 0.0
      %1584 = vmatprep.subr.mxu0 0.0
      %1585 = vmatpush1.msra.mxu0 0.0
      %1586 = vmatprep.subr.mxu0 0.0
      %1587 = vmatpush1.msra.mxu0 0.0
      %1588 = vmatprep.subr.mxu0 0.0
      %1589 = vmatpush1.msra.mxu0 0.0
      %1590 = vmatprep.subr.mxu0 0.0
      %1591 = vmatpush1.msra.mxu0 0.0
      %1592 = vmatprep.subr.mxu0 0.0
      %1593 = vmatpush1.msra.mxu0 0.0
      %1594 = vmatprep.subr.mxu0 0.0
      %1595 = vmatpush1.msra.mxu0 0.0
      %1596 = vmatprep.subr.mxu0 0.0
      %1597 = vmatpush1.msra.mxu0 0.0
      %1598 = vmatprep.subr.mxu0 0.0
      %1599 = vmatpush1.msra.mxu0 0.0
      %1600 = vmatprep.subr.mxu0 0.0
      %1601 = vmatpush1.msra.mxu0 0.0
      %1602 = vmatprep.subr.mxu0 0.0
      %1603 = vmatpush1.msra.mxu0 0.0
      %1604 = vmatprep.subr.mxu0 0.0
      %1605 = vmatpush1.msra.mxu0 0.0
      %1606 = vmatprep.subr.mxu0 0.0
      %1607 = vmatpush1.msra.mxu0 0.0
      %1608 = vmatprep.mubr.f32.mxu0 0.0
      %1609 = vmatmul.mubr.f32.gmra.mrb[0].mxu0 %v1542
      %v1610 = vpop.f32.mrb[0].mxu0
      %v1611 = vadd.f32 %v1538, %v1610
      %v1612 = vpop.f32.mrb[0].mxu0
      %1613 = vdwg.mxu0
      %s1614 = scalar_lea.vmem %s4, 256
      %v1615 = vld [vmem:[%s1614] sm:$0xff]
      %v1616 = vld [vmem:[%s1614 + $0x8] sm:$0xff]
      %v1617 = vld [vmem:[%s1614 + $0x10] sm:$0xff]
      %v1618 = vld [vmem:[%s1614 + $0x18] sm:$0xff]
      %v1619 = vld [vmem:[%s1614 + $0x20] sm:$0xff]
      %v1620 = vld [vmem:[%s1614 + $0x28] sm:$0xff]
      %v1621 = vld [vmem:[%s1614 + $0x30] sm:$0xff]
      %v1622 = vld [vmem:[%s1614 + $0x38] sm:$0xff]
      %v1623 = vld [vmem:[%s1614 + $0x40] sm:$0xff]
      %v1624 = vld [vmem:[%s1614 + $0x48] sm:$0xff]
      %v1625 = vld [vmem:[%s1614 + $0x50] sm:$0xff]
      %v1626 = vld [vmem:[%s1614 + $0x58] sm:$0xff]
      %v1627 = vld [vmem:[%s1614 + $0x60] sm:$0xff]
      %v1628 = vld [vmem:[%s1614 + $0x68] sm:$0xff]
      %v1629 = vld [vmem:[%s1614 + $0x70] sm:$0xff]
      %v1630 = vld [vmem:[%s1614 + $0x78] sm:$0xff]
      %s1631 = scalar_lea.vmem %s5, 2
      %v1632 = vld [vmem:[%s1631] sm:$0x1]
      %v1634 = vlaneseq
      %v1635 = vshrl.u32 %v1634, 7
      %v1636 = vsub.s32 0, %v1635
      %v1637 = vrot.slane %v1632, %v1636
      %1639 = vmatprep.subr.mxu0 0.0
      %1640 = vmatpush1.msra.mxu0 %v1615
      %1641 = vmatprep.subr.mxu0 0.0
      %1642 = vmatpush1.msra.mxu0 %v1616
      %1643 = vmatprep.subr.mxu0 0.0
      %1644 = vmatpush1.msra.mxu0 %v1617
      %1645 = vmatprep.subr.mxu0 0.0
      %1646 = vmatpush1.msra.mxu0 %v1618
      %1647 = vmatprep.subr.mxu0 0.0
      %1648 = vmatpush1.msra.mxu0 %v1619
      %1649 = vmatprep.subr.mxu0 0.0
      %1650 = vmatpush1.msra.mxu0 %v1620
      %1651 = vmatprep.subr.mxu0 0.0
      %1652 = vmatpush1.msra.mxu0 %v1621
      %1653 = vmatprep.subr.mxu0 0.0
      %1654 = vmatpush1.msra.mxu0 %v1622
      %1655 = vmatprep.subr.mxu0 0.0
      %1656 = vmatpush1.msra.mxu0 %v1623
      %1657 = vmatprep.subr.mxu0 0.0
      %1658 = vmatpush1.msra.mxu0 %v1624
      %1659 = vmatprep.subr.mxu0 0.0
      %1660 = vmatpush1.msra.mxu0 %v1625
      %1661 = vmatprep.subr.mxu0 0.0
      %1662 = vmatpush1.msra.mxu0 %v1626
      %1663 = vmatprep.subr.mxu0 0.0
      %1664 = vmatpush1.msra.mxu0 %v1627
      %1665 = vmatprep.subr.mxu0 0.0
      %1666 = vmatpush1.msra.mxu0 %v1628
      %1667 = vmatprep.subr.mxu0 0.0
      %1668 = vmatpush1.msra.mxu0 %v1629
      %1669 = vmatprep.subr.mxu0 0.0
      %1670 = vmatpush1.msra.mxu0 %v1630
      %1671 = vmatprep.subr.mxu0 0.0
      %1672 = vmatpush1.msra.mxu0 0.0
      %1673 = vmatprep.subr.mxu0 0.0
      %1674 = vmatpush1.msra.mxu0 0.0
      %1675 = vmatprep.subr.mxu0 0.0
      %1676 = vmatpush1.msra.mxu0 0.0
      %1677 = vmatprep.subr.mxu0 0.0
      %1678 = vmatpush1.msra.mxu0 0.0
      %1679 = vmatprep.subr.mxu0 0.0
      %1680 = vmatpush1.msra.mxu0 0.0
      %1681 = vmatprep.subr.mxu0 0.0
      %1682 = vmatpush1.msra.mxu0 0.0
      %1683 = vmatprep.subr.mxu0 0.0
      %1684 = vmatpush1.msra.mxu0 0.0
      %1685 = vmatprep.subr.mxu0 0.0
      %1686 = vmatpush1.msra.mxu0 0.0
      %1687 = vmatprep.subr.mxu0 0.0
      %1688 = vmatpush1.msra.mxu0 0.0
      %1689 = vmatprep.subr.mxu0 0.0
      %1690 = vmatpush1.msra.mxu0 0.0
      %1691 = vmatprep.subr.mxu0 0.0
      %1692 = vmatpush1.msra.mxu0 0.0
      %1693 = vmatprep.subr.mxu0 0.0
      %1694 = vmatpush1.msra.mxu0 0.0
      %1695 = vmatprep.subr.mxu0 0.0
      %1696 = vmatpush1.msra.mxu0 0.0
      %1697 = vmatprep.subr.mxu0 0.0
      %1698 = vmatpush1.msra.mxu0 0.0
      %1699 = vmatprep.subr.mxu0 0.0
      %1700 = vmatpush1.msra.mxu0 0.0
      %1701 = vmatprep.subr.mxu0 0.0
      %1702 = vmatpush1.msra.mxu0 0.0
      %1703 = vmatprep.mubr.f32.mxu0 0.0
      %1704 = vmatmul.mubr.f32.gmra.mrb[0].mxu0 %v560
      %v1705 = vpop.f32.mrb[0].mxu0
      %v1706 = vadd.f32 %v1637, %v1705
      %v1707 = vpop.f32.mrb[0].mxu0
      %1708 = vdwg.mxu0
      %v1709 = vmul.f32 %v1706, 0.17677669
      %s1710 = scalar_lea.vmem %s4, 768
      %v1711 = vld [vmem:[%s1710] sm:$0xff]
      %v1712 = vld [vmem:[%s1710 + $0x8] sm:$0xff]
      %v1713 = vld [vmem:[%s1710 + $0x10] sm:$0xff]
      %v1714 = vld [vmem:[%s1710 + $0x18] sm:$0xff]
      %v1715 = vld [vmem:[%s1710 + $0x20] sm:$0xff]
      %v1716 = vld [vmem:[%s1710 + $0x28] sm:$0xff]
      %v1717 = vld [vmem:[%s1710 + $0x30] sm:$0xff]
      %v1718 = vld [vmem:[%s1710 + $0x38] sm:$0xff]
      %v1719 = vld [vmem:[%s1710 + $0x40] sm:$0xff]
      %v1720 = vld [vmem:[%s1710 + $0x48] sm:$0xff]
      %v1721 = vld [vmem:[%s1710 + $0x50] sm:$0xff]
      %v1722 = vld [vmem:[%s1710 + $0x58] sm:$0xff]
      %v1723 = vld [vmem:[%s1710 + $0x60] sm:$0xff]
      %v1724 = vld [vmem:[%s1710 + $0x68] sm:$0xff]
      %v1725 = vld [vmem:[%s1710 + $0x70] sm:$0xff]
      %v1726 = vld [vmem:[%s1710 + $0x78] sm:$0xff]
      %s1727 = scalar_lea.vmem %s5, 6
      %v1728 = vld [vmem:[%s1727] sm:$0x1]
      %v1730 = vlaneseq
      %v1731 = vshrl.u32 %v1730, 7
      %v1732 = vsub.s32 0, %v1731
      %v1733 = vrot.slane %v1728, %v1732
      %1735 = vmatprep.subr.mxu0 0.0
      %1736 = vmatpush1.msra.mxu0 %v1711
      %1737 = vmatprep.subr.mxu0 0.0
      %1738 = vmatpush1.msra.mxu0 %v1712
      %1739 = vmatprep.subr.mxu0 0.0
      %1740 = vmatpush1.msra.mxu0 %v1713
      %1741 = vmatprep.subr.mxu0 0.0
      %1742 = vmatpush1.msra.mxu0 %v1714
      %1743 = vmatprep.subr.mxu0 0.0
      %1744 = vmatpush1.msra.mxu0 %v1715
      %1745 = vmatprep.subr.mxu0 0.0
      %1746 = vmatpush1.msra.mxu0 %v1716
      %1747 = vmatprep.subr.mxu0 0.0
      %1748 = vmatpush1.msra.mxu0 %v1717
      %1749 = vmatprep.subr.mxu0 0.0
      %1750 = vmatpush1.msra.mxu0 %v1718
      %1751 = vmatprep.subr.mxu0 0.0
      %1752 = vmatpush1.msra.mxu0 %v1719
      %1753 = vmatprep.subr.mxu0 0.0
      %1754 = vmatpush1.msra.mxu0 %v1720
      %1755 = vmatprep.subr.mxu0 0.0
      %1756 = vmatpush1.msra.mxu0 %v1721
      %1757 = vmatprep.subr.mxu0 0.0
      %1758 = vmatpush1.msra.mxu0 %v1722
      %1759 = vmatprep.subr.mxu0 0.0
      %1760 = vmatpush1.msra.mxu0 %v1723
      %1761 = vmatprep.subr.mxu0 0.0
      %1762 = vmatpush1.msra.mxu0 %v1724
      %1763 = vmatprep.subr.mxu0 0.0
      %1764 = vmatpush1.msra.mxu0 %v1725
      %1765 = vmatprep.subr.mxu0 0.0
      %1766 = vmatpush1.msra.mxu0 %v1726
      %1767 = vmatprep.subr.mxu0 0.0
      %1768 = vmatpush1.msra.mxu0 0.0
      %1769 = vmatprep.subr.mxu0 0.0
      %1770 = vmatpush1.msra.mxu0 0.0
      %1771 = vmatprep.subr.mxu0 0.0
      %1772 = vmatpush1.msra.mxu0 0.0
      %1773 = vmatprep.subr.mxu0 0.0
      %1774 = vmatpush1.msra.mxu0 0.0
      %1775 = vmatprep.subr.mxu0 0.0
      %1776 = vmatpush1.msra.mxu0 0.0
      %1777 = vmatprep.subr.mxu0 0.0
      %1778 = vmatpush1.msra.mxu0 0.0
      %1779 = vmatprep.subr.mxu0 0.0
      %1780 = vmatpush1.msra.mxu0 0.0
      %1781 = vmatprep.subr.mxu0 0.0
      %1782 = vmatpush1.msra.mxu0 0.0
      %1783 = vmatprep.subr.mxu0 0.0
      %1784 = vmatpush1.msra.mxu0 0.0
      %1785 = vmatprep.subr.mxu0 0.0
      %1786 = vmatpush1.msra.mxu0 0.0
      %1787 = vmatprep.subr.mxu0 0.0
      %1788 = vmatpush1.msra.mxu0 0.0
      %1789 = vmatprep.subr.mxu0 0.0
      %1790 = vmatpush1.msra.mxu0 0.0
      %1791 = vmatprep.subr.mxu0 0.0
      %1792 = vmatpush1.msra.mxu0 0.0
      %1793 = vmatprep.subr.mxu0 0.0
      %1794 = vmatpush1.msra.mxu0 0.0
      %1795 = vmatprep.subr.mxu0 0.0
      %1796 = vmatpush1.msra.mxu0 0.0
      %1797 = vmatprep.subr.mxu0 0.0
      %1798 = vmatpush1.msra.mxu0 0.0
      %1799 = vmatprep.mubr.f32.mxu0 0.0
      %1800 = vmatmul.mubr.f32.gmra.mrb[0].mxu0 %v560
      %v1801 = vpop.f32.mrb[0].mxu0
      %v1802 = vadd.f32 %v1733, %v1801
      %v1803 = vpop.f32.mrb[0].mxu0
      %1804 = vdwg.mxu0
      %s1805 = scalar_lea.vmem %s4, 1280
      %v1806 = vld [vmem:[%s1805] sm:$0xff]
      %v1807 = vld [vmem:[%s1805 + $0x8] sm:$0xff]
      %v1808 = vld [vmem:[%s1805 + $0x10] sm:$0xff]
      %v1809 = vld [vmem:[%s1805 + $0x18] sm:$0xff]
      %v1810 = vld [vmem:[%s1805 + $0x20] sm:$0xff]
      %v1811 = vld [vmem:[%s1805 + $0x28] sm:$0xff]
      %v1812 = vld [vmem:[%s1805 + $0x30] sm:$0xff]
      %v1813 = vld [vmem:[%s1805 + $0x38] sm:$0xff]
      %v1814 = vld [vmem:[%s1805 + $0x40] sm:$0xff]
      %v1815 = vld [vmem:[%s1805 + $0x48] sm:$0xff]
      %v1816 = vld [vmem:[%s1805 + $0x50] sm:$0xff]
      %v1817 = vld [vmem:[%s1805 + $0x58] sm:$0xff]
      %v1818 = vld [vmem:[%s1805 + $0x60] sm:$0xff]
      %v1819 = vld [vmem:[%s1805 + $0x68] sm:$0xff]
      %v1820 = vld [vmem:[%s1805 + $0x70] sm:$0xff]
      %v1821 = vld [vmem:[%s1805 + $0x78] sm:$0xff]
      %s1822 = scalar_lea.vmem %s5, 10
      %v1823 = vld [vmem:[%s1822] sm:$0x1]
      %v1825 = vlaneseq
      %v1826 = vshrl.u32 %v1825, 7
      %v1827 = vsub.s32 0, %v1826
      %v1828 = vrot.slane %v1823, %v1827
      %1830 = vmatprep.subr.mxu0 0.0
      %1831 = vmatpush1.msra.mxu0 %v1806
      %1832 = vmatprep.subr.mxu0 0.0
      %1833 = vmatpush1.msra.mxu0 %v1807
      %1834 = vmatprep.subr.mxu0 0.0
      %1835 = vmatpush1.msra.mxu0 %v1808
      %1836 = vmatprep.subr.mxu0 0.0
      %1837 = vmatpush1.msra.mxu0 %v1809
      %1838 = vmatprep.subr.mxu0 0.0
      %1839 = vmatpush1.msra.mxu0 %v1810
      %1840 = vmatprep.subr.mxu0 0.0
      %1841 = vmatpush1.msra.mxu0 %v1811
      %1842 = vmatprep.subr.mxu0 0.0
      %1843 = vmatpush1.msra.mxu0 %v1812
      %1844 = vmatprep.subr.mxu0 0.0
      %1845 = vmatpush1.msra.mxu0 %v1813
      %1846 = vmatprep.subr.mxu0 0.0
      %1847 = vmatpush1.msra.mxu0 %v1814
      %1848 = vmatprep.subr.mxu0 0.0
      %1849 = vmatpush1.msra.mxu0 %v1815
      %1850 = vmatprep.subr.mxu0 0.0
      %1851 = vmatpush1.msra.mxu0 %v1816
      %1852 = vmatprep.subr.mxu0 0.0
      %1853 = vmatpush1.msra.mxu0 %v1817
      %1854 = vmatprep.subr.mxu0 0.0
      %1855 = vmatpush1.msra.mxu0 %v1818
      %1856 = vmatprep.subr.mxu0 0.0
      %1857 = vmatpush1.msra.mxu0 %v1819
      %1858 = vmatprep.subr.mxu0 0.0
      %1859 = vmatpush1.msra.mxu0 %v1820
      %1860 = vmatprep.subr.mxu0 0.0
      %1861 = vmatpush1.msra.mxu0 %v1821
      %1862 = vmatprep.subr.mxu0 0.0
      %1863 = vmatpush1.msra.mxu0 0.0
      %1864 = vmatprep.subr.mxu0 0.0
      %1865 = vmatpush1.msra.mxu0 0.0
      %1866 = vmatprep.subr.mxu0 0.0
      %1867 = vmatpush1.msra.mxu0 0.0
      %1868 = vmatprep.subr.mxu0 0.0
      %1869 = vmatpush1.msra.mxu0 0.0
      %1870 = vmatprep.subr.mxu0 0.0
      %1871 = vmatpush1.msra.mxu0 0.0
      %1872 = vmatprep.subr.mxu0 0.0
      %1873 = vmatpush1.msra.mxu0 0.0
      %1874 = vmatprep.subr.mxu0 0.0
      %1875 = vmatpush1.msra.mxu0 0.0
      %1876 = vmatprep.subr.mxu0 0.0
      %1877 = vmatpush1.msra.mxu0 0.0
      %1878 = vmatprep.subr.mxu0 0.0
      %1879 = vmatpush1.msra.mxu0 0.0
      %1880 = vmatprep.subr.mxu0 0.0
      %1881 = vmatpush1.msra.mxu0 0.0
      %1882 = vmatprep.subr.mxu0 0.0
      %1883 = vmatpush1.msra.mxu0 0.0
      %1884 = vmatprep.subr.mxu0 0.0
      %1885 = vmatpush1.msra.mxu0 0.0
      %1886 = vmatprep.subr.mxu0 0.0
      %1887 = vmatpush1.msra.mxu0 0.0
      %1888 = vmatprep.subr.mxu0 0.0
      %1889 = vmatpush1.msra.mxu0 0.0
      %1890 = vmatprep.subr.mxu0 0.0
      %1891 = vmatpush1.msra.mxu0 0.0
      %1892 = vmatprep.subr.mxu0 0.0
      %1893 = vmatpush1.msra.mxu0 0.0
      %1894 = vmatprep.mubr.f32.mxu0 0.0
      %1895 = vmatmul.mubr.f32.gmra.mrb[0].mxu0 %v560
      %v1896 = vpop.f32.mrb[0].mxu0
      %v1897 = vadd.f32 %v1828, %v1896
      %v1898 = vpop.f32.mrb[0].mxu0
      %1899 = vdwg.mxu0
      %v1901 = vsel %vm851, %v1709, 0
      %v1904 = vsel %vm851, %v1802, 0
      %1906 = vmatprep.subr.mxu0 0.0
      %1907 = vmatpush1.xpose.msra.mxu0 %v1904
      %1908 = vmatprep.subr.mxu0 0.0
      %1909 = vmatpush1.xpose.msra.mxu0 0.0
      %1910 = vmatprep.subr.mxu0 0.0
      %1911 = vmatpush1.xpose.msra.mxu0 0.0
      %1912 = vmatprep.subr.mxu0 0.0
      %1913 = vmatpush1.xpose.msra.mxu0 0.0
      %1914 = vmatprep.subr.mxu0 0.0
      %1915 = vmatpush1.xpose.msra.mxu0 0.0
      %1916 = vmatprep.subr.mxu0 0.0
      %1917 = vmatpush1.xpose.msra.mxu0 0.0
      %1918 = vmatprep.subr.mxu0 0.0
      %1919 = vmatpush1.xpose.msra.mxu0 0.0
      %1920 = vmatprep.subr.mxu0 0.0
      %1921 = vmatpush1.xpose.msra.mxu0 0.0
      %1922 = vmatprep.subr.mxu0 0.0
      %1923 = vmatpush1.xpose.msra.mxu0 0.0
      %1924 = vmatprep.subr.mxu0 0.0
      %1925 = vmatpush1.xpose.msra.mxu0 0.0
      %1926 = vmatprep.subr.mxu0 0.0
      %1927 = vmatpush1.xpose.msra.mxu0 0.0
      %1928 = vmatprep.subr.mxu0 0.0
      %1929 = vmatpush1.xpose.msra.mxu0 0.0
      %1930 = vmatprep.subr.mxu0 0.0
      %1931 = vmatpush1.xpose.msra.mxu0 0.0
      %1932 = vmatprep.subr.mxu0 0.0
      %1933 = vmatpush1.xpose.msra.mxu0 0.0
      %1934 = vmatprep.subr.mxu0 0.0
      %1935 = vmatpush1.xpose.msra.mxu0 0.0
      %1936 = vmatprep.subr.mxu0 0.0
      %1937 = vmatpush1.xpose.msra.mxu0 0.0
      %1938 = vmatprep.subr.mxu0 0.0
      %1939 = vmatpush1.xpose.msra.mxu0 0.0
      %1940 = vmatprep.subr.mxu0 0.0
      %1941 = vmatpush1.xpose.msra.mxu0 0.0
      %1942 = vmatprep.subr.mxu0 0.0
      %1943 = vmatpush1.xpose.msra.mxu0 0.0
      %1944 = vmatprep.subr.mxu0 0.0
      %1945 = vmatpush1.xpose.msra.mxu0 0.0
      %1946 = vmatprep.subr.mxu0 0.0
      %1947 = vmatpush1.xpose.msra.mxu0 0.0
      %1948 = vmatprep.subr.mxu0 0.0
      %1949 = vmatpush1.xpose.msra.mxu0 0.0
      %1950 = vmatprep.subr.mxu0 0.0
      %1951 = vmatpush1.xpose.msra.mxu0 0.0
      %1952 = vmatprep.subr.mxu0 0.0
      %1953 = vmatpush1.xpose.msra.mxu0 0.0
      %1954 = vmatprep.subr.mxu0 0.0
      %1955 = vmatpush1.xpose.msra.mxu0 0.0
      %1956 = vmatprep.subr.mxu0 0.0
      %1957 = vmatpush1.xpose.msra.mxu0 0.0
      %1958 = vmatprep.subr.mxu0 0.0
      %1959 = vmatpush1.xpose.msra.mxu0 0.0
      %1960 = vmatprep.subr.mxu0 0.0
      %1961 = vmatpush1.xpose.msra.mxu0 0.0
      %1962 = vmatprep.subr.mxu0 0.0
      %1963 = vmatpush1.xpose.msra.mxu0 0.0
      %1964 = vmatprep.subr.mxu0 0.0
      %1965 = vmatpush1.xpose.msra.mxu0 0.0
      %1966 = vmatprep.subr.mxu0 0.0
      %1967 = vmatpush1.xpose.msra.mxu0 0.0
      %1968 = vmatprep.subr.mxu0 0.0
      %1969 = vmatpush1.xpose.msra.mxu0 0.0
      %1970 = vmatprep.mubr.f32.mxu0 0.0
      %1971 = vmatmul.mubr.f32.gmra.mrb[0].mxu0 %v1901
      %v1972 = vpop.f32.mrb[0].mxu0
      %v1973 = vadd.f32 %v849, %v1972
      %v1974 = vpop.f32.mrb[0].mxu0
      %1975 = vdwg.mxu0
      %v1976 = vsel %vm928, %v1973, -inf
      %1977 = vmax.xlane.f32.xlu0 %v1976
      %v1978 = vpop.xlane.xlu0 %1977
      %v1979 = vsub.f32 %v1973, %v1978
      %v1980 = vmul.f32 %v1979, 1.442695
      %v1981 = vpow.pop %v1980
      %v1982 = vsel %vm928, %v1981, 0.0
      %1983 = vadd.xlane.f32.xlu0 %v1982
      %v1984 = vpop.xlane.xlu0 %1983
      %v1985 = vrcp.pop %v1984
      %v1986 = vmul.f32 %v1981, %v1985
      %v1988 = vsel %vm928, %v1986, 0
      %1990 = vmatprep.subr.mxu0 0.0
      %1991 = vmatpush1.msra.mxu0 %v1897
      %1992 = vmatprep.subr.mxu0 0.0
      %1993 = vmatpush1.msra.mxu0 0.0
      %1994 = vmatprep.subr.mxu0 0.0
      %1995 = vmatpush1.msra.mxu0 0.0
      %1996 = vmatprep.subr.mxu0 0.0
      %1997 = vmatpush1.msra.mxu0 0.0
      %1998 = vmatprep.subr.mxu0 0.0
      %1999 = vmatpush1.msra.mxu0 0.0
      %2000 = vmatprep.subr.mxu0 0.0
      %2001 = vmatpush1.msra.mxu0 0.0
      %2002 = vmatprep.subr.mxu0 0.0
      %2003 = vmatpush1.msra.mxu0 0.0
      %2004 = vmatprep.subr.mxu0 0.0
      %2005 = vmatpush1.msra.mxu0 0.0
      %2006 = vmatprep.subr.mxu0 0.0
      %2007 = vmatpush1.msra.mxu0 0.0
      %2008 = vmatprep.subr.mxu0 0.0
      %2009 = vmatpush1.msra.mxu0 0.0
      %2010 = vmatprep.subr.mxu0 0.0
      %2011 = vmatpush1.msra.mxu0 0.0
      %2012 = vmatprep.subr.mxu0 0.0
      %2013 = vmatpush1.msra.mxu0 0.0
      %2014 = vmatprep.subr.mxu0 0.0
      %2015 = vmatpush1.msra.mxu0 0.0
      %2016 = vmatprep.subr.mxu0 0.0
      %2017 = vmatpush1.msra.mxu0 0.0
      %2018 = vmatprep.subr.mxu0 0.0
      %2019 = vmatpush1.msra.mxu0 0.0
      %2020 = vmatprep.subr.mxu0 0.0
      %2021 = vmatpush1.msra.mxu0 0.0
      %2022 = vmatprep.subr.mxu0 0.0
      %2023 = vmatpush1.msra.mxu0 0.0
      %2024 = vmatprep.subr.mxu0 0.0
      %2025 = vmatpush1.msra.mxu0 0.0
      %2026 = vmatprep.subr.mxu0 0.0
      %2027 = vmatpush1.msra.mxu0 0.0
      %2028 = vmatprep.subr.mxu0 0.0
      %2029 = vmatpush1.msra.mxu0 0.0
      %2030 = vmatprep.subr.mxu0 0.0
      %2031 = vmatpush1.msra.mxu0 0.0
      %2032 = vmatprep.subr.mxu0 0.0
      %2033 = vmatpush1.msra.mxu0 0.0
      %2034 = vmatprep.subr.mxu0 0.0
      %2035 = vmatpush1.msra.mxu0 0.0
      %2036 = vmatprep.subr.mxu0 0.0
      %2037 = vmatpush1.msra.mxu0 0.0
      %2038 = vmatprep.subr.mxu0 0.0
      %2039 = vmatpush1.msra.mxu0 0.0
      %2040 = vmatprep.subr.mxu0 0.0
      %2041 = vmatpush1.msra.mxu0 0.0
      %2042 = vmatprep.subr.mxu0 0.0
      %2043 = vmatpush1.msra.mxu0 0.0
      %2044 = vmatprep.subr.mxu0 0.0
      %2045 = vmatpush1.msra.mxu0 0.0
      %2046 = vmatprep.subr.mxu0 0.0
      %2047 = vmatpush1.msra.mxu0 0.0
      %2048 = vmatprep.subr.mxu0 0.0
      %2049 = vmatpush1.msra.mxu0 0.0
      %2050 = vmatprep.subr.mxu0 0.0
      %2051 = vmatpush1.msra.mxu0 0.0
      %2052 = vmatprep.subr.mxu0 0.0
      %2053 = vmatpush1.msra.mxu0 0.0
      %2054 = vmatprep.mubr.f32.mxu0 0.0
      %2055 = vmatmul.mubr.f32.gmra.mrb[0].mxu0 %v1988
      %v2056 = vpop.f32.mrb[0].mxu0
      %v2057 = vadd.f32 0.0, %v2056
      %v2058 = vpop.f32.mrb[0].mxu0
      %2059 = vdwg.mxu0
      %s2060 = scalar_lea.vmem %s6, 64
      %v2061 = vld [vmem:[%s2060] sm:$0xff]
      %v2062 = vld [vmem:[%s2060 + $0x8] sm:$0xff]
      %v2063 = vld [vmem:[%s2060 + $0x10] sm:$0xff]
      %v2064 = vld [vmem:[%s2060 + $0x18] sm:$0xff]
      %v2066 = vsel %vm851, %v2057, 0
      %2068 = vmatprep.subr.mxu0 0.0
      %2069 = vmatpush1.msra.mxu0 %v2061
      %2070 = vmatprep.subr.mxu0 0.0
      %2071 = vmatpush1.msra.mxu0 %v2062
      %2072 = vmatprep.subr.mxu0 0.0
      %2073 = vmatpush1.msra.mxu0 %v2063
      %2074 = vmatprep.subr.mxu0 0.0
      %2075 = vmatpush1.msra.mxu0 %v2064
      %2076 = vmatprep.subr.mxu0 0.0
      %2077 = vmatpush1.msra.mxu0 0.0
      %2078 = vmatprep.subr.mxu0 0.0
      %2079 = vmatpush1.msra.mxu0 0.0
      %2080 = vmatprep.subr.mxu0 0.0
      %2081 = vmatpush1.msra.mxu0 0.0
      %2082 = vmatprep.subr.mxu0 0.0
      %2083 = vmatpush1.msra.mxu0 0.0
      %2084 = vmatprep.subr.mxu0 0.0
      %2085 = vmatpush1.msra.mxu0 0.0
      %2086 = vmatprep.subr.mxu0 0.0
      %2087 = vmatpush1.msra.mxu0 0.0
      %2088 = vmatprep.subr.mxu0 0.0
      %2089 = vmatpush1.msra.mxu0 0.0
      %2090 = vmatprep.subr.mxu0 0.0
      %2091 = vmatpush1.msra.mxu0 0.0
      %2092 = vmatprep.subr.mxu0 0.0
      %2093 = vmatpush1.msra.mxu0 0.0
      %2094 = vmatprep.subr.mxu0 0.0
      %2095 = vmatpush1.msra.mxu0 0.0
      %2096 = vmatprep.subr.mxu0 0.0
      %2097 = vmatpush1.msra.mxu0 0.0
      %2098 = vmatprep.subr.mxu0 0.0
      %2099 = vmatpush1.msra.mxu0 0.0
      %2100 = vmatprep.subr.mxu0 0.0
      %2101 = vmatpush1.msra.mxu0 0.0
      %2102 = vmatprep.subr.mxu0 0.0
      %2103 = vmatpush1.msra.mxu0 0.0
      %2104 = vmatprep.subr.mxu0 0.0
      %2105 = vmatpush1.msra.mxu0 0.0
      %2106 = vmatprep.subr.mxu0 0.0
      %2107 = vmatpush1.msra.mxu0 0.0
      %2108 = vmatprep.subr.mxu0 0.0
      %2109 = vmatpush1.msra.mxu0 0.0
      %2110 = vmatprep.subr.mxu0 0.0
      %2111 = vmatpush1.msra.mxu0 0.0
      %2112 = vmatprep.subr.mxu0 0.0
      %2113 = vmatpush1.msra.mxu0 0.0
      %2114 = vmatprep.subr.mxu0 0.0
      %2115 = vmatpush1.msra.mxu0 0.0
      %2116 = vmatprep.subr.mxu0 0.0
      %2117 = vmatpush1.msra.mxu0 0.0
      %2118 = vmatprep.subr.mxu0 0.0
      %2119 = vmatpush1.msra.mxu0 0.0
      %2120 = vmatprep.subr.mxu0 0.0
      %2121 = vmatpush1.msra.mxu0 0.0
      %2122 = vmatprep.subr.mxu0 0.0
      %2123 = vmatpush1.msra.mxu0 0.0
      %2124 = vmatprep.subr.mxu0 0.0
      %2125 = vmatpush1.msra.mxu0 0.0
      %2126 = vmatprep.subr.mxu0 0.0
      %2127 = vmatpush1.msra.mxu0 0.0
      %2128 = vmatprep.subr.mxu0 0.0
      %2129 = vmatpush1.msra.mxu0 0.0
      %2130 = vmatprep.subr.mxu0 0.0
      %2131 = vmatpush1.msra.mxu0 0.0
      %2132 = vmatprep.mubr.f32.mxu0 0.0
      %2133 = vmatmul.mubr.f32.gmra.mrb[0].mxu0 %v2066
      %v2134 = vpop.f32.mrb[0].mxu0
      %v2135 = vadd.f32 0.0, %v2134
      %v2136 = vpop.f32.mrb[0].mxu0
      %2137 = vdwg.mxu0
      %v2138 = vadd.f32 %v1611, %v2135
      %s2139 = scalar_lea.vmem %s4, 384
      %v2140 = vld [vmem:[%s2139] sm:$0xff]
      %v2141 = vld [vmem:[%s2139 + $0x8] sm:$0xff]
      %v2142 = vld [vmem:[%s2139 + $0x10] sm:$0xff]
      %v2143 = vld [vmem:[%s2139 + $0x18] sm:$0xff]
      %v2144 = vld [vmem:[%s2139 + $0x20] sm:$0xff]
      %v2145 = vld [vmem:[%s2139 + $0x28] sm:$0xff]
      %v2146 = vld [vmem:[%s2139 + $0x30] sm:$0xff]
      %v2147 = vld [vmem:[%s2139 + $0x38] sm:$0xff]
      %v2148 = vld [vmem:[%s2139 + $0x40] sm:$0xff]
      %v2149 = vld [vmem:[%s2139 + $0x48] sm:$0xff]
      %v2150 = vld [vmem:[%s2139 + $0x50] sm:$0xff]
      %v2151 = vld [vmem:[%s2139 + $0x58] sm:$0xff]
      %v2152 = vld [vmem:[%s2139 + $0x60] sm:$0xff]
      %v2153 = vld [vmem:[%s2139 + $0x68] sm:$0xff]
      %v2154 = vld [vmem:[%s2139 + $0x70] sm:$0xff]
      %v2155 = vld [vmem:[%s2139 + $0x78] sm:$0xff]
      %s2156 = scalar_lea.vmem %s5, 3
      %v2157 = vld [vmem:[%s2156] sm:$0x1]
      %v2159 = vlaneseq
      %v2160 = vshrl.u32 %v2159, 7
      %v2161 = vsub.s32 0, %v2160
      %v2162 = vrot.slane %v2157, %v2161
      %2164 = vmatprep.subr.mxu0 0.0
      %2165 = vmatpush1.msra.mxu0 %v2140
      %2166 = vmatprep.subr.mxu0 0.0
      %2167 = vmatpush1.msra.mxu0 %v2141
      %2168 = vmatprep.subr.mxu0 0.0
      %2169 = vmatpush1.msra.mxu0 %v2142
      %2170 = vmatprep.subr.mxu0 0.0
      %2171 = vmatpush1.msra.mxu0 %v2143
      %2172 = vmatprep.subr.mxu0 0.0
      %2173 = vmatpush1.msra.mxu0 %v2144
      %2174 = vmatprep.subr.mxu0 0.0
      %2175 = vmatpush1.msra.mxu0 %v2145
      %2176 = vmatprep.subr.mxu0 0.0
      %2177 = vmatpush1.msra.mxu0 %v2146
      %2178 = vmatprep.subr.mxu0 0.0
      %2179 = vmatpush1.msra.mxu0 %v2147
      %2180 = vmatprep.subr.mxu0 0.0
      %2181 = vmatpush1.msra.mxu0 %v2148
      %2182 = vmatprep.subr.mxu0 0.0
      %2183 = vmatpush1.msra.mxu0 %v2149
      %2184 = vmatprep.subr.mxu0 0.0
      %2185 = vmatpush1.msra.mxu0 %v2150
      %2186 = vmatprep.subr.mxu0 0.0
      %2187 = vmatpush1.msra.mxu0 %v2151
      %2188 = vmatprep.subr.mxu0 0.0
      %2189 = vmatpush1.msra.mxu0 %v2152
      %2190 = vmatprep.subr.mxu0 0.0
      %2191 = vmatpush1.msra.mxu0 %v2153
      %2192 = vmatprep.subr.mxu0 0.0
      %2193 = vmatpush1.msra.mxu0 %v2154
      %2194 = vmatprep.subr.mxu0 0.0
      %2195 = vmatpush1.msra.mxu0 %v2155
      %2196 = vmatprep.subr.mxu0 0.0
      %2197 = vmatpush1.msra.mxu0 0.0
      %2198 = vmatprep.subr.mxu0 0.0
      %2199 = vmatpush1.msra.mxu0 0.0
      %2200 = vmatprep.subr.mxu0 0.0
      %2201 = vmatpush1.msra.mxu0 0.0
      %2202 = vmatprep.subr.mxu0 0.0
      %2203 = vmatpush1.msra.mxu0 0.0
      %2204 = vmatprep.subr.mxu0 0.0
      %2205 = vmatpush1.msra.mxu0 0.0
      %2206 = vmatprep.subr.mxu0 0.0
      %2207 = vmatpush1.msra.mxu0 0.0
      %2208 = vmatprep.subr.mxu0 0.0
      %2209 = vmatpush1.msra.mxu0 0.0
      %2210 = vmatprep.subr.mxu0 0.0
      %2211 = vmatpush1.msra.mxu0 0.0
      %2212 = vmatprep.subr.mxu0 0.0
      %2213 = vmatpush1.msra.mxu0 0.0
      %2214 = vmatprep.subr.mxu0 0.0
      %2215 = vmatpush1.msra.mxu0 0.0
      %2216 = vmatprep.subr.mxu0 0.0
      %2217 = vmatpush1.msra.mxu0 0.0
      %2218 = vmatprep.subr.mxu0 0.0
      %2219 = vmatpush1.msra.mxu0 0.0
      %2220 = vmatprep.subr.mxu0 0.0
      %2221 = vmatpush1.msra.mxu0 0.0
      %2222 = vmatprep.subr.mxu0 0.0
      %2223 = vmatpush1.msra.mxu0 0.0
      %2224 = vmatprep.subr.mxu0 0.0
      %2225 = vmatpush1.msra.mxu0 0.0
      %2226 = vmatprep.subr.mxu0 0.0
      %2227 = vmatpush1.msra.mxu0 0.0
      %2228 = vmatprep.mubr.f32.mxu0 0.0
      %2229 = vmatmul.mubr.f32.gmra.mrb[0].mxu0 %v560
      %v2230 = vpop.f32.mrb[0].mxu0
      %v2231 = vadd.f32 %v2162, %v2230
      %v2232 = vpop.f32.mrb[0].mxu0
      %2233 = vdwg.mxu0
      %v2234 = vmul.f32 %v2231, 0.17677669
      %s2235 = scalar_lea.vmem %s4, 896
      %v2236 = vld [vmem:[%s2235] sm:$0xff]
      %v2237 = vld [vmem:[%s2235 + $0x8] sm:$0xff]
      %v2238 = vld [vmem:[%s2235 + $0x10] sm:$0xff]
      %v2239 = vld [vmem:[%s2235 + $0x18] sm:$0xff]
      %v2240 = vld [vmem:[%s2235 + $0x20] sm:$0xff]
      %v2241 = vld [vmem:[%s2235 + $0x28] sm:$0xff]
      %v2242 = vld [vmem:[%s2235 + $0x30] sm:$0xff]
      %v2243 = vld [vmem:[%s2235 + $0x38] sm:$0xff]
      %v2244 = vld [vmem:[%s2235 + $0x40] sm:$0xff]
      %v2245 = vld [vmem:[%s2235 + $0x48] sm:$0xff]
      %v2246 = vld [vmem:[%s2235 + $0x50] sm:$0xff]
      %v2247 = vld [vmem:[%s2235 + $0x58] sm:$0xff]
      %v2248 = vld [vmem:[%s2235 + $0x60] sm:$0xff]
      %v2249 = vld [vmem:[%s2235 + $0x68] sm:$0xff]
      %v2250 = vld [vmem:[%s2235 + $0x70] sm:$0xff]
      %v2251 = vld [vmem:[%s2235 + $0x78] sm:$0xff]
      %s2252 = scalar_lea.vmem %s5, 7
      %v2253 = vld [vmem:[%s2252] sm:$0x1]
      %v2255 = vlaneseq
      %v2256 = vshrl.u32 %v2255, 7
      %v2257 = vsub.s32 0, %v2256
      %v2258 = vrot.slane %v2253, %v2257
      %2260 = vmatprep.subr.mxu0 0.0
      %2261 = vmatpush1.msra.mxu0 %v2236
      %2262 = vmatprep.subr.mxu0 0.0
      %2263 = vmatpush1.msra.mxu0 %v2237
      %2264 = vmatprep.subr.mxu0 0.0
      %2265 = vmatpush1.msra.mxu0 %v2238
      %2266 = vmatprep.subr.mxu0 0.0
      %2267 = vmatpush1.msra.mxu0 %v2239
      %2268 = vmatprep.subr.mxu0 0.0
      %2269 = vmatpush1.msra.mxu0 %v2240
      %2270 = vmatprep.subr.mxu0 0.0
      %2271 = vmatpush1.msra.mxu0 %v2241
      %2272 = vmatprep.subr.mxu0 0.0
      %2273 = vmatpush1.msra.mxu0 %v2242
      %2274 = vmatprep.subr.mxu0 0.0
      %2275 = vmatpush1.msra.mxu0 %v2243
      %2276 = vmatprep.subr.mxu0 0.0
      %2277 = vmatpush1.msra.mxu0 %v2244
      %2278 = vmatprep.subr.mxu0 0.0
      %2279 = vmatpush1.msra.mxu0 %v2245
      %2280 = vmatprep.subr.mxu0 0.0
      %2281 = vmatpush1.msra.mxu0 %v2246
      %2282 = vmatprep.subr.mxu0 0.0
      %2283 = vmatpush1.msra.mxu0 %v2247
      %2284 = vmatprep.subr.mxu0 0.0
      %2285 = vmatpush1.msra.mxu0 %v2248
      %2286 = vmatprep.subr.mxu0 0.0
      %2287 = vmatpush1.msra.mxu0 %v2249
      %2288 = vmatprep.subr.mxu0 0.0
      %2289 = vmatpush1.msra.mxu0 %v2250
      %2290 = vmatprep.subr.mxu0 0.0
      %2291 = vmatpush1.msra.mxu0 %v2251
      %2292 = vmatprep.subr.mxu0 0.0
      %2293 = vmatpush1.msra.mxu0 0.0
      %2294 = vmatprep.subr.mxu0 0.0
      %2295 = vmatpush1.msra.mxu0 0.0
      %2296 = vmatprep.subr.mxu0 0.0
      %2297 = vmatpush1.msra.mxu0 0.0
      %2298 = vmatprep.subr.mxu0 0.0
      %2299 = vmatpush1.msra.mxu0 0.0
      %2300 = vmatprep.subr.mxu0 0.0
      %2301 = vmatpush1.msra.mxu0 0.0
      %2302 = vmatprep.subr.mxu0 0.0
      %2303 = vmatpush1.msra.mxu0 0.0
      %2304 = vmatprep.subr.mxu0 0.0
      %2305 = vmatpush1.msra.mxu0 0.0
      %2306 = vmatprep.subr.mxu0 0.0
      %2307 = vmatpush1.msra.mxu0 0.0
      %2308 = vmatprep.subr.mxu0 0.0
      %2309 = vmatpush1.msra.mxu0 0.0
      %2310 = vmatprep.subr.mxu0 0.0
      %2311 = vmatpush1.msra.mxu0 0.0
      %2312 = vmatprep.subr.mxu0 0.0
      %2313 = vmatpush1.msra.mxu0 0.0
      %2314 = vmatprep.subr.mxu0 0.0
      %2315 = vmatpush1.msra.mxu0 0.0
      %2316 = vmatprep.subr.mxu0 0.0
      %2317 = vmatpush1.msra.mxu0 0.0
      %2318 = vmatprep.subr.mxu0 0.0
      %2319 = vmatpush1.msra.mxu0 0.0
      %2320 = vmatprep.subr.mxu0 0.0
      %2321 = vmatpush1.msra.mxu0 0.0
      %2322 = vmatprep.subr.mxu0 0.0
      %2323 = vmatpush1.msra.mxu0 0.0
      %2324 = vmatprep.mubr.f32.mxu0 0.0
      %2325 = vmatmul.mubr.f32.gmra.mrb[0].mxu0 %v560
      %v2326 = vpop.f32.mrb[0].mxu0
      %v2327 = vadd.f32 %v2258, %v2326
      %v2328 = vpop.f32.mrb[0].mxu0
      %2329 = vdwg.mxu0
      %s2330 = scalar_lea.vmem %s4, 1408
      %v2331 = vld [vmem:[%s2330] sm:$0xff]
      %v2332 = vld [vmem:[%s2330 + $0x8] sm:$0xff]
      %v2333 = vld [vmem:[%s2330 + $0x10] sm:$0xff]
      %v2334 = vld [vmem:[%s2330 + $0x18] sm:$0xff]
      %v2335 = vld [vmem:[%s2330 + $0x20] sm:$0xff]
      %v2336 = vld [vmem:[%s2330 + $0x28] sm:$0xff]
      %v2337 = vld [vmem:[%s2330 + $0x30] sm:$0xff]
      %v2338 = vld [vmem:[%s2330 + $0x38] sm:$0xff]
      %v2339 = vld [vmem:[%s2330 + $0x40] sm:$0xff]
      %v2340 = vld [vmem:[%s2330 + $0x48] sm:$0xff]
      %v2341 = vld [vmem:[%s2330 + $0x50] sm:$0xff]
      %v2342 = vld [vmem:[%s2330 + $0x58] sm:$0xff]
      %v2343 = vld [vmem:[%s2330 + $0x60] sm:$0xff]
      %v2344 = vld [vmem:[%s2330 + $0x68] sm:$0xff]
      %v2345 = vld [vmem:[%s2330 + $0x70] sm:$0xff]
      %v2346 = vld [vmem:[%s2330 + $0x78] sm:$0xff]
      %s2347 = scalar_lea.vmem %s5, 11
      %v2348 = vld [vmem:[%s2347] sm:$0x1]
      %v2350 = vlaneseq
      %v2351 = vshrl.u32 %v2350, 7
      %v2352 = vsub.s32 0, %v2351
      %v2353 = vrot.slane %v2348, %v2352
      %2355 = vmatprep.subr.mxu0 0.0
      %2356 = vmatpush1.msra.mxu0 %v2331
      %2357 = vmatprep.subr.mxu0 0.0
      %2358 = vmatpush1.msra.mxu0 %v2332
      %2359 = vmatprep.subr.mxu0 0.0
      %2360 = vmatpush1.msra.mxu0 %v2333
      %2361 = vmatprep.subr.mxu0 0.0
      %2362 = vmatpush1.msra.mxu0 %v2334
      %2363 = vmatprep.subr.mxu0 0.0
      %2364 = vmatpush1.msra.mxu0 %v2335
      %2365 = vmatprep.subr.mxu0 0.0
      %2366 = vmatpush1.msra.mxu0 %v2336
      %2367 = vmatprep.subr.mxu0 0.0
      %2368 = vmatpush1.msra.mxu0 %v2337
      %2369 = vmatprep.subr.mxu0 0.0
      %2370 = vmatpush1.msra.mxu0 %v2338
      %2371 = vmatprep.subr.mxu0 0.0
      %2372 = vmatpush1.msra.mxu0 %v2339
      %2373 = vmatprep.subr.mxu0 0.0
      %2374 = vmatpush1.msra.mxu0 %v2340
      %2375 = vmatprep.subr.mxu0 0.0
      %2376 = vmatpush1.msra.mxu0 %v2341
      %2377 = vmatprep.subr.mxu0 0.0
      %2378 = vmatpush1.msra.mxu0 %v2342
      %2379 = vmatprep.subr.mxu0 0.0
      %2380 = vmatpush1.msra.mxu0 %v2343
      %2381 = vmatprep.subr.mxu0 0.0
      %2382 = vmatpush1.msra.mxu0 %v2344
      %2383 = vmatprep.subr.mxu0 0.0
      %2384 = vmatpush1.msra.mxu0 %v2345
      %2385 = vmatprep.subr.mxu0 0.0
      %2386 = vmatpush1.msra.mxu0 %v2346
      %2387 = vmatprep.subr.mxu0 0.0
      %2388 = vmatpush1.msra.mxu0 0.0
      %2389 = vmatprep.subr.mxu0 0.0
      %2390 = vmatpush1.msra.mxu0 0.0
      %2391 = vmatprep.subr.mxu0 0.0
      %2392 = vmatpush1.msra.mxu0 0.0
      %2393 = vmatprep.subr.mxu0 0.0
      %2394 = vmatpush1.msra.mxu0 0.0
      %2395 = vmatprep.subr.mxu0 0.0
      %2396 = vmatpush1.msra.mxu0 0.0
      %2397 = vmatprep.subr.mxu0 0.0
      %2398 = vmatpush1.msra.mxu0 0.0
      %2399 = vmatprep.subr.mxu0 0.0
      %2400 = vmatpush1.msra.mxu0 0.0
      %2401 = vmatprep.subr.mxu0 0.0
      %2402 = vmatpush1.msra.mxu0 0.0
      %2403 = vmatprep.subr.mxu0 0.0
      %2404 = vmatpush1.msra.mxu0 0.0
      %2405 = vmatprep.subr.mxu0 0.0
      %2406 = vmatpush1.msra.mxu0 0.0
      %2407 = vmatprep.subr.mxu0 0.0
      %2408 = vmatpush1.msra.mxu0 0.0
      %2409 = vmatprep.subr.mxu0 0.0
      %2410 = vmatpush1.msra.mxu0 0.0
      %2411 = vmatprep.subr.mxu0 0.0
      %2412 = vmatpush1.msra.mxu0 0.0
      %2413 = vmatprep.subr.mxu0 0.0
      %2414 = vmatpush1.msra.mxu0 0.0
      %2415 = vmatprep.subr.mxu0 0.0
      %2416 = vmatpush1.msra.mxu0 0.0
      %2417 = vmatprep.subr.mxu0 0.0
      %2418 = vmatpush1.msra.mxu0 0.0
      %2419 = vmatprep.mubr.f32.mxu0 0.0
      %2420 = vmatmul.mubr.f32.gmra.mrb[0].mxu0 %v560
      %v2421 = vpop.f32.mrb[0].mxu0
      %v2422 = vadd.f32 %v2353, %v2421
      %v2423 = vpop.f32.mrb[0].mxu0
      %2424 = vdwg.mxu0
      %v2426 = vsel %vm851, %v2234, 0
      %v2429 = vsel %vm851, %v2327, 0
      %2431 = vmatprep.subr.mxu0 0.0
      %2432 = vmatpush1.xpose.msra.mxu0 %v2429
      %2433 = vmatprep.subr.mxu0 0.0
      %2434 = vmatpush1.xpose.msra.mxu0 0.0
      %2435 = vmatprep.subr.mxu0 0.0
      %2436 = vmatpush1.xpose.msra.mxu0 0.0
      %2437 = vmatprep.subr.mxu0 0.0
      %2438 = vmatpush1.xpose.msra.mxu0 0.0
      %2439 = vmatprep.subr.mxu0 0.0
      %2440 = vmatpush1.xpose.msra.mxu0 0.0
      %2441 = vmatprep.subr.mxu0 0.0
      %2442 = vmatpush1.xpose.msra.mxu0 0.0
      %2443 = vmatprep.subr.mxu0 0.0
      %2444 = vmatpush1.xpose.msra.mxu0 0.0
      %2445 = vmatprep.subr.mxu0 0.0
      %2446 = vmatpush1.xpose.msra.mxu0 0.0
      %2447 = vmatprep.subr.mxu0 0.0
      %2448 = vmatpush1.xpose.msra.mxu0 0.0
      %2449 = vmatprep.subr.mxu0 0.0
      %2450 = vmatpush1.xpose.msra.mxu0 0.0
      %2451 = vmatprep.subr.mxu0 0.0
      %2452 = vmatpush1.xpose.msra.mxu0 0.0
      %2453 = vmatprep.subr.mxu0 0.0
      %2454 = vmatpush1.xpose.msra.mxu0 0.0
      %2455 = vmatprep.subr.mxu0 0.0
      %2456 = vmatpush1.xpose.msra.mxu0 0.0
      %2457 = vmatprep.subr.mxu0 0.0
      %2458 = vmatpush1.xpose.msra.mxu0 0.0
      %2459 = vmatprep.subr.mxu0 0.0
      %2460 = vmatpush1.xpose.msra.mxu0 0.0
      %2461 = vmatprep.subr.mxu0 0.0
      %2462 = vmatpush1.xpose.msra.mxu0 0.0
      %2463 = vmatprep.subr.mxu0 0.0
      %2464 = vmatpush1.xpose.msra.mxu0 0.0
      %2465 = vmatprep.subr.mxu0 0.0
      %2466 = vmatpush1.xpose.msra.mxu0 0.0
      %2467 = vmatprep.subr.mxu0 0.0
      %2468 = vmatpush1.xpose.msra.mxu0 0.0
      %2469 = vmatprep.subr.mxu0 0.0
      %2470 = vmatpush1.xpose.msra.mxu0 0.0
      %2471 = vmatprep.subr.mxu0 0.0
      %2472 = vmatpush1.xpose.msra.mxu0 0.0
      %2473 = vmatprep.subr.mxu0 0.0
      %2474 = vmatpush1.xpose.msra.mxu0 0.0
      %2475 = vmatprep.subr.mxu0 0.0
      %2476 = vmatpush1.xpose.msra.mxu0 0.0
      %2477 = vmatprep.subr.mxu0 0.0
      %2478 = vmatpush1.xpose.msra.mxu0 0.0
      %2479 = vmatprep.subr.mxu0 0.0
      %2480 = vmatpush1.xpose.msra.mxu0 0.0
      %2481 = vmatprep.subr.mxu0 0.0
      %2482 = vmatpush1.xpose.msra.mxu0 0.0
      %2483 = vmatprep.subr.mxu0 0.0
      %2484 = vmatpush1.xpose.msra.mxu0 0.0
      %2485 = vmatprep.subr.mxu0 0.0
      %2486 = vmatpush1.xpose.msra.mxu0 0.0
      %2487 = vmatprep.subr.mxu0 0.0
      %2488 = vmatpush1.xpose.msra.mxu0 0.0
      %2489 = vmatprep.subr.mxu0 0.0
      %2490 = vmatpush1.xpose.msra.mxu0 0.0
      %2491 = vmatprep.subr.mxu0 0.0
      %2492 = vmatpush1.xpose.msra.mxu0 0.0
      %2493 = vmatprep.subr.mxu0 0.0
      %2494 = vmatpush1.xpose.msra.mxu0 0.0
      %2495 = vmatprep.mubr.f32.mxu0 0.0
      %2496 = vmatmul.mubr.f32.gmra.mrb[0].mxu0 %v2426
      %v2497 = vpop.f32.mrb[0].mxu0
      %v2498 = vadd.f32 %v849, %v2497
      %v2499 = vpop.f32.mrb[0].mxu0
      %2500 = vdwg.mxu0
      %v2501 = vsel %vm928, %v2498, -inf
      %2502 = vmax.xlane.f32.xlu0 %v2501
      %v2503 = vpop.xlane.xlu0 %2502
      %v2504 = vsub.f32 %v2498, %v2503
      %v2505 = vmul.f32 %v2504, 1.442695
      %v2506 = vpow.pop %v2505
      %v2507 = vsel %vm928, %v2506, 0.0
      %2508 = vadd.xlane.f32.xlu0 %v2507
      %v2509 = vpop.xlane.xlu0 %2508
      %v2510 = vrcp.pop %v2509
      %v2511 = vmul.f32 %v2506, %v2510
      %v2513 = vsel %vm928, %v2511, 0
      %2515 = vmatprep.subr.mxu0 0.0
      %2516 = vmatpush1.msra.mxu0 %v2422
      %2517 = vmatprep.subr.mxu0 0.0
      %2518 = vmatpush1.msra.mxu0 0.0
      %2519 = vmatprep.subr.mxu0 0.0
      %2520 = vmatpush1.msra.mxu0 0.0
      %2521 = vmatprep.subr.mxu0 0.0
      %2522 = vmatpush1.msra.mxu0 0.0
      %2523 = vmatprep.subr.mxu0 0.0
      %2524 = vmatpush1.msra.mxu0 0.0
      %2525 = vmatprep.subr.mxu0 0.0
      %2526 = vmatpush1.msra.mxu0 0.0
      %2527 = vmatprep.subr.mxu0 0.0
      %2528 = vmatpush1.msra.mxu0 0.0
      %2529 = vmatprep.subr.mxu0 0.0
      %2530 = vmatpush1.msra.mxu0 0.0
      %2531 = vmatprep.subr.mxu0 0.0
      %2532 = vmatpush1.msra.mxu0 0.0
      %2533 = vmatprep.subr.mxu0 0.0
      %2534 = vmatpush1.msra.mxu0 0.0
      %2535 = vmatprep.subr.mxu0 0.0
      %2536 = vmatpush1.msra.mxu0 0.0
      %2537 = vmatprep.subr.mxu0 0.0
      %2538 = vmatpush1.msra.mxu0 0.0
      %2539 = vmatprep.subr.mxu0 0.0
      %2540 = vmatpush1.msra.mxu0 0.0
      %2541 = vmatprep.subr.mxu0 0.0
      %2542 = vmatpush1.msra.mxu0 0.0
      %2543 = vmatprep.subr.mxu0 0.0
      %2544 = vmatpush1.msra.mxu0 0.0
      %2545 = vmatprep.subr.mxu0 0.0
      %2546 = vmatpush1.msra.mxu0 0.0
      %2547 = vmatprep.subr.mxu0 0.0
      %2548 = vmatpush1.msra.mxu0 0.0
      %2549 = vmatprep.subr.mxu0 0.0
      %2550 = vmatpush1.msra.mxu0 0.0
      %2551 = vmatprep.subr.mxu0 0.0
      %2552 = vmatpush1.msra.mxu0 0.0
      %2553 = vmatprep.subr.mxu0 0.0
      %2554 = vmatpush1.msra.mxu0 0.0
      %2555 = vmatprep.subr.mxu0 0.0
      %2556 = vmatpush1.msra.mxu0 0.0
      %2557 = vmatprep.subr.mxu0 0.0
      %2558 = vmatpush1.msra.mxu0 0.0
      %2559 = vmatprep.subr.mxu0 0.0
      %2560 = vmatpush1.msra.mxu0 0.0
      %2561 = vmatprep.subr.mxu0 0.0
      %2562 = vmatpush1.msra.mxu0 0.0
      %2563 = vmatprep.subr.mxu0 0.0
      %2564 = vmatpush1.msra.mxu0 0.0
      %2565 = vmatprep.subr.mxu0 0.0
      %2566 = vmatpush1.msra.mxu0 0.0
      %2567 = vmatprep.subr.mxu0 0.0
      %2568 = vmatpush1.msra.mxu0 0.0
      %2569 = vmatprep.subr.mxu0 0.0
      %2570 = vmatpush1.msra.mxu0 0.0
      %2571 = vmatprep.subr.mxu0 0.0
      %2572 = vmatpush1.msra.mxu0 0.0
      %2573 = vmatprep.subr.mxu0 0.0
      %2574 = vmatpush1.msra.mxu0 0.0
      %2575 = vmatprep.subr.mxu0 0.0
      %2576 = vmatpush1.msra.mxu0 0.0
      %2577 = vmatprep.subr.mxu0 0.0
      %2578 = vmatpush1.msra.mxu0 0.0
      %2579 = vmatprep.mubr.f32.mxu0 0.0
      %2580 = vmatmul.mubr.f32.gmra.mrb[0].mxu0 %v2513
      %v2581 = vpop.f32.mrb[0].mxu0
      %v2582 = vadd.f32 0.0, %v2581
      %v2583 = vpop.f32.mrb[0].mxu0
      %2584 = vdwg.mxu0
      %s2585 = scalar_lea.vmem %s6, 96
      %v2586 = vld [vmem:[%s2585] sm:$0xff]
      %v2587 = vld [vmem:[%s2585 + $0x8] sm:$0xff]
      %v2588 = vld [vmem:[%s2585 + $0x10] sm:$0xff]
      %v2589 = vld [vmem:[%s2585 + $0x18] sm:$0xff]
      %v2591 = vsel %vm851, %v2582, 0
      %2593 = vmatprep.subr.mxu0 0.0
      %2594 = vmatpush1.msra.mxu0 %v2586
      %2595 = vmatprep.subr.mxu0 0.0
      %2596 = vmatpush1.msra.mxu0 %v2587
      %2597 = vmatprep.subr.mxu0 0.0
      %2598 = vmatpush1.msra.mxu0 %v2588
      %2599 = vmatprep.subr.mxu0 0.0
      %2600 = vmatpush1.msra.mxu0 %v2589
      %2601 = vmatprep.subr.mxu0 0.0
      %2602 = vmatpush1.msra.mxu0 0.0
      %2603 = vmatprep.subr.mxu0 0.0
      %2604 = vmatpush1.msra.mxu0 0.0
      %2605 = vmatprep.subr.mxu0 0.0
      %2606 = vmatpush1.msra.mxu0 0.0
      %2607 = vmatprep.subr.mxu0 0.0
      %2608 = vmatpush1.msra.mxu0 0.0
      %2609 = vmatprep.subr.mxu0 0.0
      %2610 = vmatpush1.msra.mxu0 0.0
      %2611 = vmatprep.subr.mxu0 0.0
      %2612 = vmatpush1.msra.mxu0 0.0
      %2613 = vmatprep.subr.mxu0 0.0
      %2614 = vmatpush1.msra.mxu0 0.0
      %2615 = vmatprep.subr.mxu0 0.0
      %2616 = vmatpush1.msra.mxu0 0.0
      %2617 = vmatprep.subr.mxu0 0.0
      %2618 = vmatpush1.msra.mxu0 0.0
      %2619 = vmatprep.subr.mxu0 0.0
      %2620 = vmatpush1.msra.mxu0 0.0
      %2621 = vmatprep.subr.mxu0 0.0
      %2622 = vmatpush1.msra.mxu0 0.0
      %2623 = vmatprep.subr.mxu0 0.0
      %2624 = vmatpush1.msra.mxu0 0.0
      %2625 = vmatprep.subr.mxu0 0.0
      %2626 = vmatpush1.msra.mxu0 0.0
      %2627 = vmatprep.subr.mxu0 0.0
      %2628 = vmatpush1.msra.mxu0 0.0
      %2629 = vmatprep.subr.mxu0 0.0
      %2630 = vmatpush1.msra.mxu0 0.0
      %2631 = vmatprep.subr.mxu0 0.0
      %2632 = vmatpush1.msra.mxu0 0.0
      %2633 = vmatprep.subr.mxu0 0.0
      %2634 = vmatpush1.msra.mxu0 0.0
      %2635 = vmatprep.subr.mxu0 0.0
      %2636 = vmatpush1.msra.mxu0 0.0
      %2637 = vmatprep.subr.mxu0 0.0
      %2638 = vmatpush1.msra.mxu0 0.0
      %2639 = vmatprep.subr.mxu0 0.0
      %2640 = vmatpush1.msra.mxu0 0.0
      %2641 = vmatprep.subr.mxu0 0.0
      %2642 = vmatpush1.msra.mxu0 0.0
      %2643 = vmatprep.subr.mxu0 0.0
      %2644 = vmatpush1.msra.mxu0 0.0
      %2645 = vmatprep.subr.mxu0 0.0
      %2646 = vmatpush1.msra.mxu0 0.0
      %2647 = vmatprep.subr.mxu0 0.0
      %2648 = vmatpush1.msra.mxu0 0.0
      %2649 = vmatprep.subr.mxu0 0.0
      %2650 = vmatpush1.msra.mxu0 0.0
      %2651 = vmatprep.subr.mxu0 0.0
      %2652 = vmatpush1.msra.mxu0 0.0
      %2653 = vmatprep.subr.mxu0 0.0
      %2654 = vmatpush1.msra.mxu0 0.0
      %2655 = vmatprep.subr.mxu0 0.0
      %2656 = vmatpush1.msra.mxu0 0.0
      %2657 = vmatprep.mubr.f32.mxu0 0.0
      %2658 = vmatmul.mubr.f32.gmra.mrb[0].mxu0 %v2591
      %v2659 = vpop.f32.mrb[0].mxu0
      %v2660 = vadd.f32 0.0, %v2659
      %v2661 = vpop.f32.mrb[0].mxu0
      %2662 = vdwg.mxu0
      %v2663 = vadd.f32 %v2138, %v2660
      %v2664 = vld [vmem:[%s7] sm:$0x1]
      %v2666 = vlaneseq
      %v2667 = vshrl.u32 %v2666, 7
      %v2668 = vsub.s32 0, %v2667
      %v2669 = vrot.slane %v2664, %v2668
      %v2671 = vadd.f32 %v2663, %v2669
      %v2672 = vadd.f32 %v531, %v2671
      %v2673 = vld [vmem:[%s8] sm:$0x1]
      %v2674 = vld [vmem:[%s9] sm:$0x1]
      %v2675 = vld [vmem:[%s10] sm:$0xff]
      %v2676 = vld [vmem:[%s10 + $0x8] sm:$0xff]
      %v2677 = vld [vmem:[%s10 + $0x10] sm:$0xff]
      %v2678 = vld [vmem:[%s10 + $0x18] sm:$0xff]
      %v2679 = vld [vmem:[%s10 + $0x20] sm:$0xff]
      %v2680 = vld [vmem:[%s10 + $0x28] sm:$0xff]
      %v2681 = vld [vmem:[%s10 + $0x30] sm:$0xff]
      %v2682 = vld [vmem:[%s10 + $0x38] sm:$0xff]
      %v2683 = vld [vmem:[%s10 + $0x40] sm:$0xff]
      %v2684 = vld [vmem:[%s10 + $0x48] sm:$0xff]
      %v2685 = vld [vmem:[%s10 + $0x50] sm:$0xff]
      %v2686 = vld [vmem:[%s10 + $0x58] sm:$0xff]
      %v2687 = vld [vmem:[%s10 + $0x60] sm:$0xff]
      %v2688 = vld [vmem:[%s10 + $0x68] sm:$0xff]
      %v2689 = vld [vmem:[%s10 + $0x70] sm:$0xff]
      %v2690 = vld [vmem:[%s10 + $0x78] sm:$0xff]
      %v2691 = vld [vmem:[%s10 + $0x80] sm:$0xff]
      %v2692 = vld [vmem:[%s10 + $0x88] sm:$0xff]
      %v2693 = vld [vmem:[%s10 + $0x90] sm:$0xff]
      %v2694 = vld [vmem:[%s10 + $0x98] sm:$0xff]
      %v2695 = vld [vmem:[%s10 + $0xa0] sm:$0xff]
      %v2696 = vld [vmem:[%s10 + $0xa8] sm:$0xff]
      %v2697 = vld [vmem:[%s10 + $0xb0] sm:$0xff]
      %v2698 = vld [vmem:[%s10 + $0xb8] sm:$0xff]
      %v2699 = vld [vmem:[%s10 + $0xc0] sm:$0xff]
      %v2700 = vld [vmem:[%s10 + $0xc8] sm:$0xff]
      %v2701 = vld [vmem:[%s10 + $0xd0] sm:$0xff]
      %v2702 = vld [vmem:[%s10 + $0xd8] sm:$0xff]
      %v2703 = vld [vmem:[%s10 + $0xe0] sm:$0xff]
      %v2704 = vld [vmem:[%s10 + $0xe8] sm:$0xff]
      %v2705 = vld [vmem:[%s10 + $0xf0] sm:$0xff]
      %v2706 = vld [vmem:[%s10 + $0xf8] sm:$0xff]
      %v2707 = vld [vmem:[%s11] sm:$0x3]
      %v2708 = vld [vmem:[%s12] sm:$0xff]
      %v2709 = vld [vmem:[%s12 + $0x8] sm:$0xff]
      %v2710 = vld [vmem:[%s12 + $0x10] sm:$0xff]
      %v2711 = vld [vmem:[%s12 + $0x18] sm:$0xff]
      %v2712 = vld [vmem:[%s12 + $0x20] sm:$0xff]
      %v2713 = vld [vmem:[%s12 + $0x28] sm:$0xff]
      %v2714 = vld [vmem:[%s12 + $0x30] sm:$0xff]
      %v2715 = vld [vmem:[%s12 + $0x38] sm:$0xff]
      %v2716 = vld [vmem:[%s12 + $0x40] sm:$0xff]
      %v2717 = vld [vmem:[%s12 + $0x48] sm:$0xff]
      %v2718 = vld [vmem:[%s12 + $0x50] sm:$0xff]
      %v2719 = vld [vmem:[%s12 + $0x58] sm:$0xff]
      %v2720 = vld [vmem:[%s12 + $0x60] sm:$0xff]
      %v2721 = vld [vmem:[%s12 + $0x68] sm:$0xff]
      %v2722 = vld [vmem:[%s12 + $0x70] sm:$0xff]
      %v2723 = vld [vmem:[%s12 + $0x78] sm:$0xff]
      %v2724 = vld [vmem:[%s12 + $0x80] sm:$0xff]
      %v2725 = vld [vmem:[%s12 + $0x88] sm:$0xff]
      %v2726 = vld [vmem:[%s12 + $0x90] sm:$0xff]
      %v2727 = vld [vmem:[%s12 + $0x98] sm:$0xff]
      %v2728 = vld [vmem:[%s12 + $0xa0] sm:$0xff]
      %v2729 = vld [vmem:[%s12 + $0xa8] sm:$0xff]
      %v2730 = vld [vmem:[%s12 + $0xb0] sm:$0xff]
      %v2731 = vld [vmem:[%s12 + $0xb8] sm:$0xff]
      %v2732 = vld [vmem:[%s12 + $0xc0] sm:$0xff]
      %v2733 = vld [vmem:[%s12 + $0xc8] sm:$0xff]
      %v2734 = vld [vmem:[%s12 + $0xd0] sm:$0xff]
      %v2735 = vld [vmem:[%s12 + $0xd8] sm:$0xff]
      %v2736 = vld [vmem:[%s12 + $0xe0] sm:$0xff]
      %v2737 = vld [vmem:[%s12 + $0xe8] sm:$0xff]
      %v2738 = vld [vmem:[%s12 + $0xf0] sm:$0xff]
      %v2739 = vld [vmem:[%s12 + $0xf8] sm:$0xff]
      %v2740 = vld [vmem:[%s13] sm:$0x1]
      %2741 = vadd.xlane.f32.xlu0 %v2672
      %v2742 = vpop.xlane.xlu0 %2741
      %v2743 = vmul.f32 %v2742, %v537
      %v2744 = vsub.f32 %v2672, %v2743
      %v2745 = vmul.f32 %v2744, %v2744
      %2746 = vadd.xlane.f32.xlu0 %v2745
      %v2747 = vpop.xlane.xlu0 %2746
      %v2748 = vmul.f32 %v2747, %v537
      %v2749 = vadd.f32 %v2748, 1e-05
      %v2750 = vrsqrt.pop %v2749
      %v2751 = vmul.f32 %v2744, %v2750
      %v2753 = vlaneseq
      %v2754 = vshrl.u32 %v2753, 7
      %v2755 = vsub.s32 0, %v2754
      %v2756 = vrot.slane %v2673, %v2755
      %v2758 = vmul.f32 %v2751, %v2756
      %v2760 = vlaneseq
      %v2761 = vshrl.u32 %v2760, 7
      %v2762 = vsub.s32 0, %v2761
      %v2763 = vrot.slane %v2674, %v2762
      %v2765 = vadd.f32 %v2758, %v2763
      %v2767 = vlaneseq
      %v2768 = vshrl.u32 %v2767, 7
      %v2769 = vsub.s32 0, %v2768
      %v2770 = vrot.slane %v2707, %v2769
      %v2771 = vlaneseq
      %v2772 = vshrl.u32 %v2771, 7
      %v2773 = vsub.s32 1, %v2772
      %v2774 = vrot.slane %v2707, %v2773
      %2777 = vmatprep.subr.mxu0 %v2676
      %2778 = vmatpush1.msra.mxu0 %v2675
      %2779 = vmatprep.subr.mxu0 %v2678
      %2780 = vmatpush1.msra.mxu0 %v2677
      %2781 = vmatprep.subr.mxu0 %v2680
      %2782 = vmatpush1.msra.mxu0 %v2679
      %2783 = vmatprep.subr.mxu0 %v2682
      %2784 = vmatpush1.msra.mxu0 %v2681
      %2785 = vmatprep.subr.mxu0 %v2684
      %2786 = vmatpush1.msra.mxu0 %v2683
      %2787 = vmatprep.subr.mxu0 %v2686
      %2788 = vmatpush1.msra.mxu0 %v2685
      %2789 = vmatprep.subr.mxu0 %v2688
      %2790 = vmatpush1.msra.mxu0 %v2687
      %2791 = vmatprep.subr.mxu0 %v2690
      %2792 = vmatpush1.msra.mxu0 %v2689
      %2793 = vmatprep.subr.mxu0 %v2692
      %2794 = vmatpush1.msra.mxu0 %v2691
      %2795 = vmatprep.subr.mxu0 %v2694
      %2796 = vmatpush1.msra.mxu0 %v2693
      %2797 = vmatprep.subr.mxu0 %v2696
      %2798 = vmatpush1.msra.mxu0 %v2695
      %2799 = vmatprep.subr.mxu0 %v2698
      %2800 = vmatpush1.msra.mxu0 %v2697
      %2801 = vmatprep.subr.mxu0 %v2700
      %2802 = vmatpush1.msra.mxu0 %v2699
      %2803 = vmatprep.subr.mxu0 %v2702
      %2804 = vmatpush1.msra.mxu0 %v2701
      %2805 = vmatprep.subr.mxu0 %v2704
      %2806 = vmatpush1.msra.mxu0 %v2703
      %2807 = vmatprep.subr.mxu0 %v2706
      %2808 = vmatpush1.msra.mxu0 %v2705
      %2809 = vmatprep.subr.mxu0 0.0
      %2810 = vmatpush1.msra.mxu0 0.0
      %2811 = vmatprep.subr.mxu0 0.0
      %2812 = vmatpush1.msra.mxu0 0.0
      %2813 = vmatprep.subr.mxu0 0.0
      %2814 = vmatpush1.msra.mxu0 0.0
      %2815 = vmatprep.subr.mxu0 0.0
      %2816 = vmatpush1.msra.mxu0 0.0
      %2817 = vmatprep.subr.mxu0 0.0
      %2818 = vmatpush1.msra.mxu0 0.0
      %2819 = vmatprep.subr.mxu0 0.0
      %2820 = vmatpush1.msra.mxu0 0.0
      %2821 = vmatprep.subr.mxu0 0.0
      %2822 = vmatpush1.msra.mxu0 0.0
      %2823 = vmatprep.subr.mxu0 0.0
      %2824 = vmatpush1.msra.mxu0 0.0
      %2825 = vmatprep.subr.mxu0 0.0
      %2826 = vmatpush1.msra.mxu0 0.0
      %2827 = vmatprep.subr.mxu0 0.0
      %2828 = vmatpush1.msra.mxu0 0.0
      %2829 = vmatprep.subr.mxu0 0.0
      %2830 = vmatpush1.msra.mxu0 0.0
      %2831 = vmatprep.subr.mxu0 0.0
      %2832 = vmatpush1.msra.mxu0 0.0
      %2833 = vmatprep.subr.mxu0 0.0
      %2834 = vmatpush1.msra.mxu0 0.0
      %2835 = vmatprep.subr.mxu0 0.0
      %2836 = vmatpush1.msra.mxu0 0.0
      %2837 = vmatprep.subr.mxu0 0.0
      %2838 = vmatpush1.msra.mxu0 0.0
      %2839 = vmatprep.subr.mxu0 0.0
      %2840 = vmatpush1.msra.mxu0 0.0
      %2841 = vmatprep.mubr.f32.mxu0 0.0
      %2842 = vmatmul.mubr.f32.gmra.mrb[0].mxu0 %v2765
      %v2843 = vpop.f32.mrb[0].mxu0
      %v2844 = vadd.f32 %v2770, %v2843
      %v2845 = vpop.f32.mrb[0].mxu0
      %v2846 = vadd.f32 %v2774, %v2845
      %2847 = vdwg.mxu0
      %v2848 = vmul.f32 %v2844, 0.5
      %v2849 = vmul.f32 %v2846, 0.5
      %v2850 = vmul.f32 %v2844, 0.044715
      %v2851 = vmul.f32 %v2846, 0.044715
      %v2852 = vmul.f32 %v2850, %v2844
      %v2853 = vmul.f32 %v2851, %v2846
      %v2854 = vmul.f32 %v2852, %v2844
      %v2855 = vmul.f32 %v2853, %v2846
      %v2856 = vadd.f32 %v2844, %v2854
      %v2857 = vadd.f32 %v2846, %v2855
      %v2858 = vmul.f32 %v2856, 0.7978846
      %v2859 = vmul.f32 %v2857, 0.7978846
      %v2860 = vtanh.pop %v2858
      %v2861 = vtanh.pop %v2859
      %v2862 = vadd.f32 %v2860, 1.0
      %v2863 = vadd.f32 %v2861, 1.0
      %v2864 = vmul.f32 %v2848, %v2862
      %v2865 = vmul.f32 %v2849, %v2863
      %2866 = vmatprep.subr.mxu0 0.0
      %2867 = vmatpush1.msra.mxu0 %v2708
      %2868 = vmatprep.subr.mxu0 0.0
      %2869 = vmatpush1.msra.mxu0 %v2709
      %2870 = vmatprep.subr.mxu0 0.0
      %2871 = vmatpush1.msra.mxu0 %v2710
      %2872 = vmatprep.subr.mxu0 0.0
      %2873 = vmatpush1.msra.mxu0 %v2711
      %2874 = vmatprep.subr.mxu0 0.0
      %2875 = vmatpush1.msra.mxu0 %v2712
      %2876 = vmatprep.subr.mxu0 0.0
      %2877 = vmatpush1.msra.mxu0 %v2713
      %2878 = vmatprep.subr.mxu0 0.0
      %2879 = vmatpush1.msra.mxu0 %v2714
      %2880 = vmatprep.subr.mxu0 0.0
      %2881 = vmatpush1.msra.mxu0 %v2715
      %2882 = vmatprep.subr.mxu0 0.0
      %2883 = vmatpush1.msra.mxu0 %v2716
      %2884 = vmatprep.subr.mxu0 0.0
      %2885 = vmatpush1.msra.mxu0 %v2717
      %2886 = vmatprep.subr.mxu0 0.0
      %2887 = vmatpush1.msra.mxu0 %v2718
      %2888 = vmatprep.subr.mxu0 0.0
      %2889 = vmatpush1.msra.mxu0 %v2719
      %2890 = vmatprep.subr.mxu0 0.0
      %2891 = vmatpush1.msra.mxu0 %v2720
      %2892 = vmatprep.subr.mxu0 0.0
      %2893 = vmatpush1.msra.mxu0 %v2721
      %2894 = vmatprep.subr.mxu0 0.0
      %2895 = vmatpush1.msra.mxu0 %v2722
      %2896 = vmatprep.subr.mxu0 0.0
      %2897 = vmatpush1.msra.mxu0 %v2723
      %2898 = vmatprep.subr.mxu0 0.0
      %2899 = vmatpush1.msra.mxu0 %v2724
      %2900 = vmatprep.subr.mxu0 0.0
      %2901 = vmatpush1.msra.mxu0 %v2725
      %2902 = vmatprep.subr.mxu0 0.0
      %2903 = vmatpush1.msra.mxu0 %v2726
      %2904 = vmatprep.subr.mxu0 0.0
      %2905 = vmatpush1.msra.mxu0 %v2727
      %2906 = vmatprep.subr.mxu0 0.0
      %2907 = vmatpush1.msra.mxu0 %v2728
      %2908 = vmatprep.subr.mxu0 0.0
      %2909 = vmatpush1.msra.mxu0 %v2729
      %2910 = vmatprep.subr.mxu0 0.0
      %2911 = vmatpush1.msra.mxu0 %v2730
      %2912 = vmatprep.subr.mxu0 0.0
      %2913 = vmatpush1.msra.mxu0 %v2731
      %2914 = vmatprep.subr.mxu0 0.0
      %2915 = vmatpush1.msra.mxu0 %v2732
      %2916 = vmatprep.subr.mxu0 0.0
      %2917 = vmatpush1.msra.mxu0 %v2733
      %2918 = vmatprep.subr.mxu0 0.0
      %2919 = vmatpush1.msra.mxu0 %v2734
      %2920 = vmatprep.subr.mxu0 0.0
      %2921 = vmatpush1.msra.mxu0 %v2735
      %2922 = vmatprep.subr.mxu0 0.0
      %2923 = vmatpush1.msra.mxu0 %v2736
      %2924 = vmatprep.subr.mxu0 0.0
      %2925 = vmatpush1.msra.mxu0 %v2737
      %2926 = vmatprep.subr.mxu0 0.0
      %2927 = vmatpush1.msra.mxu0 %v2738
      %2928 = vmatprep.subr.mxu0 0.0
      %2929 = vmatpush1.msra.mxu0 %v2739
      %2930 = vmatprep.mubr.f32.mxu0 %v2865
      %2931 = vmatmul.mubr.f32.gmra.mrb[0].mxu0 %v2864
      %v2932 = vpop.f32.mrb[0].mxu0
      %v2933 = vadd.f32 0.0, %v2932
      %v2934 = vpop.f32.mrb[0].mxu0
      %2935 = vdwg.mxu0
      %v2936 = vadd.f32 %v2672, %v2933
      %v2938 = vlaneseq
      %v2939 = vshrl.u32 %v2938, 7
      %v2940 = vsub.s32 0, %v2939
      %v2941 = vrot.slane %v2740, %v2940
      %v2943 = vadd.f32 %v2936, %v2941
      %v2944 = vld [vmem:[%s14] sm:$0x1]
      %v2945 = vld [vmem:[%s15] sm:$0x1]
      %2946 = vadd.xlane.f32.xlu0 %v2943
      %v2947 = vpop.xlane.xlu0 %2946
      %v2948 = vmul.f32 %v2947, %v537
      %v2949 = vsub.f32 %v2943, %v2948
      %v2950 = vmul.f32 %v2949, %v2949
      %2951 = vadd.xlane.f32.xlu0 %v2950
      %v2952 = vpop.xlane.xlu0 %2951
      %v2953 = vmul.f32 %v2952, %v537
      %v2954 = vadd.f32 %v2953, 1e-05
      %v2955 = vrsqrt.pop %v2954
      %v2956 = vmul.f32 %v2949, %v2955
      %v2958 = vlaneseq
      %v2959 = vshrl.u32 %v2958, 7
      %v2960 = vsub.s32 0, %v2959
      %v2961 = vrot.slane %v2944, %v2960
      %v2963 = vmul.f32 %v2956, %v2961
      %v2965 = vlaneseq
      %v2966 = vshrl.u32 %v2965, 7
      %v2967 = vsub.s32 0, %v2966
      %v2968 = vrot.slane %v2945, %v2967
      %v2970 = vadd.f32 %v2963, %v2968
      %2971 = vst [vmem:[%s530] sm:$0xff] %v2970
      %p2972 = scmp.lt.s32.totalorder %s27, 1
      %s2973 = scalar_select %p2972, %s27, 1
      %s2974 = smul.addr %s2973, 8
      %s2975 = scalar_lea.vmem %s16, %s2974
      // Predicated region
      $region85: #{pegasus_forward.2} parent=83 // pred_check
        %p2976 = pneg %p391
      $region86: #{pegasus_forward.2} parent=83 // pred_check_branch
        %2978 = sbr.rel (%p2976) target = $region88
      $region87: #{pegasus_forward.2} parent=83 // pred_region
        _
      $region88: #{pegasus_forward.2} parent=83 // pred_fallthru
        _
    $region84: #{pegasus_forward.2} parent=5 // pred_fallthru
      _
    %p2979 = scmp.le.s32.totalorder 2, %s22
    // Predicated region
    $region89: #{pegasus_forward.2} parent=5 // pred_check
      %p2980 = pneg %p2979
    $region90: #{pegasus_forward.2} parent=5 // pred_check_branch
      %2982 = sbr.rel (%p2980) target = $region92
    $region91: #{pegasus_forward.2} parent=5 // pred_region
      %s2983 = ssub.s32 %s22, 2
      // Predicated region
      $region93: #{pegasus_forward.2} parent=91 // pred_check
        %p2984 = pneg %p397
      $region94: #{pegasus_forward.2} parent=91 // pred_check_branch
        %2986 = sbr.rel (%p2984) target = $region96
      $region95: #{pegasus_forward.2} parent=91 // pred_region
        %p2987 = scmp.lt.s32.totalorder %s28, 1
        %s2988 = scalar_select %p2987, %s28, 1
        %s2989 = smul.addr %s2988, 8
        %s2990 = scalar_lea.vmem %s16, %s2989
      $region96: #{pegasus_forward.2} parent=91 // pred_fallthru
        _
    $region92: #{pegasus_forward.2} parent=5 // pred_fallthru
      _
  $region6: #{pegasus_forward.2} parent=0 // loop_footer
    %s26 = sadd.s32 1, %s22
  $region7: #{pegasus_forward.2} parent=0 // loop_footer_branch
    %21 = sbr.rel target = $region3
  $region8: #{pegasus_forward.2} parent=0 // loop_exit
    _

// kernel: pegasus_forward.3
$region0: #{pegasus_forward.3}
  #allocation0 [shape = 'u32[]', space=smem, size = 0x4, offset = 0x4, fixed_abs, tag = 'smem constant byte address 0x4 - core index']
  #allocation1 [shape = 'u32[144,128]{1,0:T(1,128)}', space=vmem, size = 0x12000, scoped, tag = 'internal scratch']
  %s0 = inlined_call_operand.vmem [shape: f32[2,8,128], index: 0, kind: input, shape index: {}]
  %s1 = inlined_call_operand.vmem [shape: f32[2,8,128], index: 1, kind: input, shape index: {}]
  %s2 = inlined_call_operand.vmem [shape: f32[2,1,8], index: 2, kind: input, shape index: {}]
  %s3 = inlined_call_operand.vmem [shape: f32[1,128], index: 3, kind: input, shape index: {}]
  %s4 = inlined_call_operand.vmem [shape: f32[1,128], index: 4, kind: input, shape index: {}]
  %s5 = inlined_call_operand.vmem [shape: f32[12,128,32], index: 5, kind: input, shape index: {}]
  %s6 = inlined_call_operand.vmem [shape: f32[12,1,32], index: 6, kind: input, shape index: {}]
  %s7 = inlined_call_operand.vmem [shape: f32[4,32,128], index: 7, kind: input, shape index: {}]
  %s8 = inlined_call_operand.vmem [shape: f32[1,128], index: 8, kind: input, shape index: {}]
  %s9 = inlined_call_operand.vmem [shape: f32[1,128], index: 9, kind: input, shape index: {}]
  %s10 = inlined_call_operand.vmem [shape: f32[1,128], index: 10, kind: input, shape index: {}]
  %s11 = inlined_call_operand.vmem [shape: f32[12,128,32], index: 11, kind: input, shape index: {}]
  %s12 = inlined_call_operand.vmem [shape: f32[12,1,32], index: 12, kind: input, shape index: {}]
  %s13 = inlined_call_operand.vmem [shape: f32[4,32,128], index: 13, kind: input, shape index: {}]
  %s14 = inlined_call_operand.vmem [shape: f32[1,128], index: 14, kind: input, shape index: {}]
  %s15 = inlined_call_operand.vmem [shape: f32[1,128], index: 15, kind: input, shape index: {}]
  %s16 = inlined_call_operand.vmem [shape: f32[1,128], index: 16, kind: input, shape index: {}]
  %s17 = inlined_call_operand.vmem [shape: f32[128,256], index: 17, kind: input, shape index: {}]
  %s18 = inlined_call_operand.vmem [shape: f32[1,256], index: 18, kind: input, shape index: {}]
  %s19 = inlined_call_operand.vmem [shape: f32[256,128], index: 19, kind: input, shape index: {}]
  %s20 = inlined_call_operand.vmem [shape: f32[1,128], index: 20, kind: input, shape index: {}]
  %s21 = inlined_call_operand.vmem [shape: f32[1,128], index: 21, kind: input, shape index: {}]
  %s22 = inlined_call_operand.vmem [shape: f32[1,128], index: 22, kind: input, shape index: {}]
  %s23 = inlined_call_operand.vmem [shape: f32[128,128], index: 23, kind: input, shape index: {}]
  %s24 = inlined_call_operand.hbm [shape: f32[2,8,128], index: 24, kind: output, shape index: {}]
  %s25 = sld [smem:[#allocation0]]
  $region129: #{pegasus_forward.3} parent=0
    _
  %s27 = ssub.s32 1, %s25
  %s28 = scalar_select 0, %s27, %s25
  $region1: #{pegasus_forward.3} parent=0
    #allocation2 [shape = 'u8[8192]{0}', space=vmem, size = 0x2000, scoped, tag = 'output window, operand 0']
    #allocation3 [shape = 's32[2]{0}', space=sflag, size = 0x8, scoped, tag = 'scoped memory for pegasus_forward.3']
    %29 = vsyncpa [#allocation3], 0
    %s30 = scalar_lea.sflag [#allocation3], 1
    %31 = vsyncpa %s30, 0
    loop: start=0, step=1, limit=4
    $region2: #{pegasus_forward.3} parent=1 // loop_pre_header
      _
    $region3: #{pegasus_forward.3} parent=1 // loop_header
      %s33 = sphi 0, %s37
      %p34 = scmp.ge.s32.totalorder %s33, 4
      %s43 = sphi 0, %s45
      %s46 = sphi 0, %s43
      %s47 = sphi 0, %s46
      %s63 = sphi 0, %s47
      %s69 = sphi 0, %s71
      %s72 = sphi 0, %s69
      %s73 = sphi 0, %s72
      %s89 = sphi 0, %s73
      %s95 = sphi 0, %s97
      %s98 = sphi 0, %s95
      %s99 = sphi 0, %s98
      %s115 = sphi 0, %s99
      %s119 = sphi 0, %s119
      %s121 = sphi 0, %s119
      %s122 = sphi 0, %s121
      %s136 = sphi 0, %s122
      %s140 = sphi 0, %s140
      %s142 = sphi 0, %s140
      %s143 = sphi 0, %s142
      %s157 = sphi 0, %s143
      %s161 = sphi 0, %s161
      %s163 = sphi 0, %s161
      %s164 = sphi 0, %s163
      %s178 = sphi 0, %s164
      %s182 = sphi 0, %s182
      %s184 = sphi 0, %s182
      %s185 = sphi 0, %s184
      %s199 = sphi 0, %s185
      %s203 = sphi 0, %s203
      %s205 = sphi 0, %s203
      %s206 = sphi 0, %s205
      %s220 = sphi 0, %s206
      %s224 = sphi 0, %s224
      %s226 = sphi 0, %s224
      %s227 = sphi 0, %s226
      %s241 = sphi 0, %s227
      %s245 = sphi 0, %s245
      %s247 = sphi 0, %s245
      %s248 = sphi 0, %s247
      %s262 = sphi 0, %s248
      %s266 = sphi 0, %s266
      %s268 = sphi 0, %s266
      %s269 = sphi 0, %s268
      %s283 = sphi 0, %s269
      %s287 = sphi 0, %s287
      %s289 = sphi 0, %s287
      %s290 = sphi 0, %s289
      %s304 = sphi 0, %s290
      %s308 = sphi 0, %s308
      %s310 = sphi 0, %s308
      %s311 = sphi 0, %s310
      %s325 = sphi 0, %s311
      %s329 = sphi 0, %s329
      %s331 = sphi 0, %s329
      %s332 = sphi 0, %s331
      %s346 = sphi 0, %s332
      %s350 = sphi 0, %s350
      %s352 = sphi 0, %s350
      %s353 = sphi 0, %s352
      %s367 = sphi 0, %s353
      %s371 = sphi 0, %s371
      %s373 = sphi 0, %s371
      %s374 = sphi 0, %s373
      %s388 = sphi 0, %s374
      %s392 = sphi 0, %s392
      %s394 = sphi 0, %s392
      %s395 = sphi 0, %s394
      %s409 = sphi 0, %s395
      %s413 = sphi 0, %s413
      %s415 = sphi 0, %s413
      %s416 = sphi 0, %s415
      %s430 = sphi 0, %s416
      %s434 = sphi 0, %s434
      %s436 = sphi 0, %s434
      %s437 = sphi 0, %s436
      %s451 = sphi 0, %s437
      %s455 = sphi 0, %s455
      %s457 = sphi 0, %s455
      %s458 = sphi 0, %s457
      %s472 = sphi 0, %s458
      %s476 = sphi 0, %s476
      %s478 = sphi 0, %s476
      %s479 = sphi 0, %s478
      %s493 = sphi 0, %s479
      %s497 = sphi 0, %s497
      %s499 = sphi 0, %s497
      %s500 = sphi 0, %s499
      %s514 = sphi 0, %s500
      %s518 = sphi 0, %s518
      %s520 = sphi 0, %s518
      %s521 = sphi 0, %s520
      %s535 = sphi 0, %s521
      %s539 = sphi 0, %s539
      %s541 = sphi 0, %s539
      %s542 = sphi 0, %s541
      %s556 = sphi 0, %s542
      %s562 = sphi 0, %s564
      %s565 = sphi 0, %s562
      %s566 = sphi 0, %s565
      %s582 = sphi 0, %s566
    $region4: #{pegasus_forward.3} parent=1 // loop_header_branch
      %36 = sbr.rel (%p34) target = $region8
    $region5: #{pegasus_forward.3} parent=1 // loop_body
      %s38 = ssub.s32 %s33, 1
      %s39 = ssub.s32 %s33, 2
      %s40 = sadd.s32 %s33, 1
      %s41 = ssub.s32 %s33, %s40
      %p42 = scmp.eq.s32.totalorder %s41, 0
      %s44 = sadd.s32 %s43, 1
      %s45 = scalar_select %p42, %s43, %s44
      %p48 = pneg %p42
      %p49 = scmp.eq.s32.totalorder %s33, 1
      %p50 = por %p48, %p49
      %p51 = scmp.ne.s32.totalorder %s43, %s46
      %p52 = scmp.eq.s32.totalorder %s33, 0
      %p53 = por %p51, %p52
      %p54 = scmp.ne.s32.totalorder %s43, %s46
      %p55 = scmp.eq.s32.totalorder %s38, 1
      %p56 = por %p54, %p55
      %p57 = scmp.ne.s32.totalorder %s46, %s47
      %p58 = scmp.eq.s32.totalorder %s38, 0
      %p59 = por %p57, %p58
      %p60 = scmp.ne.s32.totalorder %s46, %s47
      %p61 = scmp.eq.s32.totalorder %s39, 1
      %p62 = por %p60, %p61
      %p64 = scmp.ne.s32.totalorder %s47, %s63
      %p65 = scmp.eq.s32.totalorder %s39, 0
      %p66 = por %p64, %p65
      %s67 = ssub.s32 %s33, %s40
      %p68 = scmp.eq.s32.totalorder %s67, 0
      %s70 = sadd.s32 %s69, 1
      %s71 = scalar_select %p68, %s69, %s70
      %p74 = pneg %p68
      %p75 = scmp.eq.s32.totalorder %s33, 1
      %p76 = por %p74, %p75
      %p77 = scmp.ne.s32.totalorder %s69, %s72
      %p78 = scmp.eq.s32.totalorder %s33, 0
      %p79 = por %p77, %p78
      %p80 = scmp.ne.s32.totalorder %s69, %s72
      %p81 = scmp.eq.s32.totalorder %s38, 1
      %p82 = por %p80, %p81
      %p83 = scmp.ne.s32.totalorder %s72, %s73
      %p84 = scmp.eq.s32.totalorder %s38, 0
      %p85 = por %p83, %p84
      %p86 = scmp.ne.s32.totalorder %s72, %s73
      %p87 = scmp.eq.s32.totalorder %s39, 1
      %p88 = por %p86, %p87
      %p90 = scmp.ne.s32.totalorder %s73, %s89
      %p91 = scmp.eq.s32.totalorder %s39, 0
      %p92 = por %p90, %p91
      %s93 = ssub.s32 %s33, %s40
      %p94 = scmp.eq.s32.totalorder %s93, 0
      %s96 = sadd.s32 %s95, 1
      %s97 = scalar_select %p94, %s95, %s96
      %p100 = pneg %p94
      %p101 = scmp.eq.s32.totalorder %s33, 1
      %p102 = por %p100, %p101
      %p103 = scmp.ne.s32.totalorder %s95, %s98
      %p104 = scmp.eq.s32.totalorder %s33, 0
      %p105 = por %p103, %p104
      %p106 = scmp.ne.s32.totalorder %s95, %s98
      %p107 = scmp.eq.s32.totalorder %s38, 1
      %p108 = por %p106, %p107
      %p109 = scmp.ne.s32.totalorder %s98, %s99
      %p110 = scmp.eq.s32.totalorder %s38, 0
      %p111 = por %p109, %p110
      %p112 = scmp.ne.s32.totalorder %s98, %s99
      %p113 = scmp.eq.s32.totalorder %s39, 1
      %p114 = por %p112, %p113
      %p116 = scmp.ne.s32.totalorder %s99, %s115
      %p117 = scmp.eq.s32.totalorder %s39, 0
      %p118 = por %p116, %p117
      %s120 = sadd.s32 %s119, 1
      %p123 = scmp.eq.s32.totalorder %s33, 1
      %p124 = scmp.ne.s32.totalorder %s119, %s121
      %p125 = scmp.eq.s32.totalorder %s33, 0
      %p126 = por %p124, %p125
      %p127 = scmp.ne.s32.totalorder %s119, %s121
      %p128 = scmp.eq.s32.totalorder %s38, 1
      %p129 = por %p127, %p128
      %p130 = scmp.ne.s32.totalorder %s121, %s122
      %p131 = scmp.eq.s32.totalorder %s38, 0
      %p132 = por %p130, %p131
      %p133 = scmp.ne.s32.totalorder %s121, %s122
      %p134 = scmp.eq.s32.totalorder %s39, 1
      %p135 = por %p133, %p134
      %p137 = scmp.ne.s32.totalorder %s122, %s136
      %p138 = scmp.eq.s32.totalorder %s39, 0
      %p139 = por %p137, %p138
      %s141 = sadd.s32 %s140, 1
      %p144 = scmp.eq.s32.totalorder %s33, 1
      %p145 = scmp.ne.s32.totalorder %s140, %s142
      %p146 = scmp.eq.s32.totalorder %s33, 0
      %p147 = por %p145, %p146
      %p148 = scmp.ne.s32.totalorder %s140, %s142
      %p149 = scmp.eq.s32.totalorder %s38, 1
      %p150 = por %p148, %p149
      %p151 = scmp.ne.s32.totalorder %s142, %s143
      %p152 = scmp.eq.s32.totalorder %s38, 0
      %p153 = por %p151, %p152
      %p154 = scmp.ne.s32.totalorder %s142, %s143
      %p155 = scmp.eq.s32.totalorder %s39, 1
      %p156 = por %p154, %p155
      %p158 = scmp.ne.s32.totalorder %s143, %s157
      %p159 = scmp.eq.s32.totalorder %s39, 0
      %p160 = por %p158, %p159
      %s162 = sadd.s32 %s161, 1
      %p165 = scmp.eq.s32.totalorder %s33, 1
      %p166 = scmp.ne.s32.totalorder %s161, %s163
      %p167 = scmp.eq.s32.totalorder %s33, 0
      %p168 = por %p166, %p167
      %p169 = scmp.ne.s32.totalorder %s161, %s163
      %p170 = scmp.eq.s32.totalorder %s38, 1
      %p171 = por %p169, %p170
      %p172 = scmp.ne.s32.totalorder %s163, %s164
      %p173 = scmp.eq.s32.totalorder %s38, 0
      %p174 = por %p172, %p173
      %p175 = scmp.ne.s32.totalorder %s163, %s164
      %p176 = scmp.eq.s32.totalorder %s39, 1
      %p177 = por %p175, %p176
      %p179 = scmp.ne.s32.totalorder %s164, %s178
      %p180 = scmp.eq.s32.totalorder %s39, 0
      %p181 = por %p179, %p180
      %s183 = sadd.s32 %s182, 1
      %p186 = scmp.eq.s32.totalorder %s33, 1
      %p187 = scmp.ne.s32.totalorder %s182, %s184
      %p188 = scmp.eq.s32.totalorder %s33, 0
      %p189 = por %p187, %p188
      %p190 = scmp.ne.s32.totalorder %s182, %s184
      %p191 = scmp.eq.s32.totalorder %s38, 1
      %p192 = por %p190, %p191
      %p193 = scmp.ne.s32.totalorder %s184, %s185
      %p194 = scmp.eq.s32.totalorder %s38, 0
      %p195 = por %p193, %p194
      %p196 = scmp.ne.s32.totalorder %s184, %s185
      %p197 = scmp.eq.s32.totalorder %s39, 1
      %p198 = por %p196, %p197
      %p200 = scmp.ne.s32.totalorder %s185, %s199
      %p201 = scmp.eq.s32.totalorder %s39, 0
      %p202 = por %p200, %p201
      %s204 = sadd.s32 %s203, 1
      %p207 = scmp.eq.s32.totalorder %s33, 1
      %p208 = scmp.ne.s32.totalorder %s203, %s205
      %p209 = scmp.eq.s32.totalorder %s33, 0
      %p210 = por %p208, %p209
      %p211 = scmp.ne.s32.totalorder %s203, %s205
      %p212 = scmp.eq.s32.totalorder %s38, 1
      %p213 = por %p211, %p212
      %p214 = scmp.ne.s32.totalorder %s205, %s206
      %p215 = scmp.eq.s32.totalorder %s38, 0
      %p216 = por %p214, %p215
      %p217 = scmp.ne.s32.totalorder %s205, %s206
      %p218 = scmp.eq.s32.totalorder %s39, 1
      %p219 = por %p217, %p218
      %p221 = scmp.ne.s32.totalorder %s206, %s220
      %p222 = scmp.eq.s32.totalorder %s39, 0
      %p223 = por %p221, %p222
      %s225 = sadd.s32 %s224, 1
      %p228 = scmp.eq.s32.totalorder %s33, 1
      %p229 = scmp.ne.s32.totalorder %s224, %s226
      %p230 = scmp.eq.s32.totalorder %s33, 0
      %p231 = por %p229, %p230
      %p232 = scmp.ne.s32.totalorder %s224, %s226
      %p233 = scmp.eq.s32.totalorder %s38, 1
      %p234 = por %p232, %p233
      %p235 = scmp.ne.s32.totalorder %s226, %s227
      %p236 = scmp.eq.s32.totalorder %s38, 0
      %p237 = por %p235, %p236
      %p238 = scmp.ne.s32.totalorder %s226, %s227
      %p239 = scmp.eq.s32.totalorder %s39, 1
      %p240 = por %p238, %p239
      %p242 = scmp.ne.s32.totalorder %s227, %s241
      %p243 = scmp.eq.s32.totalorder %s39, 0
      %p244 = por %p242, %p243
      %s246 = sadd.s32 %s245, 1
      %p249 = scmp.eq.s32.totalorder %s33, 1
      %p250 = scmp.ne.s32.totalorder %s245, %s247
      %p251 = scmp.eq.s32.totalorder %s33, 0
      %p252 = por %p250, %p251
      %p253 = scmp.ne.s32.totalorder %s245, %s247
      %p254 = scmp.eq.s32.totalorder %s38, 1
      %p255 = por %p253, %p254
      %p256 = scmp.ne.s32.totalorder %s247, %s248
      %p257 = scmp.eq.s32.totalorder %s38, 0
      %p258 = por %p256, %p257
      %p259 = scmp.ne.s32.totalorder %s247, %s248
      %p260 = scmp.eq.s32.totalorder %s39, 1
      %p261 = por %p259, %p260
      %p263 = scmp.ne.s32.totalorder %s248, %s262
      %p264 = scmp.eq.s32.totalorder %s39, 0
      %p265 = por %p263, %p264
      %s267 = sadd.s32 %s266, 1
      %p270 = scmp.eq.s32.totalorder %s33, 1
      %p271 = scmp.ne.s32.totalorder %s266, %s268
      %p272 = scmp.eq.s32.totalorder %s33, 0
      %p273 = por %p271, %p272
      %p274 = scmp.ne.s32.totalorder %s266, %s268
      %p275 = scmp.eq.s32.totalorder %s38, 1
      %p276 = por %p274, %p275
      %p277 = scmp.ne.s32.totalorder %s268, %s269
      %p278 = scmp.eq.s32.totalorder %s38, 0
      %p279 = por %p277, %p278
      %p280 = scmp.ne.s32.totalorder %s268, %s269
      %p281 = scmp.eq.s32.totalorder %s39, 1
      %p282 = por %p280, %p281
      %p284 = scmp.ne.s32.totalorder %s269, %s283
      %p285 = scmp.eq.s32.totalorder %s39, 0
      %p286 = por %p284, %p285
      %s288 = sadd.s32 %s287, 1
      %p291 = scmp.eq.s32.totalorder %s33, 1
      %p292 = scmp.ne.s32.totalorder %s287, %s289
      %p293 = scmp.eq.s32.totalorder %s33, 0
      %p294 = por %p292, %p293
      %p295 = scmp.ne.s32.totalorder %s287, %s289
      %p296 = scmp.eq.s32.totalorder %s38, 1
      %p297 = por %p295, %p296
      %p298 = scmp.ne.s32.totalorder %s289, %s290
      %p299 = scmp.eq.s32.totalorder %s38, 0
      %p300 = por %p298, %p299
      %p301 = scmp.ne.s32.totalorder %s289, %s290
      %p302 = scmp.eq.s32.totalorder %s39, 1
      %p303 = por %p301, %p302
      %p305 = scmp.ne.s32.totalorder %s290, %s304
      %p306 = scmp.eq.s32.totalorder %s39, 0
      %p307 = por %p305, %p306
      %s309 = sadd.s32 %s308, 1
      %p312 = scmp.eq.s32.totalorder %s33, 1
      %p313 = scmp.ne.s32.totalorder %s308, %s310
      %p314 = scmp.eq.s32.totalorder %s33, 0
      %p315 = por %p313, %p314
      %p316 = scmp.ne.s32.totalorder %s308, %s310
      %p317 = scmp.eq.s32.totalorder %s38, 1
      %p318 = por %p316, %p317
      %p319 = scmp.ne.s32.totalorder %s310, %s311
      %p320 = scmp.eq.s32.totalorder %s38, 0
      %p321 = por %p319, %p320
      %p322 = scmp.ne.s32.totalorder %s310, %s311
      %p323 = scmp.eq.s32.totalorder %s39, 1
      %p324 = por %p322, %p323
      %p326 = scmp.ne.s32.totalorder %s311, %s325
      %p327 = scmp.eq.s32.totalorder %s39, 0
      %p328 = por %p326, %p327
      %s330 = sadd.s32 %s329, 1
      %p333 = scmp.eq.s32.totalorder %s33, 1
      %p334 = scmp.ne.s32.totalorder %s329, %s331
      %p335 = scmp.eq.s32.totalorder %s33, 0
      %p336 = por %p334, %p335
      %p337 = scmp.ne.s32.totalorder %s329, %s331
      %p338 = scmp.eq.s32.totalorder %s38, 1
      %p339 = por %p337, %p338
      %p340 = scmp.ne.s32.totalorder %s331, %s332
      %p341 = scmp.eq.s32.totalorder %s38, 0
      %p342 = por %p340, %p341
      %p343 = scmp.ne.s32.totalorder %s331, %s332
      %p344 = scmp.eq.s32.totalorder %s39, 1
      %p345 = por %p343, %p344
      %p347 = scmp.ne.s32.totalorder %s332, %s346
      %p348 = scmp.eq.s32.totalorder %s39, 0
      %p349 = por %p347, %p348
      %s351 = sadd.s32 %s350, 1
      %p354 = scmp.eq.s32.totalorder %s33, 1
      %p355 = scmp.ne.s32.totalorder %s350, %s352
      %p356 = scmp.eq.s32.totalorder %s33, 0
      %p357 = por %p355, %p356
      %p358 = scmp.ne.s32.totalorder %s350, %s352
      %p359 = scmp.eq.s32.totalorder %s38, 1
      %p360 = por %p358, %p359
      %p361 = scmp.ne.s32.totalorder %s352, %s353
      %p362 = scmp.eq.s32.totalorder %s38, 0
      %p363 = por %p361, %p362
      %p364 = scmp.ne.s32.totalorder %s352, %s353
      %p365 = scmp.eq.s32.totalorder %s39, 1
      %p366 = por %p364, %p365
      %p368 = scmp.ne.s32.totalorder %s353, %s367
      %p369 = scmp.eq.s32.totalorder %s39, 0
      %p370 = por %p368, %p369
      %s372 = sadd.s32 %s371, 1
      %p375 = scmp.eq.s32.totalorder %s33, 1
      %p376 = scmp.ne.s32.totalorder %s371, %s373
      %p377 = scmp.eq.s32.totalorder %s33, 0
      %p378 = por %p376, %p377
      %p379 = scmp.ne.s32.totalorder %s371, %s373
      %p380 = scmp.eq.s32.totalorder %s38, 1
      %p381 = por %p379, %p380
      %p382 = scmp.ne.s32.totalorder %s373, %s374
      %p383 = scmp.eq.s32.totalorder %s38, 0
      %p384 = por %p382, %p383
      %p385 = scmp.ne.s32.totalorder %s373, %s374
      %p386 = scmp.eq.s32.totalorder %s39, 1
      %p387 = por %p385, %p386
      %p389 = scmp.ne.s32.totalorder %s374, %s388
      %p390 = scmp.eq.s32.totalorder %s39, 0
      %p391 = por %p389, %p390
      %s393 = sadd.s32 %s392, 1
      %p396 = scmp.eq.s32.totalorder %s33, 1
      %p397 = scmp.ne.s32.totalorder %s392, %s394
      %p398 = scmp.eq.s32.totalorder %s33, 0
      %p399 = por %p397, %p398
      %p400 = scmp.ne.s32.totalorder %s392, %s394
      %p401 = scmp.eq.s32.totalorder %s38, 1
      %p402 = por %p400, %p401
      %p403 = scmp.ne.s32.totalorder %s394, %s395
      %p404 = scmp.eq.s32.totalorder %s38, 0
      %p405 = por %p403, %p404
      %p406 = scmp.ne.s32.totalorder %s394, %s395
      %p407 = scmp.eq.s32.totalorder %s39, 1
      %p408 = por %p406, %p407
      %p410 = scmp.ne.s32.totalorder %s395, %s409
      %p411 = scmp.eq.s32.totalorder %s39, 0
      %p412 = por %p410, %p411
      %s414 = sadd.s32 %s413, 1
      %p417 = scmp.eq.s32.totalorder %s33, 1
      %p418 = scmp.ne.s32.totalorder %s413, %s415
      %p419 = scmp.eq.s32.totalorder %s33, 0
      %p420 = por %p418, %p419
      %p421 = scmp.ne.s32.totalorder %s413, %s415
      %p422 = scmp.eq.s32.totalorder %s38, 1
      %p423 = por %p421, %p422
      %p424 = scmp.ne.s32.totalorder %s415, %s416
      %p425 = scmp.eq.s32.totalorder %s38, 0
      %p426 = por %p424, %p425
      %p427 = scmp.ne.s32.totalorder %s415, %s416
      %p428 = scmp.eq.s32.totalorder %s39, 1
      %p429 = por %p427, %p428
      %p431 = scmp.ne.s32.totalorder %s416, %s430
      %p432 = scmp.eq.s32.totalorder %s39, 0
      %p433 = por %p431, %p432
      %s435 = sadd.s32 %s434, 1
      %p438 = scmp.eq.s32.totalorder %s33, 1
      %p439 = scmp.ne.s32.totalorder %s434, %s436
      %p440 = scmp.eq.s32.totalorder %s33, 0
      %p441 = por %p439, %p440
      %p442 = scmp.ne.s32.totalorder %s434, %s436
      %p443 = scmp.eq.s32.totalorder %s38, 1
      %p444 = por %p442, %p443
      %p445 = scmp.ne.s32.totalorder %s436, %s437
      %p446 = scmp.eq.s32.totalorder %s38, 0
      %p447 = por %p445, %p446
      %p448 = scmp.ne.s32.totalorder %s436, %s437
      %p449 = scmp.eq.s32.totalorder %s39, 1
      %p450 = por %p448, %p449
      %p452 = scmp.ne.s32.totalorder %s437, %s451
      %p453 = scmp.eq.s32.totalorder %s39, 0
      %p454 = por %p452, %p453
      %s456 = sadd.s32 %s455, 1
      %p459 = scmp.eq.s32.totalorder %s33, 1
      %p460 = scmp.ne.s32.totalorder %s455, %s457
      %p461 = scmp.eq.s32.totalorder %s33, 0
      %p462 = por %p460, %p461
      %p463 = scmp.ne.s32.totalorder %s455, %s457
      %p464 = scmp.eq.s32.totalorder %s38, 1
      %p465 = por %p463, %p464
      %p466 = scmp.ne.s32.totalorder %s457, %s458
      %p467 = scmp.eq.s32.totalorder %s38, 0
      %p468 = por %p466, %p467
      %p469 = scmp.ne.s32.totalorder %s457, %s458
      %p470 = scmp.eq.s32.totalorder %s39, 1
      %p471 = por %p469, %p470
      %p473 = scmp.ne.s32.totalorder %s458, %s472
      %p474 = scmp.eq.s32.totalorder %s39, 0
      %p475 = por %p473, %p474
      %s477 = sadd.s32 %s476, 1
      %p480 = scmp.eq.s32.totalorder %s33, 1
      %p481 = scmp.ne.s32.totalorder %s476, %s478
      %p482 = scmp.eq.s32.totalorder %s33, 0
      %p483 = por %p481, %p482
      %p484 = scmp.ne.s32.totalorder %s476, %s478
      %p485 = scmp.eq.s32.totalorder %s38, 1
      %p486 = por %p484, %p485
      %p487 = scmp.ne.s32.totalorder %s478, %s479
      %p488 = scmp.eq.s32.totalorder %s38, 0
      %p489 = por %p487, %p488
      %p490 = scmp.ne.s32.totalorder %s478, %s479
      %p491 = scmp.eq.s32.totalorder %s39, 1
      %p492 = por %p490, %p491
      %p494 = scmp.ne.s32.totalorder %s479, %s493
      %p495 = scmp.eq.s32.totalorder %s39, 0
      %p496 = por %p494, %p495
      %s498 = sadd.s32 %s497, 1
      %p501 = scmp.eq.s32.totalorder %s33, 1
      %p502 = scmp.ne.s32.totalorder %s497, %s499
      %p503 = scmp.eq.s32.totalorder %s33, 0
      %p504 = por %p502, %p503
      %p505 = scmp.ne.s32.totalorder %s497, %s499
      %p506 = scmp.eq.s32.totalorder %s38, 1
      %p507 = por %p505, %p506
      %p508 = scmp.ne.s32.totalorder %s499, %s500
      %p509 = scmp.eq.s32.totalorder %s38, 0
      %p510 = por %p508, %p509
      %p511 = scmp.ne.s32.totalorder %s499, %s500
      %p512 = scmp.eq.s32.totalorder %s39, 1
      %p513 = por %p511, %p512
      %p515 = scmp.ne.s32.totalorder %s500, %s514
      %p516 = scmp.eq.s32.totalorder %s39, 0
      %p517 = por %p515, %p516
      %s519 = sadd.s32 %s518, 1
      %p522 = scmp.eq.s32.totalorder %s33, 1
      %p523 = scmp.ne.s32.totalorder %s518, %s520
      %p524 = scmp.eq.s32.totalorder %s33, 0
      %p525 = por %p523, %p524
      %p526 = scmp.ne.s32.totalorder %s518, %s520
      %p527 = scmp.eq.s32.totalorder %s38, 1
      %p528 = por %p526, %p527
      %p529 = scmp.ne.s32.totalorder %s520, %s521
      %p530 = scmp.eq.s32.totalorder %s38, 0
      %p531 = por %p529, %p530
      %p532 = scmp.ne.s32.totalorder %s520, %s521
      %p533 = scmp.eq.s32.totalorder %s39, 1
      %p534 = por %p532, %p533
      %p536 = scmp.ne.s32.totalorder %s521, %s535
      %p537 = scmp.eq.s32.totalorder %s39, 0
      %p538 = por %p536, %p537
      %s540 = sadd.s32 %s539, 1
      %p543 = scmp.eq.s32.totalorder %s33, 1
      %p544 = scmp.ne.s32.totalorder %s539, %s541
      %p545 = scmp.eq.s32.totalorder %s33, 0
      %p546 = por %p544, %p545
      %p547 = scmp.ne.s32.totalorder %s539, %s541
      %p548 = scmp.eq.s32.totalorder %s38, 1
      %p549 = por %p547, %p548
      %p550 = scmp.ne.s32.totalorder %s541, %s542
      %p551 = scmp.eq.s32.totalorder %s38, 0
      %p552 = por %p550, %p551
      %p553 = scmp.ne.s32.totalorder %s541, %s542
      %p554 = scmp.eq.s32.totalorder %s39, 1
      %p555 = por %p553, %p554
      %p557 = scmp.ne.s32.totalorder %s542, %s556
      %p558 = scmp.eq.s32.totalorder %s39, 0
      %p559 = por %p557, %p558
      %s560 = ssub.s32 %s33, %s40
      %p561 = scmp.eq.s32.totalorder %s560, 0
      %s563 = sadd.s32 %s562, 1
      %s564 = scalar_select %p561, %s562, %s563
      %p567 = pneg %p561
      %p568 = scmp.eq.s32.totalorder %s33, 1
      %p569 = por %p567, %p568
      %p570 = scmp.ne.s32.totalorder %s562, %s565
      %p571 = scmp.eq.s32.totalorder %s33, 0
      %p572 = por %p570, %p571
      %p573 = scmp.ne.s32.totalorder %s562, %s565
      %p574 = scmp.eq.s32.totalorder %s38, 1
      %p575 = por %p573, %p574
      %p576 = scmp.ne.s32.totalorder %s565, %s566
      %p577 = scmp.eq.s32.totalorder %s38, 0
      %p578 = por %p576, %p577
      %p579 = scmp.ne.s32.totalorder %s565, %s566
      %p580 = scmp.eq.s32.totalorder %s39, 1
      %p581 = por %p579, %p580
      %p583 = scmp.ne.s32.totalorder %s566, %s582
      %p584 = scmp.eq.s32.totalorder %s39, 0
      %p585 = por %p583, %p584
      %p586 = scmp.le.s32.totalorder 1, %s33
      %p587 = scmp.lt.s32.totalorder %s33, 3
      %p588 = pnand %p586, %p587
      %p589 = pneg %p588
      // Predicated region
      $region9: #{pegasus_forward.3} parent=5 // pred_check
        _
      $region10: #{pegasus_forward.3} parent=5 // pred_check_branch
        %591 = sbr.rel (%p588) target = $region12
      $region11: #{pegasus_forward.3} parent=5 // pred_region
        %s592 = ssub.s32 %s33, 1
        // Predicated region
        $region13: #{pegasus_forward.3} parent=11 // pred_check
          %p593 = pneg %p132
        $region14: #{pegasus_forward.3} parent=11 // pred_check_branch
          %595 = sbr.rel (%p593) target = $region16
        $region15: #{pegasus_forward.3} parent=11 // pred_region
          _
        $region16: #{pegasus_forward.3} parent=11 // pred_fallthru
          _
        // Predicated region
        $region17: #{pegasus_forward.3} parent=11 // pred_check
          %p596 = pneg %p153
        $region18: #{pegasus_forward.3} parent=11 // pred_check_branch
          %598 = sbr.rel (%p596) target = $region20
        $region19: #{pegasus_forward.3} parent=11 // pred_region
          _
        $region20: #{pegasus_forward.3} parent=11 // pred_fallthru
          _
        // Predicated region
        $region21: #{pegasus_forward.3} parent=11 // pred_check
          %p599 = pneg %p174
        $region22: #{pegasus_forward.3} parent=11 // pred_check_branch
          %601 = sbr.rel (%p599) target = $region24
        $region23: #{pegasus_forward.3} parent=11 // pred_region
          _
        $region24: #{pegasus_forward.3} parent=11 // pred_fallthru
          _
        // Predicated region
        $region25: #{pegasus_forward.3} parent=11 // pred_check
          %p602 = pneg %p195
        $region26: #{pegasus_forward.3} parent=11 // pred_check_branch
          %604 = sbr.rel (%p602) target = $region28
        $region27: #{pegasus_forward.3} parent=11 // pred_region
          _
        $region28: #{pegasus_forward.3} parent=11 // pred_fallthru
          _
        // Predicated region
        $region29: #{pegasus_forward.3} parent=11 // pred_check
          %p605 = pneg %p216
        $region30: #{pegasus_forward.3} parent=11 // pred_check_branch
          %607 = sbr.rel (%p605) target = $region32
        $region31: #{pegasus_forward.3} parent=11 // pred_region
          _
        $region32: #{pegasus_forward.3} parent=11 // pred_fallthru
          _
        // Predicated region
        $region33: #{pegasus_forward.3} parent=11 // pred_check
          %p608 = pneg %p237
        $region34: #{pegasus_forward.3} parent=11 // pred_check_branch
          %610 = sbr.rel (%p608) target = $region36
        $region35: #{pegasus_forward.3} parent=11 // pred_region
          _
        $region36: #{pegasus_forward.3} parent=11 // pred_fallthru
          _
        // Predicated region
        $region37: #{pegasus_forward.3} parent=11 // pred_check
          %p611 = pneg %p258
        $region38: #{pegasus_forward.3} parent=11 // pred_check_branch
          %613 = sbr.rel (%p611) target = $region40
        $region39: #{pegasus_forward.3} parent=11 // pred_region
          _
        $region40: #{pegasus_forward.3} parent=11 // pred_fallthru
          _
        // Predicated region
        $region41: #{pegasus_forward.3} parent=11 // pred_check
          %p614 = pneg %p279
        $region42: #{pegasus_forward.3} parent=11 // pred_check_branch
          %616 = sbr.rel (%p614) target = $region44
        $region43: #{pegasus_forward.3} parent=11 // pred_region
          _
        $region44: #{pegasus_forward.3} parent=11 // pred_fallthru
          _
        // Predicated region
        $region45: #{pegasus_forward.3} parent=11 // pred_check
          %p617 = pneg %p300
        $region46: #{pegasus_forward.3} parent=11 // pred_check_branch
          %619 = sbr.rel (%p617) target = $region48
        $region47: #{pegasus_forward.3} parent=11 // pred_region
          _
        $region48: #{pegasus_forward.3} parent=11 // pred_fallthru
          _
        // Predicated region
        $region49: #{pegasus_forward.3} parent=11 // pred_check
          %p620 = pneg %p321
        $region50: #{pegasus_forward.3} parent=11 // pred_check_branch
          %622 = sbr.rel (%p620) target = $region52
        $region51: #{pegasus_forward.3} parent=11 // pred_region
          _
        $region52: #{pegasus_forward.3} parent=11 // pred_fallthru
          _
        // Predicated region
        $region53: #{pegasus_forward.3} parent=11 // pred_check
          %p623 = pneg %p342
        $region54: #{pegasus_forward.3} parent=11 // pred_check_branch
          %625 = sbr.rel (%p623) target = $region56
        $region55: #{pegasus_forward.3} parent=11 // pred_region
          _
        $region56: #{pegasus_forward.3} parent=11 // pred_fallthru
          _
        // Predicated region
        $region57: #{pegasus_forward.3} parent=11 // pred_check
          %p626 = pneg %p363
        $region58: #{pegasus_forward.3} parent=11 // pred_check_branch
          %628 = sbr.rel (%p626) target = $region60
        $region59: #{pegasus_forward.3} parent=11 // pred_region
          _
        $region60: #{pegasus_forward.3} parent=11 // pred_fallthru
          _
        // Predicated region
        $region61: #{pegasus_forward.3} parent=11 // pred_check
          %p629 = pneg %p384
        $region62: #{pegasus_forward.3} parent=11 // pred_check_branch
          %631 = sbr.rel (%p629) target = $region64
        $region63: #{pegasus_forward.3} parent=11 // pred_region
          _
        $region64: #{pegasus_forward.3} parent=11 // pred_fallthru
          _
        // Predicated region
        $region65: #{pegasus_forward.3} parent=11 // pred_check
          %p632 = pneg %p405
        $region66: #{pegasus_forward.3} parent=11 // pred_check_branch
          %634 = sbr.rel (%p632) target = $region68
        $region67: #{pegasus_forward.3} parent=11 // pred_region
          _
        $region68: #{pegasus_forward.3} parent=11 // pred_fallthru
          _
        // Predicated region
        $region69: #{pegasus_forward.3} parent=11 // pred_check
          %p635 = pneg %p426
        $region70: #{pegasus_forward.3} parent=11 // pred_check_branch
          %637 = sbr.rel (%p635) target = $region72
        $region71: #{pegasus_forward.3} parent=11 // pred_region
          _
        $region72: #{pegasus_forward.3} parent=11 // pred_fallthru
          _
        // Predicated region
        $region73: #{pegasus_forward.3} parent=11 // pred_check
          %p638 = pneg %p447
        $region74: #{pegasus_forward.3} parent=11 // pred_check_branch
          %640 = sbr.rel (%p638) target = $region76
        $region75: #{pegasus_forward.3} parent=11 // pred_region
          _
        $region76: #{pegasus_forward.3} parent=11 // pred_fallthru
          _
        // Predicated region
        $region77: #{pegasus_forward.3} parent=11 // pred_check
          %p641 = pneg %p468
        $region78: #{pegasus_forward.3} parent=11 // pred_check_branch
          %643 = sbr.rel (%p641) target = $region80
        $region79: #{pegasus_forward.3} parent=11 // pred_region
          _
        $region80: #{pegasus_forward.3} parent=11 // pred_fallthru
          _
        // Predicated region
        $region81: #{pegasus_forward.3} parent=11 // pred_check
          %p644 = pneg %p489
        $region82: #{pegasus_forward.3} parent=11 // pred_check_branch
          %646 = sbr.rel (%p644) target = $region84
        $region83: #{pegasus_forward.3} parent=11 // pred_region
          _
        $region84: #{pegasus_forward.3} parent=11 // pred_fallthru
          _
        // Predicated region
        $region85: #{pegasus_forward.3} parent=11 // pred_check
          %p647 = pneg %p510
        $region86: #{pegasus_forward.3} parent=11 // pred_check_branch
          %649 = sbr.rel (%p647) target = $region88
        $region87: #{pegasus_forward.3} parent=11 // pred_region
          _
        $region88: #{pegasus_forward.3} parent=11 // pred_fallthru
          _
        // Predicated region
        $region89: #{pegasus_forward.3} parent=11 // pred_check
          %p650 = pneg %p531
        $region90: #{pegasus_forward.3} parent=11 // pred_check_branch
          %652 = sbr.rel (%p650) target = $region92
        $region91: #{pegasus_forward.3} parent=11 // pred_region
          _
        $region92: #{pegasus_forward.3} parent=11 // pred_fallthru
          _
        // Predicated region
        $region93: #{pegasus_forward.3} parent=11 // pred_check
          %p653 = pneg %p552
        $region94: #{pegasus_forward.3} parent=11 // pred_check_branch
          %655 = sbr.rel (%p653) target = $region96
        $region95: #{pegasus_forward.3} parent=11 // pred_region
          _
        $region96: #{pegasus_forward.3} parent=11 // pred_fallthru
          _
      $region12: #{pegasus_forward.3} parent=5 // pred_fallthru
        _
      %p656 = scmp.lt.s32.totalorder %s33, 2
      // Predicated region
      $region97: #{pegasus_forward.3} parent=5 // pred_check
        %p657 = pneg %p656
      $region98: #{pegasus_forward.3} parent=5 // pred_check_branch
        %659 = sbr.rel (%p657) target = $region100
      $region99: #{pegasus_forward.3} parent=5 // pred_region
        // Predicated region
        $region101: #{pegasus_forward.3} parent=99 // pred_check
          %p660 = pneg %p53
        $region102: #{pegasus_forward.3} parent=99 // pred_check_branch
          %662 = sbr.rel (%p660) target = $region104
        $region103: #{pegasus_forward.3} parent=99 // pred_region
          %p663 = scmp.lt.s32.totalorder %s33, 1
          %s664 = scalar_select %p663, %s33, 1
          %s665 = smul.addr %s664, 8
          %s666 = scalar_lea.vmem %s0, %s665
        $region104: #{pegasus_forward.3} parent=99 // pred_fallthru
          _
        // Predicated region
        $region105: #{pegasus_forward.3} parent=99 // pred_check
          %p667 = pneg %p79
        $region106: #{pegasus_forward.3} parent=99 // pred_check_branch
          %669 = sbr.rel (%p667) target = $region108
        $region107: #{pegasus_forward.3} parent=99 // pred_region
          %p670 = scmp.lt.s32.totalorder %s33, 1
          %s671 = scalar_select %p670, %s33, 1
          %s672 = smul.addr %s671, 8
          %s673 = scalar_lea.vmem %s1, %s672
        $region108: #{pegasus_forward.3} parent=99 // pred_fallthru
          _
        // Predicated region
        $region109: #{pegasus_forward.3} parent=99 // pred_check
          %p674 = pneg %p105
        $region110: #{pegasus_forward.3} parent=99 // pred_check_branch
          %676 = sbr.rel (%p674) target = $region112
        $region111: #{pegasus_forward.3} parent=99 // pred_region
          %p677 = scmp.lt.s32.totalorder %s33, 1
          %s678 = scalar_select %p677, %s33, 1
          %s679 = scalar_lea.vmem %s2, %s678
        $region112: #{pegasus_forward.3} parent=99 // pred_fallthru
          _
      $region100: #{pegasus_forward.3} parent=5 // pred_fallthru
        _
      %p680 = scmp.le.s32.totalorder 1, %s33
      %p681 = scmp.lt.s32.totalorder %s33, 3
      %p682 = pnand %p680, %p681
      %p683 = pneg %p682
      // Predicated region
      $region113: #{pegasus_forward.3} parent=5 // pred_check
        _
      $region114: #{pegasus_forward.3} parent=5 // pred_check_branch
        %685 = sbr.rel (%p682) target = $region116
      $region115: #{pegasus_forward.3} parent=5 // pred_region
        %s686 = ssub.s32 %s33, 1
        %p687 = scmp.lt.s32.totalorder %s38, 1
        %s688 = scalar_select %p687, %s38, 1
        %s689 = smul.addr %s688, 8
        %s690 = scalar_lea.vmem %s0, %s689
        %p691 = pneg %p59
        %p692 = pneg %p56
        %p693 = scmp.lt.s32.totalorder %s38, 1
        %s694 = scalar_select %p693, %s38, 1
        %s695 = smul.addr %s694, 8
        %s696 = scalar_lea.vmem %s1, %s695
        %p697 = pneg %p85
        %p698 = pneg %p82
        %p699 = scmp.lt.s32.totalorder %s38, 1
        %s700 = scalar_select %p699, %s38, 1
        %s701 = scalar_lea.vmem %s2, %s700
        %p702 = pneg %p111
        %p703 = pneg %p108
        %p704 = pneg %p132
        %p705 = pneg %p129
        %p706 = pneg %p153
        %p707 = pneg %p150
        %p708 = pneg %p174
        %p709 = pneg %p171
        %p710 = pneg %p195
        %p711 = pneg %p192
        %p712 = pneg %p216
        %p713 = pneg %p213
        %p714 = pneg %p237
        %p715 = pneg %p234
        %p716 = pneg %p258
        %p717 = pneg %p255
        %p718 = pneg %p279
        %p719 = pneg %p276
        %p720 = pneg %p300
        %p721 = pneg %p297
        %p722 = pneg %p321
        %p723 = pneg %p318
        %p724 = pneg %p342
        %p725 = pneg %p339
        %p726 = pneg %p363
        %p727 = pneg %p360
        %p728 = pneg %p384
        %p729 = pneg %p381
        %p730 = pneg %p405
        %p731 = pneg %p402
        %p732 = pneg %p426
        %p733 = pneg %p423
        %p734 = pneg %p447
        %p735 = pneg %p444
        %p736 = pneg %p468
        %p737 = pneg %p465
        %p738 = pneg %p489
        %p739 = pneg %p486
        %p740 = pneg %p510
        %p741 = pneg %p507
        %p742 = pneg %p531
        %p743 = pneg %p528
        %p744 = pneg %p552
        %p745 = pneg %p549
        %p746 = pneg %p578
        %p747 = pneg %p575
        %s748 = sand.u32 %s565, 1
        %s749 = scalar_lea.sflag [#allocation3], %s748
        %s750 = sand.u32 %s565, 1
        %s751 = smul.addr %s750, 8
        %s752 = scalar_lea.vmem [#allocation2], %s751
        %p753 = scmp.lt.s32.totalorder %s38, 1
        %s754 = scalar_select %p753, %s38, 1
        %s755 = smul.addr %s754, 8
        %s756 = scalar_lea.vmem %s0, %s755
        %p757 = scmp.lt.s32.totalorder %s38, 1
        %s758 = scalar_select %p757, %s38, 1
        %s759 = smul.addr %s758, 8
        %s760 = scalar_lea.vmem %s1, %s759
        %p761 = scmp.lt.s32.totalorder %s38, 1
        %s762 = scalar_select %p761, %s38, 1
        %s763 = scalar_lea.vmem %s2, %s762
        %v764 = vld [vmem:[%s756] sm:$0xff]
        %v765 = vld [vmem:[%s760] sm:$0xff]
        %v766 = vld [vmem:[%s763] sm:$0x1]
        %v767 = vlaneseq
        %v768 = vshrl.u32 %v767, 7
        %v769 = vlaneseq
        %v770 = vand.u32 %v769, 127
        %vm771 = vcmp.gt.s32.totalorder %v770, %v768
        %v772 = vsel %vm771, -1e+09, 0.0
        %v773 = vld [vmem:[%s3] sm:$0x1]
        %v774 = vld [vmem:[%s4] sm:$0x1]
        %775 = vadd.xlane.f32.xlu0 %v764
        %v776 = vpop.xlane.xlu0 %775
        %v777 = vrcp.pop 128.0
        %v778 = vmul.f32 %v776, %v777
        %v779 = vsub.f32 %v764, %v778
        %v780 = vmul.f32 %v779, %v779
        %781 = vadd.xlane.f32.xlu0 %v780
        %v782 = vpop.xlane.xlu0 %781
        %v783 = vmul.f32 %v782, %v777
        %v784 = vadd.f32 %v783, 1e-05
        %v785 = vrsqrt.pop %v784
        %v786 = vmul.f32 %v779, %v785
        %v788 = vlaneseq
        %v789 = vshrl.u32 %v788, 7
        %v790 = vsub.s32 0, %v789
        %v791 = vrot.slane %v773, %v790
        %v793 = vmul.f32 %v786, %v791
        %v795 = vlaneseq
        %v796 = vshrl.u32 %v795, 7
        %v797 = vsub.s32 0, %v796
        %v798 = vrot.slane %v774, %v797
        %v800 = vadd.f32 %v793, %v798
        %v801 = vld [vmem:[%s5] sm:$0xff]
        %v802 = vld [vmem:[%s5 + $0x8] sm:$0xff]
        %v803 = vld [vmem:[%s5 + $0x10] sm:$0xff]
        %v804 = vld [vmem:[%s5 + $0x18] sm:$0xff]
        %v805 = vld [vmem:[%s5 + $0x20] sm:$0xff]
        %v806 = vld [vmem:[%s5 + $0x28] sm:$0xff]
        %v807 = vld [vmem:[%s5 + $0x30] sm:$0xff]
        %v808 = vld [vmem:[%s5 + $0x38] sm:$0xff]
        %v809 = vld [vmem:[%s5 + $0x40] sm:$0xff]
        %v810 = vld [vmem:[%s5 + $0x48] sm:$0xff]
        %v811 = vld [vmem:[%s5 + $0x50] sm:$0xff]
        %v812 = vld [vmem:[%s5 + $0x58] sm:$0xff]
        %v813 = vld [vmem:[%s5 + $0x60] sm:$0xff]
        %v814 = vld [vmem:[%s5 + $0x68] sm:$0xff]
        %v815 = vld [vmem:[%s5 + $0x70] sm:$0xff]
        %v816 = vld [vmem:[%s5 + $0x78] sm:$0xff]
        %v817 = vld [vmem:[%s6] sm:$0x1]
        %v819 = vlaneseq
        %v820 = vshrl.u32 %v819, 7
        %v821 = vsub.s32 0, %v820
        %v822 = vrot.slane %v817, %v821
        %824 = vmatprep.subr.mxu0 0.0
        %825 = vmatpush1.msra.mxu0 %v801
        %826 = vmatprep.subr.mxu0 0.0
        %827 = vmatpush1.msra.mxu0 %v802
        %828 = vmatprep.subr.mxu0 0.0
        %829 = vmatpush1.msra.mxu0 %v803
        %830 = vmatprep.subr.mxu0 0.0
        %831 = vmatpush1.msra.mxu0 %v804
        %832 = vmatprep.subr.mxu0 0.0
        %833 = vmatpush1.msra.mxu0 %v805
        %834 = vmatprep.subr.mxu0 0.0
        %835 = vmatpush1.msra.mxu0 %v806
        %836 = vmatprep.subr.mxu0 0.0
        %837 = vmatpush1.msra.mxu0 %v807
        %838 = vmatprep.subr.mxu0 0.0
        %839 = vmatpush1.msra.mxu0 %v808
        %840 = vmatprep.subr.mxu0 0.0
        %841 = vmatpush1.msra.mxu0 %v809
        %842 = vmatprep.subr.mxu0 0.0
        %843 = vmatpush1.msra.mxu0 %v810
        %844 = vmatprep.subr.mxu0 0.0
        %845 = vmatpush1.msra.mxu0 %v811
        %846 = vmatprep.subr.mxu0 0.0
        %847 = vmatpush1.msra.mxu0 %v812
        %848 = vmatprep.subr.mxu0 0.0
        %849 = vmatpush1.msra.mxu0 %v813
        %850 = vmatprep.subr.mxu0 0.0
        %851 = vmatpush1.msra.mxu0 %v814
        %852 = vmatprep.subr.mxu0 0.0
        %853 = vmatpush1.msra.mxu0 %v815
        %854 = vmatprep.subr.mxu0 0.0
        %855 = vmatpush1.msra.mxu0 %v816
        %856 = vmatprep.subr.mxu0 0.0
        %857 = vmatpush1.msra.mxu0 0.0
        %858 = vmatprep.subr.mxu0 0.0
        %859 = vmatpush1.msra.mxu0 0.0
        %860 = vmatprep.subr.mxu0 0.0
        %861 = vmatpush1.msra.mxu0 0.0
        %862 = vmatprep.subr.mxu0 0.0
        %863 = vmatpush1.msra.mxu0 0.0
        %864 = vmatprep.subr.mxu0 0.0
        %865 = vmatpush1.msra.mxu0 0.0
        %866 = vmatprep.subr.mxu0 0.0
        %867 = vmatpush1.msra.mxu0 0.0
        %868 = vmatprep.subr.mxu0 0.0
        %869 = vmatpush1.msra.mxu0 0.0
        %870 = vmatprep.subr.mxu0 0.0
        %871 = vmatpush1.msra.mxu0 0.0
        %872 = vmatprep.subr.mxu0 0.0
        %873 = vmatpush1.msra.mxu0 0.0
        %874 = vmatprep.subr.mxu0 0.0
        %875 = vmatpush1.msra.mxu0 0.0
        %876 = vmatprep.subr.mxu0 0.0
        %877 = vmatpush1.msra.mxu0 0.0
        %878 = vmatprep.subr.mxu0 0.0
        %879 = vmatpush1.msra.mxu0 0.0
        %880 = vmatprep.subr.mxu0 0.0
        %881 = vmatpush1.msra.mxu0 0.0
        %882 = vmatprep.subr.mxu0 0.0
        %883 = vmatpush1.msra.mxu0 0.0
        %884 = vmatprep.subr.mxu0 0.0
        %885 = vmatpush1.msra.mxu0 0.0
        %886 = vmatprep.subr.mxu0 0.0
        %887 = vmatpush1.msra.mxu0 0.0
        %888 = vmatprep.mubr.f32.mxu0 0.0
        %889 = vmatmul.mubr.f32.gmra.mrb[0].mxu0 %v800
        %v890 = vpop.f32.mrb[0].mxu0
        %v891 = vadd.f32 %v822, %v890
        %v892 = vpop.f32.mrb[0].mxu0
        %893 = vdwg.mxu0
        %v894 = vmul.f32 %v891, 0.17677669
        %s895 = scalar_lea.vmem %s5, 512
        %v896 = vld [vmem:[%s895] sm:$0xff]
        %v897 = vld [vmem:[%s895 + $0x8] sm:$0xff]
        %v898 = vld [vmem:[%s895 + $0x10] sm:$0xff]
        %v899 = vld [vmem:[%s895 + $0x18] sm:$0xff]
        %v900 = vld [vmem:[%s895 + $0x20] sm:$0xff]
        %v901 = vld [vmem:[%s895 + $0x28] sm:$0xff]
        %v902 = vld [vmem:[%s895 + $0x30] sm:$0xff]
        %v903 = vld [vmem:[%s895 + $0x38] sm:$0xff]
        %v904 = vld [vmem:[%s895 + $0x40] sm:$0xff]
        %v905 = vld [vmem:[%s895 + $0x48] sm:$0xff]
        %v906 = vld [vmem:[%s895 + $0x50] sm:$0xff]
        %v907 = vld [vmem:[%s895 + $0x58] sm:$0xff]
        %v908 = vld [vmem:[%s895 + $0x60] sm:$0xff]
        %v909 = vld [vmem:[%s895 + $0x68] sm:$0xff]
        %v910 = vld [vmem:[%s895 + $0x70] sm:$0xff]
        %v911 = vld [vmem:[%s895 + $0x78] sm:$0xff]
        %s912 = scalar_lea.vmem %s6, 4
        %v913 = vld [vmem:[%s912] sm:$0x1]
        %v915 = vlaneseq
        %v916 = vshrl.u32 %v915, 7
        %v917 = vsub.s32 0, %v916
        %v918 = vrot.slane %v913, %v917
        %920 = vmatprep.subr.mxu0 0.0
        %921 = vmatpush1.msra.mxu0 %v896
        %922 = vmatprep.subr.mxu0 0.0
        %923 = vmatpush1.msra.mxu0 %v897
        %924 = vmatprep.subr.mxu0 0.0
        %925 = vmatpush1.msra.mxu0 %v898
        %926 = vmatprep.subr.mxu0 0.0
        %927 = vmatpush1.msra.mxu0 %v899
        %928 = vmatprep.subr.mxu0 0.0
        %929 = vmatpush1.msra.mxu0 %v900
        %930 = vmatprep.subr.mxu0 0.0
        %931 = vmatpush1.msra.mxu0 %v901
        %932 = vmatprep.subr.mxu0 0.0
        %933 = vmatpush1.msra.mxu0 %v902
        %934 = vmatprep.subr.mxu0 0.0
        %935 = vmatpush1.msra.mxu0 %v903
        %936 = vmatprep.subr.mxu0 0.0
        %937 = vmatpush1.msra.mxu0 %v904
        %938 = vmatprep.subr.mxu0 0.0
        %939 = vmatpush1.msra.mxu0 %v905
        %940 = vmatprep.subr.mxu0 0.0
        %941 = vmatpush1.msra.mxu0 %v906
        %942 = vmatprep.subr.mxu0 0.0
        %943 = vmatpush1.msra.mxu0 %v907
        %944 = vmatprep.subr.mxu0 0.0
        %945 = vmatpush1.msra.mxu0 %v908
        %946 = vmatprep.subr.mxu0 0.0
        %947 = vmatpush1.msra.mxu0 %v909
        %948 = vmatprep.subr.mxu0 0.0
        %949 = vmatpush1.msra.mxu0 %v910
        %950 = vmatprep.subr.mxu0 0.0
        %951 = vmatpush1.msra.mxu0 %v911
        %952 = vmatprep.subr.mxu0 0.0
        %953 = vmatpush1.msra.mxu0 0.0
        %954 = vmatprep.subr.mxu0 0.0
        %955 = vmatpush1.msra.mxu0 0.0
        %956 = vmatprep.subr.mxu0 0.0
        %957 = vmatpush1.msra.mxu0 0.0
        %958 = vmatprep.subr.mxu0 0.0
        %959 = vmatpush1.msra.mxu0 0.0
        %960 = vmatprep.subr.mxu0 0.0
        %961 = vmatpush1.msra.mxu0 0.0
        %962 = vmatprep.subr.mxu0 0.0
        %963 = vmatpush1.msra.mxu0 0.0
        %964 = vmatprep.subr.mxu0 0.0
        %965 = vmatpush1.msra.mxu0 0.0
        %966 = vmatprep.subr.mxu0 0.0
        %967 = vmatpush1.msra.mxu0 0.0
        %968 = vmatprep.subr.mxu0 0.0
        %969 = vmatpush1.msra.mxu0 0.0
        %970 = vmatprep.subr.mxu0 0.0
        %971 = vmatpush1.msra.mxu0 0.0
        %972 = vmatprep.subr.mxu0 0.0
        %973 = vmatpush1.msra.mxu0 0.0
        %974 = vmatprep.subr.mxu0 0.0
        %975 = vmatpush1.msra.mxu0 0.0
        %976 = vmatprep.subr.mxu0 0.0
        %977 = vmatpush1.msra.mxu0 0.0
        %978 = vmatprep.subr.mxu0 0.0
        %979 = vmatpush1.msra.mxu0 0.0
        %980 = vmatprep.subr.mxu0 0.0
        %981 = vmatpush1.msra.mxu0 0.0
        %982 = vmatprep.subr.mxu0 0.0
        %983 = vmatpush1.msra.mxu0 0.0
        %984 = vmatprep.mubr.f32.mxu0 0.0
        %985 = vmatmul.mubr.f32.gmra.mrb[0].mxu0 %v800
        %v986 = vpop.f32.mrb[0].mxu0
        %v987 = vadd.f32 %v918, %v986
        %v988 = vpop.f32.mrb[0].mxu0
        %989 = vdwg.mxu0
        %s990 = scalar_lea.vmem %s5, 1024
        %v991 = vld [vmem:[%s990] sm:$0xff]
        %v992 = vld [vmem:[%s990 + $0x8] sm:$0xff]
        %v993 = vld [vmem:[%s990 + $0x10] sm:$0xff]
        %v994 = vld [vmem:[%s990 + $0x18] sm:$0xff]
        %v995 = vld [vmem:[%s990 + $0x20] sm:$0xff]
        %v996 = vld [vmem:[%s990 + $0x28] sm:$0xff]
        %v997 = vld [vmem:[%s990 + $0x30] sm:$0xff]
        %v998 = vld [vmem:[%s990 + $0x38] sm:$0xff]
        %v999 = vld [vmem:[%s990 + $0x40] sm:$0xff]
        %v1000 = vld [vmem:[%s990 + $0x48] sm:$0xff]
        %v1001 = vld [vmem:[%s990 + $0x50] sm:$0xff]
        %v1002 = vld [vmem:[%s990 + $0x58] sm:$0xff]
        %v1003 = vld [vmem:[%s990 + $0x60] sm:$0xff]
        %v1004 = vld [vmem:[%s990 + $0x68] sm:$0xff]
        %v1005 = vld [vmem:[%s990 + $0x70] sm:$0xff]
        %v1006 = vld [vmem:[%s990 + $0x78] sm:$0xff]
        %s1007 = scalar_lea.vmem %s6, 8
        %v1008 = vld [vmem:[%s1007] sm:$0x1]
        %v1010 = vlaneseq
        %v1011 = vshrl.u32 %v1010, 7
        %v1012 = vsub.s32 0, %v1011
        %v1013 = vrot.slane %v1008, %v1012
        %1015 = vmatprep.subr.mxu0 0.0
        %1016 = vmatpush1.msra.mxu0 %v991
        %1017 = vmatprep.subr.mxu0 0.0
        %1018 = vmatpush1.msra.mxu0 %v992
        %1019 = vmatprep.subr.mxu0 0.0
        %1020 = vmatpush1.msra.mxu0 %v993
        %1021 = vmatprep.subr.mxu0 0.0
        %1022 = vmatpush1.msra.mxu0 %v994
        %1023 = vmatprep.subr.mxu0 0.0
        %1024 = vmatpush1.msra.mxu0 %v995
        %1025 = vmatprep.subr.mxu0 0.0
        %1026 = vmatpush1.msra.mxu0 %v996
        %1027 = vmatprep.subr.mxu0 0.0
        %1028 = vmatpush1.msra.mxu0 %v997
        %1029 = vmatprep.subr.mxu0 0.0
        %1030 = vmatpush1.msra.mxu0 %v998
        %1031 = vmatprep.subr.mxu0 0.0
        %1032 = vmatpush1.msra.mxu0 %v999
        %1033 = vmatprep.subr.mxu0 0.0
        %1034 = vmatpush1.msra.mxu0 %v1000
        %1035 = vmatprep.subr.mxu0 0.0
        %1036 = vmatpush1.msra.mxu0 %v1001
        %1037 = vmatprep.subr.mxu0 0.0
        %1038 = vmatpush1.msra.mxu0 %v1002
        %1039 = vmatprep.subr.mxu0 0.0
        %1040 = vmatpush1.msra.mxu0 %v1003
        %1041 = vmatprep.subr.mxu0 0.0
        %1042 = vmatpush1.msra.mxu0 %v1004
        %1043 = vmatprep.subr.mxu0 0.0
        %1044 = vmatpush1.msra.mxu0 %v1005
        %1045 = vmatprep.subr.mxu0 0.0
        %1046 = vmatpush1.msra.mxu0 %v1006
        %1047 = vmatprep.subr.mxu0 0.0
        %1048 = vmatpush1.msra.mxu0 0.0
        %1049 = vmatprep.subr.mxu0 0.0
        %1050 = vmatpush1.msra.mxu0 0.0
        %1051 = vmatprep.subr.mxu0 0.0
        %1052 = vmatpush1.msra.mxu0 0.0
        %1053 = vmatprep.subr.mxu0 0.0
        %1054 = vmatpush1.msra.mxu0 0.0
        %1055 = vmatprep.subr.mxu0 0.0
        %1056 = vmatpush1.msra.mxu0 0.0
        %1057 = vmatprep.subr.mxu0 0.0
        %1058 = vmatpush1.msra.mxu0 0.0
        %1059 = vmatprep.subr.mxu0 0.0
        %1060 = vmatpush1.msra.mxu0 0.0
        %1061 = vmatprep.subr.mxu0 0.0
        %1062 = vmatpush1.msra.mxu0 0.0
        %1063 = vmatprep.subr.mxu0 0.0
        %1064 = vmatpush1.msra.mxu0 0.0
        %1065 = vmatprep.subr.mxu0 0.0
        %1066 = vmatpush1.msra.mxu0 0.0
        %1067 = vmatprep.subr.mxu0 0.0
        %1068 = vmatpush1.msra.mxu0 0.0
        %1069 = vmatprep.subr.mxu0 0.0
        %1070 = vmatpush1.msra.mxu0 0.0
        %1071 = vmatprep.subr.mxu0 0.0
        %1072 = vmatpush1.msra.mxu0 0.0
        %1073 = vmatprep.subr.mxu0 0.0
        %1074 = vmatpush1.msra.mxu0 0.0
        %1075 = vmatprep.subr.mxu0 0.0
        %1076 = vmatpush1.msra.mxu0 0.0
        %1077 = vmatprep.subr.mxu0 0.0
        %1078 = vmatpush1.msra.mxu0 0.0
        %1079 = vmatprep.mubr.f32.mxu0 0.0
        %1080 = vmatmul.mubr.f32.gmra.mrb[0].mxu0 %v800
        %v1081 = vpop.f32.mrb[0].mxu0
        %v1082 = vadd.f32 %v1013, %v1081
        %v1083 = vpop.f32.mrb[0].mxu0
        %1084 = vdwg.mxu0
        %vm1085 = vcmask 261120
        %v1087 = vsel %vm1085, %v894, 0
        %v1090 = vsel %vm1085, %v987, 0
        %1092 = vmatprep.subr.mxu0 0.0
        %1093 = vmatpush1.xpose.msra.mxu0 %v1090
        %1094 = vmatprep.subr.mxu0 0.0
        %1095 = vmatpush1.xpose.msra.mxu0 0.0
        %1096 = vmatprep.subr.mxu0 0.0
        %1097 = vmatpush1.xpose.msra.mxu0 0.0
        %1098 = vmatprep.subr.mxu0 0.0
        %1099 = vmatpush1.xpose.msra.mxu0 0.0
        %1100 = vmatprep.subr.mxu0 0.0
        %1101 = vmatpush1.xpose.msra.mxu0 0.0
        %1102 = vmatprep.subr.mxu0 0.0
        %1103 = vmatpush1.xpose.msra.mxu0 0.0
        %1104 = vmatprep.subr.mxu0 0.0
        %1105 = vmatpush1.xpose.msra.mxu0 0.0
        %1106 = vmatprep.subr.mxu0 0.0
        %1107 = vmatpush1.xpose.msra.mxu0 0.0
        %1108 = vmatprep.subr.mxu0 0.0
        %1109 = vmatpush1.xpose.msra.mxu0 0.0
        %1110 = vmatprep.subr.mxu0 0.0
        %1111 = vmatpush1.xpose.msra.mxu0 0.0
        %1112 = vmatprep.subr.mxu0 0.0
        %1113 = vmatpush1.xpose.msra.mxu0 0.0
        %1114 = vmatprep.subr.mxu0 0.0
        %1115 = vmatpush1.xpose.msra.mxu0 0.0
        %1116 = vmatprep.subr.mxu0 0.0
        %1117 = vmatpush1.xpose.msra.mxu0 0.0
        %1118 = vmatprep.subr.mxu0 0.0
        %1119 = vmatpush1.xpose.msra.mxu0 0.0
        %1120 = vmatprep.subr.mxu0 0.0
        %1121 = vmatpush1.xpose.msra.mxu0 0.0
        %1122 = vmatprep.subr.mxu0 0.0
        %1123 = vmatpush1.xpose.msra.mxu0 0.0
        %1124 = vmatprep.subr.mxu0 0.0
        %1125 = vmatpush1.xpose.msra.mxu0 0.0
        %1126 = vmatprep.subr.mxu0 0.0
        %1127 = vmatpush1.xpose.msra.mxu0 0.0
        %1128 = vmatprep.subr.mxu0 0.0
        %1129 = vmatpush1.xpose.msra.mxu0 0.0
        %1130 = vmatprep.subr.mxu0 0.0
        %1131 = vmatpush1.xpose.msra.mxu0 0.0
        %1132 = vmatprep.subr.mxu0 0.0
        %1133 = vmatpush1.xpose.msra.mxu0 0.0
        %1134 = vmatprep.subr.mxu0 0.0
        %1135 = vmatpush1.xpose.msra.mxu0 0.0
        %1136 = vmatprep.subr.mxu0 0.0
        %1137 = vmatpush1.xpose.msra.mxu0 0.0
        %1138 = vmatprep.subr.mxu0 0.0
        %1139 = vmatpush1.xpose.msra.mxu0 0.0
        %1140 = vmatprep.subr.mxu0 0.0
        %1141 = vmatpush1.xpose.msra.mxu0 0.0
        %1142 = vmatprep.subr.mxu0 0.0
        %1143 = vmatpush1.xpose.msra.mxu0 0.0
        %1144 = vmatprep.subr.mxu0 0.0
        %1145 = vmatpush1.xpose.msra.mxu0 0.0
        %1146 = vmatprep.subr.mxu0 0.0
        %1147 = vmatpush1.xpose.msra.mxu0 0.0
        %1148 = vmatprep.subr.mxu0 0.0
        %1149 = vmatpush1.xpose.msra.mxu0 0.0
        %1150 = vmatprep.subr.mxu0 0.0
        %1151 = vmatpush1.xpose.msra.mxu0 0.0
        %1152 = vmatprep.subr.mxu0 0.0
        %1153 = vmatpush1.xpose.msra.mxu0 0.0
        %1154 = vmatprep.subr.mxu0 0.0
        %1155 = vmatpush1.xpose.msra.mxu0 0.0
        %1156 = vmatprep.mubr.f32.mxu0 0.0
        %1157 = vmatmul.mubr.f32.gmra.mrb[0].mxu0 %v1087
        %v1158 = vpop.f32.mrb[0].mxu0
        %v1159 = vadd.f32 %v772, %v1158
        %v1160 = vpop.f32.mrb[0].mxu0
        %1161 = vdwg.mxu0
        %vm1162 = vcmask 64512
        %v1163 = vsel %vm1162, %v1159, -inf
        %1164 = vmax.xlane.f32.xlu0 %v1163
        %v1165 = vpop.xlane.xlu0 %1164
        %v1166 = vsub.f32 %v1159, %v1165
        %v1167 = vmul.f32 %v1166, 1.442695
        %v1168 = vpow.pop %v1167
        %v1169 = vsel %vm1162, %v1168, 0.0
        %1170 = vadd.xlane.f32.xlu0 %v1169
        %v1171 = vpop.xlane.xlu0 %1170
        %v1172 = vrcp.pop %v1171
        %v1173 = vmul.f32 %v1168, %v1172
        %v1175 = vsel %vm1162, %v1173, 0
        %1177 = vmatprep.subr.mxu0 0.0
        %1178 = vmatpush1.msra.mxu0 %v1082
        %1179 = vmatprep.subr.mxu0 0.0
        %1180 = vmatpush1.msra.mxu0 0.0
        %1181 = vmatprep.subr.mxu0 0.0
        %1182 = vmatpush1.msra.mxu0 0.0
        %1183 = vmatprep.subr.mxu0 0.0
        %1184 = vmatpush1.msra.mxu0 0.0
        %1185 = vmatprep.subr.mxu0 0.0
        %1186 = vmatpush1.msra.mxu0 0.0
        %1187 = vmatprep.subr.mxu0 0.0
        %1188 = vmatpush1.msra.mxu0 0.0
        %1189 = vmatprep.subr.mxu0 0.0
        %1190 = vmatpush1.msra.mxu0 0.0
        %1191 = vmatprep.subr.mxu0 0.0
        %1192 = vmatpush1.msra.mxu0 0.0
        %1193 = vmatprep.subr.mxu0 0.0
        %1194 = vmatpush1.msra.mxu0 0.0
        %1195 = vmatprep.subr.mxu0 0.0
        %1196 = vmatpush1.msra.mxu0 0.0
        %1197 = vmatprep.subr.mxu0 0.0
        %1198 = vmatpush1.msra.mxu0 0.0
        %1199 = vmatprep.subr.mxu0 0.0
        %1200 = vmatpush1.msra.mxu0 0.0
        %1201 = vmatprep.subr.mxu0 0.0
        %1202 = vmatpush1.msra.mxu0 0.0
        %1203 = vmatprep.subr.mxu0 0.0
        %1204 = vmatpush1.msra.mxu0 0.0
        %1205 = vmatprep.subr.mxu0 0.0
        %1206 = vmatpush1.msra.mxu0 0.0
        %1207 = vmatprep.subr.mxu0 0.0
        %1208 = vmatpush1.msra.mxu0 0.0
        %1209 = vmatprep.subr.mxu0 0.0
        %1210 = vmatpush1.msra.mxu0 0.0
        %1211 = vmatprep.subr.mxu0 0.0
        %1212 = vmatpush1.msra.mxu0 0.0
        %1213 = vmatprep.subr.mxu0 0.0
        %1214 = vmatpush1.msra.mxu0 0.0
        %1215 = vmatprep.subr.mxu0 0.0
        %1216 = vmatpush1.msra.mxu0 0.0
        %1217 = vmatprep.subr.mxu0 0.0
        %1218 = vmatpush1.msra.mxu0 0.0
        %1219 = vmatprep.subr.mxu0 0.0
        %1220 = vmatpush1.msra.mxu0 0.0
        %1221 = vmatprep.subr.mxu0 0.0
        %1222 = vmatpush1.msra.mxu0 0.0
        %1223 = vmatprep.subr.mxu0 0.0
        %1224 = vmatpush1.msra.mxu0 0.0
        %1225 = vmatprep.subr.mxu0 0.0
        %1226 = vmatpush1.msra.mxu0 0.0
        %1227 = vmatprep.subr.mxu0 0.0
        %1228 = vmatpush1.msra.mxu0 0.0
        %1229 = vmatprep.subr.mxu0 0.0
        %1230 = vmatpush1.msra.mxu0 0.0
        %1231 = vmatprep.subr.mxu0 0.0
        %1232 = vmatpush1.msra.mxu0 0.0
        %1233 = vmatprep.subr.mxu0 0.0
        %1234 = vmatpush1.msra.mxu0 0.0
        %1235 = vmatprep.subr.mxu0 0.0
        %1236 = vmatpush1.msra.mxu0 0.0
        %1237 = vmatprep.subr.mxu0 0.0
        %1238 = vmatpush1.msra.mxu0 0.0
        %1239 = vmatprep.subr.mxu0 0.0
        %1240 = vmatpush1.msra.mxu0 0.0
        %1241 = vmatprep.mubr.f32.mxu0 0.0
        %1242 = vmatmul.mubr.f32.gmra.mrb[0].mxu0 %v1175
        %v1243 = vpop.f32.mrb[0].mxu0
        %v1244 = vadd.f32 0.0, %v1243
        %v1245 = vpop.f32.mrb[0].mxu0
        %1246 = vdwg.mxu0
        %v1247 = vld [vmem:[%s7] sm:$0xff]
        %v1248 = vld [vmem:[%s7 + $0x8] sm:$0xff]
        %v1249 = vld [vmem:[%s7 + $0x10] sm:$0xff]
        %v1250 = vld [vmem:[%s7 + $0x18] sm:$0xff]
        %s1251 = scalar_lea.vmem %s5, 128
        %v1252 = vld [vmem:[%s1251] sm:$0xff]
        %v1253 = vld [vmem:[%s1251 + $0x8] sm:$0xff]
        %v1254 = vld [vmem:[%s1251 + $0x10] sm:$0xff]
        %v1255 = vld [vmem:[%s1251 + $0x18] sm:$0xff]
        %v1256 = vld [vmem:[%s1251 + $0x20] sm:$0xff]
        %v1257 = vld [vmem:[%s1251 + $0x28] sm:$0xff]
        %v1258 = vld [vmem:[%s1251 + $0x30] sm:$0xff]
        %v1259 = vld [vmem:[%s1251 + $0x38] sm:$0xff]
        %v1260 = vld [vmem:[%s1251 + $0x40] sm:$0xff]
        %v1261 = vld [vmem:[%s1251 + $0x48] sm:$0xff]
        %v1262 = vld [vmem:[%s1251 + $0x50] sm:$0xff]
        %v1263 = vld [vmem:[%s1251 + $0x58] sm:$0xff]
        %v1264 = vld [vmem:[%s1251 + $0x60] sm:$0xff]
        %v1265 = vld [vmem:[%s1251 + $0x68] sm:$0xff]
        %v1266 = vld [vmem:[%s1251 + $0x70] sm:$0xff]
        %v1267 = vld [vmem:[%s1251 + $0x78] sm:$0xff]
        %s1268 = scalar_lea.vmem %s6, 1
        %v1269 = vld [vmem:[%s1268] sm:$0x1]
        %v1271 = vlaneseq
        %v1272 = vshrl.u32 %v1271, 7
        %v1273 = vsub.s32 0, %v1272
        %v1274 = vrot.slane %v1269, %v1273
        %1276 = vmatprep.subr.mxu0 0.0
        %1277 = vmatpush1.msra.mxu0 %v1252
        %1278 = vmatprep.subr.mxu0 0.0
        %1279 = vmatpush1.msra.mxu0 %v1253
        %1280 = vmatprep.subr.mxu0 0.0
        %1281 = vmatpush1.msra.mxu0 %v1254
        %1282 = vmatprep.subr.mxu0 0.0
        %1283 = vmatpush1.msra.mxu0 %v1255
        %1284 = vmatprep.subr.mxu0 0.0
        %1285 = vmatpush1.msra.mxu0 %v1256
        %1286 = vmatprep.subr.mxu0 0.0
        %1287 = vmatpush1.msra.mxu0 %v1257
        %1288 = vmatprep.subr.mxu0 0.0
        %1289 = vmatpush1.msra.mxu0 %v1258
        %1290 = vmatprep.subr.mxu0 0.0
        %1291 = vmatpush1.msra.mxu0 %v1259
        %1292 = vmatprep.subr.mxu0 0.0
        %1293 = vmatpush1.msra.mxu0 %v1260
        %1294 = vmatprep.subr.mxu0 0.0
        %1295 = vmatpush1.msra.mxu0 %v1261
        %1296 = vmatprep.subr.mxu0 0.0
        %1297 = vmatpush1.msra.mxu0 %v1262
        %1298 = vmatprep.subr.mxu0 0.0
        %1299 = vmatpush1.msra.mxu0 %v1263
        %1300 = vmatprep.subr.mxu0 0.0
        %1301 = vmatpush1.msra.mxu0 %v1264
        %1302 = vmatprep.subr.mxu0 0.0
        %1303 = vmatpush1.msra.mxu0 %v1265
        %1304 = vmatprep.subr.mxu0 0.0
        %1305 = vmatpush1.msra.mxu0 %v1266
        %1306 = vmatprep.subr.mxu0 0.0
        %1307 = vmatpush1.msra.mxu0 %v1267
        %1308 = vmatprep.subr.mxu0 0.0
        %1309 = vmatpush1.msra.mxu0 0.0
        %1310 = vmatprep.subr.mxu0 0.0
        %1311 = vmatpush1.msra.mxu0 0.0
        %1312 = vmatprep.subr.mxu0 0.0
        %1313 = vmatpush1.msra.mxu0 0.0
        %1314 = vmatprep.subr.mxu0 0.0
        %1315 = vmatpush1.msra.mxu0 0.0
        %1316 = vmatprep.subr.mxu0 0.0
        %1317 = vmatpush1.msra.mxu0 0.0
        %1318 = vmatprep.subr.mxu0 0.0
        %1319 = vmatpush1.msra.mxu0 0.0
        %1320 = vmatprep.subr.mxu0 0.0
        %1321 = vmatpush1.msra.mxu0 0.0
        %1322 = vmatprep.subr.mxu0 0.0
        %1323 = vmatpush1.msra.mxu0 0.0
        %1324 = vmatprep.subr.mxu0 0.0
        %1325 = vmatpush1.msra.mxu0 0.0
        %1326 = vmatprep.subr.mxu0 0.0
        %1327 = vmatpush1.msra.mxu0 0.0
        %1328 = vmatprep.subr.mxu0 0.0
        %1329 = vmatpush1.msra.mxu0 0.0
        %1330 = vmatprep.subr.mxu0 0.0
        %1331 = vmatpush1.msra.mxu0 0.0
        %1332 = vmatprep.subr.mxu0 0.0
        %1333 = vmatpush1.msra.mxu0 0.0
        %1334 = vmatprep.subr.mxu0 0.0
        %1335 = vmatpush1.msra.mxu0 0.0
        %1336 = vmatprep.subr.mxu0 0.0
        %1337 = vmatpush1.msra.mxu0 0.0
        %1338 = vmatprep.subr.mxu0 0.0
        %1339 = vmatpush1.msra.mxu0 0.0
        %1340 = vmatprep.mubr.f32.mxu0 0.0
        %1341 = vmatmul.mubr.f32.gmra.mrb[0].mxu0 %v800
        %v1342 = vpop.f32.mrb[0].mxu0
        %v1343 = vadd.f32 %v1274, %v1342
        %v1344 = vpop.f32.mrb[0].mxu0
        %1345 = vdwg.mxu0
        %v1346 = vmul.f32 %v1343, 0.17677669
        %s1347 = scalar_lea.vmem %s5, 640
        %v1348 = vld [vmem:[%s1347] sm:$0xff]
        %v1349 = vld [vmem:[%s1347 + $0x8] sm:$0xff]
        %v1350 = vld [vmem:[%s1347 + $0x10] sm:$0xff]
        %v1351 = vld [vmem:[%s1347 + $0x18] sm:$0xff]
        %v1352 = vld [vmem:[%s1347 + $0x20] sm:$0xff]
        %v1353 = vld [vmem:[%s1347 + $0x28] sm:$0xff]
        %v1354 = vld [vmem:[%s1347 + $0x30] sm:$0xff]
        %v1355 = vld [vmem:[%s1347 + $0x38] sm:$0xff]
        %v1356 = vld [vmem:[%s1347 + $0x40] sm:$0xff]
        %v1357 = vld [vmem:[%s1347 + $0x48] sm:$0xff]
        %v1358 = vld [vmem:[%s1347 + $0x50] sm:$0xff]
        %v1359 = vld [vmem:[%s1347 + $0x58] sm:$0xff]
        %v1360 = vld [vmem:[%s1347 + $0x60] sm:$0xff]
        %v1361 = vld [vmem:[%s1347 + $0x68] sm:$0xff]
        %v1362 = vld [vmem:[%s1347 + $0x70] sm:$0xff]
        %v1363 = vld [vmem:[%s1347 + $0x78] sm:$0xff]
        %s1364 = scalar_lea.vmem %s6, 5
        %v1365 = vld [vmem:[%s1364] sm:$0x1]
        %v1367 = vlaneseq
        %v1368 = vshrl.u32 %v1367, 7
        %v1369 = vsub.s32 0, %v1368
        %v1370 = vrot.slane %v1365, %v1369
        %1372 = vmatprep.subr.mxu0 0.0
        %1373 = vmatpush1.msra.mxu0 %v1348
        %1374 = vmatprep.subr.mxu0 0.0
        %1375 = vmatpush1.msra.mxu0 %v1349
        %1376 = vmatprep.subr.mxu0 0.0
        %1377 = vmatpush1.msra.mxu0 %v1350
        %1378 = vmatprep.subr.mxu0 0.0
        %1379 = vmatpush1.msra.mxu0 %v1351
        %1380 = vmatprep.subr.mxu0 0.0
        %1381 = vmatpush1.msra.mxu0 %v1352
        %1382 = vmatprep.subr.mxu0 0.0
        %1383 = vmatpush1.msra.mxu0 %v1353
        %1384 = vmatprep.subr.mxu0 0.0
        %1385 = vmatpush1.msra.mxu0 %v1354
        %1386 = vmatprep.subr.mxu0 0.0
        %1387 = vmatpush1.msra.mxu0 %v1355
        %1388 = vmatprep.subr.mxu0 0.0
        %1389 = vmatpush1.msra.mxu0 %v1356
        %1390 = vmatprep.subr.mxu0 0.0
        %1391 = vmatpush1.msra.mxu0 %v1357
        %1392 = vmatprep.subr.mxu0 0.0
        %1393 = vmatpush1.msra.mxu0 %v1358
        %1394 = vmatprep.subr.mxu0 0.0
        %1395 = vmatpush1.msra.mxu0 %v1359
        %1396 = vmatprep.subr.mxu0 0.0
        %1397 = vmatpush1.msra.mxu0 %v1360
        %1398 = vmatprep.subr.mxu0 0.0
        %1399 = vmatpush1.msra.mxu0 %v1361
        %1400 = vmatprep.subr.mxu0 0.0
        %1401 = vmatpush1.msra.mxu0 %v1362
        %1402 = vmatprep.subr.mxu0 0.0
        %1403 = vmatpush1.msra.mxu0 %v1363
        %1404 = vmatprep.subr.mxu0 0.0
        %1405 = vmatpush1.msra.mxu0 0.0
        %1406 = vmatprep.subr.mxu0 0.0
        %1407 = vmatpush1.msra.mxu0 0.0
        %1408 = vmatprep.subr.mxu0 0.0
        %1409 = vmatpush1.msra.mxu0 0.0
        %1410 = vmatprep.subr.mxu0 0.0
        %1411 = vmatpush1.msra.mxu0 0.0
        %1412 = vmatprep.subr.mxu0 0.0
        %1413 = vmatpush1.msra.mxu0 0.0
        %1414 = vmatprep.subr.mxu0 0.0
        %1415 = vmatpush1.msra.mxu0 0.0
        %1416 = vmatprep.subr.mxu0 0.0
        %1417 = vmatpush1.msra.mxu0 0.0
        %1418 = vmatprep.subr.mxu0 0.0
        %1419 = vmatpush1.msra.mxu0 0.0
        %1420 = vmatprep.subr.mxu0 0.0
        %1421 = vmatpush1.msra.mxu0 0.0
        %1422 = vmatprep.subr.mxu0 0.0
        %1423 = vmatpush1.msra.mxu0 0.0
        %1424 = vmatprep.subr.mxu0 0.0
        %1425 = vmatpush1.msra.mxu0 0.0
        %1426 = vmatprep.subr.mxu0 0.0
        %1427 = vmatpush1.msra.mxu0 0.0
        %1428 = vmatprep.subr.mxu0 0.0
        %1429 = vmatpush1.msra.mxu0 0.0
        %1430 = vmatprep.subr.mxu0 0.0
        %1431 = vmatpush1.msra.mxu0 0.0
        %1432 = vmatprep.subr.mxu0 0.0
        %1433 = vmatpush1.msra.mxu0 0.0
        %1434 = vmatprep.subr.mxu0 0.0
        %1435 = vmatpush1.msra.mxu0 0.0
        %1436 = vmatprep.mubr.f32.mxu0 0.0
        %1437 = vmatmul.mubr.f32.gmra.mrb[0].mxu0 %v800
        %v1438 = vpop.f32.mrb[0].mxu0
        %v1439 = vadd.f32 %v1370, %v1438
        %v1440 = vpop.f32.mrb[0].mxu0
        %1441 = vdwg.mxu0
        %s1442 = scalar_lea.vmem %s5, 1152
        %v1443 = vld [vmem:[%s1442] sm:$0xff]
        %v1444 = vld [vmem:[%s1442 + $0x8] sm:$0xff]
        %v1445 = vld [vmem:[%s1442 + $0x10] sm:$0xff]
        %v1446 = vld [vmem:[%s1442 + $0x18] sm:$0xff]
        %v1447 = vld [vmem:[%s1442 + $0x20] sm:$0xff]
        %v1448 = vld [vmem:[%s1442 + $0x28] sm:$0xff]
        %v1449 = vld [vmem:[%s1442 + $0x30] sm:$0xff]
        %v1450 = vld [vmem:[%s1442 + $0x38] sm:$0xff]
        %v1451 = vld [vmem:[%s1442 + $0x40] sm:$0xff]
        %v1452 = vld [vmem:[%s1442 + $0x48] sm:$0xff]
        %v1453 = vld [vmem:[%s1442 + $0x50] sm:$0xff]
        %v1454 = vld [vmem:[%s1442 + $0x58] sm:$0xff]
        %v1455 = vld [vmem:[%s1442 + $0x60] sm:$0xff]
        %v1456 = vld [vmem:[%s1442 + $0x68] sm:$0xff]
        %v1457 = vld [vmem:[%s1442 + $0x70] sm:$0xff]
        %v1458 = vld [vmem:[%s1442 + $0x78] sm:$0xff]
        %s1459 = scalar_lea.vmem %s6, 9
        %v1460 = vld [vmem:[%s1459] sm:$0x1]
        %v1462 = vlaneseq
        %v1463 = vshrl.u32 %v1462, 7
        %v1464 = vsub.s32 0, %v1463
        %v1465 = vrot.slane %v1460, %v1464
        %1467 = vmatprep.subr.mxu0 0.0
        %1468 = vmatpush1.msra.mxu0 %v1443
        %1469 = vmatprep.subr.mxu0 0.0
        %1470 = vmatpush1.msra.mxu0 %v1444
        %1471 = vmatprep.subr.mxu0 0.0
        %1472 = vmatpush1.msra.mxu0 %v1445
        %1473 = vmatprep.subr.mxu0 0.0
        %1474 = vmatpush1.msra.mxu0 %v1446
        %1475 = vmatprep.subr.mxu0 0.0
        %1476 = vmatpush1.msra.mxu0 %v1447
        %1477 = vmatprep.subr.mxu0 0.0
        %1478 = vmatpush1.msra.mxu0 %v1448
        %1479 = vmatprep.subr.mxu0 0.0
        %1480 = vmatpush1.msra.mxu0 %v1449
        %1481 = vmatprep.subr.mxu0 0.0
        %1482 = vmatpush1.msra.mxu0 %v1450
        %1483 = vmatprep.subr.mxu0 0.0
        %1484 = vmatpush1.msra.mxu0 %v1451
        %1485 = vmatprep.subr.mxu0 0.0
        %1486 = vmatpush1.msra.mxu0 %v1452
        %1487 = vmatprep.subr.mxu0 0.0
        %1488 = vmatpush1.msra.mxu0 %v1453
        %1489 = vmatprep.subr.mxu0 0.0
        %1490 = vmatpush1.msra.mxu0 %v1454
        %1491 = vmatprep.subr.mxu0 0.0
        %1492 = vmatpush1.msra.mxu0 %v1455
        %1493 = vmatprep.subr.mxu0 0.0
        %1494 = vmatpush1.msra.mxu0 %v1456
        %1495 = vmatprep.subr.mxu0 0.0
        %1496 = vmatpush1.msra.mxu0 %v1457
        %1497 = vmatprep.subr.mxu0 0.0
        %1498 = vmatpush1.msra.mxu0 %v1458
        %1499 = vmatprep.subr.mxu0 0.0
        %1500 = vmatpush1.msra.mxu0 0.0
        %1501 = vmatprep.subr.mxu0 0.0
        %1502 = vmatpush1.msra.mxu0 0.0
        %1503 = vmatprep.subr.mxu0 0.0
        %1504 = vmatpush1.msra.mxu0 0.0
        %1505 = vmatprep.subr.mxu0 0.0
        %1506 = vmatpush1.msra.mxu0 0.0
        %1507 = vmatprep.subr.mxu0 0.0
        %1508 = vmatpush1.msra.mxu0 0.0
        %1509 = vmatprep.subr.mxu0 0.0
        %1510 = vmatpush1.msra.mxu0 0.0
        %1511 = vmatprep.subr.mxu0 0.0
        %1512 = vmatpush1.msra.mxu0 0.0
        %1513 = vmatprep.subr.mxu0 0.0
        %1514 = vmatpush1.msra.mxu0 0.0
        %1515 = vmatprep.subr.mxu0 0.0
        %1516 = vmatpush1.msra.mxu0 0.0
        %1517 = vmatprep.subr.mxu0 0.0
        %1518 = vmatpush1.msra.mxu0 0.0
        %1519 = vmatprep.subr.mxu0 0.0
        %1520 = vmatpush1.msra.mxu0 0.0
        %1521 = vmatprep.subr.mxu0 0.0
        %1522 = vmatpush1.msra.mxu0 0.0
        %1523 = vmatprep.subr.mxu0 0.0
        %1524 = vmatpush1.msra.mxu0 0.0
        %1525 = vmatprep.subr.mxu0 0.0
        %1526 = vmatpush1.msra.mxu0 0.0
        %1527 = vmatprep.subr.mxu0 0.0
        %1528 = vmatpush1.msra.mxu0 0.0
        %1529 = vmatprep.subr.mxu0 0.0
        %1530 = vmatpush1.msra.mxu0 0.0
        %1531 = vmatprep.mubr.f32.mxu0 0.0
        %1532 = vmatmul.mubr.f32.gmra.mrb[0].mxu0 %v800
        %v1533 = vpop.f32.mrb[0].mxu0
        %v1534 = vadd.f32 %v1465, %v1533
        %v1535 = vpop.f32.mrb[0].mxu0
        %1536 = vdwg.mxu0
        %v1538 = vsel %vm1085, %v1346, 0
        %v1541 = vsel %vm1085, %v1439, 0
        %1543 = vmatprep.subr.mxu0 0.0
        %1544 = vmatpush1.xpose.msra.mxu0 %v1541
        %1545 = vmatprep.subr.mxu0 0.0
        %1546 = vmatpush1.xpose.msra.mxu0 0.0
        %1547 = vmatprep.subr.mxu0 0.0
        %1548 = vmatpush1.xpose.msra.mxu0 0.0
        %1549 = vmatprep.subr.mxu0 0.0
        %1550 = vmatpush1.xpose.msra.mxu0 0.0
        %1551 = vmatprep.subr.mxu0 0.0
        %1552 = vmatpush1.xpose.msra.mxu0 0.0
        %1553 = vmatprep.subr.mxu0 0.0
        %1554 = vmatpush1.xpose.msra.mxu0 0.0
        %1555 = vmatprep.subr.mxu0 0.0
        %1556 = vmatpush1.xpose.msra.mxu0 0.0
        %1557 = vmatprep.subr.mxu0 0.0
        %1558 = vmatpush1.xpose.msra.mxu0 0.0
        %1559 = vmatprep.subr.mxu0 0.0
        %1560 = vmatpush1.xpose.msra.mxu0 0.0
        %1561 = vmatprep.subr.mxu0 0.0
        %1562 = vmatpush1.xpose.msra.mxu0 0.0
        %1563 = vmatprep.subr.mxu0 0.0
        %1564 = vmatpush1.xpose.msra.mxu0 0.0
        %1565 = vmatprep.subr.mxu0 0.0
        %1566 = vmatpush1.xpose.msra.mxu0 0.0
        %1567 = vmatprep.subr.mxu0 0.0
        %1568 = vmatpush1.xpose.msra.mxu0 0.0
        %1569 = vmatprep.subr.mxu0 0.0
        %1570 = vmatpush1.xpose.msra.mxu0 0.0
        %1571 = vmatprep.subr.mxu0 0.0
        %1572 = vmatpush1.xpose.msra.mxu0 0.0
        %1573 = vmatprep.subr.mxu0 0.0
        %1574 = vmatpush1.xpose.msra.mxu0 0.0
        %1575 = vmatprep.subr.mxu0 0.0
        %1576 = vmatpush1.xpose.msra.mxu0 0.0
        %1577 = vmatprep.subr.mxu0 0.0
        %1578 = vmatpush1.xpose.msra.mxu0 0.0
        %1579 = vmatprep.subr.mxu0 0.0
        %1580 = vmatpush1.xpose.msra.mxu0 0.0
        %1581 = vmatprep.subr.mxu0 0.0
        %1582 = vmatpush1.xpose.msra.mxu0 0.0
        %1583 = vmatprep.subr.mxu0 0.0
        %1584 = vmatpush1.xpose.msra.mxu0 0.0
        %1585 = vmatprep.subr.mxu0 0.0
        %1586 = vmatpush1.xpose.msra.mxu0 0.0
        %1587 = vmatprep.subr.mxu0 0.0
        %1588 = vmatpush1.xpose.msra.mxu0 0.0
        %1589 = vmatprep.subr.mxu0 0.0
        %1590 = vmatpush1.xpose.msra.mxu0 0.0
        %1591 = vmatprep.subr.mxu0 0.0
        %1592 = vmatpush1.xpose.msra.mxu0 0.0
        %1593 = vmatprep.subr.mxu0 0.0
        %1594 = vmatpush1.xpose.msra.mxu0 0.0
        %1595 = vmatprep.subr.mxu0 0.0
        %1596 = vmatpush1.xpose.msra.mxu0 0.0
        %1597 = vmatprep.subr.mxu0 0.0
        %1598 = vmatpush1.xpose.msra.mxu0 0.0
        %1599 = vmatprep.subr.mxu0 0.0
        %1600 = vmatpush1.xpose.msra.mxu0 0.0
        %1601 = vmatprep.subr.mxu0 0.0
        %1602 = vmatpush1.xpose.msra.mxu0 0.0
        %1603 = vmatprep.subr.mxu0 0.0
        %1604 = vmatpush1.xpose.msra.mxu0 0.0
        %1605 = vmatprep.subr.mxu0 0.0
        %1606 = vmatpush1.xpose.msra.mxu0 0.0
        %1607 = vmatprep.mubr.f32.mxu0 0.0
        %1608 = vmatmul.mubr.f32.gmra.mrb[0].mxu0 %v1538
        %v1609 = vpop.f32.mrb[0].mxu0
        %v1610 = vadd.f32 %v772, %v1609
        %v1611 = vpop.f32.mrb[0].mxu0
        %1612 = vdwg.mxu0
        %v1613 = vsel %vm1162, %v1610, -inf
        %1614 = vmax.xlane.f32.xlu0 %v1613
        %v1615 = vpop.xlane.xlu0 %1614
        %v1616 = vsub.f32 %v1610, %v1615
        %v1617 = vmul.f32 %v1616, 1.442695
        %v1618 = vpow.pop %v1617
        %v1619 = vsel %vm1162, %v1618, 0.0
        %1620 = vadd.xlane.f32.xlu0 %v1619
        %v1621 = vpop.xlane.xlu0 %1620
        %v1622 = vrcp.pop %v1621
        %v1623 = vmul.f32 %v1618, %v1622
        %v1625 = vsel %vm1162, %v1623, 0
        %1627 = vmatprep.subr.mxu0 0.0
        %1628 = vmatpush1.msra.mxu0 %v1534
        %1629 = vmatprep.subr.mxu0 0.0
        %1630 = vmatpush1.msra.mxu0 0.0
        %1631 = vmatprep.subr.mxu0 0.0
        %1632 = vmatpush1.msra.mxu0 0.0
        %1633 = vmatprep.subr.mxu0 0.0
        %1634 = vmatpush1.msra.mxu0 0.0
        %1635 = vmatprep.subr.mxu0 0.0
        %1636 = vmatpush1.msra.mxu0 0.0
        %1637 = vmatprep.subr.mxu0 0.0
        %1638 = vmatpush1.msra.mxu0 0.0
        %1639 = vmatprep.subr.mxu0 0.0
        %1640 = vmatpush1.msra.mxu0 0.0
        %1641 = vmatprep.subr.mxu0 0.0
        %1642 = vmatpush1.msra.mxu0 0.0
        %1643 = vmatprep.subr.mxu0 0.0
        %1644 = vmatpush1.msra.mxu0 0.0
        %1645 = vmatprep.subr.mxu0 0.0
        %1646 = vmatpush1.msra.mxu0 0.0
        %1647 = vmatprep.subr.mxu0 0.0
        %1648 = vmatpush1.msra.mxu0 0.0
        %1649 = vmatprep.subr.mxu0 0.0
        %1650 = vmatpush1.msra.mxu0 0.0
        %1651 = vmatprep.subr.mxu0 0.0
        %1652 = vmatpush1.msra.mxu0 0.0
        %1653 = vmatprep.subr.mxu0 0.0
        %1654 = vmatpush1.msra.mxu0 0.0
        %1655 = vmatprep.subr.mxu0 0.0
        %1656 = vmatpush1.msra.mxu0 0.0
        %1657 = vmatprep.subr.mxu0 0.0
        %1658 = vmatpush1.msra.mxu0 0.0
        %1659 = vmatprep.subr.mxu0 0.0
        %1660 = vmatpush1.msra.mxu0 0.0
        %1661 = vmatprep.subr.mxu0 0.0
        %1662 = vmatpush1.msra.mxu0 0.0
        %1663 = vmatprep.subr.mxu0 0.0
        %1664 = vmatpush1.msra.mxu0 0.0
        %1665 = vmatprep.subr.mxu0 0.0
        %1666 = vmatpush1.msra.mxu0 0.0
        %1667 = vmatprep.subr.mxu0 0.0
        %1668 = vmatpush1.msra.mxu0 0.0
        %1669 = vmatprep.subr.mxu0 0.0
        %1670 = vmatpush1.msra.mxu0 0.0
        %1671 = vmatprep.subr.mxu0 0.0
        %1672 = vmatpush1.msra.mxu0 0.0
        %1673 = vmatprep.subr.mxu0 0.0
        %1674 = vmatpush1.msra.mxu0 0.0
        %1675 = vmatprep.subr.mxu0 0.0
        %1676 = vmatpush1.msra.mxu0 0.0
        %1677 = vmatprep.subr.mxu0 0.0
        %1678 = vmatpush1.msra.mxu0 0.0
        %1679 = vmatprep.subr.mxu0 0.0
        %1680 = vmatpush1.msra.mxu0 0.0
        %1681 = vmatprep.subr.mxu0 0.0
        %1682 = vmatpush1.msra.mxu0 0.0
        %1683 = vmatprep.subr.mxu0 0.0
        %1684 = vmatpush1.msra.mxu0 0.0
        %1685 = vmatprep.subr.mxu0 0.0
        %1686 = vmatpush1.msra.mxu0 0.0
        %1687 = vmatprep.subr.mxu0 0.0
        %1688 = vmatpush1.msra.mxu0 0.0
        %1689 = vmatprep.subr.mxu0 0.0
        %1690 = vmatpush1.msra.mxu0 0.0
        %1691 = vmatprep.mubr.f32.mxu0 0.0
        %1692 = vmatmul.mubr.f32.gmra.mrb[0].mxu0 %v1625
        %v1693 = vpop.f32.mrb[0].mxu0
        %v1694 = vadd.f32 0.0, %v1693
        %v1695 = vpop.f32.mrb[0].mxu0
        %1696 = vdwg.mxu0
        %s1697 = scalar_lea.vmem %s7, 32
        %v1698 = vld [vmem:[%s1697] sm:$0xff]
        %v1699 = vld [vmem:[%s1697 + $0x8] sm:$0xff]
        %v1700 = vld [vmem:[%s1697 + $0x10] sm:$0xff]
        %v1701 = vld [vmem:[%s1697 + $0x18] sm:$0xff]
        %v1703 = vsel %vm1085, %v1694, 0
        %1705 = vmatprep.subr.mxu0 0.0
        %1706 = vmatpush1.msra.mxu0 %v1698
        %1707 = vmatprep.subr.mxu0 0.0
        %1708 = vmatpush1.msra.mxu0 %v1699
        %1709 = vmatprep.subr.mxu0 0.0
        %1710 = vmatpush1.msra.mxu0 %v1700
        %1711 = vmatprep.subr.mxu0 0.0
        %1712 = vmatpush1.msra.mxu0 %v1701
        %1713 = vmatprep.subr.mxu0 0.0
        %1714 = vmatpush1.msra.mxu0 0.0
        %1715 = vmatprep.subr.mxu0 0.0
        %1716 = vmatpush1.msra.mxu0 0.0
        %1717 = vmatprep.subr.mxu0 0.0
        %1718 = vmatpush1.msra.mxu0 0.0
        %1719 = vmatprep.subr.mxu0 0.0
        %1720 = vmatpush1.msra.mxu0 0.0
        %1721 = vmatprep.subr.mxu0 0.0
        %1722 = vmatpush1.msra.mxu0 0.0
        %1723 = vmatprep.subr.mxu0 0.0
        %1724 = vmatpush1.msra.mxu0 0.0
        %1725 = vmatprep.subr.mxu0 0.0
        %1726 = vmatpush1.msra.mxu0 0.0
        %1727 = vmatprep.subr.mxu0 0.0
        %1728 = vmatpush1.msra.mxu0 0.0
        %1729 = vmatprep.subr.mxu0 0.0
        %1730 = vmatpush1.msra.mxu0 0.0
        %1731 = vmatprep.subr.mxu0 0.0
        %1732 = vmatpush1.msra.mxu0 0.0
        %1733 = vmatprep.subr.mxu0 0.0
        %1734 = vmatpush1.msra.mxu0 0.0
        %1735 = vmatprep.subr.mxu0 0.0
        %1736 = vmatpush1.msra.mxu0 0.0
        %1737 = vmatprep.subr.mxu0 0.0
        %1738 = vmatpush1.msra.mxu0 0.0
        %1739 = vmatprep.subr.mxu0 0.0
        %1740 = vmatpush1.msra.mxu0 0.0
        %1741 = vmatprep.subr.mxu0 0.0
        %1742 = vmatpush1.msra.mxu0 0.0
        %1743 = vmatprep.subr.mxu0 0.0
        %1744 = vmatpush1.msra.mxu0 0.0
        %1745 = vmatprep.subr.mxu0 0.0
        %1746 = vmatpush1.msra.mxu0 0.0
        %1747 = vmatprep.subr.mxu0 0.0
        %1748 = vmatpush1.msra.mxu0 0.0
        %1749 = vmatprep.subr.mxu0 0.0
        %1750 = vmatpush1.msra.mxu0 0.0
        %1751 = vmatprep.subr.mxu0 0.0
        %1752 = vmatpush1.msra.mxu0 0.0
        %1753 = vmatprep.subr.mxu0 0.0
        %1754 = vmatpush1.msra.mxu0 0.0
        %1755 = vmatprep.subr.mxu0 0.0
        %1756 = vmatpush1.msra.mxu0 0.0
        %1757 = vmatprep.subr.mxu0 0.0
        %1758 = vmatpush1.msra.mxu0 0.0
        %1759 = vmatprep.subr.mxu0 0.0
        %1760 = vmatpush1.msra.mxu0 0.0
        %1761 = vmatprep.subr.mxu0 0.0
        %1762 = vmatpush1.msra.mxu0 0.0
        %1763 = vmatprep.subr.mxu0 0.0
        %1764 = vmatpush1.msra.mxu0 0.0
        %1765 = vmatprep.subr.mxu0 0.0
        %1766 = vmatpush1.msra.mxu0 0.0
        %1767 = vmatprep.subr.mxu0 0.0
        %1768 = vmatpush1.msra.mxu0 0.0
        %1769 = vmatprep.mubr.f32.mxu0 0.0
        %1770 = vmatmul.mubr.f32.gmra.mrb[0].mxu0 %v1703
        %v1771 = vpop.f32.mrb[0].mxu0
        %v1772 = vadd.f32 0.0, %v1771
        %v1773 = vpop.f32.mrb[0].mxu0
        %1774 = vdwg.mxu0
        %v1776 = vsel %vm1085, %v1244, 0
        %1778 = vmatprep.subr.mxu0 0.0
        %1779 = vmatpush1.msra.mxu0 %v1247
        %1780 = vmatprep.subr.mxu0 0.0
        %1781 = vmatpush1.msra.mxu0 %v1248
        %1782 = vmatprep.subr.mxu0 0.0
        %1783 = vmatpush1.msra.mxu0 %v1249
        %1784 = vmatprep.subr.mxu0 0.0
        %1785 = vmatpush1.msra.mxu0 %v1250
        %1786 = vmatprep.subr.mxu0 0.0
        %1787 = vmatpush1.msra.mxu0 0.0
        %1788 = vmatprep.subr.mxu0 0.0
        %1789 = vmatpush1.msra.mxu0 0.0
        %1790 = vmatprep.subr.mxu0 0.0
        %1791 = vmatpush1.msra.mxu0 0.0
        %1792 = vmatprep.subr.mxu0 0.0
        %1793 = vmatpush1.msra.mxu0 0.0
        %1794 = vmatprep.subr.mxu0 0.0
        %1795 = vmatpush1.msra.mxu0 0.0
        %1796 = vmatprep.subr.mxu0 0.0
        %1797 = vmatpush1.msra.mxu0 0.0
        %1798 = vmatprep.subr.mxu0 0.0
        %1799 = vmatpush1.msra.mxu0 0.0
        %1800 = vmatprep.subr.mxu0 0.0
        %1801 = vmatpush1.msra.mxu0 0.0
        %1802 = vmatprep.subr.mxu0 0.0
        %1803 = vmatpush1.msra.mxu0 0.0
        %1804 = vmatprep.subr.mxu0 0.0
        %1805 = vmatpush1.msra.mxu0 0.0
        %1806 = vmatprep.subr.mxu0 0.0
        %1807 = vmatpush1.msra.mxu0 0.0
        %1808 = vmatprep.subr.mxu0 0.0
        %1809 = vmatpush1.msra.mxu0 0.0
        %1810 = vmatprep.subr.mxu0 0.0
        %1811 = vmatpush1.msra.mxu0 0.0
        %1812 = vmatprep.subr.mxu0 0.0
        %1813 = vmatpush1.msra.mxu0 0.0
        %1814 = vmatprep.subr.mxu0 0.0
        %1815 = vmatpush1.msra.mxu0 0.0
        %1816 = vmatprep.subr.mxu0 0.0
        %1817 = vmatpush1.msra.mxu0 0.0
        %1818 = vmatprep.subr.mxu0 0.0
        %1819 = vmatpush1.msra.mxu0 0.0
        %1820 = vmatprep.subr.mxu0 0.0
        %1821 = vmatpush1.msra.mxu0 0.0
        %1822 = vmatprep.subr.mxu0 0.0
        %1823 = vmatpush1.msra.mxu0 0.0
        %1824 = vmatprep.subr.mxu0 0.0
        %1825 = vmatpush1.msra.mxu0 0.0
        %1826 = vmatprep.subr.mxu0 0.0
        %1827 = vmatpush1.msra.mxu0 0.0
        %1828 = vmatprep.subr.mxu0 0.0
        %1829 = vmatpush1.msra.mxu0 0.0
        %1830 = vmatprep.subr.mxu0 0.0
        %1831 = vmatpush1.msra.mxu0 0.0
        %1832 = vmatprep.subr.mxu0 0.0
        %1833 = vmatpush1.msra.mxu0 0.0
        %1834 = vmatprep.subr.mxu0 0.0
        %1835 = vmatpush1.msra.mxu0 0.0
        %1836 = vmatprep.subr.mxu0 0.0
        %1837 = vmatpush1.msra.mxu0 0.0
        %1838 = vmatprep.subr.mxu0 0.0
        %1839 = vmatpush1.msra.mxu0 0.0
        %1840 = vmatprep.subr.mxu0 0.0
        %1841 = vmatpush1.msra.mxu0 0.0
        %1842 = vmatprep.mubr.f32.mxu0 0.0
        %1843 = vmatmul.mubr.f32.gmra.mrb[0].mxu0 %v1776
        %v1844 = vpop.f32.mrb[0].mxu0
        %v1845 = vadd.f32 %v1772, %v1844
        %v1846 = vpop.f32.mrb[0].mxu0
        %1847 = vdwg.mxu0
        %s1848 = scalar_lea.vmem %s5, 256
        %v1849 = vld [vmem:[%s1848] sm:$0xff]
        %v1850 = vld [vmem:[%s1848 + $0x8] sm:$0xff]
        %v1851 = vld [vmem:[%s1848 + $0x10] sm:$0xff]
        %v1852 = vld [vmem:[%s1848 + $0x18] sm:$0xff]
        %v1853 = vld [vmem:[%s1848 + $0x20] sm:$0xff]
        %v1854 = vld [vmem:[%s1848 + $0x28] sm:$0xff]
        %v1855 = vld [vmem:[%s1848 + $0x30] sm:$0xff]
        %v1856 = vld [vmem:[%s1848 + $0x38] sm:$0xff]
        %v1857 = vld [vmem:[%s1848 + $0x40] sm:$0xff]
        %v1858 = vld [vmem:[%s1848 + $0x48] sm:$0xff]
        %v1859 = vld [vmem:[%s1848 + $0x50] sm:$0xff]
        %v1860 = vld [vmem:[%s1848 + $0x58] sm:$0xff]
        %v1861 = vld [vmem:[%s1848 + $0x60] sm:$0xff]
        %v1862 = vld [vmem:[%s1848 + $0x68] sm:$0xff]
        %v1863 = vld [vmem:[%s1848 + $0x70] sm:$0xff]
        %v1864 = vld [vmem:[%s1848 + $0x78] sm:$0xff]
        %s1865 = scalar_lea.vmem %s6, 2
        %v1866 = vld [vmem:[%s1865] sm:$0x1]
        %v1868 = vlaneseq
        %v1869 = vshrl.u32 %v1868, 7
        %v1870 = vsub.s32 0, %v1869
        %v1871 = vrot.slane %v1866, %v1870
        %1873 = vmatprep.subr.mxu0 0.0
        %1874 = vmatpush1.msra.mxu0 %v1849
        %1875 = vmatprep.subr.mxu0 0.0
        %1876 = vmatpush1.msra.mxu0 %v1850
        %1877 = vmatprep.subr.mxu0 0.0
        %1878 = vmatpush1.msra.mxu0 %v1851
        %1879 = vmatprep.subr.mxu0 0.0
        %1880 = vmatpush1.msra.mxu0 %v1852
        %1881 = vmatprep.subr.mxu0 0.0
        %1882 = vmatpush1.msra.mxu0 %v1853
        %1883 = vmatprep.subr.mxu0 0.0
        %1884 = vmatpush1.msra.mxu0 %v1854
        %1885 = vmatprep.subr.mxu0 0.0
        %1886 = vmatpush1.msra.mxu0 %v1855
        %1887 = vmatprep.subr.mxu0 0.0
        %1888 = vmatpush1.msra.mxu0 %v1856
        %1889 = vmatprep.subr.mxu0 0.0
        %1890 = vmatpush1.msra.mxu0 %v1857
        %1891 = vmatprep.subr.mxu0 0.0
        %1892 = vmatpush1.msra.mxu0 %v1858
        %1893 = vmatprep.subr.mxu0 0.0
        %1894 = vmatpush1.msra.mxu0 %v1859
        %1895 = vmatprep.subr.mxu0 0.0
        %1896 = vmatpush1.msra.mxu0 %v1860
        %1897 = vmatprep.subr.mxu0 0.0
        %1898 = vmatpush1.msra.mxu0 %v1861
        %1899 = vmatprep.subr.mxu0 0.0
        %1900 = vmatpush1.msra.mxu0 %v1862
        %1901 = vmatprep.subr.mxu0 0.0
        %1902 = vmatpush1.msra.mxu0 %v1863
        %1903 = vmatprep.subr.mxu0 0.0
        %1904 = vmatpush1.msra.mxu0 %v1864
        %1905 = vmatprep.subr.mxu0 0.0
        %1906 = vmatpush1.msra.mxu0 0.0
        %1907 = vmatprep.subr.mxu0 0.0
        %1908 = vmatpush1.msra.mxu0 0.0
        %1909 = vmatprep.subr.mxu0 0.0
        %1910 = vmatpush1.msra.mxu0 0.0
        %1911 = vmatprep.subr.mxu0 0.0
        %1912 = vmatpush1.msra.mxu0 0.0
        %1913 = vmatprep.subr.mxu0 0.0
        %1914 = vmatpush1.msra.mxu0 0.0
        %1915 = vmatprep.subr.mxu0 0.0
        %1916 = vmatpush1.msra.mxu0 0.0
        %1917 = vmatprep.subr.mxu0 0.0
        %1918 = vmatpush1.msra.mxu0 0.0
        %1919 = vmatprep.subr.mxu0 0.0
        %1920 = vmatpush1.msra.mxu0 0.0
        %1921 = vmatprep.subr.mxu0 0.0
        %1922 = vmatpush1.msra.mxu0 0.0
        %1923 = vmatprep.subr.mxu0 0.0
        %1924 = vmatpush1.msra.mxu0 0.0
        %1925 = vmatprep.subr.mxu0 0.0
        %1926 = vmatpush1.msra.mxu0 0.0
        %1927 = vmatprep.subr.mxu0 0.0
        %1928 = vmatpush1.msra.mxu0 0.0
        %1929 = vmatprep.subr.mxu0 0.0
        %1930 = vmatpush1.msra.mxu0 0.0
        %1931 = vmatprep.subr.mxu0 0.0
        %1932 = vmatpush1.msra.mxu0 0.0
        %1933 = vmatprep.subr.mxu0 0.0
        %1934 = vmatpush1.msra.mxu0 0.0
        %1935 = vmatprep.subr.mxu0 0.0
        %1936 = vmatpush1.msra.mxu0 0.0
        %1937 = vmatprep.mubr.f32.mxu0 0.0
        %1938 = vmatmul.mubr.f32.gmra.mrb[0].mxu0 %v800
        %v1939 = vpop.f32.mrb[0].mxu0
        %v1940 = vadd.f32 %v1871, %v1939
        %v1941 = vpop.f32.mrb[0].mxu0
        %1942 = vdwg.mxu0
        %v1943 = vmul.f32 %v1940, 0.17677669
        %s1944 = scalar_lea.vmem %s5, 768
        %v1945 = vld [vmem:[%s1944] sm:$0xff]
        %v1946 = vld [vmem:[%s1944 + $0x8] sm:$0xff]
        %v1947 = vld [vmem:[%s1944 + $0x10] sm:$0xff]
        %v1948 = vld [vmem:[%s1944 + $0x18] sm:$0xff]
        %v1949 = vld [vmem:[%s1944 + $0x20] sm:$0xff]
        %v1950 = vld [vmem:[%s1944 + $0x28] sm:$0xff]
        %v1951 = vld [vmem:[%s1944 + $0x30] sm:$0xff]
        %v1952 = vld [vmem:[%s1944 + $0x38] sm:$0xff]
        %v1953 = vld [vmem:[%s1944 + $0x40] sm:$0xff]
        %v1954 = vld [vmem:[%s1944 + $0x48] sm:$0xff]
        %v1955 = vld [vmem:[%s1944 + $0x50] sm:$0xff]
        %v1956 = vld [vmem:[%s1944 + $0x58] sm:$0xff]
        %v1957 = vld [vmem:[%s1944 + $0x60] sm:$0xff]
        %v1958 = vld [vmem:[%s1944 + $0x68] sm:$0xff]
        %v1959 = vld [vmem:[%s1944 + $0x70] sm:$0xff]
        %v1960 = vld [vmem:[%s1944 + $0x78] sm:$0xff]
        %s1961 = scalar_lea.vmem %s6, 6
        %v1962 = vld [vmem:[%s1961] sm:$0x1]
        %v1964 = vlaneseq
        %v1965 = vshrl.u32 %v1964, 7
        %v1966 = vsub.s32 0, %v1965
        %v1967 = vrot.slane %v1962, %v1966
        %1969 = vmatprep.subr.mxu0 0.0
        %1970 = vmatpush1.msra.mxu0 %v1945
        %1971 = vmatprep.subr.mxu0 0.0
        %1972 = vmatpush1.msra.mxu0 %v1946
        %1973 = vmatprep.subr.mxu0 0.0
        %1974 = vmatpush1.msra.mxu0 %v1947
        %1975 = vmatprep.subr.mxu0 0.0
        %1976 = vmatpush1.msra.mxu0 %v1948
        %1977 = vmatprep.subr.mxu0 0.0
        %1978 = vmatpush1.msra.mxu0 %v1949
        %1979 = vmatprep.subr.mxu0 0.0
        %1980 = vmatpush1.msra.mxu0 %v1950
        %1981 = vmatprep.subr.mxu0 0.0
        %1982 = vmatpush1.msra.mxu0 %v1951
        %1983 = vmatprep.subr.mxu0 0.0
        %1984 = vmatpush1.msra.mxu0 %v1952
        %1985 = vmatprep.subr.mxu0 0.0
        %1986 = vmatpush1.msra.mxu0 %v1953
        %1987 = vmatprep.subr.mxu0 0.0
        %1988 = vmatpush1.msra.mxu0 %v1954
        %1989 = vmatprep.subr.mxu0 0.0
        %1990 = vmatpush1.msra.mxu0 %v1955
        %1991 = vmatprep.subr.mxu0 0.0
        %1992 = vmatpush1.msra.mxu0 %v1956
        %1993 = vmatprep.subr.mxu0 0.0
        %1994 = vmatpush1.msra.mxu0 %v1957
        %1995 = vmatprep.subr.mxu0 0.0
        %1996 = vmatpush1.msra.mxu0 %v1958
        %1997 = vmatprep.subr.mxu0 0.0
        %1998 = vmatpush1.msra.mxu0 %v1959
        %1999 = vmatprep.subr.mxu0 0.0
        %2000 = vmatpush1.msra.mxu0 %v1960
        %2001 = vmatprep.subr.mxu0 0.0
        %2002 = vmatpush1.msra.mxu0 0.0
        %2003 = vmatprep.subr.mxu0 0.0
        %2004 = vmatpush1.msra.mxu0 0.0
        %2005 = vmatprep.subr.mxu0 0.0
        %2006 = vmatpush1.msra.mxu0 0.0
        %2007 = vmatprep.subr.mxu0 0.0
        %2008 = vmatpush1.msra.mxu0 0.0
        %2009 = vmatprep.subr.mxu0 0.0
        %2010 = vmatpush1.msra.mxu0 0.0
        %2011 = vmatprep.subr.mxu0 0.0
        %2012 = vmatpush1.msra.mxu0 0.0
        %2013 = vmatprep.subr.mxu0 0.0
        %2014 = vmatpush1.msra.mxu0 0.0
        %2015 = vmatprep.subr.mxu0 0.0
        %2016 = vmatpush1.msra.mxu0 0.0
        %2017 = vmatprep.subr.mxu0 0.0
        %2018 = vmatpush1.msra.mxu0 0.0
        %2019 = vmatprep.subr.mxu0 0.0
        %2020 = vmatpush1.msra.mxu0 0.0
        %2021 = vmatprep.subr.mxu0 0.0
        %2022 = vmatpush1.msra.mxu0 0.0
        %2023 = vmatprep.subr.mxu0 0.0
        %2024 = vmatpush1.msra.mxu0 0.0
        %2025 = vmatprep.subr.mxu0 0.0
        %2026 = vmatpush1.msra.mxu0 0.0
        %2027 = vmatprep.subr.mxu0 0.0
        %2028 = vmatpush1.msra.mxu0 0.0
        %2029 = vmatprep.subr.mxu0 0.0
        %2030 = vmatpush1.msra.mxu0 0.0
        %2031 = vmatprep.subr.mxu0 0.0
        %2032 = vmatpush1.msra.mxu0 0.0
        %2033 = vmatprep.mubr.f32.mxu0 0.0
        %2034 = vmatmul.mubr.f32.gmra.mrb[0].mxu0 %v800
        %v2035 = vpop.f32.mrb[0].mxu0
        %v2036 = vadd.f32 %v1967, %v2035
        %v2037 = vpop.f32.mrb[0].mxu0
        %2038 = vdwg.mxu0
        %s2039 = scalar_lea.vmem %s5, 1280
        %v2040 = vld [vmem:[%s2039] sm:$0xff]
        %v2041 = vld [vmem:[%s2039 + $0x8] sm:$0xff]
        %v2042 = vld [vmem:[%s2039 + $0x10] sm:$0xff]
        %v2043 = vld [vmem:[%s2039 + $0x18] sm:$0xff]
        %v2044 = vld [vmem:[%s2039 + $0x20] sm:$0xff]
        %v2045 = vld [vmem:[%s2039 + $0x28] sm:$0xff]
        %v2046 = vld [vmem:[%s2039 + $0x30] sm:$0xff]
        %v2047 = vld [vmem:[%s2039 + $0x38] sm:$0xff]
        %v2048 = vld [vmem:[%s2039 + $0x40] sm:$0xff]
        %v2049 = vld [vmem:[%s2039 + $0x48] sm:$0xff]
        %v2050 = vld [vmem:[%s2039 + $0x50] sm:$0xff]
        %v2051 = vld [vmem:[%s2039 + $0x58] sm:$0xff]
        %v2052 = vld [vmem:[%s2039 + $0x60] sm:$0xff]
        %v2053 = vld [vmem:[%s2039 + $0x68] sm:$0xff]
        %v2054 = vld [vmem:[%s2039 + $0x70] sm:$0xff]
        %v2055 = vld [vmem:[%s2039 + $0x78] sm:$0xff]
        %s2056 = scalar_lea.vmem %s6, 10
        %v2057 = vld [vmem:[%s2056] sm:$0x1]
        %v2059 = vlaneseq
        %v2060 = vshrl.u32 %v2059, 7
        %v2061 = vsub.s32 0, %v2060
        %v2062 = vrot.slane %v2057, %v2061
        %2064 = vmatprep.subr.mxu0 0.0
        %2065 = vmatpush1.msra.mxu0 %v2040
        %2066 = vmatprep.subr.mxu0 0.0
        %2067 = vmatpush1.msra.mxu0 %v2041
        %2068 = vmatprep.subr.mxu0 0.0
        %2069 = vmatpush1.msra.mxu0 %v2042
        %2070 = vmatprep.subr.mxu0 0.0
        %2071 = vmatpush1.msra.mxu0 %v2043
        %2072 = vmatprep.subr.mxu0 0.0
        %2073 = vmatpush1.msra.mxu0 %v2044
        %2074 = vmatprep.subr.mxu0 0.0
        %2075 = vmatpush1.msra.mxu0 %v2045
        %2076 = vmatprep.subr.mxu0 0.0
        %2077 = vmatpush1.msra.mxu0 %v2046
        %2078 = vmatprep.subr.mxu0 0.0
        %2079 = vmatpush1.msra.mxu0 %v2047
        %2080 = vmatprep.subr.mxu0 0.0
        %2081 = vmatpush1.msra.mxu0 %v2048
        %2082 = vmatprep.subr.mxu0 0.0
        %2083 = vmatpush1.msra.mxu0 %v2049
        %2084 = vmatprep.subr.mxu0 0.0
        %2085 = vmatpush1.msra.mxu0 %v2050
        %2086 = vmatprep.subr.mxu0 0.0
        %2087 = vmatpush1.msra.mxu0 %v2051
        %2088 = vmatprep.subr.mxu0 0.0
        %2089 = vmatpush1.msra.mxu0 %v2052
        %2090 = vmatprep.subr.mxu0 0.0
        %2091 = vmatpush1.msra.mxu0 %v2053
        %2092 = vmatprep.subr.mxu0 0.0
        %2093 = vmatpush1.msra.mxu0 %v2054
        %2094 = vmatprep.subr.mxu0 0.0
        %2095 = vmatpush1.msra.mxu0 %v2055
        %2096 = vmatprep.subr.mxu0 0.0
        %2097 = vmatpush1.msra.mxu0 0.0
        %2098 = vmatprep.subr.mxu0 0.0
        %2099 = vmatpush1.msra.mxu0 0.0
        %2100 = vmatprep.subr.mxu0 0.0
        %2101 = vmatpush1.msra.mxu0 0.0
        %2102 = vmatprep.subr.mxu0 0.0
        %2103 = vmatpush1.msra.mxu0 0.0
        %2104 = vmatprep.subr.mxu0 0.0
        %2105 = vmatpush1.msra.mxu0 0.0
        %2106 = vmatprep.subr.mxu0 0.0
        %2107 = vmatpush1.msra.mxu0 0.0
        %2108 = vmatprep.subr.mxu0 0.0
        %2109 = vmatpush1.msra.mxu0 0.0
        %2110 = vmatprep.subr.mxu0 0.0
        %2111 = vmatpush1.msra.mxu0 0.0
        %2112 = vmatprep.subr.mxu0 0.0
        %2113 = vmatpush1.msra.mxu0 0.0
        %2114 = vmatprep.subr.mxu0 0.0
        %2115 = vmatpush1.msra.mxu0 0.0
        %2116 = vmatprep.subr.mxu0 0.0
        %2117 = vmatpush1.msra.mxu0 0.0
        %2118 = vmatprep.subr.mxu0 0.0
        %2119 = vmatpush1.msra.mxu0 0.0
        %2120 = vmatprep.subr.mxu0 0.0
        %2121 = vmatpush1.msra.mxu0 0.0
        %2122 = vmatprep.subr.mxu0 0.0
        %2123 = vmatpush1.msra.mxu0 0.0
        %2124 = vmatprep.subr.mxu0 0.0
        %2125 = vmatpush1.msra.mxu0 0.0
        %2126 = vmatprep.subr.mxu0 0.0
        %2127 = vmatpush1.msra.mxu0 0.0
        %2128 = vmatprep.mubr.f32.mxu0 0.0
        %2129 = vmatmul.mubr.f32.gmra.mrb[0].mxu0 %v800
        %v2130 = vpop.f32.mrb[0].mxu0
        %v2131 = vadd.f32 %v2062, %v2130
        %v2132 = vpop.f32.mrb[0].mxu0
        %2133 = vdwg.mxu0
        %v2135 = vsel %vm1085, %v1943, 0
        %v2138 = vsel %vm1085, %v2036, 0
        %2140 = vmatprep.subr.mxu0 0.0
        %2141 = vmatpush1.xpose.msra.mxu0 %v2138
        %2142 = vmatprep.subr.mxu0 0.0
        %2143 = vmatpush1.xpose.msra.mxu0 0.0
        %2144 = vmatprep.subr.mxu0 0.0
        %2145 = vmatpush1.xpose.msra.mxu0 0.0
        %2146 = vmatprep.subr.mxu0 0.0
        %2147 = vmatpush1.xpose.msra.mxu0 0.0
        %2148 = vmatprep.subr.mxu0 0.0
        %2149 = vmatpush1.xpose.msra.mxu0 0.0
        %2150 = vmatprep.subr.mxu0 0.0
        %2151 = vmatpush1.xpose.msra.mxu0 0.0
        %2152 = vmatprep.subr.mxu0 0.0
        %2153 = vmatpush1.xpose.msra.mxu0 0.0
        %2154 = vmatprep.subr.mxu0 0.0
        %2155 = vmatpush1.xpose.msra.mxu0 0.0
        %2156 = vmatprep.subr.mxu0 0.0
        %2157 = vmatpush1.xpose.msra.mxu0 0.0
        %2158 = vmatprep.subr.mxu0 0.0
        %2159 = vmatpush1.xpose.msra.mxu0 0.0
        %2160 = vmatprep.subr.mxu0 0.0
        %2161 = vmatpush1.xpose.msra.mxu0 0.0
        %2162 = vmatprep.subr.mxu0 0.0
        %2163 = vmatpush1.xpose.msra.mxu0 0.0
        %2164 = vmatprep.subr.mxu0 0.0
        %2165 = vmatpush1.xpose.msra.mxu0 0.0
        %2166 = vmatprep.subr.mxu0 0.0
        %2167 = vmatpush1.xpose.msra.mxu0 0.0
        %2168 = vmatprep.subr.mxu0 0.0
        %2169 = vmatpush1.xpose.msra.mxu0 0.0
        %2170 = vmatprep.subr.mxu0 0.0
        %2171 = vmatpush1.xpose.msra.mxu0 0.0
        %2172 = vmatprep.subr.mxu0 0.0
        %2173 = vmatpush1.xpose.msra.mxu0 0.0
        %2174 = vmatprep.subr.mxu0 0.0
        %2175 = vmatpush1.xpose.msra.mxu0 0.0
        %2176 = vmatprep.subr.mxu0 0.0
        %2177 = vmatpush1.xpose.msra.mxu0 0.0
        %2178 = vmatprep.subr.mxu0 0.0
        %2179 = vmatpush1.xpose.msra.mxu0 0.0
        %2180 = vmatprep.subr.mxu0 0.0
        %2181 = vmatpush1.xpose.msra.mxu0 0.0
        %2182 = vmatprep.subr.mxu0 0.0
        %2183 = vmatpush1.xpose.msra.mxu0 0.0
        %2184 = vmatprep.subr.mxu0 0.0
        %2185 = vmatpush1.xpose.msra.mxu0 0.0
        %2186 = vmatprep.subr.mxu0 0.0
        %2187 = vmatpush1.xpose.msra.mxu0 0.0
        %2188 = vmatprep.subr.mxu0 0.0
        %2189 = vmatpush1.xpose.msra.mxu0 0.0
        %2190 = vmatprep.subr.mxu0 0.0
        %2191 = vmatpush1.xpose.msra.mxu0 0.0
        %2192 = vmatprep.subr.mxu0 0.0
        %2193 = vmatpush1.xpose.msra.mxu0 0.0
        %2194 = vmatprep.subr.mxu0 0.0
        %2195 = vmatpush1.xpose.msra.mxu0 0.0
        %2196 = vmatprep.subr.mxu0 0.0
        %2197 = vmatpush1.xpose.msra.mxu0 0.0
        %2198 = vmatprep.subr.mxu0 0.0
        %2199 = vmatpush1.xpose.msra.mxu0 0.0
        %2200 = vmatprep.subr.mxu0 0.0
        %2201 = vmatpush1.xpose.msra.mxu0 0.0
        %2202 = vmatprep.subr.mxu0 0.0
        %2203 = vmatpush1.xpose.msra.mxu0 0.0
        %2204 = vmatprep.mubr.f32.mxu0 0.0
        %2205 = vmatmul.mubr.f32.gmra.mrb[0].mxu0 %v2135
        %v2206 = vpop.f32.mrb[0].mxu0
        %v2207 = vadd.f32 %v772, %v2206
        %v2208 = vpop.f32.mrb[0].mxu0
        %2209 = vdwg.mxu0
        %v2210 = vsel %vm1162, %v2207, -inf
        %2211 = vmax.xlane.f32.xlu0 %v2210
        %v2212 = vpop.xlane.xlu0 %2211
        %v2213 = vsub.f32 %v2207, %v2212
        %v2214 = vmul.f32 %v2213, 1.442695
        %v2215 = vpow.pop %v2214
        %v2216 = vsel %vm1162, %v2215, 0.0
        %2217 = vadd.xlane.f32.xlu0 %v2216
        %v2218 = vpop.xlane.xlu0 %2217
        %v2219 = vrcp.pop %v2218
        %v2220 = vmul.f32 %v2215, %v2219
        %v2222 = vsel %vm1162, %v2220, 0
        %2224 = vmatprep.subr.mxu0 0.0
        %2225 = vmatpush1.msra.mxu0 %v2131
        %2226 = vmatprep.subr.mxu0 0.0
        %2227 = vmatpush1.msra.mxu0 0.0
        %2228 = vmatprep.subr.mxu0 0.0
        %2229 = vmatpush1.msra.mxu0 0.0
        %2230 = vmatprep.subr.mxu0 0.0
        %2231 = vmatpush1.msra.mxu0 0.0
        %2232 = vmatprep.subr.mxu0 0.0
        %2233 = vmatpush1.msra.mxu0 0.0
        %2234 = vmatprep.subr.mxu0 0.0
        %2235 = vmatpush1.msra.mxu0 0.0
        %2236 = vmatprep.subr.mxu0 0.0
        %2237 = vmatpush1.msra.mxu0 0.0
        %2238 = vmatprep.subr.mxu0 0.0
        %2239 = vmatpush1.msra.mxu0 0.0
        %2240 = vmatprep.subr.mxu0 0.0
        %2241 = vmatpush1.msra.mxu0 0.0
        %2242 = vmatprep.subr.mxu0 0.0
        %2243 = vmatpush1.msra.mxu0 0.0
        %2244 = vmatprep.subr.mxu0 0.0
        %2245 = vmatpush1.msra.mxu0 0.0
        %2246 = vmatprep.subr.mxu0 0.0
        %2247 = vmatpush1.msra.mxu0 0.0
        %2248 = vmatprep.subr.mxu0 0.0
        %2249 = vmatpush1.msra.mxu0 0.0
        %2250 = vmatprep.subr.mxu0 0.0
        %2251 = vmatpush1.msra.mxu0 0.0
        %2252 = vmatprep.subr.mxu0 0.0
        %2253 = vmatpush1.msra.mxu0 0.0
        %2254 = vmatprep.subr.mxu0 0.0
        %2255 = vmatpush1.msra.mxu0 0.0
        %2256 = vmatprep.subr.mxu0 0.0
        %2257 = vmatpush1.msra.mxu0 0.0
        %2258 = vmatprep.subr.mxu0 0.0
        %2259 = vmatpush1.msra.mxu0 0.0
        %2260 = vmatprep.subr.mxu0 0.0
        %2261 = vmatpush1.msra.mxu0 0.0
        %2262 = vmatprep.subr.mxu0 0.0
        %2263 = vmatpush1.msra.mxu0 0.0
        %2264 = vmatprep.subr.mxu0 0.0
        %2265 = vmatpush1.msra.mxu0 0.0
        %2266 = vmatprep.subr.mxu0 0.0
        %2267 = vmatpush1.msra.mxu0 0.0
        %2268 = vmatprep.subr.mxu0 0.0
        %2269 = vmatpush1.msra.mxu0 0.0
        %2270 = vmatprep.subr.mxu0 0.0
        %2271 = vmatpush1.msra.mxu0 0.0
        %2272 = vmatprep.subr.mxu0 0.0
        %2273 = vmatpush1.msra.mxu0 0.0
        %2274 = vmatprep.subr.mxu0 0.0
        %2275 = vmatpush1.msra.mxu0 0.0
        %2276 = vmatprep.subr.mxu0 0.0
        %2277 = vmatpush1.msra.mxu0 0.0
        %2278 = vmatprep.subr.mxu0 0.0
        %2279 = vmatpush1.msra.mxu0 0.0
        %2280 = vmatprep.subr.mxu0 0.0
        %2281 = vmatpush1.msra.mxu0 0.0
        %2282 = vmatprep.subr.mxu0 0.0
        %2283 = vmatpush1.msra.mxu0 0.0
        %2284 = vmatprep.subr.mxu0 0.0
        %2285 = vmatpush1.msra.mxu0 0.0
        %2286 = vmatprep.subr.mxu0 0.0
        %2287 = vmatpush1.msra.mxu0 0.0
        %2288 = vmatprep.mubr.f32.mxu0 0.0
        %2289 = vmatmul.mubr.f32.gmra.mrb[0].mxu0 %v2222
        %v2290 = vpop.f32.mrb[0].mxu0
        %v2291 = vadd.f32 0.0, %v2290
        %v2292 = vpop.f32.mrb[0].mxu0
        %2293 = vdwg.mxu0
        %s2294 = scalar_lea.vmem %s7, 64
        %v2295 = vld [vmem:[%s2294] sm:$0xff]
        %v2296 = vld [vmem:[%s2294 + $0x8] sm:$0xff]
        %v2297 = vld [vmem:[%s2294 + $0x10] sm:$0xff]
        %v2298 = vld [vmem:[%s2294 + $0x18] sm:$0xff]
        %v2300 = vsel %vm1085, %v2291, 0
        %2302 = vmatprep.subr.mxu0 0.0
        %2303 = vmatpush1.msra.mxu0 %v2295
        %2304 = vmatprep.subr.mxu0 0.0
        %2305 = vmatpush1.msra.mxu0 %v2296
        %2306 = vmatprep.subr.mxu0 0.0
        %2307 = vmatpush1.msra.mxu0 %v2297
        %2308 = vmatprep.subr.mxu0 0.0
        %2309 = vmatpush1.msra.mxu0 %v2298
        %2310 = vmatprep.subr.mxu0 0.0
        %2311 = vmatpush1.msra.mxu0 0.0
        %2312 = vmatprep.subr.mxu0 0.0
        %2313 = vmatpush1.msra.mxu0 0.0
        %2314 = vmatprep.subr.mxu0 0.0
        %2315 = vmatpush1.msra.mxu0 0.0
        %2316 = vmatprep.subr.mxu0 0.0
        %2317 = vmatpush1.msra.mxu0 0.0
        %2318 = vmatprep.subr.mxu0 0.0
        %2319 = vmatpush1.msra.mxu0 0.0
        %2320 = vmatprep.subr.mxu0 0.0
        %2321 = vmatpush1.msra.mxu0 0.0
        %2322 = vmatprep.subr.mxu0 0.0
        %2323 = vmatpush1.msra.mxu0 0.0
        %2324 = vmatprep.subr.mxu0 0.0
        %2325 = vmatpush1.msra.mxu0 0.0
        %2326 = vmatprep.subr.mxu0 0.0
        %2327 = vmatpush1.msra.mxu0 0.0
        %2328 = vmatprep.subr.mxu0 0.0
        %2329 = vmatpush1.msra.mxu0 0.0
        %2330 = vmatprep.subr.mxu0 0.0
        %2331 = vmatpush1.msra.mxu0 0.0
        %2332 = vmatprep.subr.mxu0 0.0
        %2333 = vmatpush1.msra.mxu0 0.0
        %2334 = vmatprep.subr.mxu0 0.0
        %2335 = vmatpush1.msra.mxu0 0.0
        %2336 = vmatprep.subr.mxu0 0.0
        %2337 = vmatpush1.msra.mxu0 0.0
        %2338 = vmatprep.subr.mxu0 0.0
        %2339 = vmatpush1.msra.mxu0 0.0
        %2340 = vmatprep.subr.mxu0 0.0
        %2341 = vmatpush1.msra.mxu0 0.0
        %2342 = vmatprep.subr.mxu0 0.0
        %2343 = vmatpush1.msra.mxu0 0.0
        %2344 = vmatprep.subr.mxu0 0.0
        %2345 = vmatpush1.msra.mxu0 0.0
        %2346 = vmatprep.subr.mxu0 0.0
        %2347 = vmatpush1.msra.mxu0 0.0
        %2348 = vmatprep.subr.mxu0 0.0
        %2349 = vmatpush1.msra.mxu0 0.0
        %2350 = vmatprep.subr.mxu0 0.0
        %2351 = vmatpush1.msra.mxu0 0.0
        %2352 = vmatprep.subr.mxu0 0.0
        %2353 = vmatpush1.msra.mxu0 0.0
        %2354 = vmatprep.subr.mxu0 0.0
        %2355 = vmatpush1.msra.mxu0 0.0
        %2356 = vmatprep.subr.mxu0 0.0
        %2357 = vmatpush1.msra.mxu0 0.0
        %2358 = vmatprep.subr.mxu0 0.0
        %2359 = vmatpush1.msra.mxu0 0.0
        %2360 = vmatprep.subr.mxu0 0.0
        %2361 = vmatpush1.msra.mxu0 0.0
        %2362 = vmatprep.subr.mxu0 0.0
        %2363 = vmatpush1.msra.mxu0 0.0
        %2364 = vmatprep.subr.mxu0 0.0
        %2365 = vmatpush1.msra.mxu0 0.0
        %2366 = vmatprep.mubr.f32.mxu0 0.0
        %2367 = vmatmul.mubr.f32.gmra.mrb[0].mxu0 %v2300
        %v2368 = vpop.f32.mrb[0].mxu0
        %v2369 = vadd.f32 0.0, %v2368
        %v2370 = vpop.f32.mrb[0].mxu0
        %2371 = vdwg.mxu0
        %v2372 = vadd.f32 %v1845, %v2369
        %s2373 = scalar_lea.vmem %s5, 384
        %v2374 = vld [vmem:[%s2373] sm:$0xff]
        %v2375 = vld [vmem:[%s2373 + $0x8] sm:$0xff]
        %v2376 = vld [vmem:[%s2373 + $0x10] sm:$0xff]
        %v2377 = vld [vmem:[%s2373 + $0x18] sm:$0xff]
        %v2378 = vld [vmem:[%s2373 + $0x20] sm:$0xff]
        %v2379 = vld [vmem:[%s2373 + $0x28] sm:$0xff]
        %v2380 = vld [vmem:[%s2373 + $0x30] sm:$0xff]
        %v2381 = vld [vmem:[%s2373 + $0x38] sm:$0xff]
        %v2382 = vld [vmem:[%s2373 + $0x40] sm:$0xff]
        %v2383 = vld [vmem:[%s2373 + $0x48] sm:$0xff]
        %v2384 = vld [vmem:[%s2373 + $0x50] sm:$0xff]
        %v2385 = vld [vmem:[%s2373 + $0x58] sm:$0xff]
        %v2386 = vld [vmem:[%s2373 + $0x60] sm:$0xff]
        %v2387 = vld [vmem:[%s2373 + $0x68] sm:$0xff]
        %v2388 = vld [vmem:[%s2373 + $0x70] sm:$0xff]
        %v2389 = vld [vmem:[%s2373 + $0x78] sm:$0xff]
        %s2390 = scalar_lea.vmem %s6, 3
        %v2391 = vld [vmem:[%s2390] sm:$0x1]
        %v2393 = vlaneseq
        %v2394 = vshrl.u32 %v2393, 7
        %v2395 = vsub.s32 0, %v2394
        %v2396 = vrot.slane %v2391, %v2395
        %2398 = vmatprep.subr.mxu0 0.0
        %2399 = vmatpush1.msra.mxu0 %v2374
        %2400 = vmatprep.subr.mxu0 0.0
        %2401 = vmatpush1.msra.mxu0 %v2375
        %2402 = vmatprep.subr.mxu0 0.0
        %2403 = vmatpush1.msra.mxu0 %v2376
        %2404 = vmatprep.subr.mxu0 0.0
        %2405 = vmatpush1.msra.mxu0 %v2377
        %2406 = vmatprep.subr.mxu0 0.0
        %2407 = vmatpush1.msra.mxu0 %v2378
        %2408 = vmatprep.subr.mxu0 0.0
        %2409 = vmatpush1.msra.mxu0 %v2379
        %2410 = vmatprep.subr.mxu0 0.0
        %2411 = vmatpush1.msra.mxu0 %v2380
        %2412 = vmatprep.subr.mxu0 0.0
        %2413 = vmatpush1.msra.mxu0 %v2381
        %2414 = vmatprep.subr.mxu0 0.0
        %2415 = vmatpush1.msra.mxu0 %v2382
        %2416 = vmatprep.subr.mxu0 0.0
        %2417 = vmatpush1.msra.mxu0 %v2383
        %2418 = vmatprep.subr.mxu0 0.0
        %2419 = vmatpush1.msra.mxu0 %v2384
        %2420 = vmatprep.subr.mxu0 0.0
        %2421 = vmatpush1.msra.mxu0 %v2385
        %2422 = vmatprep.subr.mxu0 0.0
        %2423 = vmatpush1.msra.mxu0 %v2386
        %2424 = vmatprep.subr.mxu0 0.0
        %2425 = vmatpush1.msra.mxu0 %v2387
        %2426 = vmatprep.subr.mxu0 0.0
        %2427 = vmatpush1.msra.mxu0 %v2388
        %2428 = vmatprep.subr.mxu0 0.0
        %2429 = vmatpush1.msra.mxu0 %v2389
        %2430 = vmatprep.subr.mxu0 0.0
        %2431 = vmatpush1.msra.mxu0 0.0
        %2432 = vmatprep.subr.mxu0 0.0
        %2433 = vmatpush1.msra.mxu0 0.0
        %2434 = vmatprep.subr.mxu0 0.0
        %2435 = vmatpush1.msra.mxu0 0.0
        %2436 = vmatprep.subr.mxu0 0.0
        %2437 = vmatpush1.msra.mxu0 0.0
        %2438 = vmatprep.subr.mxu0 0.0
        %2439 = vmatpush1.msra.mxu0 0.0
        %2440 = vmatprep.subr.mxu0 0.0
        %2441 = vmatpush1.msra.mxu0 0.0
        %2442 = vmatprep.subr.mxu0 0.0
        %2443 = vmatpush1.msra.mxu0 0.0
        %2444 = vmatprep.subr.mxu0 0.0
        %2445 = vmatpush1.msra.mxu0 0.0
        %2446 = vmatprep.subr.mxu0 0.0
        %2447 = vmatpush1.msra.mxu0 0.0
        %2448 = vmatprep.subr.mxu0 0.0
        %2449 = vmatpush1.msra.mxu0 0.0
        %2450 = vmatprep.subr.mxu0 0.0
        %2451 = vmatpush1.msra.mxu0 0.0
        %2452 = vmatprep.subr.mxu0 0.0
        %2453 = vmatpush1.msra.mxu0 0.0
        %2454 = vmatprep.subr.mxu0 0.0
        %2455 = vmatpush1.msra.mxu0 0.0
        %2456 = vmatprep.subr.mxu0 0.0
        %2457 = vmatpush1.msra.mxu0 0.0
        %2458 = vmatprep.subr.mxu0 0.0
        %2459 = vmatpush1.msra.mxu0 0.0
        %2460 = vmatprep.subr.mxu0 0.0
        %2461 = vmatpush1.msra.mxu0 0.0
        %2462 = vmatprep.mubr.f32.mxu0 0.0
        %2463 = vmatmul.mubr.f32.gmra.mrb[0].mxu0 %v800
        %v2464 = vpop.f32.mrb[0].mxu0
        %v2465 = vadd.f32 %v2396, %v2464
        %v2466 = vpop.f32.mrb[0].mxu0
        %2467 = vdwg.mxu0
        %v2468 = vmul.f32 %v2465, 0.17677669
        %s2469 = scalar_lea.vmem %s5, 896
        %v2470 = vld [vmem:[%s2469] sm:$0xff]
        %v2471 = vld [vmem:[%s2469 + $0x8] sm:$0xff]
        %v2472 = vld [vmem:[%s2469 + $0x10] sm:$0xff]
        %v2473 = vld [vmem:[%s2469 + $0x18] sm:$0xff]
        %v2474 = vld [vmem:[%s2469 + $0x20] sm:$0xff]
        %v2475 = vld [vmem:[%s2469 + $0x28] sm:$0xff]
        %v2476 = vld [vmem:[%s2469 + $0x30] sm:$0xff]
        %v2477 = vld [vmem:[%s2469 + $0x38] sm:$0xff]
        %v2478 = vld [vmem:[%s2469 + $0x40] sm:$0xff]
        %v2479 = vld [vmem:[%s2469 + $0x48] sm:$0xff]
        %v2480 = vld [vmem:[%s2469 + $0x50] sm:$0xff]
        %v2481 = vld [vmem:[%s2469 + $0x58] sm:$0xff]
        %v2482 = vld [vmem:[%s2469 + $0x60] sm:$0xff]
        %v2483 = vld [vmem:[%s2469 + $0x68] sm:$0xff]
        %v2484 = vld [vmem:[%s2469 + $0x70] sm:$0xff]
        %v2485 = vld [vmem:[%s2469 + $0x78] sm:$0xff]
        %s2486 = scalar_lea.vmem %s6, 7
        %v2487 = vld [vmem:[%s2486] sm:$0x1]
        %v2489 = vlaneseq
        %v2490 = vshrl.u32 %v2489, 7
        %v2491 = vsub.s32 0, %v2490
        %v2492 = vrot.slane %v2487, %v2491
        %2494 = vmatprep.subr.mxu0 0.0
        %2495 = vmatpush1.msra.mxu0 %v2470
        %2496 = vmatprep.subr.mxu0 0.0
        %2497 = vmatpush1.msra.mxu0 %v2471
        %2498 = vmatprep.subr.mxu0 0.0
        %2499 = vmatpush1.msra.mxu0 %v2472
        %2500 = vmatprep.subr.mxu0 0.0
        %2501 = vmatpush1.msra.mxu0 %v2473
        %2502 = vmatprep.subr.mxu0 0.0
        %2503 = vmatpush1.msra.mxu0 %v2474
        %2504 = vmatprep.subr.mxu0 0.0
        %2505 = vmatpush1.msra.mxu0 %v2475
        %2506 = vmatprep.subr.mxu0 0.0
        %2507 = vmatpush1.msra.mxu0 %v2476
        %2508 = vmatprep.subr.mxu0 0.0
        %2509 = vmatpush1.msra.mxu0 %v2477
        %2510 = vmatprep.subr.mxu0 0.0
        %2511 = vmatpush1.msra.mxu0 %v2478
        %2512 = vmatprep.subr.mxu0 0.0
        %2513 = vmatpush1.msra.mxu0 %v2479
        %2514 = vmatprep.subr.mxu0 0.0
        %2515 = vmatpush1.msra.mxu0 %v2480
        %2516 = vmatprep.subr.mxu0 0.0
        %2517 = vmatpush1.msra.mxu0 %v2481
        %2518 = vmatprep.subr.mxu0 0.0
        %2519 = vmatpush1.msra.mxu0 %v2482
        %2520 = vmatprep.subr.mxu0 0.0
        %2521 = vmatpush1.msra.mxu0 %v2483
        %2522 = vmatprep.subr.mxu0 0.0
        %2523 = vmatpush1.msra.mxu0 %v2484
        %2524 = vmatprep.subr.mxu0 0.0
        %2525 = vmatpush1.msra.mxu0 %v2485
        %2526 = vmatprep.subr.mxu0 0.0
        %2527 = vmatpush1.msra.mxu0 0.0
        %2528 = vmatprep.subr.mxu0 0.0
        %2529 = vmatpush1.msra.mxu0 0.0
        %2530 = vmatprep.subr.mxu0 0.0
        %2531 = vmatpush1.msra.mxu0 0.0
        %2532 = vmatprep.subr.mxu0 0.0
        %2533 = vmatpush1.msra.mxu0 0.0
        %2534 = vmatprep.subr.mxu0 0.0
        %2535 = vmatpush1.msra.mxu0 0.0
        %2536 = vmatprep.subr.mxu0 0.0
        %2537 = vmatpush1.msra.mxu0 0.0
        %2538 = vmatprep.subr.mxu0 0.0
        %2539 = vmatpush1.msra.mxu0 0.0
        %2540 = vmatprep.subr.mxu0 0.0
        %2541 = vmatpush1.msra.mxu0 0.0
        %2542 = vmatprep.subr.mxu0 0.0
        %2543 = vmatpush1.msra.mxu0 0.0
        %2544 = vmatprep.subr.mxu0 0.0
        %2545 = vmatpush1.msra.mxu0 0.0
        %2546 = vmatprep.subr.mxu0 0.0
        %2547 = vmatpush1.msra.mxu0 0.0
        %2548 = vmatprep.subr.mxu0 0.0
        %2549 = vmatpush1.msra.mxu0 0.0
        %2550 = vmatprep.subr.mxu0 0.0
        %2551 = vmatpush1.msra.mxu0 0.0
        %2552 = vmatprep.subr.mxu0 0.0
        %2553 = vmatpush1.msra.mxu0 0.0
        %2554 = vmatprep.subr.mxu0 0.0
        %2555 = vmatpush1.msra.mxu0 0.0
        %2556 = vmatprep.subr.mxu0 0.0
        %2557 = vmatpush1.msra.mxu0 0.0
        %2558 = vmatprep.mubr.f32.mxu0 0.0
        %2559 = vmatmul.mubr.f32.gmra.mrb[0].mxu0 %v800
        %v2560 = vpop.f32.mrb[0].mxu0
        %v2561 = vadd.f32 %v2492, %v2560
        %v2562 = vpop.f32.mrb[0].mxu0
        %2563 = vdwg.mxu0
        %s2564 = scalar_lea.vmem %s5, 1408
        %v2565 = vld [vmem:[%s2564] sm:$0xff]
        %v2566 = vld [vmem:[%s2564 + $0x8] sm:$0xff]
        %v2567 = vld [vmem:[%s2564 + $0x10] sm:$0xff]
        %v2568 = vld [vmem:[%s2564 + $0x18] sm:$0xff]
        %v2569 = vld [vmem:[%s2564 + $0x20] sm:$0xff]
        %v2570 = vld [vmem:[%s2564 + $0x28] sm:$0xff]
        %v2571 = vld [vmem:[%s2564 + $0x30] sm:$0xff]
        %v2572 = vld [vmem:[%s2564 + $0x38] sm:$0xff]
        %v2573 = vld [vmem:[%s2564 + $0x40] sm:$0xff]
        %v2574 = vld [vmem:[%s2564 + $0x48] sm:$0xff]
        %v2575 = vld [vmem:[%s2564 + $0x50] sm:$0xff]
        %v2576 = vld [vmem:[%s2564 + $0x58] sm:$0xff]
        %v2577 = vld [vmem:[%s2564 + $0x60] sm:$0xff]
        %v2578 = vld [vmem:[%s2564 + $0x68] sm:$0xff]
        %v2579 = vld [vmem:[%s2564 + $0x70] sm:$0xff]
        %v2580 = vld [vmem:[%s2564 + $0x78] sm:$0xff]
        %s2581 = scalar_lea.vmem %s6, 11
        %v2582 = vld [vmem:[%s2581] sm:$0x1]
        %v2584 = vlaneseq
        %v2585 = vshrl.u32 %v2584, 7
        %v2586 = vsub.s32 0, %v2585
        %v2587 = vrot.slane %v2582, %v2586
        %2589 = vmatprep.subr.mxu0 0.0
        %2590 = vmatpush1.msra.mxu0 %v2565
        %2591 = vmatprep.subr.mxu0 0.0
        %2592 = vmatpush1.msra.mxu0 %v2566
        %2593 = vmatprep.subr.mxu0 0.0
        %2594 = vmatpush1.msra.mxu0 %v2567
        %2595 = vmatprep.subr.mxu0 0.0
        %2596 = vmatpush1.msra.mxu0 %v2568
        %2597 = vmatprep.subr.mxu0 0.0
        %2598 = vmatpush1.msra.mxu0 %v2569
        %2599 = vmatprep.subr.mxu0 0.0
        %2600 = vmatpush1.msra.mxu0 %v2570
        %2601 = vmatprep.subr.mxu0 0.0
        %2602 = vmatpush1.msra.mxu0 %v2571
        %2603 = vmatprep.subr.mxu0 0.0
        %2604 = vmatpush1.msra.mxu0 %v2572
        %2605 = vmatprep.subr.mxu0 0.0
        %2606 = vmatpush1.msra.mxu0 %v2573
        %2607 = vmatprep.subr.mxu0 0.0
        %2608 = vmatpush1.msra.mxu0 %v2574
        %2609 = vmatprep.subr.mxu0 0.0
        %2610 = vmatpush1.msra.mxu0 %v2575
        %2611 = vmatprep.subr.mxu0 0.0
        %2612 = vmatpush1.msra.mxu0 %v2576
        %2613 = vmatprep.subr.mxu0 0.0
        %2614 = vmatpush1.msra.mxu0 %v2577
        %2615 = vmatprep.subr.mxu0 0.0
        %2616 = vmatpush1.msra.mxu0 %v2578
        %2617 = vmatprep.subr.mxu0 0.0
        %2618 = vmatpush1.msra.mxu0 %v2579
        %2619 = vmatprep.subr.mxu0 0.0
        %2620 = vmatpush1.msra.mxu0 %v2580
        %2621 = vmatprep.subr.mxu0 0.0
        %2622 = vmatpush1.msra.mxu0 0.0
        %2623 = vmatprep.subr.mxu0 0.0
        %2624 = vmatpush1.msra.mxu0 0.0
        %2625 = vmatprep.subr.mxu0 0.0
        %2626 = vmatpush1.msra.mxu0 0.0
        %2627 = vmatprep.subr.mxu0 0.0
        %2628 = vmatpush1.msra.mxu0 0.0
        %2629 = vmatprep.subr.mxu0 0.0
        %2630 = vmatpush1.msra.mxu0 0.0
        %2631 = vmatprep.subr.mxu0 0.0
        %2632 = vmatpush1.msra.mxu0 0.0
        %2633 = vmatprep.subr.mxu0 0.0
        %2634 = vmatpush1.msra.mxu0 0.0
        %2635 = vmatprep.subr.mxu0 0.0
        %2636 = vmatpush1.msra.mxu0 0.0
        %2637 = vmatprep.subr.mxu0 0.0
        %2638 = vmatpush1.msra.mxu0 0.0
        %2639 = vmatprep.subr.mxu0 0.0
        %2640 = vmatpush1.msra.mxu0 0.0
        %2641 = vmatprep.subr.mxu0 0.0
        %2642 = vmatpush1.msra.mxu0 0.0
        %2643 = vmatprep.subr.mxu0 0.0
        %2644 = vmatpush1.msra.mxu0 0.0
        %2645 = vmatprep.subr.mxu0 0.0
        %2646 = vmatpush1.msra.mxu0 0.0
        %2647 = vmatprep.subr.mxu0 0.0
        %2648 = vmatpush1.msra.mxu0 0.0
        %2649 = vmatprep.subr.mxu0 0.0
        %2650 = vmatpush1.msra.mxu0 0.0
        %2651 = vmatprep.subr.mxu0 0.0
        %2652 = vmatpush1.msra.mxu0 0.0
        %2653 = vmatprep.mubr.f32.mxu0 0.0
        %2654 = vmatmul.mubr.f32.gmra.mrb[0].mxu0 %v800
        %v2655 = vpop.f32.mrb[0].mxu0
        %v2656 = vadd.f32 %v2587, %v2655
        %v2657 = vpop.f32.mrb[0].mxu0
        %2658 = vdwg.mxu0
        %v2660 = vsel %vm1085, %v2468, 0
        %v2663 = vsel %vm1085, %v2561, 0
        %2665 = vmatprep.subr.mxu0 0.0
        %2666 = vmatpush1.xpose.msra.mxu0 %v2663
        %2667 = vmatprep.subr.mxu0 0.0
        %2668 = vmatpush1.xpose.msra.mxu0 0.0
        %2669 = vmatprep.subr.mxu0 0.0
        %2670 = vmatpush1.xpose.msra.mxu0 0.0
        %2671 = vmatprep.subr.mxu0 0.0
        %2672 = vmatpush1.xpose.msra.mxu0 0.0
        %2673 = vmatprep.subr.mxu0 0.0
        %2674 = vmatpush1.xpose.msra.mxu0 0.0
        %2675 = vmatprep.subr.mxu0 0.0
        %2676 = vmatpush1.xpose.msra.mxu0 0.0
        %2677 = vmatprep.subr.mxu0 0.0
        %2678 = vmatpush1.xpose.msra.mxu0 0.0
        %2679 = vmatprep.subr.mxu0 0.0
        %2680 = vmatpush1.xpose.msra.mxu0 0.0
        %2681 = vmatprep.subr.mxu0 0.0
        %2682 = vmatpush1.xpose.msra.mxu0 0.0
        %2683 = vmatprep.subr.mxu0 0.0
        %2684 = vmatpush1.xpose.msra.mxu0 0.0
        %2685 = vmatprep.subr.mxu0 0.0
        %2686 = vmatpush1.xpose.msra.mxu0 0.0
        %2687 = vmatprep.subr.mxu0 0.0
        %2688 = vmatpush1.xpose.msra.mxu0 0.0
        %2689 = vmatprep.subr.mxu0 0.0
        %2690 = vmatpush1.xpose.msra.mxu0 0.0
        %2691 = vmatprep.subr.mxu0 0.0
        %2692 = vmatpush1.xpose.msra.mxu0 0.0
        %2693 = vmatprep.subr.mxu0 0.0
        %2694 = vmatpush1.xpose.msra.mxu0 0.0
        %2695 = vmatprep.subr.mxu0 0.0
        %2696 = vmatpush1.xpose.msra.mxu0 0.0
        %2697 = vmatprep.subr.mxu0 0.0
        %2698 = vmatpush1.xpose.msra.mxu0 0.0
        %2699 = vmatprep.subr.mxu0 0.0
        %2700 = vmatpush1.xpose.msra.mxu0 0.0
        %2701 = vmatprep.subr.mxu0 0.0
        %2702 = vmatpush1.xpose.msra.mxu0 0.0
        %2703 = vmatprep.subr.mxu0 0.0
        %2704 = vmatpush1.xpose.msra.mxu0 0.0
        %2705 = vmatprep.subr.mxu0 0.0
        %2706 = vmatpush1.xpose.msra.mxu0 0.0
        %2707 = vmatprep.subr.mxu0 0.0
        %2708 = vmatpush1.xpose.msra.mxu0 0.0
        %2709 = vmatprep.subr.mxu0 0.0
        %2710 = vmatpush1.xpose.msra.mxu0 0.0
        %2711 = vmatprep.subr.mxu0 0.0
        %2712 = vmatpush1.xpose.msra.mxu0 0.0
        %2713 = vmatprep.subr.mxu0 0.0
        %2714 = vmatpush1.xpose.msra.mxu0 0.0
        %2715 = vmatprep.subr.mxu0 0.0
        %2716 = vmatpush1.xpose.msra.mxu0 0.0
        %2717 = vmatprep.subr.mxu0 0.0
        %2718 = vmatpush1.xpose.msra.mxu0 0.0
        %2719 = vmatprep.subr.mxu0 0.0
        %2720 = vmatpush1.xpose.msra.mxu0 0.0
        %2721 = vmatprep.subr.mxu0 0.0
        %2722 = vmatpush1.xpose.msra.mxu0 0.0
        %2723 = vmatprep.subr.mxu0 0.0
        %2724 = vmatpush1.xpose.msra.mxu0 0.0
        %2725 = vmatprep.subr.mxu0 0.0
        %2726 = vmatpush1.xpose.msra.mxu0 0.0
        %2727 = vmatprep.subr.mxu0 0.0
        %2728 = vmatpush1.xpose.msra.mxu0 0.0
        %2729 = vmatprep.mubr.f32.mxu0 0.0
        %2730 = vmatmul.mubr.f32.gmra.mrb[0].mxu0 %v2660
        %v2731 = vpop.f32.mrb[0].mxu0
        %v2732 = vadd.f32 %v772, %v2731
        %v2733 = vpop.f32.mrb[0].mxu0
        %2734 = vdwg.mxu0
        %v2735 = vsel %vm1162, %v2732, -inf
        %2736 = vmax.xlane.f32.xlu0 %v2735
        %v2737 = vpop.xlane.xlu0 %2736
        %v2738 = vsub.f32 %v2732, %v2737
        %v2739 = vmul.f32 %v2738, 1.442695
        %v2740 = vpow.pop %v2739
        %v2741 = vsel %vm1162, %v2740, 0.0
        %2742 = vadd.xlane.f32.xlu0 %v2741
        %v2743 = vpop.xlane.xlu0 %2742
        %v2744 = vrcp.pop %v2743
        %v2745 = vmul.f32 %v2740, %v2744
        %v2747 = vsel %vm1162, %v2745, 0
        %2749 = vmatprep.subr.mxu0 0.0
        %2750 = vmatpush1.msra.mxu0 %v2656
        %2751 = vmatprep.subr.mxu0 0.0
        %2752 = vmatpush1.msra.mxu0 0.0
        %2753 = vmatprep.subr.mxu0 0.0
        %2754 = vmatpush1.msra.mxu0 0.0
        %2755 = vmatprep.subr.mxu0 0.0
        %2756 = vmatpush1.msra.mxu0 0.0
        %2757 = vmatprep.subr.mxu0 0.0
        %2758 = vmatpush1.msra.mxu0 0.0
        %2759 = vmatprep.subr.mxu0 0.0
        %2760 = vmatpush1.msra.mxu0 0.0
        %2761 = vmatprep.subr.mxu0 0.0
        %2762 = vmatpush1.msra.mxu0 0.0
        %2763 = vmatprep.subr.mxu0 0.0
        %2764 = vmatpush1.msra.mxu0 0.0
        %2765 = vmatprep.subr.mxu0 0.0
        %2766 = vmatpush1.msra.mxu0 0.0
        %2767 = vmatprep.subr.mxu0 0.0
        %2768 = vmatpush1.msra.mxu0 0.0
        %2769 = vmatprep.subr.mxu0 0.0
        %2770 = vmatpush1.msra.mxu0 0.0
        %2771 = vmatprep.subr.mxu0 0.0
        %2772 = vmatpush1.msra.mxu0 0.0
        %2773 = vmatprep.subr.mxu0 0.0
        %2774 = vmatpush1.msra.mxu0 0.0
        %2775 = vmatprep.subr.mxu0 0.0
        %2776 = vmatpush1.msra.mxu0 0.0
        %2777 = vmatprep.subr.mxu0 0.0
        %2778 = vmatpush1.msra.mxu0 0.0
        %2779 = vmatprep.subr.mxu0 0.0
        %2780 = vmatpush1.msra.mxu0 0.0
        %2781 = vmatprep.subr.mxu0 0.0
        %2782 = vmatpush1.msra.mxu0 0.0
        %2783 = vmatprep.subr.mxu0 0.0
        %2784 = vmatpush1.msra.mxu0 0.0
        %2785 = vmatprep.subr.mxu0 0.0
        %2786 = vmatpush1.msra.mxu0 0.0
        %2787 = vmatprep.subr.mxu0 0.0
        %2788 = vmatpush1.msra.mxu0 0.0
        %2789 = vmatprep.subr.mxu0 0.0
        %2790 = vmatpush1.msra.mxu0 0.0
        %2791 = vmatprep.subr.mxu0 0.0
        %2792 = vmatpush1.msra.mxu0 0.0
        %2793 = vmatprep.subr.mxu0 0.0
        %2794 = vmatpush1.msra.mxu0 0.0
        %2795 = vmatprep.subr.mxu0 0.0
        %2796 = vmatpush1.msra.mxu0 0.0
        %2797 = vmatprep.subr.mxu0 0.0
        %2798 = vmatpush1.msra.mxu0 0.0
        %2799 = vmatprep.subr.mxu0 0.0
        %2800 = vmatpush1.msra.mxu0 0.0
        %2801 = vmatprep.subr.mxu0 0.0
        %2802 = vmatpush1.msra.mxu0 0.0
        %2803 = vmatprep.subr.mxu0 0.0
        %2804 = vmatpush1.msra.mxu0 0.0
        %2805 = vmatprep.subr.mxu0 0.0
        %2806 = vmatpush1.msra.mxu0 0.0
        %2807 = vmatprep.subr.mxu0 0.0
        %2808 = vmatpush1.msra.mxu0 0.0
        %2809 = vmatprep.subr.mxu0 0.0
        %2810 = vmatpush1.msra.mxu0 0.0
        %2811 = vmatprep.subr.mxu0 0.0
        %2812 = vmatpush1.msra.mxu0 0.0
        %2813 = vmatprep.mubr.f32.mxu0 0.0
        %2814 = vmatmul.mubr.f32.gmra.mrb[0].mxu0 %v2747
        %v2815 = vpop.f32.mrb[0].mxu0
        %v2816 = vadd.f32 0.0, %v2815
        %v2817 = vpop.f32.mrb[0].mxu0
        %2818 = vdwg.mxu0
        %s2819 = scalar_lea.vmem %s7, 96
        %v2820 = vld [vmem:[%s2819] sm:$0xff]
        %v2821 = vld [vmem:[%s2819 + $0x8] sm:$0xff]
        %v2822 = vld [vmem:[%s2819 + $0x10] sm:$0xff]
        %v2823 = vld [vmem:[%s2819 + $0x18] sm:$0xff]
        %v2825 = vsel %vm1085, %v2816, 0
        %2827 = vmatprep.subr.mxu0 0.0
        %2828 = vmatpush1.msra.mxu0 %v2820
        %2829 = vmatprep.subr.mxu0 0.0
        %2830 = vmatpush1.msra.mxu0 %v2821
        %2831 = vmatprep.subr.mxu0 0.0
        %2832 = vmatpush1.msra.mxu0 %v2822
        %2833 = vmatprep.subr.mxu0 0.0
        %2834 = vmatpush1.msra.mxu0 %v2823
        %2835 = vmatprep.subr.mxu0 0.0
        %2836 = vmatpush1.msra.mxu0 0.0
        %2837 = vmatprep.subr.mxu0 0.0
        %2838 = vmatpush1.msra.mxu0 0.0
        %2839 = vmatprep.subr.mxu0 0.0
        %2840 = vmatpush1.msra.mxu0 0.0
        %2841 = vmatprep.subr.mxu0 0.0
        %2842 = vmatpush1.msra.mxu0 0.0
        %2843 = vmatprep.subr.mxu0 0.0
        %2844 = vmatpush1.msra.mxu0 0.0
        %2845 = vmatprep.subr.mxu0 0.0
        %2846 = vmatpush1.msra.mxu0 0.0
        %2847 = vmatprep.subr.mxu0 0.0
        %2848 = vmatpush1.msra.mxu0 0.0
        %2849 = vmatprep.subr.mxu0 0.0
        %2850 = vmatpush1.msra.mxu0 0.0
        %2851 = vmatprep.subr.mxu0 0.0
        %2852 = vmatpush1.msra.mxu0 0.0
        %2853 = vmatprep.subr.mxu0 0.0
        %2854 = vmatpush1.msra.mxu0 0.0
        %2855 = vmatprep.subr.mxu0 0.0
        %2856 = vmatpush1.msra.mxu0 0.0
        %2857 = vmatprep.subr.mxu0 0.0
        %2858 = vmatpush1.msra.mxu0 0.0
        %2859 = vmatprep.subr.mxu0 0.0
        %2860 = vmatpush1.msra.mxu0 0.0
        %2861 = vmatprep.subr.mxu0 0.0
        %2862 = vmatpush1.msra.mxu0 0.0
        %2863 = vmatprep.subr.mxu0 0.0
        %2864 = vmatpush1.msra.mxu0 0.0
        %2865 = vmatprep.subr.mxu0 0.0
        %2866 = vmatpush1.msra.mxu0 0.0
        %2867 = vmatprep.subr.mxu0 0.0
        %2868 = vmatpush1.msra.mxu0 0.0
        %2869 = vmatprep.subr.mxu0 0.0
        %2870 = vmatpush1.msra.mxu0 0.0
        %2871 = vmatprep.subr.mxu0 0.0
        %2872 = vmatpush1.msra.mxu0 0.0
        %2873 = vmatprep.subr.mxu0 0.0
        %2874 = vmatpush1.msra.mxu0 0.0
        %2875 = vmatprep.subr.mxu0 0.0
        %2876 = vmatpush1.msra.mxu0 0.0
        %2877 = vmatprep.subr.mxu0 0.0
        %2878 = vmatpush1.msra.mxu0 0.0
        %2879 = vmatprep.subr.mxu0 0.0
        %2880 = vmatpush1.msra.mxu0 0.0
        %2881 = vmatprep.subr.mxu0 0.0
        %2882 = vmatpush1.msra.mxu0 0.0
        %2883 = vmatprep.subr.mxu0 0.0
        %2884 = vmatpush1.msra.mxu0 0.0
        %2885 = vmatprep.subr.mxu0 0.0
        %2886 = vmatpush1.msra.mxu0 0.0
        %2887 = vmatprep.subr.mxu0 0.0
        %2888 = vmatpush1.msra.mxu0 0.0
        %2889 = vmatprep.subr.mxu0 0.0
        %2890 = vmatpush1.msra.mxu0 0.0
        %2891 = vmatprep.mubr.f32.mxu0 0.0
        %2892 = vmatmul.mubr.f32.gmra.mrb[0].mxu0 %v2825
        %v2893 = vpop.f32.mrb[0].mxu0
        %v2894 = vadd.f32 0.0, %v2893
        %v2895 = vpop.f32.mrb[0].mxu0
        %2896 = vdwg.mxu0
        %v2897 = vadd.f32 %v2372, %v2894
        %v2898 = vld [vmem:[%s8] sm:$0x1]
        %v2900 = vlaneseq
        %v2901 = vshrl.u32 %v2900, 7
        %v2902 = vsub.s32 0, %v2901
        %v2903 = vrot.slane %v2898, %v2902
        %v2905 = vadd.f32 %v2897, %v2903
        %v2906 = vadd.f32 %v764, %v2905
        %v2907 = vld [vmem:[%s9] sm:$0x1]
        %v2908 = vld [vmem:[%s10] sm:$0x1]
        %2909 = vadd.xlane.f32.xlu0 %v2906
        %v2910 = vpop.xlane.xlu0 %2909
        %v2911 = vmul.f32 %v2910, %v777
        %v2912 = vsub.f32 %v2906, %v2911
        %v2913 = vmul.f32 %v2912, %v2912
        %2914 = vadd.xlane.f32.xlu0 %v2913
        %v2915 = vpop.xlane.xlu0 %2914
        %v2916 = vmul.f32 %v2915, %v777
        %v2917 = vadd.f32 %v2916, 1e-05
        %v2918 = vrsqrt.pop %v2917
        %v2919 = vmul.f32 %v2912, %v2918
        %v2921 = vlaneseq
        %v2922 = vshrl.u32 %v2921, 7
        %v2923 = vsub.s32 0, %v2922
        %v2924 = vrot.slane %v2907, %v2923
        %v2926 = vmul.f32 %v2919, %v2924
        %v2928 = vlaneseq
        %v2929 = vshrl.u32 %v2928, 7
        %v2930 = vsub.s32 0, %v2929
        %v2931 = vrot.slane %v2908, %v2930
        %v2933 = vadd.f32 %v2926, %v2931
        %v2934 = vld [vmem:[%s11] sm:$0xff]
        %v2935 = vld [vmem:[%s11 + $0x8] sm:$0xff]
        %v2936 = vld [vmem:[%s11 + $0x10] sm:$0xff]
        %v2937 = vld [vmem:[%s11 + $0x18] sm:$0xff]
        %v2938 = vld [vmem:[%s11 + $0x20] sm:$0xff]
        %v2939 = vld [vmem:[%s11 + $0x28] sm:$0xff]
        %v2940 = vld [vmem:[%s11 + $0x30] sm:$0xff]
        %v2941 = vld [vmem:[%s11 + $0x38] sm:$0xff]
        %v2942 = vld [vmem:[%s11 + $0x40] sm:$0xff]
        %v2943 = vld [vmem:[%s11 + $0x48] sm:$0xff]
        %v2944 = vld [vmem:[%s11 + $0x50] sm:$0xff]
        %v2945 = vld [vmem:[%s11 + $0x58] sm:$0xff]
        %v2946 = vld [vmem:[%s11 + $0x60] sm:$0xff]
        %v2947 = vld [vmem:[%s11 + $0x68] sm:$0xff]
        %v2948 = vld [vmem:[%s11 + $0x70] sm:$0xff]
        %v2949 = vld [vmem:[%s11 + $0x78] sm:$0xff]
        %v2950 = vld [vmem:[%s12] sm:$0x1]
        %v2952 = vlaneseq
        %v2953 = vshrl.u32 %v2952, 7
        %v2954 = vsub.s32 0, %v2953
        %v2955 = vrot.slane %v2950, %v2954
        %2957 = vmatprep.subr.mxu0 0.0
        %2958 = vmatpush1.msra.mxu0 %v2934
        %2959 = vmatprep.subr.mxu0 0.0
        %2960 = vmatpush1.msra.mxu0 %v2935
        %2961 = vmatprep.subr.mxu0 0.0
        %2962 = vmatpush1.msra.mxu0 %v2936
        %2963 = vmatprep.subr.mxu0 0.0
        %2964 = vmatpush1.msra.mxu0 %v2937
        %2965 = vmatprep.subr.mxu0 0.0
        %2966 = vmatpush1.msra.mxu0 %v2938
        %2967 = vmatprep.subr.mxu0 0.0
        %2968 = vmatpush1.msra.mxu0 %v2939
        %2969 = vmatprep.subr.mxu0 0.0
        %2970 = vmatpush1.msra.mxu0 %v2940
        %2971 = vmatprep.subr.mxu0 0.0
        %2972 = vmatpush1.msra.mxu0 %v2941
        %2973 = vmatprep.subr.mxu0 0.0
        %2974 = vmatpush1.msra.mxu0 %v2942
        %2975 = vmatprep.subr.mxu0 0.0
        %2976 = vmatpush1.msra.mxu0 %v2943
        %2977 = vmatprep.subr.mxu0 0.0
        %2978 = vmatpush1.msra.mxu0 %v2944
        %2979 = vmatprep.subr.mxu0 0.0
        %2980 = vmatpush1.msra.mxu0 %v2945
        %2981 = vmatprep.subr.mxu0 0.0
        %2982 = vmatpush1.msra.mxu0 %v2946
        %2983 = vmatprep.subr.mxu0 0.0
        %2984 = vmatpush1.msra.mxu0 %v2947
        %2985 = vmatprep.subr.mxu0 0.0
        %2986 = vmatpush1.msra.mxu0 %v2948
        %2987 = vmatprep.subr.mxu0 0.0
        %2988 = vmatpush1.msra.mxu0 %v2949
        %2989 = vmatprep.subr.mxu0 0.0
        %2990 = vmatpush1.msra.mxu0 0.0
        %2991 = vmatprep.subr.mxu0 0.0
        %2992 = vmatpush1.msra.mxu0 0.0
        %2993 = vmatprep.subr.mxu0 0.0
        %2994 = vmatpush1.msra.mxu0 0.0
        %2995 = vmatprep.subr.mxu0 0.0
        %2996 = vmatpush1.msra.mxu0 0.0
        %2997 = vmatprep.subr.mxu0 0.0
        %2998 = vmatpush1.msra.mxu0 0.0
        %2999 = vmatprep.subr.mxu0 0.0
        %3000 = vmatpush1.msra.mxu0 0.0
        %3001 = vmatprep.subr.mxu0 0.0
        %3002 = vmatpush1.msra.mxu0 0.0
        %3003 = vmatprep.subr.mxu0 0.0
        %3004 = vmatpush1.msra.mxu0 0.0
        %3005 = vmatprep.subr.mxu0 0.0
        %3006 = vmatpush1.msra.mxu0 0.0
        %3007 = vmatprep.subr.mxu0 0.0
        %3008 = vmatpush1.msra.mxu0 0.0
        %3009 = vmatprep.subr.mxu0 0.0
        %3010 = vmatpush1.msra.mxu0 0.0
        %3011 = vmatprep.subr.mxu0 0.0
        %3012 = vmatpush1.msra.mxu0 0.0
        %3013 = vmatprep.subr.mxu0 0.0
        %3014 = vmatpush1.msra.mxu0 0.0
        %3015 = vmatprep.subr.mxu0 0.0
        %3016 = vmatpush1.msra.mxu0 0.0
        %3017 = vmatprep.subr.mxu0 0.0
        %3018 = vmatpush1.msra.mxu0 0.0
        %3019 = vmatprep.subr.mxu0 0.0
        %3020 = vmatpush1.msra.mxu0 0.0
        %3021 = vmatprep.mubr.f32.mxu0 0.0
        %3022 = vmatmul.mubr.f32.gmra.mrb[0].mxu0 %v2933
        %v3023 = vpop.f32.mrb[0].mxu0
        %v3024 = vadd.f32 %v2955, %v3023
        %v3025 = vpop.f32.mrb[0].mxu0
        %3026 = vdwg.mxu0
        %v3027 = vmul.f32 %v3024, 0.17677669
        %s3028 = scalar_lea.vmem %s11, 512
        %v3029 = vld [vmem:[%s3028] sm:$0xff]
        %v3030 = vld [vmem:[%s3028 + $0x8] sm:$0xff]
        %v3031 = vld [vmem:[%s3028 + $0x10] sm:$0xff]
        %v3032 = vld [vmem:[%s3028 + $0x18] sm:$0xff]
        %v3033 = vld [vmem:[%s3028 + $0x20] sm:$0xff]
        %v3034 = vld [vmem:[%s3028 + $0x28] sm:$0xff]
        %v3035 = vld [vmem:[%s3028 + $0x30] sm:$0xff]
        %v3036 = vld [vmem:[%s3028 + $0x38] sm:$0xff]
        %v3037 = vld [vmem:[%s3028 + $0x40] sm:$0xff]
        %v3038 = vld [vmem:[%s3028 + $0x48] sm:$0xff]
        %v3039 = vld [vmem:[%s3028 + $0x50] sm:$0xff]
        %v3040 = vld [vmem:[%s3028 + $0x58] sm:$0xff]
        %v3041 = vld [vmem:[%s3028 + $0x60] sm:$0xff]
        %v3042 = vld [vmem:[%s3028 + $0x68] sm:$0xff]
        %v3043 = vld [vmem:[%s3028 + $0x70] sm:$0xff]
        %v3044 = vld [vmem:[%s3028 + $0x78] sm:$0xff]
        %s3045 = scalar_lea.vmem %s12, 4
        %v3046 = vld [vmem:[%s3045] sm:$0x1]
        %v3048 = vlaneseq
        %v3049 = vshrl.u32 %v3048, 7
        %v3050 = vsub.s32 0, %v3049
        %v3051 = vrot.slane %v3046, %v3050
        %3053 = vmatprep.subr.mxu0 0.0
        %3054 = vmatpush1.msra.mxu0 %v3029
        %3055 = vmatprep.subr.mxu0 0.0
        %3056 = vmatpush1.msra.mxu0 %v3030
        %3057 = vmatprep.subr.mxu0 0.0
        %3058 = vmatpush1.msra.mxu0 %v3031
        %3059 = vmatprep.subr.mxu0 0.0
        %3060 = vmatpush1.msra.mxu0 %v3032
        %3061 = vmatprep.subr.mxu0 0.0
        %3062 = vmatpush1.msra.mxu0 %v3033
        %3063 = vmatprep.subr.mxu0 0.0
        %3064 = vmatpush1.msra.mxu0 %v3034
        %3065 = vmatprep.subr.mxu0 0.0
        %3066 = vmatpush1.msra.mxu0 %v3035
        %3067 = vmatprep.subr.mxu0 0.0
        %3068 = vmatpush1.msra.mxu0 %v3036
        %3069 = vmatprep.subr.mxu0 0.0
        %3070 = vmatpush1.msra.mxu0 %v3037
        %3071 = vmatprep.subr.mxu0 0.0
        %3072 = vmatpush1.msra.mxu0 %v3038
        %3073 = vmatprep.subr.mxu0 0.0
        %3074 = vmatpush1.msra.mxu0 %v3039
        %3075 = vmatprep.subr.mxu0 0.0
        %3076 = vmatpush1.msra.mxu0 %v3040
        %3077 = vmatprep.subr.mxu0 0.0
        %3078 = vmatpush1.msra.mxu0 %v3041
        %3079 = vmatprep.subr.mxu0 0.0
        %3080 = vmatpush1.msra.mxu0 %v3042
        %3081 = vmatprep.subr.mxu0 0.0
        %3082 = vmatpush1.msra.mxu0 %v3043
        %3083 = vmatprep.subr.mxu0 0.0
        %3084 = vmatpush1.msra.mxu0 %v3044
        %3085 = vmatprep.subr.mxu0 0.0
        %3086 = vmatpush1.msra.mxu0 0.0
        %3087 = vmatprep.subr.mxu0 0.0
        %3088 = vmatpush1.msra.mxu0 0.0
        %3089 = vmatprep.subr.mxu0 0.0
        %3090 = vmatpush1.msra.mxu0 0.0
        %3091 = vmatprep.subr.mxu0 0.0
        %3092 = vmatpush1.msra.mxu0 0.0
        %3093 = vmatprep.subr.mxu0 0.0
        %3094 = vmatpush1.msra.mxu0 0.0
        %3095 = vmatprep.subr.mxu0 0.0
        %3096 = vmatpush1.msra.mxu0 0.0
        %3097 = vmatprep.subr.mxu0 0.0
        %3098 = vmatpush1.msra.mxu0 0.0
        %3099 = vmatprep.subr.mxu0 0.0
        %3100 = vmatpush1.msra.mxu0 0.0
        %3101 = vmatprep.subr.mxu0 0.0
        %3102 = vmatpush1.msra.mxu0 0.0
        %3103 = vmatprep.subr.mxu0 0.0
        %3104 = vmatpush1.msra.mxu0 0.0
        %3105 = vmatprep.subr.mxu0 0.0
        %3106 = vmatpush1.msra.mxu0 0.0
        %3107 = vmatprep.subr.mxu0 0.0
        %3108 = vmatpush1.msra.mxu0 0.0
        %3109 = vmatprep.subr.mxu0 0.0
        %3110 = vmatpush1.msra.mxu0 0.0
        %3111 = vmatprep.subr.mxu0 0.0
        %3112 = vmatpush1.msra.mxu0 0.0
        %3113 = vmatprep.subr.mxu0 0.0
        %3114 = vmatpush1.msra.mxu0 0.0
        %3115 = vmatprep.subr.mxu0 0.0
        %3116 = vmatpush1.msra.mxu0 0.0
        %3117 = vmatprep.mubr.f32.mxu0 0.0
        %3118 = vmatmul.mubr.f32.gmra.mrb[0].mxu0 %v765
        %v3119 = vpop.f32.mrb[0].mxu0
        %v3120 = vadd.f32 %v3051, %v3119
        %v3121 = vpop.f32.mrb[0].mxu0
        %3122 = vdwg.mxu0
        %s3123 = scalar_lea.vmem %s11, 1024
        %v3124 = vld [vmem:[%s3123] sm:$0xff]
        %v3125 = vld [vmem:[%s3123 + $0x8] sm:$0xff]
        %v3126 = vld [vmem:[%s3123 + $0x10] sm:$0xff]
        %v3127 = vld [vmem:[%s3123 + $0x18] sm:$0xff]
        %v3128 = vld [vmem:[%s3123 + $0x20] sm:$0xff]
        %v3129 = vld [vmem:[%s3123 + $0x28] sm:$0xff]
        %v3130 = vld [vmem:[%s3123 + $0x30] sm:$0xff]
        %v3131 = vld [vmem:[%s3123 + $0x38] sm:$0xff]
        %v3132 = vld [vmem:[%s3123 + $0x40] sm:$0xff]
        %v3133 = vld [vmem:[%s3123 + $0x48] sm:$0xff]
        %v3134 = vld [vmem:[%s3123 + $0x50] sm:$0xff]
        %v3135 = vld [vmem:[%s3123 + $0x58] sm:$0xff]
        %v3136 = vld [vmem:[%s3123 + $0x60] sm:$0xff]
        %v3137 = vld [vmem:[%s3123 + $0x68] sm:$0xff]
        %v3138 = vld [vmem:[%s3123 + $0x70] sm:$0xff]
        %v3139 = vld [vmem:[%s3123 + $0x78] sm:$0xff]
        %s3140 = scalar_lea.vmem %s12, 8
        %v3141 = vld [vmem:[%s3140] sm:$0x1]
        %v3143 = vlaneseq
        %v3144 = vshrl.u32 %v3143, 7
        %v3145 = vsub.s32 0, %v3144
        %v3146 = vrot.slane %v3141, %v3145
        %3148 = vmatprep.subr.mxu0 0.0
        %3149 = vmatpush1.msra.mxu0 %v3124
        %3150 = vmatprep.subr.mxu0 0.0
        %3151 = vmatpush1.msra.mxu0 %v3125
        %3152 = vmatprep.subr.mxu0 0.0
        %3153 = vmatpush1.msra.mxu0 %v3126
        %3154 = vmatprep.subr.mxu0 0.0
        %3155 = vmatpush1.msra.mxu0 %v3127
        %3156 = vmatprep.subr.mxu0 0.0
        %3157 = vmatpush1.msra.mxu0 %v3128
        %3158 = vmatprep.subr.mxu0 0.0
        %3159 = vmatpush1.msra.mxu0 %v3129
        %3160 = vmatprep.subr.mxu0 0.0
        %3161 = vmatpush1.msra.mxu0 %v3130
        %3162 = vmatprep.subr.mxu0 0.0
        %3163 = vmatpush1.msra.mxu0 %v3131
        %3164 = vmatprep.subr.mxu0 0.0
        %3165 = vmatpush1.msra.mxu0 %v3132
        %3166 = vmatprep.subr.mxu0 0.0
        %3167 = vmatpush1.msra.mxu0 %v3133
        %3168 = vmatprep.subr.mxu0 0.0
        %3169 = vmatpush1.msra.mxu0 %v3134
        %3170 = vmatprep.subr.mxu0 0.0
        %3171 = vmatpush1.msra.mxu0 %v3135
        %3172 = vmatprep.subr.mxu0 0.0
        %3173 = vmatpush1.msra.mxu0 %v3136
        %3174 = vmatprep.subr.mxu0 0.0
        %3175 = vmatpush1.msra.mxu0 %v3137
        %3176 = vmatprep.subr.mxu0 0.0
        %3177 = vmatpush1.msra.mxu0 %v3138
        %3178 = vmatprep.subr.mxu0 0.0
        %3179 = vmatpush1.msra.mxu0 %v3139
        %3180 = vmatprep.subr.mxu0 0.0
        %3181 = vmatpush1.msra.mxu0 0.0
        %3182 = vmatprep.subr.mxu0 0.0
        %3183 = vmatpush1.msra.mxu0 0.0
        %3184 = vmatprep.subr.mxu0 0.0
        %3185 = vmatpush1.msra.mxu0 0.0
        %3186 = vmatprep.subr.mxu0 0.0
        %3187 = vmatpush1.msra.mxu0 0.0
        %3188 = vmatprep.subr.mxu0 0.0
        %3189 = vmatpush1.msra.mxu0 0.0
        %3190 = vmatprep.subr.mxu0 0.0
        %3191 = vmatpush1.msra.mxu0 0.0
        %3192 = vmatprep.subr.mxu0 0.0
        %3193 = vmatpush1.msra.mxu0 0.0
        %3194 = vmatprep.subr.mxu0 0.0
        %3195 = vmatpush1.msra.mxu0 0.0
        %3196 = vmatprep.subr.mxu0 0.0
        %3197 = vmatpush1.msra.mxu0 0.0
        %3198 = vmatprep.subr.mxu0 0.0
        %3199 = vmatpush1.msra.mxu0 0.0
        %3200 = vmatprep.subr.mxu0 0.0
        %3201 = vmatpush1.msra.mxu0 0.0
        %3202 = vmatprep.subr.mxu0 0.0
        %3203 = vmatpush1.msra.mxu0 0.0
        %3204 = vmatprep.subr.mxu0 0.0
        %3205 = vmatpush1.msra.mxu0 0.0
        %3206 = vmatprep.subr.mxu0 0.0
        %3207 = vmatpush1.msra.mxu0 0.0
        %3208 = vmatprep.subr.mxu0 0.0
        %3209 = vmatpush1.msra.mxu0 0.0
        %3210 = vmatprep.subr.mxu0 0.0
        %3211 = vmatpush1.msra.mxu0 0.0
        %3212 = vmatprep.mubr.f32.mxu0 0.0
        %3213 = vmatmul.mubr.f32.gmra.mrb[0].mxu0 %v765
        %v3214 = vpop.f32.mrb[0].mxu0
        %v3215 = vadd.f32 %v3146, %v3214
        %v3216 = vpop.f32.mrb[0].mxu0
        %3217 = vdwg.mxu0
        %v3219 = vlaneseq
        %v3220 = vshrl.u32 %v3219, 7
        %v3221 = vsub.s32 0, %v3220
        %v3222 = vrot.slane %v766, %v3221
        %v3225 = vsel %vm1085, %v3027, 0
        %v3228 = vsel %vm1085, %v3120, 0
        %3230 = vmatprep.subr.mxu0 0.0
        %3231 = vmatpush1.xpose.msra.mxu0 %v3228
        %3232 = vmatprep.subr.mxu0 0.0
        %3233 = vmatpush1.xpose.msra.mxu0 0.0
        %3234 = vmatprep.subr.mxu0 0.0
        %3235 = vmatpush1.xpose.msra.mxu0 0.0
        %3236 = vmatprep.subr.mxu0 0.0
        %3237 = vmatpush1.xpose.msra.mxu0 0.0
        %3238 = vmatprep.subr.mxu0 0.0
        %3239 = vmatpush1.xpose.msra.mxu0 0.0
        %3240 = vmatprep.subr.mxu0 0.0
        %3241 = vmatpush1.xpose.msra.mxu0 0.0
        %3242 = vmatprep.subr.mxu0 0.0
        %3243 = vmatpush1.xpose.msra.mxu0 0.0
        %3244 = vmatprep.subr.mxu0 0.0
        %3245 = vmatpush1.xpose.msra.mxu0 0.0
        %3246 = vmatprep.subr.mxu0 0.0
        %3247 = vmatpush1.xpose.msra.mxu0 0.0
        %3248 = vmatprep.subr.mxu0 0.0
        %3249 = vmatpush1.xpose.msra.mxu0 0.0
        %3250 = vmatprep.subr.mxu0 0.0
        %3251 = vmatpush1.xpose.msra.mxu0 0.0
        %3252 = vmatprep.subr.mxu0 0.0
        %3253 = vmatpush1.xpose.msra.mxu0 0.0
        %3254 = vmatprep.subr.mxu0 0.0
        %3255 = vmatpush1.xpose.msra.mxu0 0.0
        %3256 = vmatprep.subr.mxu0 0.0
        %3257 = vmatpush1.xpose.msra.mxu0 0.0
        %3258 = vmatprep.subr.mxu0 0.0
        %3259 = vmatpush1.xpose.msra.mxu0 0.0
        %3260 = vmatprep.subr.mxu0 0.0
        %3261 = vmatpush1.xpose.msra.mxu0 0.0
        %3262 = vmatprep.subr.mxu0 0.0
        %3263 = vmatpush1.xpose.msra.mxu0 0.0
        %3264 = vmatprep.subr.mxu0 0.0
        %3265 = vmatpush1.xpose.msra.mxu0 0.0
        %3266 = vmatprep.subr.mxu0 0.0
        %3267 = vmatpush1.xpose.msra.mxu0 0.0
        %3268 = vmatprep.subr.mxu0 0.0
        %3269 = vmatpush1.xpose.msra.mxu0 0.0
        %3270 = vmatprep.subr.mxu0 0.0
        %3271 = vmatpush1.xpose.msra.mxu0 0.0
        %3272 = vmatprep.subr.mxu0 0.0
        %3273 = vmatpush1.xpose.msra.mxu0 0.0
        %3274 = vmatprep.subr.mxu0 0.0
        %3275 = vmatpush1.xpose.msra.mxu0 0.0
        %3276 = vmatprep.subr.mxu0 0.0
        %3277 = vmatpush1.xpose.msra.mxu0 0.0
        %3278 = vmatprep.subr.mxu0 0.0
        %3279 = vmatpush1.xpose.msra.mxu0 0.0
        %3280 = vmatprep.subr.mxu0 0.0
        %3281 = vmatpush1.xpose.msra.mxu0 0.0
        %3282 = vmatprep.subr.mxu0 0.0
        %3283 = vmatpush1.xpose.msra.mxu0 0.0
        %3284 = vmatprep.subr.mxu0 0.0
        %3285 = vmatpush1.xpose.msra.mxu0 0.0
        %3286 = vmatprep.subr.mxu0 0.0
        %3287 = vmatpush1.xpose.msra.mxu0 0.0
        %3288 = vmatprep.subr.mxu0 0.0
        %3289 = vmatpush1.xpose.msra.mxu0 0.0
        %3290 = vmatprep.subr.mxu0 0.0
        %3291 = vmatpush1.xpose.msra.mxu0 0.0
        %3292 = vmatprep.subr.mxu0 0.0
        %3293 = vmatpush1.xpose.msra.mxu0 0.0
        %3294 = vmatprep.mubr.f32.mxu0 0.0
        %3295 = vmatmul.mubr.f32.gmra.mrb[0].mxu0 %v3225
        %v3296 = vpop.f32.mrb[0].mxu0
        %v3297 = vadd.f32 %v3222, %v3296
        %v3298 = vpop.f32.mrb[0].mxu0
        %3299 = vdwg.mxu0
        %v3300 = vsel %vm1162, %v3297, -inf
        %3301 = vmax.xlane.f32.xlu0 %v3300
        %v3302 = vpop.xlane.xlu0 %3301
        %v3303 = vsub.f32 %v3297, %v3302
        %v3304 = vmul.f32 %v3303, 1.442695
        %v3305 = vpow.pop %v3304
        %v3306 = vsel %vm1162, %v3305, 0.0
        %3307 = vadd.xlane.f32.xlu0 %v3306
        %v3308 = vpop.xlane.xlu0 %3307
        %v3309 = vrcp.pop %v3308
        %v3310 = vmul.f32 %v3305, %v3309
        %v3312 = vsel %vm1162, %v3310, 0
        %3314 = vmatprep.subr.mxu0 0.0
        %3315 = vmatpush1.msra.mxu0 %v3215
        %3316 = vmatprep.subr.mxu0 0.0
        %3317 = vmatpush1.msra.mxu0 0.0
        %3318 = vmatprep.subr.mxu0 0.0
        %3319 = vmatpush1.msra.mxu0 0.0
        %3320 = vmatprep.subr.mxu0 0.0
        %3321 = vmatpush1.msra.mxu0 0.0
        %3322 = vmatprep.subr.mxu0 0.0
        %3323 = vmatpush1.msra.mxu0 0.0
        %3324 = vmatprep.subr.mxu0 0.0
        %3325 = vmatpush1.msra.mxu0 0.0
        %3326 = vmatprep.subr.mxu0 0.0
        %3327 = vmatpush1.msra.mxu0 0.0
        %3328 = vmatprep.subr.mxu0 0.0
        %3329 = vmatpush1.msra.mxu0 0.0
        %3330 = vmatprep.subr.mxu0 0.0
        %3331 = vmatpush1.msra.mxu0 0.0
        %3332 = vmatprep.subr.mxu0 0.0
        %3333 = vmatpush1.msra.mxu0 0.0
        %3334 = vmatprep.subr.mxu0 0.0
        %3335 = vmatpush1.msra.mxu0 0.0
        %3336 = vmatprep.subr.mxu0 0.0
        %3337 = vmatpush1.msra.mxu0 0.0
        %3338 = vmatprep.subr.mxu0 0.0
        %3339 = vmatpush1.msra.mxu0 0.0
        %3340 = vmatprep.subr.mxu0 0.0
        %3341 = vmatpush1.msra.mxu0 0.0
        %3342 = vmatprep.subr.mxu0 0.0
        %3343 = vmatpush1.msra.mxu0 0.0
        %3344 = vmatprep.subr.mxu0 0.0
        %3345 = vmatpush1.msra.mxu0 0.0
        %3346 = vmatprep.subr.mxu0 0.0
        %3347 = vmatpush1.msra.mxu0 0.0
        %3348 = vmatprep.subr.mxu0 0.0
        %3349 = vmatpush1.msra.mxu0 0.0
        %3350 = vmatprep.subr.mxu0 0.0
        %3351 = vmatpush1.msra.mxu0 0.0
        %3352 = vmatprep.subr.mxu0 0.0
        %3353 = vmatpush1.msra.mxu0 0.0
        %3354 = vmatprep.subr.mxu0 0.0
        %3355 = vmatpush1.msra.mxu0 0.0
        %3356 = vmatprep.subr.mxu0 0.0
        %3357 = vmatpush1.msra.mxu0 0.0
        %3358 = vmatprep.subr.mxu0 0.0
        %3359 = vmatpush1.msra.mxu0 0.0
        %3360 = vmatprep.subr.mxu0 0.0
        %3361 = vmatpush1.msra.mxu0 0.0
        %3362 = vmatprep.subr.mxu0 0.0
        %3363 = vmatpush1.msra.mxu0 0.0
        %3364 = vmatprep.subr.mxu0 0.0
        %3365 = vmatpush1.msra.mxu0 0.0
        %3366 = vmatprep.subr.mxu0 0.0
        %3367 = vmatpush1.msra.mxu0 0.0
        %3368 = vmatprep.subr.mxu0 0.0
        %3369 = vmatpush1.msra.mxu0 0.0
        %3370 = vmatprep.subr.mxu0 0.0
        %3371 = vmatpush1.msra.mxu0 0.0
        %3372 = vmatprep.subr.mxu0 0.0
        %3373 = vmatpush1.msra.mxu0 0.0
        %3374 = vmatprep.subr.mxu0 0.0
        %3375 = vmatpush1.msra.mxu0 0.0
        %3376 = vmatprep.subr.mxu0 0.0
        %3377 = vmatpush1.msra.mxu0 0.0
        %3378 = vmatprep.mubr.f32.mxu0 0.0
        %3379 = vmatmul.mubr.f32.gmra.mrb[0].mxu0 %v3312
        %v3380 = vpop.f32.mrb[0].mxu0
        %v3381 = vadd.f32 0.0, %v3380
        %v3382 = vpop.f32.mrb[0].mxu0
        %3383 = vdwg.mxu0
        %v3384 = vld [vmem:[%s13] sm:$0xff]
        %v3385 = vld [vmem:[%s13 + $0x8] sm:$0xff]
        %v3386 = vld [vmem:[%s13 + $0x10] sm:$0xff]
        %v3387 = vld [vmem:[%s13 + $0x18] sm:$0xff]
        %s3388 = scalar_lea.vmem %s11, 128
        %v3389 = vld [vmem:[%s3388] sm:$0xff]
        %v3390 = vld [vmem:[%s3388 + $0x8] sm:$0xff]
        %v3391 = vld [vmem:[%s3388 + $0x10] sm:$0xff]
        %v3392 = vld [vmem:[%s3388 + $0x18] sm:$0xff]
        %v3393 = vld [vmem:[%s3388 + $0x20] sm:$0xff]
        %v3394 = vld [vmem:[%s3388 + $0x28] sm:$0xff]
        %v3395 = vld [vmem:[%s3388 + $0x30] sm:$0xff]
        %v3396 = vld [vmem:[%s3388 + $0x38] sm:$0xff]
        %v3397 = vld [vmem:[%s3388 + $0x40] sm:$0xff]
        %v3398 = vld [vmem:[%s3388 + $0x48] sm:$0xff]
        %v3399 = vld [vmem:[%s3388 + $0x50] sm:$0xff]
        %v3400 = vld [vmem:[%s3388 + $0x58] sm:$0xff]
        %v3401 = vld [vmem:[%s3388 + $0x60] sm:$0xff]
        %v3402 = vld [vmem:[%s3388 + $0x68] sm:$0xff]
        %v3403 = vld [vmem:[%s3388 + $0x70] sm:$0xff]
        %v3404 = vld [vmem:[%s3388 + $0x78] sm:$0xff]
        %s3405 = scalar_lea.vmem %s12, 1
        %v3406 = vld [vmem:[%s3405] sm:$0x1]
        %v3408 = vlaneseq
        %v3409 = vshrl.u32 %v3408, 7
        %v3410 = vsub.s32 0, %v3409
        %v3411 = vrot.slane %v3406, %v3410
        %3413 = vmatprep.subr.mxu0 0.0
        %3414 = vmatpush1.msra.mxu0 %v3389
        %3415 = vmatprep.subr.mxu0 0.0
        %3416 = vmatpush1.msra.mxu0 %v3390
        %3417 = vmatprep.subr.mxu0 0.0
        %3418 = vmatpush1.msra.mxu0 %v3391
        %3419 = vmatprep.subr.mxu0 0.0
        %3420 = vmatpush1.msra.mxu0 %v3392
        %3421 = vmatprep.subr.mxu0 0.0
        %3422 = vmatpush1.msra.mxu0 %v3393
        %3423 = vmatprep.subr.mxu0 0.0
        %3424 = vmatpush1.msra.mxu0 %v3394
        %3425 = vmatprep.subr.mxu0 0.0
        %3426 = vmatpush1.msra.mxu0 %v3395
        %3427 = vmatprep.subr.mxu0 0.0
        %3428 = vmatpush1.msra.mxu0 %v3396
        %3429 = vmatprep.subr.mxu0 0.0
        %3430 = vmatpush1.msra.mxu0 %v3397
        %3431 = vmatprep.subr.mxu0 0.0
        %3432 = vmatpush1.msra.mxu0 %v3398
        %3433 = vmatprep.subr.mxu0 0.0
        %3434 = vmatpush1.msra.mxu0 %v3399
        %3435 = vmatprep.subr.mxu0 0.0
        %3436 = vmatpush1.msra.mxu0 %v3400
        %3437 = vmatprep.subr.mxu0 0.0
        %3438 = vmatpush1.msra.mxu0 %v3401
        %3439 = vmatprep.subr.mxu0 0.0
        %3440 = vmatpush1.msra.mxu0 %v3402
        %3441 = vmatprep.subr.mxu0 0.0
        %3442 = vmatpush1.msra.mxu0 %v3403
        %3443 = vmatprep.subr.mxu0 0.0
        %3444 = vmatpush1.msra.mxu0 %v3404
        %3445 = vmatprep.subr.mxu0 0.0
        %3446 = vmatpush1.msra.mxu0 0.0
        %3447 = vmatprep.subr.mxu0 0.0
        %3448 = vmatpush1.msra.mxu0 0.0
        %3449 = vmatprep.subr.mxu0 0.0
        %3450 = vmatpush1.msra.mxu0 0.0
        %3451 = vmatprep.subr.mxu0 0.0
        %3452 = vmatpush1.msra.mxu0 0.0
        %3453 = vmatprep.subr.mxu0 0.0
        %3454 = vmatpush1.msra.mxu0 0.0
        %3455 = vmatprep.subr.mxu0 0.0
        %3456 = vmatpush1.msra.mxu0 0.0
        %3457 = vmatprep.subr.mxu0 0.0
        %3458 = vmatpush1.msra.mxu0 0.0
        %3459 = vmatprep.subr.mxu0 0.0
        %3460 = vmatpush1.msra.mxu0 0.0
        %3461 = vmatprep.subr.mxu0 0.0
        %3462 = vmatpush1.msra.mxu0 0.0
        %3463 = vmatprep.subr.mxu0 0.0
        %3464 = vmatpush1.msra.mxu0 0.0
        %3465 = vmatprep.subr.mxu0 0.0
        %3466 = vmatpush1.msra.mxu0 0.0
        %3467 = vmatprep.subr.mxu0 0.0
        %3468 = vmatpush1.msra.mxu0 0.0
        %3469 = vmatprep.subr.mxu0 0.0
        %3470 = vmatpush1.msra.mxu0 0.0
        %3471 = vmatprep.subr.mxu0 0.0
        %3472 = vmatpush1.msra.mxu0 0.0
        %3473 = vmatprep.subr.mxu0 0.0
        %3474 = vmatpush1.msra.mxu0 0.0
        %3475 = vmatprep.subr.mxu0 0.0
        %3476 = vmatpush1.msra.mxu0 0.0
        %3477 = vmatprep.mubr.f32.mxu0 0.0
        %3478 = vmatmul.mubr.f32.gmra.mrb[0].mxu0 %v2933
        %v3479 = vpop.f32.mrb[0].mxu0
        %v3480 = vadd.f32 %v3411, %v3479
        %v3481 = vpop.f32.mrb[0].mxu0
        %3482 = vdwg.mxu0
        %v3483 = vmul.f32 %v3480, 0.17677669
        %s3484 = scalar_lea.vmem %s11, 640
        %v3485 = vld [vmem:[%s3484] sm:$0xff]
        %v3486 = vld [vmem:[%s3484 + $0x8] sm:$0xff]
        %v3487 = vld [vmem:[%s3484 + $0x10] sm:$0xff]
        %v3488 = vld [vmem:[%s3484 + $0x18] sm:$0xff]
        %v3489 = vld [vmem:[%s3484 + $0x20] sm:$0xff]
        %v3490 = vld [vmem:[%s3484 + $0x28] sm:$0xff]
        %v3491 = vld [vmem:[%s3484 + $0x30] sm:$0xff]
        %v3492 = vld [vmem:[%s3484 + $0x38] sm:$0xff]
        %v3493 = vld [vmem:[%s3484 + $0x40] sm:$0xff]
        %v3494 = vld [vmem:[%s3484 + $0x48] sm:$0xff]
        %v3495 = vld [vmem:[%s3484 + $0x50] sm:$0xff]
        %v3496 = vld [vmem:[%s3484 + $0x58] sm:$0xff]
        %v3497 = vld [vmem:[%s3484 + $0x60] sm:$0xff]
        %v3498 = vld [vmem:[%s3484 + $0x68] sm:$0xff]
        %v3499 = vld [vmem:[%s3484 + $0x70] sm:$0xff]
        %v3500 = vld [vmem:[%s3484 + $0x78] sm:$0xff]
        %s3501 = scalar_lea.vmem %s12, 5
        %v3502 = vld [vmem:[%s3501] sm:$0x1]
        %v3504 = vlaneseq
        %v3505 = vshrl.u32 %v3504, 7
        %v3506 = vsub.s32 0, %v3505
        %v3507 = vrot.slane %v3502, %v3506
        %3509 = vmatprep.subr.mxu0 0.0
        %3510 = vmatpush1.msra.mxu0 %v3485
        %3511 = vmatprep.subr.mxu0 0.0
        %3512 = vmatpush1.msra.mxu0 %v3486
        %3513 = vmatprep.subr.mxu0 0.0
        %3514 = vmatpush1.msra.mxu0 %v3487
        %3515 = vmatprep.subr.mxu0 0.0
        %3516 = vmatpush1.msra.mxu0 %v3488
        %3517 = vmatprep.subr.mxu0 0.0
        %3518 = vmatpush1.msra.mxu0 %v3489
        %3519 = vmatprep.subr.mxu0 0.0
        %3520 = vmatpush1.msra.mxu0 %v3490
        %3521 = vmatprep.subr.mxu0 0.0
        %3522 = vmatpush1.msra.mxu0 %v3491
        %3523 = vmatprep.subr.mxu0 0.0
        %3524 = vmatpush1.msra.mxu0 %v3492
        %3525 = vmatprep.subr.mxu0 0.0
        %3526 = vmatpush1.msra.mxu0 %v3493
        %3527 = vmatprep.subr.mxu0 0.0
        %3528 = vmatpush1.msra.mxu0 %v3494
        %3529 = vmatprep.subr.mxu0 0.0
        %3530 = vmatpush1.msra.mxu0 %v3495
        %3531 = vmatprep.subr.mxu0 0.0
        %3532 = vmatpush1.msra.mxu0 %v3496
        %3533 = vmatprep.subr.mxu0 0.0
        %3534 = vmatpush1.msra.mxu0 %v3497
        %3535 = vmatprep.subr.mxu0 0.0
        %3536 = vmatpush1.msra.mxu0 %v3498
        %3537 = vmatprep.subr.mxu0 0.0
        %3538 = vmatpush1.msra.mxu0 %v3499
        %3539 = vmatprep.subr.mxu0 0.0
        %3540 = vmatpush1.msra.mxu0 %v3500
        %3541 = vmatprep.subr.mxu0 0.0
        %3542 = vmatpush1.msra.mxu0 0.0
        %3543 = vmatprep.subr.mxu0 0.0
        %3544 = vmatpush1.msra.mxu0 0.0
        %3545 = vmatprep.subr.mxu0 0.0
        %3546 = vmatpush1.msra.mxu0 0.0
        %3547 = vmatprep.subr.mxu0 0.0
        %3548 = vmatpush1.msra.mxu0 0.0
        %3549 = vmatprep.subr.mxu0 0.0
        %3550 = vmatpush1.msra.mxu0 0.0
        %3551 = vmatprep.subr.mxu0 0.0
        %3552 = vmatpush1.msra.mxu0 0.0
        %3553 = vmatprep.subr.mxu0 0.0
        %3554 = vmatpush1.msra.mxu0 0.0
        %3555 = vmatprep.subr.mxu0 0.0
        %3556 = vmatpush1.msra.mxu0 0.0
        %3557 = vmatprep.subr.mxu0 0.0
        %3558 = vmatpush1.msra.mxu0 0.0
        %3559 = vmatprep.subr.mxu0 0.0
        %3560 = vmatpush1.msra.mxu0 0.0
        %3561 = vmatprep.subr.mxu0 0.0
        %3562 = vmatpush1.msra.mxu0 0.0
        %3563 = vmatprep.subr.mxu0 0.0
        %3564 = vmatpush1.msra.mxu0 0.0
        %3565 = vmatprep.subr.mxu0 0.0
        %3566 = vmatpush1.msra.mxu0 0.0
        %3567 = vmatprep.subr.mxu0 0.0
        %3568 = vmatpush1.msra.mxu0 0.0
        %3569 = vmatprep.subr.mxu0 0.0
        %3570 = vmatpush1.msra.mxu0 0.0
        %3571 = vmatprep.subr.mxu0 0.0
        %3572 = vmatpush1.msra.mxu0 0.0
        %3573 = vmatprep.mubr.f32.mxu0 0.0
        %3574 = vmatmul.mubr.f32.gmra.mrb[0].mxu0 %v765
        %v3575 = vpop.f32.mrb[0].mxu0
        %v3576 = vadd.f32 %v3507, %v3575
        %v3577 = vpop.f32.mrb[0].mxu0
        %3578 = vdwg.mxu0
        %s3579 = scalar_lea.vmem %s11, 1152
        %v3580 = vld [vmem:[%s3579] sm:$0xff]
        %v3581 = vld [vmem:[%s3579 + $0x8] sm:$0xff]
        %v3582 = vld [vmem:[%s3579 + $0x10] sm:$0xff]
        %v3583 = vld [vmem:[%s3579 + $0x18] sm:$0xff]
        %v3584 = vld [vmem:[%s3579 + $0x20] sm:$0xff]
        %v3585 = vld [vmem:[%s3579 + $0x28] sm:$0xff]
        %v3586 = vld [vmem:[%s3579 + $0x30] sm:$0xff]
        %v3587 = vld [vmem:[%s3579 + $0x38] sm:$0xff]
        %v3588 = vld [vmem:[%s3579 + $0x40] sm:$0xff]
        %v3589 = vld [vmem:[%s3579 + $0x48] sm:$0xff]
        %v3590 = vld [vmem:[%s3579 + $0x50] sm:$0xff]
        %v3591 = vld [vmem:[%s3579 + $0x58] sm:$0xff]
        %v3592 = vld [vmem:[%s3579 + $0x60] sm:$0xff]
        %v3593 = vld [vmem:[%s3579 + $0x68] sm:$0xff]
        %v3594 = vld [vmem:[%s3579 + $0x70] sm:$0xff]
        %v3595 = vld [vmem:[%s3579 + $0x78] sm:$0xff]
        %s3596 = scalar_lea.vmem %s12, 9
        %v3597 = vld [vmem:[%s3596] sm:$0x1]
        %v3599 = vlaneseq
        %v3600 = vshrl.u32 %v3599, 7
        %v3601 = vsub.s32 0, %v3600
        %v3602 = vrot.slane %v3597, %v3601
        %3604 = vmatprep.subr.mxu0 0.0
        %3605 = vmatpush1.msra.mxu0 %v3580
        %3606 = vmatprep.subr.mxu0 0.0
        %3607 = vmatpush1.msra.mxu0 %v3581
        %3608 = vmatprep.subr.mxu0 0.0
        %3609 = vmatpush1.msra.mxu0 %v3582
        %3610 = vmatprep.subr.mxu0 0.0
        %3611 = vmatpush1.msra.mxu0 %v3583
        %3612 = vmatprep.subr.mxu0 0.0
        %3613 = vmatpush1.msra.mxu0 %v3584
        %3614 = vmatprep.subr.mxu0 0.0
        %3615 = vmatpush1.msra.mxu0 %v3585
        %3616 = vmatprep.subr.mxu0 0.0
        %3617 = vmatpush1.msra.mxu0 %v3586
        %3618 = vmatprep.subr.mxu0 0.0
        %3619 = vmatpush1.msra.mxu0 %v3587
        %3620 = vmatprep.subr.mxu0 0.0
        %3621 = vmatpush1.msra.mxu0 %v3588
        %3622 = vmatprep.subr.mxu0 0.0
        %3623 = vmatpush1.msra.mxu0 %v3589
        %3624 = vmatprep.subr.mxu0 0.0
        %3625 = vmatpush1.msra.mxu0 %v3590
        %3626 = vmatprep.subr.mxu0 0.0
        %3627 = vmatpush1.msra.mxu0 %v3591
        %3628 = vmatprep.subr.mxu0 0.0
        %3629 = vmatpush1.msra.mxu0 %v3592
        %3630 = vmatprep.subr.mxu0 0.0
        %3631 = vmatpush1.msra.mxu0 %v3593
        %3632 = vmatprep.subr.mxu0 0.0
        %3633 = vmatpush1.msra.mxu0 %v3594
        %3634 = vmatprep.subr.mxu0 0.0
        %3635 = vmatpush1.msra.mxu0 %v3595
        %3636 = vmatprep.subr.mxu0 0.0
        %3637 = vmatpush1.msra.mxu0 0.0
        %3638 = vmatprep.subr.mxu0 0.0
        %3639 = vmatpush1.msra.mxu0 0.0
        %3640 = vmatprep.subr.mxu0 0.0
        %3641 = vmatpush1.msra.mxu0 0.0
        %3642 = vmatprep.subr.mxu0 0.0
        %3643 = vmatpush1.msra.mxu0 0.0
        %3644 = vmatprep.subr.mxu0 0.0
        %3645 = vmatpush1.msra.mxu0 0.0
        %3646 = vmatprep.subr.mxu0 0.0
        %3647 = vmatpush1.msra.mxu0 0.0
        %3648 = vmatprep.subr.mxu0 0.0
        %3649 = vmatpush1.msra.mxu0 0.0
        %3650 = vmatprep.subr.mxu0 0.0
        %3651 = vmatpush1.msra.mxu0 0.0
        %3652 = vmatprep.subr.mxu0 0.0
        %3653 = vmatpush1.msra.mxu0 0.0
        %3654 = vmatprep.subr.mxu0 0.0
        %3655 = vmatpush1.msra.mxu0 0.0
        %3656 = vmatprep.subr.mxu0 0.0
        %3657 = vmatpush1.msra.mxu0 0.0
        %3658 = vmatprep.subr.mxu0 0.0
        %3659 = vmatpush1.msra.mxu0 0.0
        %3660 = vmatprep.subr.mxu0 0.0
        %3661 = vmatpush1.msra.mxu0 0.0
        %3662 = vmatprep.subr.mxu0 0.0
        %3663 = vmatpush1.msra.mxu0 0.0
        %3664 = vmatprep.subr.mxu0 0.0
        %3665 = vmatpush1.msra.mxu0 0.0
        %3666 = vmatprep.subr.mxu0 0.0
        %3667 = vmatpush1.msra.mxu0 0.0
        %3668 = vmatprep.mubr.f32.mxu0 0.0
        %3669 = vmatmul.mubr.f32.gmra.mrb[0].mxu0 %v765
        %v3670 = vpop.f32.mrb[0].mxu0
        %v3671 = vadd.f32 %v3602, %v3670
        %v3672 = vpop.f32.mrb[0].mxu0
        %3673 = vdwg.mxu0
        %v3675 = vsel %vm1085, %v3483, 0
        %v3678 = vsel %vm1085, %v3576, 0
        %3680 = vmatprep.subr.mxu0 0.0
        %3681 = vmatpush1.xpose.msra.mxu0 %v3678
        %3682 = vmatprep.subr.mxu0 0.0
        %3683 = vmatpush1.xpose.msra.mxu0 0.0
        %3684 = vmatprep.subr.mxu0 0.0
        %3685 = vmatpush1.xpose.msra.mxu0 0.0
        %3686 = vmatprep.subr.mxu0 0.0
        %3687 = vmatpush1.xpose.msra.mxu0 0.0
        %3688 = vmatprep.subr.mxu0 0.0
        %3689 = vmatpush1.xpose.msra.mxu0 0.0
        %3690 = vmatprep.subr.mxu0 0.0
        %3691 = vmatpush1.xpose.msra.mxu0 0.0
        %3692 = vmatprep.subr.mxu0 0.0
        %3693 = vmatpush1.xpose.msra.mxu0 0.0
        %3694 = vmatprep.subr.mxu0 0.0
        %3695 = vmatpush1.xpose.msra.mxu0 0.0
        %3696 = vmatprep.subr.mxu0 0.0
        %3697 = vmatpush1.xpose.msra.mxu0 0.0
        %3698 = vmatprep.subr.mxu0 0.0
        %3699 = vmatpush1.xpose.msra.mxu0 0.0
        %3700 = vmatprep.subr.mxu0 0.0
        %3701 = vmatpush1.xpose.msra.mxu0 0.0
        %3702 = vmatprep.subr.mxu0 0.0
        %3703 = vmatpush1.xpose.msra.mxu0 0.0
        %3704 = vmatprep.subr.mxu0 0.0
        %3705 = vmatpush1.xpose.msra.mxu0 0.0
        %3706 = vmatprep.subr.mxu0 0.0
        %3707 = vmatpush1.xpose.msra.mxu0 0.0
        %3708 = vmatprep.subr.mxu0 0.0
        %3709 = vmatpush1.xpose.msra.mxu0 0.0
        %3710 = vmatprep.subr.mxu0 0.0
        %3711 = vmatpush1.xpose.msra.mxu0 0.0
        %3712 = vmatprep.subr.mxu0 0.0
        %3713 = vmatpush1.xpose.msra.mxu0 0.0
        %3714 = vmatprep.subr.mxu0 0.0
        %3715 = vmatpush1.xpose.msra.mxu0 0.0
        %3716 = vmatprep.subr.mxu0 0.0
        %3717 = vmatpush1.xpose.msra.mxu0 0.0
        %3718 = vmatprep.subr.mxu0 0.0
        %3719 = vmatpush1.xpose.msra.mxu0 0.0
        %3720 = vmatprep.subr.mxu0 0.0
        %3721 = vmatpush1.xpose.msra.mxu0 0.0
        %3722 = vmatprep.subr.mxu0 0.0
        %3723 = vmatpush1.xpose.msra.mxu0 0.0
        %3724 = vmatprep.subr.mxu0 0.0
        %3725 = vmatpush1.xpose.msra.mxu0 0.0
        %3726 = vmatprep.subr.mxu0 0.0
        %3727 = vmatpush1.xpose.msra.mxu0 0.0
        %3728 = vmatprep.subr.mxu0 0.0
        %3729 = vmatpush1.xpose.msra.mxu0 0.0
        %3730 = vmatprep.subr.mxu0 0.0
        %3731 = vmatpush1.xpose.msra.mxu0 0.0
        %3732 = vmatprep.subr.mxu0 0.0
        %3733 = vmatpush1.xpose.msra.mxu0 0.0
        %3734 = vmatprep.subr.mxu0 0.0
        %3735 = vmatpush1.xpose.msra.mxu0 0.0
        %3736 = vmatprep.subr.mxu0 0.0
        %3737 = vmatpush1.xpose.msra.mxu0 0.0
        %3738 = vmatprep.subr.mxu0 0.0
        %3739 = vmatpush1.xpose.msra.mxu0 0.0
        %3740 = vmatprep.subr.mxu0 0.0
        %3741 = vmatpush1.xpose.msra.mxu0 0.0
        %3742 = vmatprep.subr.mxu0 0.0
        %3743 = vmatpush1.xpose.msra.mxu0 0.0
        %3744 = vmatprep.mubr.f32.mxu0 0.0
        %3745 = vmatmul.mubr.f32.gmra.mrb[0].mxu0 %v3675
        %v3746 = vpop.f32.mrb[0].mxu0
        %v3747 = vadd.f32 %v3222, %v3746
        %v3748 = vpop.f32.mrb[0].mxu0
        %3749 = vdwg.mxu0
        %v3750 = vsel %vm1162, %v3747, -inf
        %3751 = vmax.xlane.f32.xlu0 %v3750
        %v3752 = vpop.xlane.xlu0 %3751
        %v3753 = vsub.f32 %v3747, %v3752
        %v3754 = vmul.f32 %v3753, 1.442695
        %v3755 = vpow.pop %v3754
        %v3756 = vsel %vm1162, %v3755, 0.0
        %3757 = vadd.xlane.f32.xlu0 %v3756
        %v3758 = vpop.xlane.xlu0 %3757
        %v3759 = vrcp.pop %v3758
        %v3760 = vmul.f32 %v3755, %v3759
        %v3762 = vsel %vm1162, %v3760, 0
        %3764 = vmatprep.subr.mxu0 0.0
        %3765 = vmatpush1.msra.mxu0 %v3671
        %3766 = vmatprep.subr.mxu0 0.0
        %3767 = vmatpush1.msra.mxu0 0.0
        %3768 = vmatprep.subr.mxu0 0.0
        %3769 = vmatpush1.msra.mxu0 0.0
        %3770 = vmatprep.subr.mxu0 0.0
        %3771 = vmatpush1.msra.mxu0 0.0
        %3772 = vmatprep.subr.mxu0 0.0
        %3773 = vmatpush1.msra.mxu0 0.0
        %3774 = vmatprep.subr.mxu0 0.0
        %3775 = vmatpush1.msra.mxu0 0.0
        %3776 = vmatprep.subr.mxu0 0.0
        %3777 = vmatpush1.msra.mxu0 0.0
        %3778 = vmatprep.subr.mxu0 0.0
        %3779 = vmatpush1.msra.mxu0 0.0
        %3780 = vmatprep.subr.mxu0 0.0
        %3781 = vmatpush1.msra.mxu0 0.0
        %3782 = vmatprep.subr.mxu0 0.0
        %3783 = vmatpush1.msra.mxu0 0.0
        %3784 = vmatprep.subr.mxu0 0.0
        %3785 = vmatpush1.msra.mxu0 0.0
        %3786 = vmatprep.subr.mxu0 0.0
        %3787 = vmatpush1.msra.mxu0 0.0
        %3788 = vmatprep.subr.mxu0 0.0
        %3789 = vmatpush1.msra.mxu0 0.0
        %3790 = vmatprep.subr.mxu0 0.0
        %3791 = vmatpush1.msra.mxu0 0.0
        %3792 = vmatprep.subr.mxu0 0.0
        %3793 = vmatpush1.msra.mxu0 0.0
        %3794 = vmatprep.subr.mxu0 0.0
        %3795 = vmatpush1.msra.mxu0 0.0
        %3796 = vmatprep.subr.mxu0 0.0
        %3797 = vmatpush1.msra.mxu0 0.0
        %3798 = vmatprep.subr.mxu0 0.0
        %3799 = vmatpush1.msra.mxu0 0.0
        %3800 = vmatprep.subr.mxu0 0.0
        %3801 = vmatpush1.msra.mxu0 0.0
        %3802 = vmatprep.subr.mxu0 0.0
        %3803 = vmatpush1.msra.mxu0 0.0
        %3804 = vmatprep.subr.mxu0 0.0
        %3805 = vmatpush1.msra.mxu0 0.0
        %3806 = vmatprep.subr.mxu0 0.0
        %3807 = vmatpush1.msra.mxu0 0.0
        %3808 = vmatprep.subr.mxu0 0.0
        %3809 = vmatpush1.msra.mxu0 0.0
        %3810 = vmatprep.subr.mxu0 0.0
        %3811 = vmatpush1.msra.mxu0 0.0
        %3812 = vmatprep.subr.mxu0 0.0
        %3813 = vmatpush1.msra.mxu0 0.0
        %3814 = vmatprep.subr.mxu0 0.0
        %3815 = vmatpush1.msra.mxu0 0.0
        %3816 = vmatprep.subr.mxu0 0.0
        %3817 = vmatpush1.msra.mxu0 0.0
        %3818 = vmatprep.subr.mxu0 0.0
        %3819 = vmatpush1.msra.mxu0 0.0
        %3820 = vmatprep.subr.mxu0 0.0
        %3821 = vmatpush1.msra.mxu0 0.0
        %3822 = vmatprep.subr.mxu0 0.0
        %3823 = vmatpush1.msra.mxu0 0.0
        %3824 = vmatprep.subr.mxu0 0.0
        %3825 = vmatpush1.msra.mxu0 0.0
        %3826 = vmatprep.subr.mxu0 0.0
        %3827 = vmatpush1.msra.mxu0 0.0
        %3828 = vmatprep.mubr.f32.mxu0 0.0
        %3829 = vmatmul.mubr.f32.gmra.mrb[0].mxu0 %v3762
        %v3830 = vpop.f32.mrb[0].mxu0
        %v3831 = vadd.f32 0.0, %v3830
        %v3832 = vpop.f32.mrb[0].mxu0
        %3833 = vdwg.mxu0
        %s3834 = scalar_lea.vmem %s13, 32
        %v3835 = vld [vmem:[%s3834] sm:$0xff]
        %v3836 = vld [vmem:[%s3834 + $0x8] sm:$0xff]
        %v3837 = vld [vmem:[%s3834 + $0x10] sm:$0xff]
        %v3838 = vld [vmem:[%s3834 + $0x18] sm:$0xff]
        %v3840 = vsel %vm1085, %v3831, 0
        %3842 = vmatprep.subr.mxu0 0.0
        %3843 = vmatpush1.msra.mxu0 %v3835
        %3844 = vmatprep.subr.mxu0 0.0
        %3845 = vmatpush1.msra.mxu0 %v3836
        %3846 = vmatprep.subr.mxu0 0.0
        %3847 = vmatpush1.msra.mxu0 %v3837
        %3848 = vmatprep.subr.mxu0 0.0
        %3849 = vmatpush1.msra.mxu0 %v3838
        %3850 = vmatprep.subr.mxu0 0.0
        %3851 = vmatpush1.msra.mxu0 0.0
        %3852 = vmatprep.subr.mxu0 0.0
        %3853 = vmatpush1.msra.mxu0 0.0
        %3854 = vmatprep.subr.mxu0 0.0
        %3855 = vmatpush1.msra.mxu0 0.0
        %3856 = vmatprep.subr.mxu0 0.0
        %3857 = vmatpush1.msra.mxu0 0.0
        %3858 = vmatprep.subr.mxu0 0.0
        %3859 = vmatpush1.msra.mxu0 0.0
        %3860 = vmatprep.subr.mxu0 0.0
        %3861 = vmatpush1.msra.mxu0 0.0
        %3862 = vmatprep.subr.mxu0 0.0
        %3863 = vmatpush1.msra.mxu0 0.0
        %3864 = vmatprep.subr.mxu0 0.0
        %3865 = vmatpush1.msra.mxu0 0.0
        %3866 = vmatprep.subr.mxu0 0.0
        %3867 = vmatpush1.msra.mxu0 0.0
        %3868 = vmatprep.subr.mxu0 0.0
        %3869 = vmatpush1.msra.mxu0 0.0
        %3870 = vmatprep.subr.mxu0 0.0
        %3871 = vmatpush1.msra.mxu0 0.0
        %3872 = vmatprep.subr.mxu0 0.0
        %3873 = vmatpush1.msra.mxu0 0.0
        %3874 = vmatprep.subr.mxu0 0.0
        %3875 = vmatpush1.msra.mxu0 0.0
        %3876 = vmatprep.subr.mxu0 0.0
        %3877 = vmatpush1.msra.mxu0 0.0
        %3878 = vmatprep.subr.mxu0 0.0
        %3879 = vmatpush1.msra.mxu0 0.0
        %3880 = vmatprep.subr.mxu0 0.0
        %3881 = vmatpush1.msra.mxu0 0.0
        %3882 = vmatprep.subr.mxu0 0.0
        %3883 = vmatpush1.msra.mxu0 0.0
        %3884 = vmatprep.subr.mxu0 0.0
        %3885 = vmatpush1.msra.mxu0 0.0
        %3886 = vmatprep.subr.mxu0 0.0
        %3887 = vmatpush1.msra.mxu0 0.0
        %3888 = vmatprep.subr.mxu0 0.0
        %3889 = vmatpush1.msra.mxu0 0.0
        %3890 = vmatprep.subr.mxu0 0.0
        %3891 = vmatpush1.msra.mxu0 0.0
        %3892 = vmatprep.subr.mxu0 0.0
        %3893 = vmatpush1.msra.mxu0 0.0
        %3894 = vmatprep.subr.mxu0 0.0
        %3895 = vmatpush1.msra.mxu0 0.0
        %3896 = vmatprep.subr.mxu0 0.0
        %3897 = vmatpush1.msra.mxu0 0.0
        %3898 = vmatprep.subr.mxu0 0.0
        %3899 = vmatpush1.msra.mxu0 0.0
        %3900 = vmatprep.subr.mxu0 0.0
        %3901 = vmatpush1.msra.mxu0 0.0
        %3902 = vmatprep.subr.mxu0 0.0
        %3903 = vmatpush1.msra.mxu0 0.0
        %3904 = vmatprep.subr.mxu0 0.0
        %3905 = vmatpush1.msra.mxu0 0.0
        %3906 = vmatprep.mubr.f32.mxu0 0.0
        %3907 = vmatmul.mubr.f32.gmra.mrb[0].mxu0 %v3840
        %v3908 = vpop.f32.mrb[0].mxu0
        %v3909 = vadd.f32 0.0, %v3908
        %v3910 = vpop.f32.mrb[0].mxu0
        %3911 = vdwg.mxu0
        %v3913 = vsel %vm1085, %v3381, 0
        %3915 = vmatprep.subr.mxu0 0.0
        %3916 = vmatpush1.msra.mxu0 %v3384
        %3917 = vmatprep.subr.mxu0 0.0
        %3918 = vmatpush1.msra.mxu0 %v3385
        %3919 = vmatprep.subr.mxu0 0.0
        %3920 = vmatpush1.msra.mxu0 %v3386
        %3921 = vmatprep.subr.mxu0 0.0
        %3922 = vmatpush1.msra.mxu0 %v3387
        %3923 = vmatprep.subr.mxu0 0.0
        %3924 = vmatpush1.msra.mxu0 0.0
        %3925 = vmatprep.subr.mxu0 0.0
        %3926 = vmatpush1.msra.mxu0 0.0
        %3927 = vmatprep.subr.mxu0 0.0
        %3928 = vmatpush1.msra.mxu0 0.0
        %3929 = vmatprep.subr.mxu0 0.0
        %3930 = vmatpush1.msra.mxu0 0.0
        %3931 = vmatprep.subr.mxu0 0.0
        %3932 = vmatpush1.msra.mxu0 0.0
        %3933 = vmatprep.subr.mxu0 0.0
        %3934 = vmatpush1.msra.mxu0 0.0
        %3935 = vmatprep.subr.mxu0 0.0
        %3936 = vmatpush1.msra.mxu0 0.0
        %3937 = vmatprep.subr.mxu0 0.0
        %3938 = vmatpush1.msra.mxu0 0.0
        %3939 = vmatprep.subr.mxu0 0.0
        %3940 = vmatpush1.msra.mxu0 0.0
        %3941 = vmatprep.subr.mxu0 0.0
        %3942 = vmatpush1.msra.mxu0 0.0
        %3943 = vmatprep.subr.mxu0 0.0
        %3944 = vmatpush1.msra.mxu0 0.0
        %3945 = vmatprep.subr.mxu0 0.0
        %3946 = vmatpush1.msra.mxu0 0.0
        %3947 = vmatprep.subr.mxu0 0.0
        %3948 = vmatpush1.msra.mxu0 0.0
        %3949 = vmatprep.subr.mxu0 0.0
        %3950 = vmatpush1.msra.mxu0 0.0
        %3951 = vmatprep.subr.mxu0 0.0
        %3952 = vmatpush1.msra.mxu0 0.0
        %3953 = vmatprep.subr.mxu0 0.0
        %3954 = vmatpush1.msra.mxu0 0.0
        %3955 = vmatprep.subr.mxu0 0.0
        %3956 = vmatpush1.msra.mxu0 0.0
        %3957 = vmatprep.subr.mxu0 0.0
        %3958 = vmatpush1.msra.mxu0 0.0
        %3959 = vmatprep.subr.mxu0 0.0
        %3960 = vmatpush1.msra.mxu0 0.0
        %3961 = vmatprep.subr.mxu0 0.0
        %3962 = vmatpush1.msra.mxu0 0.0
        %3963 = vmatprep.subr.mxu0 0.0
        %3964 = vmatpush1.msra.mxu0 0.0
        %3965 = vmatprep.subr.mxu0 0.0
        %3966 = vmatpush1.msra.mxu0 0.0
        %3967 = vmatprep.subr.mxu0 0.0
        %3968 = vmatpush1.msra.mxu0 0.0
        %3969 = vmatprep.subr.mxu0 0.0
        %3970 = vmatpush1.msra.mxu0 0.0
        %3971 = vmatprep.subr.mxu0 0.0
        %3972 = vmatpush1.msra.mxu0 0.0
        %3973 = vmatprep.subr.mxu0 0.0
        %3974 = vmatpush1.msra.mxu0 0.0
        %3975 = vmatprep.subr.mxu0 0.0
        %3976 = vmatpush1.msra.mxu0 0.0
        %3977 = vmatprep.subr.mxu0 0.0
        %3978 = vmatpush1.msra.mxu0 0.0
        %3979 = vmatprep.mubr.f32.mxu0 0.0
        %3980 = vmatmul.mubr.f32.gmra.mrb[0].mxu0 %v3913
        %v3981 = vpop.f32.mrb[0].mxu0
        %v3982 = vadd.f32 %v3909, %v3981
        %v3983 = vpop.f32.mrb[0].mxu0
        %3984 = vdwg.mxu0
        %s3985 = scalar_lea.vmem %s11, 256
        %v3986 = vld [vmem:[%s3985] sm:$0xff]
        %v3987 = vld [vmem:[%s3985 + $0x8] sm:$0xff]
        %v3988 = vld [vmem:[%s3985 + $0x10] sm:$0xff]
        %v3989 = vld [vmem:[%s3985 + $0x18] sm:$0xff]
        %v3990 = vld [vmem:[%s3985 + $0x20] sm:$0xff]
        %v3991 = vld [vmem:[%s3985 + $0x28] sm:$0xff]
        %v3992 = vld [vmem:[%s3985 + $0x30] sm:$0xff]
        %v3993 = vld [vmem:[%s3985 + $0x38] sm:$0xff]
        %v3994 = vld [vmem:[%s3985 + $0x40] sm:$0xff]
        %v3995 = vld [vmem:[%s3985 + $0x48] sm:$0xff]
        %v3996 = vld [vmem:[%s3985 + $0x50] sm:$0xff]
        %v3997 = vld [vmem:[%s3985 + $0x58] sm:$0xff]
        %v3998 = vld [vmem:[%s3985 + $0x60] sm:$0xff]
        %v3999 = vld [vmem:[%s3985 + $0x68] sm:$0xff]
        %v4000 = vld [vmem:[%s3985 + $0x70] sm:$0xff]
        %v4001 = vld [vmem:[%s3985 + $0x78] sm:$0xff]
        %s4002 = scalar_lea.vmem %s12, 2
        %v4003 = vld [vmem:[%s4002] sm:$0x1]
        %v4005 = vlaneseq
        %v4006 = vshrl.u32 %v4005, 7
        %v4007 = vsub.s32 0, %v4006
        %v4008 = vrot.slane %v4003, %v4007
        %4010 = vmatprep.subr.mxu0 0.0
        %4011 = vmatpush1.msra.mxu0 %v3986
        %4012 = vmatprep.subr.mxu0 0.0
        %4013 = vmatpush1.msra.mxu0 %v3987
        %4014 = vmatprep.subr.mxu0 0.0
        %4015 = vmatpush1.msra.mxu0 %v3988
        %4016 = vmatprep.subr.mxu0 0.0
        %4017 = vmatpush1.msra.mxu0 %v3989
        %4018 = vmatprep.subr.mxu0 0.0
        %4019 = vmatpush1.msra.mxu0 %v3990
        %4020 = vmatprep.subr.mxu0 0.0
        %4021 = vmatpush1.msra.mxu0 %v3991
        %4022 = vmatprep.subr.mxu0 0.0
        %4023 = vmatpush1.msra.mxu0 %v3992
        %4024 = vmatprep.subr.mxu0 0.0
        %4025 = vmatpush1.msra.mxu0 %v3993
        %4026 = vmatprep.subr.mxu0 0.0
        %4027 = vmatpush1.msra.mxu0 %v3994
        %4028 = vmatprep.subr.mxu0 0.0
        %4029 = vmatpush1.msra.mxu0 %v3995
        %4030 = vmatprep.subr.mxu0 0.0
        %4031 = vmatpush1.msra.mxu0 %v3996
        %4032 = vmatprep.subr.mxu0 0.0
        %4033 = vmatpush1.msra.mxu0 %v3997
        %4034 = vmatprep.subr.mxu0 0.0
        %4035 = vmatpush1.msra.mxu0 %v3998
        %4036 = vmatprep.subr.mxu0 0.0
        %4037 = vmatpush1.msra.mxu0 %v3999
        %4038 = vmatprep.subr.mxu0 0.0
        %4039 = vmatpush1.msra.mxu0 %v4000
        %4040 = vmatprep.subr.mxu0 0.0
        %4041 = vmatpush1.msra.mxu0 %v4001
        %4042 = vmatprep.subr.mxu0 0.0
        %4043 = vmatpush1.msra.mxu0 0.0
        %4044 = vmatprep.subr.mxu0 0.0
        %4045 = vmatpush1.msra.mxu0 0.0
        %4046 = vmatprep.subr.mxu0 0.0
        %4047 = vmatpush1.msra.mxu0 0.0
        %4048 = vmatprep.subr.mxu0 0.0
        %4049 = vmatpush1.msra.mxu0 0.0
        %4050 = vmatprep.subr.mxu0 0.0
        %4051 = vmatpush1.msra.mxu0 0.0
        %4052 = vmatprep.subr.mxu0 0.0
        %4053 = vmatpush1.msra.mxu0 0.0
        %4054 = vmatprep.subr.mxu0 0.0
        %4055 = vmatpush1.msra.mxu0 0.0
        %4056 = vmatprep.subr.mxu0 0.0
        %4057 = vmatpush1.msra.mxu0 0.0
        %4058 = vmatprep.subr.mxu0 0.0
        %4059 = vmatpush1.msra.mxu0 0.0
        %4060 = vmatprep.subr.mxu0 0.0
        %4061 = vmatpush1.msra.mxu0 0.0
        %4062 = vmatprep.subr.mxu0 0.0
        %4063 = vmatpush1.msra.mxu0 0.0
        %4064 = vmatprep.subr.mxu0 0.0
        %4065 = vmatpush1.msra.mxu0 0.0
        %4066 = vmatprep.subr.mxu0 0.0
        %4067 = vmatpush1.msra.mxu0 0.0
        %4068 = vmatprep.subr.mxu0 0.0
        %4069 = vmatpush1.msra.mxu0 0.0
        %4070 = vmatprep.subr.mxu0 0.0
        %4071 = vmatpush1.msra.mxu0 0.0
        %4072 = vmatprep.subr.mxu0 0.0
        %4073 = vmatpush1.msra.mxu0 0.0
        %4074 = vmatprep.mubr.f32.mxu0 0.0
        %4075 = vmatmul.mubr.f32.gmra.mrb[0].mxu0 %v2933
        %v4076 = vpop.f32.mrb[0].mxu0
        %v4077 = vadd.f32 %v4008, %v4076
        %v4078 = vpop.f32.mrb[0].mxu0
        %4079 = vdwg.mxu0
        %v4080 = vmul.f32 %v4077, 0.17677669
        %s4081 = scalar_lea.vmem %s11, 768
        %v4082 = vld [vmem:[%s4081] sm:$0xff]
        %v4083 = vld [vmem:[%s4081 + $0x8] sm:$0xff]
        %v4084 = vld [vmem:[%s4081 + $0x10] sm:$0xff]
        %v4085 = vld [vmem:[%s4081 + $0x18] sm:$0xff]
        %v4086 = vld [vmem:[%s4081 + $0x20] sm:$0xff]
        %v4087 = vld [vmem:[%s4081 + $0x28] sm:$0xff]
        %v4088 = vld [vmem:[%s4081 + $0x30] sm:$0xff]
        %v4089 = vld [vmem:[%s4081 + $0x38] sm:$0xff]
        %v4090 = vld [vmem:[%s4081 + $0x40] sm:$0xff]
        %v4091 = vld [vmem:[%s4081 + $0x48] sm:$0xff]
        %v4092 = vld [vmem:[%s4081 + $0x50] sm:$0xff]
        %v4093 = vld [vmem:[%s4081 + $0x58] sm:$0xff]
        %v4094 = vld [vmem:[%s4081 + $0x60] sm:$0xff]
        %v4095 = vld [vmem:[%s4081 + $0x68] sm:$0xff]
        %v4096 = vld [vmem:[%s4081 + $0x70] sm:$0xff]
        %v4097 = vld [vmem:[%s4081 + $0x78] sm:$0xff]
        %s4098 = scalar_lea.vmem %s12, 6
        %v4099 = vld [vmem:[%s4098] sm:$0x1]
        %v4101 = vlaneseq
        %v4102 = vshrl.u32 %v4101, 7
        %v4103 = vsub.s32 0, %v4102
        %v4104 = vrot.slane %v4099, %v4103
        %4106 = vmatprep.subr.mxu0 0.0
        %4107 = vmatpush1.msra.mxu0 %v4082
        %4108 = vmatprep.subr.mxu0 0.0
        %4109 = vmatpush1.msra.mxu0 %v4083
        %4110 = vmatprep.subr.mxu0 0.0
        %4111 = vmatpush1.msra.mxu0 %v4084
        %4112 = vmatprep.subr.mxu0 0.0
        %4113 = vmatpush1.msra.mxu0 %v4085
        %4114 = vmatprep.subr.mxu0 0.0
        %4115 = vmatpush1.msra.mxu0 %v4086
        %4116 = vmatprep.subr.mxu0 0.0
        %4117 = vmatpush1.msra.mxu0 %v4087
        %4118 = vmatprep.subr.mxu0 0.0
        %4119 = vmatpush1.msra.mxu0 %v4088
        %4120 = vmatprep.subr.mxu0 0.0
        %4121 = vmatpush1.msra.mxu0 %v4089
        %4122 = vmatprep.subr.mxu0 0.0
        %4123 = vmatpush1.msra.mxu0 %v4090
        %4124 = vmatprep.subr.mxu0 0.0
        %4125 = vmatpush1.msra.mxu0 %v4091
        %4126 = vmatprep.subr.mxu0 0.0
        %4127 = vmatpush1.msra.mxu0 %v4092
        %4128 = vmatprep.subr.mxu0 0.0
        %4129 = vmatpush1.msra.mxu0 %v4093
        %4130 = vmatprep.subr.mxu0 0.0
        %4131 = vmatpush1.msra.mxu0 %v4094
        %4132 = vmatprep.subr.mxu0 0.0
        %4133 = vmatpush1.msra.mxu0 %v4095
        %4134 = vmatprep.subr.mxu0 0.0
        %4135 = vmatpush1.msra.mxu0 %v4096
        %4136 = vmatprep.subr.mxu0 0.0
        %4137 = vmatpush1.msra.mxu0 %v4097
        %4138 = vmatprep.subr.mxu0 0.0
        %4139 = vmatpush1.msra.mxu0 0.0
        %4140 = vmatprep.subr.mxu0 0.0
        %4141 = vmatpush1.msra.mxu0 0.0
        %4142 = vmatprep.subr.mxu0 0.0
        %4143 = vmatpush1.msra.mxu0 0.0
        %4144 = vmatprep.subr.mxu0 0.0
        %4145 = vmatpush1.msra.mxu0 0.0
        %4146 = vmatprep.subr.mxu0 0.0
        %4147 = vmatpush1.msra.mxu0 0.0
        %4148 = vmatprep.subr.mxu0 0.0
        %4149 = vmatpush1.msra.mxu0 0.0
        %4150 = vmatprep.subr.mxu0 0.0
        %4151 = vmatpush1.msra.mxu0 0.0
        %4152 = vmatprep.subr.mxu0 0.0
        %4153 = vmatpush1.msra.mxu0 0.0
        %4154 = vmatprep.subr.mxu0 0.0
        %4155 = vmatpush1.msra.mxu0 0.0
        %4156 = vmatprep.subr.mxu0 0.0
        %4157 = vmatpush1.msra.mxu0 0.0
        %4158 = vmatprep.subr.mxu0 0.0
        %4159 = vmatpush1.msra.mxu0 0.0
        %4160 = vmatprep.subr.mxu0 0.0
        %4161 = vmatpush1.msra.mxu0 0.0
        %4162 = vmatprep.subr.mxu0 0.0
        %4163 = vmatpush1.msra.mxu0 0.0
        %4164 = vmatprep.subr.mxu0 0.0
        %4165 = vmatpush1.msra.mxu0 0.0
        %4166 = vmatprep.subr.mxu0 0.0
        %4167 = vmatpush1.msra.mxu0 0.0
        %4168 = vmatprep.subr.mxu0 0.0
        %4169 = vmatpush1.msra.mxu0 0.0
        %4170 = vmatprep.mubr.f32.mxu0 0.0
        %4171 = vmatmul.mubr.f32.gmra.mrb[0].mxu0 %v765
        %v4172 = vpop.f32.mrb[0].mxu0
        %v4173 = vadd.f32 %v4104, %v4172
        %v4174 = vpop.f32.mrb[0].mxu0
        %4175 = vdwg.mxu0
        %s4176 = scalar_lea.vmem %s11, 1280
        %v4177 = vld [vmem:[%s4176] sm:$0xff]
        %v4178 = vld [vmem:[%s4176 + $0x8] sm:$0xff]
        %v4179 = vld [vmem:[%s4176 + $0x10] sm:$0xff]
        %v4180 = vld [vmem:[%s4176 + $0x18] sm:$0xff]
        %v4181 = vld [vmem:[%s4176 + $0x20] sm:$0xff]
        %v4182 = vld [vmem:[%s4176 + $0x28] sm:$0xff]
        %v4183 = vld [vmem:[%s4176 + $0x30] sm:$0xff]
        %v4184 = vld [vmem:[%s4176 + $0x38] sm:$0xff]
        %v4185 = vld [vmem:[%s4176 + $0x40] sm:$0xff]
        %v4186 = vld [vmem:[%s4176 + $0x48] sm:$0xff]
        %v4187 = vld [vmem:[%s4176 + $0x50] sm:$0xff]
        %v4188 = vld [vmem:[%s4176 + $0x58] sm:$0xff]
        %v4189 = vld [vmem:[%s4176 + $0x60] sm:$0xff]
        %v4190 = vld [vmem:[%s4176 + $0x68] sm:$0xff]
        %v4191 = vld [vmem:[%s4176 + $0x70] sm:$0xff]
        %v4192 = vld [vmem:[%s4176 + $0x78] sm:$0xff]
        %s4193 = scalar_lea.vmem %s12, 10
        %v4194 = vld [vmem:[%s4193] sm:$0x1]
        %v4196 = vlaneseq
        %v4197 = vshrl.u32 %v4196, 7
        %v4198 = vsub.s32 0, %v4197
        %v4199 = vrot.slane %v4194, %v4198
        %4201 = vmatprep.subr.mxu0 0.0
        %4202 = vmatpush1.msra.mxu0 %v4177
        %4203 = vmatprep.subr.mxu0 0.0
        %4204 = vmatpush1.msra.mxu0 %v4178
        %4205 = vmatprep.subr.mxu0 0.0
        %4206 = vmatpush1.msra.mxu0 %v4179
        %4207 = vmatprep.subr.mxu0 0.0
        %4208 = vmatpush1.msra.mxu0 %v4180
        %4209 = vmatprep.subr.mxu0 0.0
        %4210 = vmatpush1.msra.mxu0 %v4181
        %4211 = vmatprep.subr.mxu0 0.0
        %4212 = vmatpush1.msra.mxu0 %v4182
        %4213 = vmatprep.subr.mxu0 0.0
        %4214 = vmatpush1.msra.mxu0 %v4183
        %4215 = vmatprep.subr.mxu0 0.0
        %4216 = vmatpush1.msra.mxu0 %v4184
        %4217 = vmatprep.subr.mxu0 0.0
        %4218 = vmatpush1.msra.mxu0 %v4185
        %4219 = vmatprep.subr.mxu0 0.0
        %4220 = vmatpush1.msra.mxu0 %v4186
        %4221 = vmatprep.subr.mxu0 0.0
        %4222 = vmatpush1.msra.mxu0 %v4187
        %4223 = vmatprep.subr.mxu0 0.0
        %4224 = vmatpush1.msra.mxu0 %v4188
        %4225 = vmatprep.subr.mxu0 0.0
        %4226 = vmatpush1.msra.mxu0 %v4189
        %4227 = vmatprep.subr.mxu0 0.0
        %4228 = vmatpush1.msra.mxu0 %v4190
        %4229 = vmatprep.subr.mxu0 0.0
        %4230 = vmatpush1.msra.mxu0 %v4191
        %4231 = vmatprep.subr.mxu0 0.0
        %4232 = vmatpush1.msra.mxu0 %v4192
        %4233 = vmatprep.subr.mxu0 0.0
        %4234 = vmatpush1.msra.mxu0 0.0
        %4235 = vmatprep.subr.mxu0 0.0
        %4236 = vmatpush1.msra.mxu0 0.0
        %4237 = vmatprep.subr.mxu0 0.0
        %4238 = vmatpush1.msra.mxu0 0.0
        %4239 = vmatprep.subr.mxu0 0.0
        %4240 = vmatpush1.msra.mxu0 0.0
        %4241 = vmatprep.subr.mxu0 0.0
        %4242 = vmatpush1.msra.mxu0 0.0
        %4243 = vmatprep.subr.mxu0 0.0
        %4244 = vmatpush1.msra.mxu0 0.0
        %4245 = vmatprep.subr.mxu0 0.0
        %4246 = vmatpush1.msra.mxu0 0.0
        %4247 = vmatprep.subr.mxu0 0.0
        %4248 = vmatpush1.msra.mxu0 0.0
        %4249 = vmatprep.subr.mxu0 0.0
        %4250 = vmatpush1.msra.mxu0 0.0
        %4251 = vmatprep.subr.mxu0 0.0
        %4252 = vmatpush1.msra.mxu0 0.0
        %4253 = vmatprep.subr.mxu0 0.0
        %4254 = vmatpush1.msra.mxu0 0.0
        %4255 = vmatprep.subr.mxu0 0.0
        %4256 = vmatpush1.msra.mxu0 0.0
        %4257 = vmatprep.subr.mxu0 0.0
        %4258 = vmatpush1.msra.mxu0 0.0
        %4259 = vmatprep.subr.mxu0 0.0
        %4260 = vmatpush1.msra.mxu0 0.0
        %4261 = vmatprep.subr.mxu0 0.0
        %4262 = vmatpush1.msra.mxu0 0.0
        %4263 = vmatprep.subr.mxu0 0.0
        %4264 = vmatpush1.msra.mxu0 0.0
        %4265 = vmatprep.mubr.f32.mxu0 0.0
        %4266 = vmatmul.mubr.f32.gmra.mrb[0].mxu0 %v765
        %v4267 = vpop.f32.mrb[0].mxu0
        %v4268 = vadd.f32 %v4199, %v4267
        %v4269 = vpop.f32.mrb[0].mxu0
        %4270 = vdwg.mxu0
        %v4272 = vsel %vm1085, %v4080, 0
        %v4275 = vsel %vm1085, %v4173, 0
        %4277 = vmatprep.subr.mxu0 0.0
        %4278 = vmatpush1.xpose.msra.mxu0 %v4275
        %4279 = vmatprep.subr.mxu0 0.0
        %4280 = vmatpush1.xpose.msra.mxu0 0.0
        %4281 = vmatprep.subr.mxu0 0.0
        %4282 = vmatpush1.xpose.msra.mxu0 0.0
        %4283 = vmatprep.subr.mxu0 0.0
        %4284 = vmatpush1.xpose.msra.mxu0 0.0
        %4285 = vmatprep.subr.mxu0 0.0
        %4286 = vmatpush1.xpose.msra.mxu0 0.0
        %4287 = vmatprep.subr.mxu0 0.0
        %4288 = vmatpush1.xpose.msra.mxu0 0.0
        %4289 = vmatprep.subr.mxu0 0.0
        %4290 = vmatpush1.xpose.msra.mxu0 0.0
        %4291 = vmatprep.subr.mxu0 0.0
        %4292 = vmatpush1.xpose.msra.mxu0 0.0
        %4293 = vmatprep.subr.mxu0 0.0
        %4294 = vmatpush1.xpose.msra.mxu0 0.0
        %4295 = vmatprep.subr.mxu0 0.0
        %4296 = vmatpush1.xpose.msra.mxu0 0.0
        %4297 = vmatprep.subr.mxu0 0.0
        %4298 = vmatpush1.xpose.msra.mxu0 0.0
        %4299 = vmatprep.subr.mxu0 0.0
        %4300 = vmatpush1.xpose.msra.mxu0 0.0
        %4301 = vmatprep.subr.mxu0 0.0
        %4302 = vmatpush1.xpose.msra.mxu0 0.0
        %4303 = vmatprep.subr.mxu0 0.0
        %4304 = vmatpush1.xpose.msra.mxu0 0.0
        %4305 = vmatprep.subr.mxu0 0.0
        %4306 = vmatpush1.xpose.msra.mxu0 0.0
        %4307 = vmatprep.subr.mxu0 0.0
        %4308 = vmatpush1.xpose.msra.mxu0 0.0
        %4309 = vmatprep.subr.mxu0 0.0
        %4310 = vmatpush1.xpose.msra.mxu0 0.0
        %4311 = vmatprep.subr.mxu0 0.0
        %4312 = vmatpush1.xpose.msra.mxu0 0.0
        %4313 = vmatprep.subr.mxu0 0.0
        %4314 = vmatpush1.xpose.msra.mxu0 0.0
        %4315 = vmatprep.subr.mxu0 0.0
        %4316 = vmatpush1.xpose.msra.mxu0 0.0
        %4317 = vmatprep.subr.mxu0 0.0
        %4318 = vmatpush1.xpose.msra.mxu0 0.0
        %4319 = vmatprep.subr.mxu0 0.0
        %4320 = vmatpush1.xpose.msra.mxu0 0.0
        %4321 = vmatprep.subr.mxu0 0.0
        %4322 = vmatpush1.xpose.msra.mxu0 0.0
        %4323 = vmatprep.subr.mxu0 0.0
        %4324 = vmatpush1.xpose.msra.mxu0 0.0
        %4325 = vmatprep.subr.mxu0 0.0
        %4326 = vmatpush1.xpose.msra.mxu0 0.0
        %4327 = vmatprep.subr.mxu0 0.0
        %4328 = vmatpush1.xpose.msra.mxu0 0.0
        %4329 = vmatprep.subr.mxu0 0.0
        %4330 = vmatpush1.xpose.msra.mxu0 0.0
        %4331 = vmatprep.subr.mxu0 0.0
        %4332 = vmatpush1.xpose.msra.mxu0 0.0
        %4333 = vmatprep.subr.mxu0 0.0
        %4334 = vmatpush1.xpose.msra.mxu0 0.0
        %4335 = vmatprep.subr.mxu0 0.0
        %4336 = vmatpush1.xpose.msra.mxu0 0.0
        %4337 = vmatprep.subr.mxu0 0.0
        %4338 = vmatpush1.xpose.msra.mxu0 0.0
        %4339 = vmatprep.subr.mxu0 0.0
        %4340 = vmatpush1.xpose.msra.mxu0 0.0
        %4341 = vmatprep.mubr.f32.mxu0 0.0
        %4342 = vmatmul.mubr.f32.gmra.mrb[0].mxu0 %v4272
        %v4343 = vpop.f32.mrb[0].mxu0
        %v4344 = vadd.f32 %v3222, %v4343
        %v4345 = vpop.f32.mrb[0].mxu0
        %4346 = vdwg.mxu0
        %v4347 = vsel %vm1162, %v4344, -inf
        %4348 = vmax.xlane.f32.xlu0 %v4347
        %v4349 = vpop.xlane.xlu0 %4348
        %v4350 = vsub.f32 %v4344, %v4349
        %v4351 = vmul.f32 %v4350, 1.442695
        %v4352 = vpow.pop %v4351
        %v4353 = vsel %vm1162, %v4352, 0.0
        %4354 = vadd.xlane.f32.xlu0 %v4353
        %v4355 = vpop.xlane.xlu0 %4354
        %v4356 = vrcp.pop %v4355
        %v4357 = vmul.f32 %v4352, %v4356
        %v4359 = vsel %vm1162, %v4357, 0
        %4361 = vmatprep.subr.mxu0 0.0
        %4362 = vmatpush1.msra.mxu0 %v4268
        %4363 = vmatprep.subr.mxu0 0.0
        %4364 = vmatpush1.msra.mxu0 0.0
        %4365 = vmatprep.subr.mxu0 0.0
        %4366 = vmatpush1.msra.mxu0 0.0
        %4367 = vmatprep.subr.mxu0 0.0
        %4368 = vmatpush1.msra.mxu0 0.0
        %4369 = vmatprep.subr.mxu0 0.0
        %4370 = vmatpush1.msra.mxu0 0.0
        %4371 = vmatprep.subr.mxu0 0.0
        %4372 = vmatpush1.msra.mxu0 0.0
        %4373 = vmatprep.subr.mxu0 0.0
        %4374 = vmatpush1.msra.mxu0 0.0
        %4375 = vmatprep.subr.mxu0 0.0
        %4376 = vmatpush1.msra.mxu0 0.0
        %4377 = vmatprep.subr.mxu0 0.0
        %4378 = vmatpush1.msra.mxu0 0.0
        %4379 = vmatprep.subr.mxu0 0.0
        %4380 = vmatpush1.msra.mxu0 0.0
        %4381 = vmatprep.subr.mxu0 0.0
        %4382 = vmatpush1.msra.mxu0 0.0
        %4383 = vmatprep.subr.mxu0 0.0
        %4384 = vmatpush1.msra.mxu0 0.0
        %4385 = vmatprep.subr.mxu0 0.0
        %4386 = vmatpush1.msra.mxu0 0.0
        %4387 = vmatprep.subr.mxu0 0.0
        %4388 = vmatpush1.msra.mxu0 0.0
        %4389 = vmatprep.subr.mxu0 0.0
        %4390 = vmatpush1.msra.mxu0 0.0
        %4391 = vmatprep.subr.mxu0 0.0
        %4392 = vmatpush1.msra.mxu0 0.0
        %4393 = vmatprep.subr.mxu0 0.0
        %4394 = vmatpush1.msra.mxu0 0.0
        %4395 = vmatprep.subr.mxu0 0.0
        %4396 = vmatpush1.msra.mxu0 0.0
        %4397 = vmatprep.subr.mxu0 0.0
        %4398 = vmatpush1.msra.mxu0 0.0
        %4399 = vmatprep.subr.mxu0 0.0
        %4400 = vmatpush1.msra.mxu0 0.0
        %4401 = vmatprep.subr.mxu0 0.0
        %4402 = vmatpush1.msra.mxu0 0.0
        %4403 = vmatprep.subr.mxu0 0.0
        %4404 = vmatpush1.msra.mxu0 0.0
        %4405 = vmatprep.subr.mxu0 0.0
        %4406 = vmatpush1.msra.mxu0 0.0
        %4407 = vmatprep.subr.mxu0 0.0
        %4408 = vmatpush1.msra.mxu0 0.0
        %4409 = vmatprep.subr.mxu0 0.0
        %4410 = vmatpush1.msra.mxu0 0.0
        %4411 = vmatprep.subr.mxu0 0.0
        %4412 = vmatpush1.msra.mxu0 0.0
        %4413 = vmatprep.subr.mxu0 0.0
        %4414 = vmatpush1.msra.mxu0 0.0
        %4415 = vmatprep.subr.mxu0 0.0
        %4416 = vmatpush1.msra.mxu0 0.0
        %4417 = vmatprep.subr.mxu0 0.0
        %4418 = vmatpush1.msra.mxu0 0.0
        %4419 = vmatprep.subr.mxu0 0.0
        %4420 = vmatpush1.msra.mxu0 0.0
        %4421 = vmatprep.subr.mxu0 0.0
        %4422 = vmatpush1.msra.mxu0 0.0
        %4423 = vmatprep.subr.mxu0 0.0
        %4424 = vmatpush1.msra.mxu0 0.0
        %4425 = vmatprep.mubr.f32.mxu0 0.0
        %4426 = vmatmul.mubr.f32.gmra.mrb[0].mxu0 %v4359
        %v4427 = vpop.f32.mrb[0].mxu0
        %v4428 = vadd.f32 0.0, %v4427
        %v4429 = vpop.f32.mrb[0].mxu0
        %4430 = vdwg.mxu0
        %s4431 = scalar_lea.vmem %s13, 64
        %v4432 = vld [vmem:[%s4431] sm:$0xff]
        %v4433 = vld [vmem:[%s4431 + $0x8] sm:$0xff]
        %v4434 = vld [vmem:[%s4431 + $0x10] sm:$0xff]
        %v4435 = vld [vmem:[%s4431 + $0x18] sm:$0xff]
        %v4437 = vsel %vm1085, %v4428, 0
        %4439 = vmatprep.subr.mxu0 0.0
        %4440 = vmatpush1.msra.mxu0 %v4432
        %4441 = vmatprep.subr.mxu0 0.0
        %4442 = vmatpush1.msra.mxu0 %v4433
        %4443 = vmatprep.subr.mxu0 0.0
        %4444 = vmatpush1.msra.mxu0 %v4434
        %4445 = vmatprep.subr.mxu0 0.0
        %4446 = vmatpush1.msra.mxu0 %v4435
        %4447 = vmatprep.subr.mxu0 0.0
        %4448 = vmatpush1.msra.mxu0 0.0
        %4449 = vmatprep.subr.mxu0 0.0
        %4450 = vmatpush1.msra.mxu0 0.0
        %4451 = vmatprep.subr.mxu0 0.0
        %4452 = vmatpush1.msra.mxu0 0.0
        %4453 = vmatprep.subr.mxu0 0.0
        %4454 = vmatpush1.msra.mxu0 0.0
        %4455 = vmatprep.subr.mxu0 0.0
        %4456 = vmatpush1.msra.mxu0 0.0
        %4457 = vmatprep.subr.mxu0 0.0
        %4458 = vmatpush1.msra.mxu0 0.0
        %4459 = vmatprep.subr.mxu0 0.0
        %4460 = vmatpush1.msra.mxu0 0.0
        %4461 = vmatprep.subr.mxu0 0.0
        %4462 = vmatpush1.msra.mxu0 0.0
        %4463 = vmatprep.subr.mxu0 0.0
        %4464 = vmatpush1.msra.mxu0 0.0
        %4465 = vmatprep.subr.mxu0 0.0
        %4466 = vmatpush1.msra.mxu0 0.0
        %4467 = vmatprep.subr.mxu0 0.0
        %4468 = vmatpush1.msra.mxu0 0.0
        %4469 = vmatprep.subr.mxu0 0.0
        %4470 = vmatpush1.msra.mxu0 0.0
        %4471 = vmatprep.subr.mxu0 0.0
        %4472 = vmatpush1.msra.mxu0 0.0
        %4473 = vmatprep.subr.mxu0 0.0
        %4474 = vmatpush1.msra.mxu0 0.0
        %4475 = vmatprep.subr.mxu0 0.0
        %4476 = vmatpush1.msra.mxu0 0.0
        %4477 = vmatprep.subr.mxu0 0.0
        %4478 = vmatpush1.msra.mxu0 0.0
        %4479 = vmatprep.subr.mxu0 0.0
        %4480 = vmatpush1.msra.mxu0 0.0
        %4481 = vmatprep.subr.mxu0 0.0
        %4482 = vmatpush1.msra.mxu0 0.0
        %4483 = vmatprep.subr.mxu0 0.0
        %4484 = vmatpush1.msra.mxu0 0.0
        %4485 = vmatprep.subr.mxu0 0.0
        %4486 = vmatpush1.msra.mxu0 0.0
        %4487 = vmatprep.subr.mxu0 0.0
        %4488 = vmatpush1.msra.mxu0 0.0
        %4489 = vmatprep.subr.mxu0 0.0
        %4490 = vmatpush1.msra.mxu0 0.0
        %4491 = vmatprep.subr.mxu0 0.0
        %4492 = vmatpush1.msra.mxu0 0.0
        %4493 = vmatprep.subr.mxu0 0.0
        %4494 = vmatpush1.msra.mxu0 0.0
        %4495 = vmatprep.subr.mxu0 0.0
        %4496 = vmatpush1.msra.mxu0 0.0
        %4497 = vmatprep.subr.mxu0 0.0
        %4498 = vmatpush1.msra.mxu0 0.0
        %4499 = vmatprep.subr.mxu0 0.0
        %4500 = vmatpush1.msra.mxu0 0.0
        %4501 = vmatprep.subr.mxu0 0.0
        %4502 = vmatpush1.msra.mxu0 0.0
        %4503 = vmatprep.mubr.f32.mxu0 0.0
        %4504 = vmatmul.mubr.f32.gmra.mrb[0].mxu0 %v4437
        %v4505 = vpop.f32.mrb[0].mxu0
        %v4506 = vadd.f32 0.0, %v4505
        %v4507 = vpop.f32.mrb[0].mxu0
        %4508 = vdwg.mxu0
        %v4509 = vadd.f32 %v3982, %v4506
        %s4510 = scalar_lea.vmem %s11, 384
        %v4511 = vld [vmem:[%s4510] sm:$0xff]
        %v4512 = vld [vmem:[%s4510 + $0x8] sm:$0xff]
        %v4513 = vld [vmem:[%s4510 + $0x10] sm:$0xff]
        %v4514 = vld [vmem:[%s4510 + $0x18] sm:$0xff]
        %v4515 = vld [vmem:[%s4510 + $0x20] sm:$0xff]
        %v4516 = vld [vmem:[%s4510 + $0x28] sm:$0xff]
        %v4517 = vld [vmem:[%s4510 + $0x30] sm:$0xff]
        %v4518 = vld [vmem:[%s4510 + $0x38] sm:$0xff]
        %v4519 = vld [vmem:[%s4510 + $0x40] sm:$0xff]
        %v4520 = vld [vmem:[%s4510 + $0x48] sm:$0xff]
        %v4521 = vld [vmem:[%s4510 + $0x50] sm:$0xff]
        %v4522 = vld [vmem:[%s4510 + $0x58] sm:$0xff]
        %v4523 = vld [vmem:[%s4510 + $0x60] sm:$0xff]
        %v4524 = vld [vmem:[%s4510 + $0x68] sm:$0xff]
        %v4525 = vld [vmem:[%s4510 + $0x70] sm:$0xff]
        %v4526 = vld [vmem:[%s4510 + $0x78] sm:$0xff]
        %s4527 = scalar_lea.vmem %s12, 3
        %v4528 = vld [vmem:[%s4527] sm:$0x1]
        %v4530 = vlaneseq
        %v4531 = vshrl.u32 %v4530, 7
        %v4532 = vsub.s32 0, %v4531
        %v4533 = vrot.slane %v4528, %v4532
        %4535 = vmatprep.subr.mxu0 0.0
        %4536 = vmatpush1.msra.mxu0 %v4511
        %4537 = vmatprep.subr.mxu0 0.0
        %4538 = vmatpush1.msra.mxu0 %v4512
        %4539 = vmatprep.subr.mxu0 0.0
        %4540 = vmatpush1.msra.mxu0 %v4513
        %4541 = vmatprep.subr.mxu0 0.0
        %4542 = vmatpush1.msra.mxu0 %v4514
        %4543 = vmatprep.subr.mxu0 0.0
        %4544 = vmatpush1.msra.mxu0 %v4515
        %4545 = vmatprep.subr.mxu0 0.0
        %4546 = vmatpush1.msra.mxu0 %v4516
        %4547 = vmatprep.subr.mxu0 0.0
        %4548 = vmatpush1.msra.mxu0 %v4517
        %4549 = vmatprep.subr.mxu0 0.0
        %4550 = vmatpush1.msra.mxu0 %v4518
        %4551 = vmatprep.subr.mxu0 0.0
        %4552 = vmatpush1.msra.mxu0 %v4519
        %4553 = vmatprep.subr.mxu0 0.0
        %4554 = vmatpush1.msra.mxu0 %v4520
        %4555 = vmatprep.subr.mxu0 0.0
        %4556 = vmatpush1.msra.mxu0 %v4521
        %4557 = vmatprep.subr.mxu0 0.0
        %4558 = vmatpush1.msra.mxu0 %v4522
        %4559 = vmatprep.subr.mxu0 0.0
        %4560 = vmatpush1.msra.mxu0 %v4523
        %4561 = vmatprep.subr.mxu0 0.0
        %4562 = vmatpush1.msra.mxu0 %v4524
        %4563 = vmatprep.subr.mxu0 0.0
        %4564 = vmatpush1.msra.mxu0 %v4525
        %4565 = vmatprep.subr.mxu0 0.0
        %4566 = vmatpush1.msra.mxu0 %v4526
        %4567 = vmatprep.subr.mxu0 0.0
        %4568 = vmatpush1.msra.mxu0 0.0
        %4569 = vmatprep.subr.mxu0 0.0
        %4570 = vmatpush1.msra.mxu0 0.0
        %4571 = vmatprep.subr.mxu0 0.0
        %4572 = vmatpush1.msra.mxu0 0.0
        %4573 = vmatprep.subr.mxu0 0.0
        %4574 = vmatpush1.msra.mxu0 0.0
        %4575 = vmatprep.subr.mxu0 0.0
        %4576 = vmatpush1.msra.mxu0 0.0
        %4577 = vmatprep.subr.mxu0 0.0
        %4578 = vmatpush1.msra.mxu0 0.0
        %4579 = vmatprep.subr.mxu0 0.0
        %4580 = vmatpush1.msra.mxu0 0.0
        %4581 = vmatprep.subr.mxu0 0.0
        %4582 = vmatpush1.msra.mxu0 0.0
        %4583 = vmatprep.subr.mxu0 0.0
        %4584 = vmatpush1.msra.mxu0 0.0
        %4585 = vmatprep.subr.mxu0 0.0
        %4586 = vmatpush1.msra.mxu0 0.0
        %4587 = vmatprep.subr.mxu0 0.0
        %4588 = vmatpush1.msra.mxu0 0.0
        %4589 = vmatprep.subr.mxu0 0.0
        %4590 = vmatpush1.msra.mxu0 0.0
        %4591 = vmatprep.subr.mxu0 0.0
        %4592 = vmatpush1.msra.mxu0 0.0
        %4593 = vmatprep.subr.mxu0 0.0
        %4594 = vmatpush1.msra.mxu0 0.0
        %4595 = vmatprep.subr.mxu0 0.0
        %4596 = vmatpush1.msra.mxu0 0.0
        %4597 = vmatprep.subr.mxu0 0.0
        %4598 = vmatpush1.msra.mxu0 0.0
        %4599 = vmatprep.mubr.f32.mxu0 0.0
        %4600 = vmatmul.mubr.f32.gmra.mrb[0].mxu0 %v2933
        %v4601 = vpop.f32.mrb[0].mxu0
        %v4602 = vadd.f32 %v4533, %v4601
        %v4603 = vpop.f32.mrb[0].mxu0
        %4604 = vdwg.mxu0
        %v4605 = vmul.f32 %v4602, 0.17677669
        %s4606 = scalar_lea.vmem %s11, 896
        %v4607 = vld [vmem:[%s4606] sm:$0xff]
        %v4608 = vld [vmem:[%s4606 + $0x8] sm:$0xff]
        %v4609 = vld [vmem:[%s4606 + $0x10] sm:$0xff]
        %v4610 = vld [vmem:[%s4606 + $0x18] sm:$0xff]
        %v4611 = vld [vmem:[%s4606 + $0x20] sm:$0xff]
        %v4612 = vld [vmem:[%s4606 + $0x28] sm:$0xff]
        %v4613 = vld [vmem:[%s4606 + $0x30] sm:$0xff]
        %v4614 = vld [vmem:[%s4606 + $0x38] sm:$0xff]
        %v4615 = vld [vmem:[%s4606 + $0x40] sm:$0xff]
        %v4616 = vld [vmem:[%s4606 + $0x48] sm:$0xff]
        %v4617 = vld [vmem:[%s4606 + $0x50] sm:$0xff]
        %v4618 = vld [vmem:[%s4606 + $0x58] sm:$0xff]
        %v4619 = vld [vmem:[%s4606 + $0x60] sm:$0xff]
        %v4620 = vld [vmem:[%s4606 + $0x68] sm:$0xff]
        %v4621 = vld [vmem:[%s4606 + $0x70] sm:$0xff]
        %v4622 = vld [vmem:[%s4606 + $0x78] sm:$0xff]
        %s4623 = scalar_lea.vmem %s12, 7
        %v4624 = vld [vmem:[%s4623] sm:$0x1]
        %v4626 = vlaneseq
        %v4627 = vshrl.u32 %v4626, 7
        %v4628 = vsub.s32 0, %v4627
        %v4629 = vrot.slane %v4624, %v4628
        %4631 = vmatprep.subr.mxu0 0.0
        %4632 = vmatpush1.msra.mxu0 %v4607
        %4633 = vmatprep.subr.mxu0 0.0
        %4634 = vmatpush1.msra.mxu0 %v4608
        %4635 = vmatprep.subr.mxu0 0.0
        %4636 = vmatpush1.msra.mxu0 %v4609
        %4637 = vmatprep.subr.mxu0 0.0
        %4638 = vmatpush1.msra.mxu0 %v4610
        %4639 = vmatprep.subr.mxu0 0.0
        %4640 = vmatpush1.msra.mxu0 %v4611
        %4641 = vmatprep.subr.mxu0 0.0
        %4642 = vmatpush1.msra.mxu0 %v4612
        %4643 = vmatprep.subr.mxu0 0.0
        %4644 = vmatpush1.msra.mxu0 %v4613
        %4645 = vmatprep.subr.mxu0 0.0
        %4646 = vmatpush1.msra.mxu0 %v4614
        %4647 = vmatprep.subr.mxu0 0.0
        %4648 = vmatpush1.msra.mxu0 %v4615
        %4649 = vmatprep.subr.mxu0 0.0
        %4650 = vmatpush1.msra.mxu0 %v4616
        %4651 = vmatprep.subr.mxu0 0.0
        %4652 = vmatpush1.msra.mxu0 %v4617
        %4653 = vmatprep.subr.mxu0 0.0
        %4654 = vmatpush1.msra.mxu0 %v4618
        %4655 = vmatprep.subr.mxu0 0.0
        %4656 = vmatpush1.msra.mxu0 %v4619
        %4657 = vmatprep.subr.mxu0 0.0
        %4658 = vmatpush1.msra.mxu0 %v4620
        %4659 = vmatprep.subr.mxu0 0.0
        %4660 = vmatpush1.msra.mxu0 %v4621
        %4661 = vmatprep.subr.mxu0 0.0
        %4662 = vmatpush1.msra.mxu0 %v4622
        %4663 = vmatprep.subr.mxu0 0.0
        %4664 = vmatpush1.msra.mxu0 0.0
        %4665 = vmatprep.subr.mxu0 0.0
        %4666 = vmatpush1.msra.mxu0 0.0
        %4667 = vmatprep.subr.mxu0 0.0
        %4668 = vmatpush1.msra.mxu0 0.0
        %4669 = vmatprep.subr.mxu0 0.0
        %4670 = vmatpush1.msra.mxu0 0.0
        %4671 = vmatprep.subr.mxu0 0.0
        %4672 = vmatpush1.msra.mxu0 0.0
        %4673 = vmatprep.subr.mxu0 0.0
        %4674 = vmatpush1.msra.mxu0 0.0
        %4675 = vmatprep.subr.mxu0 0.0
        %4676 = vmatpush1.msra.mxu0 0.0
        %4677 = vmatprep.subr.mxu0 0.0
        %4678 = vmatpush1.msra.mxu0 0.0
        %4679 = vmatprep.subr.mxu0 0.0
        %4680 = vmatpush1.msra.mxu0 0.0
        %4681 = vmatprep.subr.mxu0 0.0
        %4682 = vmatpush1.msra.mxu0 0.0
        %4683 = vmatprep.subr.mxu0 0.0
        %4684 = vmatpush1.msra.mxu0 0.0
        %4685 = vmatprep.subr.mxu0 0.0
        %4686 = vmatpush1.msra.mxu0 0.0
        %4687 = vmatprep.subr.mxu0 0.0
        %4688 = vmatpush1.msra.mxu0 0.0
        %4689 = vmatprep.subr.mxu0 0.0
        %4690 = vmatpush1.msra.mxu0 0.0
        %4691 = vmatprep.subr.mxu0 0.0
        %4692 = vmatpush1.msra.mxu0 0.0
        %4693 = vmatprep.subr.mxu0 0.0
        %4694 = vmatpush1.msra.mxu0 0.0
        %4695 = vmatprep.mubr.f32.mxu0 0.0
        %4696 = vmatmul.mubr.f32.gmra.mrb[0].mxu0 %v765
        %v4697 = vpop.f32.mrb[0].mxu0
        %v4698 = vadd.f32 %v4629, %v4697
        %v4699 = vpop.f32.mrb[0].mxu0
        %4700 = vdwg.mxu0
        %s4701 = scalar_lea.vmem %s11, 1408
        %v4702 = vld [vmem:[%s4701] sm:$0xff]
        %v4703 = vld [vmem:[%s4701 + $0x8] sm:$0xff]
        %v4704 = vld [vmem:[%s4701 + $0x10] sm:$0xff]
        %v4705 = vld [vmem:[%s4701 + $0x18] sm:$0xff]
        %v4706 = vld [vmem:[%s4701 + $0x20] sm:$0xff]
        %v4707 = vld [vmem:[%s4701 + $0x28] sm:$0xff]
        %v4708 = vld [vmem:[%s4701 + $0x30] sm:$0xff]
        %v4709 = vld [vmem:[%s4701 + $0x38] sm:$0xff]
        %v4710 = vld [vmem:[%s4701 + $0x40] sm:$0xff]
        %v4711 = vld [vmem:[%s4701 + $0x48] sm:$0xff]
        %v4712 = vld [vmem:[%s4701 + $0x50] sm:$0xff]
        %v4713 = vld [vmem:[%s4701 + $0x58] sm:$0xff]
        %v4714 = vld [vmem:[%s4701 + $0x60] sm:$0xff]
        %v4715 = vld [vmem:[%s4701 + $0x68] sm:$0xff]
        %v4716 = vld [vmem:[%s4701 + $0x70] sm:$0xff]
        %v4717 = vld [vmem:[%s4701 + $0x78] sm:$0xff]
        %s4718 = scalar_lea.vmem %s12, 11
        %v4719 = vld [vmem:[%s4718] sm:$0x1]
        %v4721 = vlaneseq
        %v4722 = vshrl.u32 %v4721, 7
        %v4723 = vsub.s32 0, %v4722
        %v4724 = vrot.slane %v4719, %v4723
        %4726 = vmatprep.subr.mxu0 0.0
        %4727 = vmatpush1.msra.mxu0 %v4702
        %4728 = vmatprep.subr.mxu0 0.0
        %4729 = vmatpush1.msra.mxu0 %v4703
        %4730 = vmatprep.subr.mxu0 0.0
        %4731 = vmatpush1.msra.mxu0 %v4704
        %4732 = vmatprep.subr.mxu0 0.0
        %4733 = vmatpush1.msra.mxu0 %v4705
        %4734 = vmatprep.subr.mxu0 0.0
        %4735 = vmatpush1.msra.mxu0 %v4706
        %4736 = vmatprep.subr.mxu0 0.0
        %4737 = vmatpush1.msra.mxu0 %v4707
        %4738 = vmatprep.subr.mxu0 0.0
        %4739 = vmatpush1.msra.mxu0 %v4708
        %4740 = vmatprep.subr.mxu0 0.0
        %4741 = vmatpush1.msra.mxu0 %v4709
        %4742 = vmatprep.subr.mxu0 0.0
        %4743 = vmatpush1.msra.mxu0 %v4710
        %4744 = vmatprep.subr.mxu0 0.0
        %4745 = vmatpush1.msra.mxu0 %v4711
        %4746 = vmatprep.subr.mxu0 0.0
        %4747 = vmatpush1.msra.mxu0 %v4712
        %4748 = vmatprep.subr.mxu0 0.0
        %4749 = vmatpush1.msra.mxu0 %v4713
        %4750 = vmatprep.subr.mxu0 0.0
        %4751 = vmatpush1.msra.mxu0 %v4714
        %4752 = vmatprep.subr.mxu0 0.0
        %4753 = vmatpush1.msra.mxu0 %v4715
        %4754 = vmatprep.subr.mxu0 0.0
        %4755 = vmatpush1.msra.mxu0 %v4716
        %4756 = vmatprep.subr.mxu0 0.0
        %4757 = vmatpush1.msra.mxu0 %v4717
        %4758 = vmatprep.subr.mxu0 0.0
        %4759 = vmatpush1.msra.mxu0 0.0
        %4760 = vmatprep.subr.mxu0 0.0
        %4761 = vmatpush1.msra.mxu0 0.0
        %4762 = vmatprep.subr.mxu0 0.0
        %4763 = vmatpush1.msra.mxu0 0.0
        %4764 = vmatprep.subr.mxu0 0.0
        %4765 = vmatpush1.msra.mxu0 0.0
        %4766 = vmatprep.subr.mxu0 0.0
        %4767 = vmatpush1.msra.mxu0 0.0
        %4768 = vmatprep.subr.mxu0 0.0
        %4769 = vmatpush1.msra.mxu0 0.0
        %4770 = vmatprep.subr.mxu0 0.0
        %4771 = vmatpush1.msra.mxu0 0.0
        %4772 = vmatprep.subr.mxu0 0.0
        %4773 = vmatpush1.msra.mxu0 0.0
        %4774 = vmatprep.subr.mxu0 0.0
        %4775 = vmatpush1.msra.mxu0 0.0
        %4776 = vmatprep.subr.mxu0 0.0
        %4777 = vmatpush1.msra.mxu0 0.0
        %4778 = vmatprep.subr.mxu0 0.0
        %4779 = vmatpush1.msra.mxu0 0.0
        %4780 = vmatprep.subr.mxu0 0.0
        %4781 = vmatpush1.msra.mxu0 0.0
        %4782 = vmatprep.subr.mxu0 0.0
        %4783 = vmatpush1.msra.mxu0 0.0
        %4784 = vmatprep.subr.mxu0 0.0
        %4785 = vmatpush1.msra.mxu0 0.0
        %4786 = vmatprep.subr.mxu0 0.0
        %4787 = vmatpush1.msra.mxu0 0.0
        %4788 = vmatprep.subr.mxu0 0.0
        %4789 = vmatpush1.msra.mxu0 0.0
        %4790 = vmatprep.mubr.f32.mxu0 0.0
        %4791 = vmatmul.mubr.f32.gmra.mrb[0].mxu0 %v765
        %v4792 = vpop.f32.mrb[0].mxu0
        %v4793 = vadd.f32 %v4724, %v4792
        %v4794 = vpop.f32.mrb[0].mxu0
        %4795 = vdwg.mxu0
        %v4797 = vsel %vm1085, %v4605, 0
        %v4800 = vsel %vm1085, %v4698, 0
        %4802 = vmatprep.subr.mxu0 0.0
        %4803 = vmatpush1.xpose.msra.mxu0 %v4800
        %4804 = vmatprep.subr.mxu0 0.0
        %4805 = vmatpush1.xpose.msra.mxu0 0.0
        %4806 = vmatprep.subr.mxu0 0.0
        %4807 = vmatpush1.xpose.msra.mxu0 0.0
        %4808 = vmatprep.subr.mxu0 0.0
        %4809 = vmatpush1.xpose.msra.mxu0 0.0
        %4810 = vmatprep.subr.mxu0 0.0
        %4811 = vmatpush1.xpose.msra.mxu0 0.0
        %4812 = vmatprep.subr.mxu0 0.0
        %4813 = vmatpush1.xpose.msra.mxu0 0.0
        %4814 = vmatprep.subr.mxu0 0.0
        %4815 = vmatpush1.xpose.msra.mxu0 0.0
        %4816 = vmatprep.subr.mxu0 0.0
        %4817 = vmatpush1.xpose.msra.mxu0 0.0
        %4818 = vmatprep.subr.mxu0 0.0
        %4819 = vmatpush1.xpose.msra.mxu0 0.0
        %4820 = vmatprep.subr.mxu0 0.0
        %4821 = vmatpush1.xpose.msra.mxu0 0.0
        %4822 = vmatprep.subr.mxu0 0.0
        %4823 = vmatpush1.xpose.msra.mxu0 0.0
        %4824 = vmatprep.subr.mxu0 0.0
        %4825 = vmatpush1.xpose.msra.mxu0 0.0
        %4826 = vmatprep.subr.mxu0 0.0
        %4827 = vmatpush1.xpose.msra.mxu0 0.0
        %4828 = vmatprep.subr.mxu0 0.0
        %4829 = vmatpush1.xpose.msra.mxu0 0.0
        %4830 = vmatprep.subr.mxu0 0.0
        %4831 = vmatpush1.xpose.msra.mxu0 0.0
        %4832 = vmatprep.subr.mxu0 0.0
        %4833 = vmatpush1.xpose.msra.mxu0 0.0
        %4834 = vmatprep.subr.mxu0 0.0
        %4835 = vmatpush1.xpose.msra.mxu0 0.0
        %4836 = vmatprep.subr.mxu0 0.0
        %4837 = vmatpush1.xpose.msra.mxu0 0.0
        %4838 = vmatprep.subr.mxu0 0.0
        %4839 = vmatpush1.xpose.msra.mxu0 0.0
        %4840 = vmatprep.subr.mxu0 0.0
        %4841 = vmatpush1.xpose.msra.mxu0 0.0
        %4842 = vmatprep.subr.mxu0 0.0
        %4843 = vmatpush1.xpose.msra.mxu0 0.0
        %4844 = vmatprep.subr.mxu0 0.0
        %4845 = vmatpush1.xpose.msra.mxu0 0.0
        %4846 = vmatprep.subr.mxu0 0.0
        %4847 = vmatpush1.xpose.msra.mxu0 0.0
        %4848 = vmatprep.subr.mxu0 0.0
        %4849 = vmatpush1.xpose.msra.mxu0 0.0
        %4850 = vmatprep.subr.mxu0 0.0
        %4851 = vmatpush1.xpose.msra.mxu0 0.0
        %4852 = vmatprep.subr.mxu0 0.0
        %4853 = vmatpush1.xpose.msra.mxu0 0.0
        %4854 = vmatprep.subr.mxu0 0.0
        %4855 = vmatpush1.xpose.msra.mxu0 0.0
        %4856 = vmatprep.subr.mxu0 0.0
        %4857 = vmatpush1.xpose.msra.mxu0 0.0
        %4858 = vmatprep.subr.mxu0 0.0
        %4859 = vmatpush1.xpose.msra.mxu0 0.0
        %4860 = vmatprep.subr.mxu0 0.0
        %4861 = vmatpush1.xpose.msra.mxu0 0.0
        %4862 = vmatprep.subr.mxu0 0.0
        %4863 = vmatpush1.xpose.msra.mxu0 0.0
        %4864 = vmatprep.subr.mxu0 0.0
        %4865 = vmatpush1.xpose.msra.mxu0 0.0
        %4866 = vmatprep.mubr.f32.mxu0 0.0
        %4867 = vmatmul.mubr.f32.gmra.mrb[0].mxu0 %v4797
        %v4868 = vpop.f32.mrb[0].mxu0
        %v4869 = vadd.f32 %v3222, %v4868
        %v4870 = vpop.f32.mrb[0].mxu0
        %4871 = vdwg.mxu0
        %v4872 = vsel %vm1162, %v4869, -inf
        %4873 = vmax.xlane.f32.xlu0 %v4872
        %v4874 = vpop.xlane.xlu0 %4873
        %v4875 = vsub.f32 %v4869, %v4874
        %v4876 = vmul.f32 %v4875, 1.442695
        %v4877 = vpow.pop %v4876
        %v4878 = vsel %vm1162, %v4877, 0.0
        %4879 = vadd.xlane.f32.xlu0 %v4878
        %v4880 = vpop.xlane.xlu0 %4879
        %v4881 = vrcp.pop %v4880
        %v4882 = vmul.f32 %v4877, %v4881
        %v4884 = vsel %vm1162, %v4882, 0
        %4886 = vmatprep.subr.mxu0 0.0
        %4887 = vmatpush1.msra.mxu0 %v4793
        %4888 = vmatprep.subr.mxu0 0.0
        %4889 = vmatpush1.msra.mxu0 0.0
        %4890 = vmatprep.subr.mxu0 0.0
        %4891 = vmatpush1.msra.mxu0 0.0
        %4892 = vmatprep.subr.mxu0 0.0
        %4893 = vmatpush1.msra.mxu0 0.0
        %4894 = vmatprep.subr.mxu0 0.0
        %4895 = vmatpush1.msra.mxu0 0.0
        %4896 = vmatprep.subr.mxu0 0.0
        %4897 = vmatpush1.msra.mxu0 0.0
        %4898 = vmatprep.subr.mxu0 0.0
        %4899 = vmatpush1.msra.mxu0 0.0
        %4900 = vmatprep.subr.mxu0 0.0
        %4901 = vmatpush1.msra.mxu0 0.0
        %4902 = vmatprep.subr.mxu0 0.0
        %4903 = vmatpush1.msra.mxu0 0.0
        %4904 = vmatprep.subr.mxu0 0.0
        %4905 = vmatpush1.msra.mxu0 0.0
        %4906 = vmatprep.subr.mxu0 0.0
        %4907 = vmatpush1.msra.mxu0 0.0
        %4908 = vmatprep.subr.mxu0 0.0
        %4909 = vmatpush1.msra.mxu0 0.0
        %4910 = vmatprep.subr.mxu0 0.0
        %4911 = vmatpush1.msra.mxu0 0.0
        %4912 = vmatprep.subr.mxu0 0.0
        %4913 = vmatpush1.msra.mxu0 0.0
        %4914 = vmatprep.subr.mxu0 0.0
        %4915 = vmatpush1.msra.mxu0 0.0
        %4916 = vmatprep.subr.mxu0 0.0
        %4917 = vmatpush1.msra.mxu0 0.0
        %4918 = vmatprep.subr.mxu0 0.0
        %4919 = vmatpush1.msra.mxu0 0.0
        %4920 = vmatprep.subr.mxu0 0.0
        %4921 = vmatpush1.msra.mxu0 0.0
        %4922 = vmatprep.subr.mxu0 0.0
        %4923 = vmatpush1.msra.mxu0 0.0
        %4924 = vmatprep.subr.mxu0 0.0
        %4925 = vmatpush1.msra.mxu0 0.0
        %4926 = vmatprep.subr.mxu0 0.0
        %4927 = vmatpush1.msra.mxu0 0.0
        %4928 = vmatprep.subr.mxu0 0.0
        %4929 = vmatpush1.msra.mxu0 0.0
        %4930 = vmatprep.subr.mxu0 0.0
        %4931 = vmatpush1.msra.mxu0 0.0
        %4932 = vmatprep.subr.mxu0 0.0
        %4933 = vmatpush1.msra.mxu0 0.0
        %4934 = vmatprep.subr.mxu0 0.0
        %4935 = vmatpush1.msra.mxu0 0.0
        %4936 = vmatprep.subr.mxu0 0.0
        %4937 = vmatpush1.msra.mxu0 0.0
        %4938 = vmatprep.subr.mxu0 0.0
        %4939 = vmatpush1.msra.mxu0 0.0
        %4940 = vmatprep.subr.mxu0 0.0
        %4941 = vmatpush1.msra.mxu0 0.0
        %4942 = vmatprep.subr.mxu0 0.0
        %4943 = vmatpush1.msra.mxu0 0.0
        %4944 = vmatprep.subr.mxu0 0.0
        %4945 = vmatpush1.msra.mxu0 0.0
        %4946 = vmatprep.subr.mxu0 0.0
        %4947 = vmatpush1.msra.mxu0 0.0
        %4948 = vmatprep.subr.mxu0 0.0
        %4949 = vmatpush1.msra.mxu0 0.0
        %4950 = vmatprep.mubr.f32.mxu0 0.0
        %4951 = vmatmul.mubr.f32.gmra.mrb[0].mxu0 %v4884
        %v4952 = vpop.f32.mrb[0].mxu0
        %v4953 = vadd.f32 0.0, %v4952
        %v4954 = vpop.f32.mrb[0].mxu0
        %4955 = vdwg.mxu0
        %s4956 = scalar_lea.vmem %s13, 96
        %v4957 = vld [vmem:[%s4956] sm:$0xff]
        %v4958 = vld [vmem:[%s4956 + $0x8] sm:$0xff]
        %v4959 = vld [vmem:[%s4956 + $0x10] sm:$0xff]
        %v4960 = vld [vmem:[%s4956 + $0x18] sm:$0xff]
        %v4962 = vsel %vm1085, %v4953, 0
        %4964 = vmatprep.subr.mxu0 0.0
        %4965 = vmatpush1.msra.mxu0 %v4957
        %4966 = vmatprep.subr.mxu0 0.0
        %4967 = vmatpush1.msra.mxu0 %v4958
        %4968 = vmatprep.subr.mxu0 0.0
        %4969 = vmatpush1.msra.mxu0 %v4959
        %4970 = vmatprep.subr.mxu0 0.0
        %4971 = vmatpush1.msra.mxu0 %v4960
        %4972 = vmatprep.subr.mxu0 0.0
        %4973 = vmatpush1.msra.mxu0 0.0
        %4974 = vmatprep.subr.mxu0 0.0
        %4975 = vmatpush1.msra.mxu0 0.0
        %4976 = vmatprep.subr.mxu0 0.0
        %4977 = vmatpush1.msra.mxu0 0.0
        %4978 = vmatprep.subr.mxu0 0.0
        %4979 = vmatpush1.msra.mxu0 0.0
        %4980 = vmatprep.subr.mxu0 0.0
        %4981 = vmatpush1.msra.mxu0 0.0
        %4982 = vmatprep.subr.mxu0 0.0
        %4983 = vmatpush1.msra.mxu0 0.0
        %4984 = vmatprep.subr.mxu0 0.0
        %4985 = vmatpush1.msra.mxu0 0.0
        %4986 = vmatprep.subr.mxu0 0.0
        %4987 = vmatpush1.msra.mxu0 0.0
        %4988 = vmatprep.subr.mxu0 0.0
        %4989 = vmatpush1.msra.mxu0 0.0
        %4990 = vmatprep.subr.mxu0 0.0
        %4991 = vmatpush1.msra.mxu0 0.0
        %4992 = vmatprep.subr.mxu0 0.0
        %4993 = vmatpush1.msra.mxu0 0.0
        %4994 = vmatprep.subr.mxu0 0.0
        %4995 = vmatpush1.msra.mxu0 0.0
        %4996 = vmatprep.subr.mxu0 0.0
        %4997 = vmatpush1.msra.mxu0 0.0
        %4998 = vmatprep.subr.mxu0 0.0
        %4999 = vmatpush1.msra.mxu0 0.0
        %5000 = vmatprep.subr.mxu0 0.0
        %5001 = vmatpush1.msra.mxu0 0.0
        %5002 = vmatprep.subr.mxu0 0.0
        %5003 = vmatpush1.msra.mxu0 0.0
        %5004 = vmatprep.subr.mxu0 0.0
        %5005 = vmatpush1.msra.mxu0 0.0
        %5006 = vmatprep.subr.mxu0 0.0
        %5007 = vmatpush1.msra.mxu0 0.0
        %5008 = vmatprep.subr.mxu0 0.0
        %5009 = vmatpush1.msra.mxu0 0.0
        %5010 = vmatprep.subr.mxu0 0.0
        %5011 = vmatpush1.msra.mxu0 0.0
        %5012 = vmatprep.subr.mxu0 0.0
        %5013 = vmatpush1.msra.mxu0 0.0
        %5014 = vmatprep.subr.mxu0 0.0
        %5015 = vmatpush1.msra.mxu0 0.0
        %5016 = vmatprep.subr.mxu0 0.0
        %5017 = vmatpush1.msra.mxu0 0.0
        %5018 = vmatprep.subr.mxu0 0.0
        %5019 = vmatpush1.msra.mxu0 0.0
        %5020 = vmatprep.subr.mxu0 0.0
        %5021 = vmatpush1.msra.mxu0 0.0
        %5022 = vmatprep.subr.mxu0 0.0
        %5023 = vmatpush1.msra.mxu0 0.0
        %5024 = vmatprep.subr.mxu0 0.0
        %5025 = vmatpush1.msra.mxu0 0.0
        %5026 = vmatprep.subr.mxu0 0.0
        %5027 = vmatpush1.msra.mxu0 0.0
        %5028 = vmatprep.mubr.f32.mxu0 0.0
        %5029 = vmatmul.mubr.f32.gmra.mrb[0].mxu0 %v4962
        %v5030 = vpop.f32.mrb[0].mxu0
        %v5031 = vadd.f32 0.0, %v5030
        %v5032 = vpop.f32.mrb[0].mxu0
        %5033 = vdwg.mxu0
        %v5034 = vadd.f32 %v4509, %v5031
        %v5035 = vld [vmem:[%s14] sm:$0x1]
        %v5037 = vlaneseq
        %v5038 = vshrl.u32 %v5037, 7
        %v5039 = vsub.s32 0, %v5038
        %v5040 = vrot.slane %v5035, %v5039
        %v5042 = vadd.f32 %v5034, %v5040
        %v5043 = vadd.f32 %v2906, %v5042
        %v5044 = vld [vmem:[%s15] sm:$0x1]
        %v5045 = vld [vmem:[%s16] sm:$0x1]
        %v5046 = vld [vmem:[%s17] sm:$0xff]
        %v5047 = vld [vmem:[%s17 + $0x8] sm:$0xff]
        %v5048 = vld [vmem:[%s17 + $0x10] sm:$0xff]
        %v5049 = vld [vmem:[%s17 + $0x18] sm:$0xff]
        %v5050 = vld [vmem:[%s17 + $0x20] sm:$0xff]
        %v5051 = vld [vmem:[%s17 + $0x28] sm:$0xff]
        %v5052 = vld [vmem:[%s17 + $0x30] sm:$0xff]
        %v5053 = vld [vmem:[%s17 + $0x38] sm:$0xff]
        %v5054 = vld [vmem:[%s17 + $0x40] sm:$0xff]
        %v5055 = vld [vmem:[%s17 + $0x48] sm:$0xff]
        %v5056 = vld [vmem:[%s17 + $0x50] sm:$0xff]
        %v5057 = vld [vmem:[%s17 + $0x58] sm:$0xff]
        %v5058 = vld [vmem:[%s17 + $0x60] sm:$0xff]
        %v5059 = vld [vmem:[%s17 + $0x68] sm:$0xff]
        %v5060 = vld [vmem:[%s17 + $0x70] sm:$0xff]
        %v5061 = vld [vmem:[%s17 + $0x78] sm:$0xff]
        %v5062 = vld [vmem:[%s17 + $0x80] sm:$0xff]
        %v5063 = vld [vmem:[%s17 + $0x88] sm:$0xff]
        %v5064 = vld [vmem:[%s17 + $0x90] sm:$0xff]
        %v5065 = vld [vmem:[%s17 + $0x98] sm:$0xff]
        %v5066 = vld [vmem:[%s17 + $0xa0] sm:$0xff]
        %v5067 = vld [vmem:[%s17 + $0xa8] sm:$0xff]
        %v5068 = vld [vmem:[%s17 + $0xb0] sm:$0xff]
        %v5069 = vld [vmem:[%s17 + $0xb8] sm:$0xff]
        %v5070 = vld [vmem:[%s17 + $0xc0] sm:$0xff]
        %v5071 = vld [vmem:[%s17 + $0xc8] sm:$0xff]
        %v5072 = vld [vmem:[%s17 + $0xd0] sm:$0xff]
        %v5073 = vld [vmem:[%s17 + $0xd8] sm:$0xff]
        %v5074 = vld [vmem:[%s17 + $0xe0] sm:$0xff]
        %v5075 = vld [vmem:[%s17 + $0xe8] sm:$0xff]
        %v5076 = vld [vmem:[%s17 + $0xf0] sm:$0xff]
        %v5077 = vld [vmem:[%s17 + $0xf8] sm:$0xff]
        %v5078 = vld [vmem:[%s18] sm:$0x3]
        %v5079 = vld [vmem:[%s19] sm:$0xff]
        %v5080 = vld [vmem:[%s19 + $0x8] sm:$0xff]
        %v5081 = vld [vmem:[%s19 + $0x10] sm:$0xff]
        %v5082 = vld [vmem:[%s19 + $0x18] sm:$0xff]
        %v5083 = vld [vmem:[%s19 + $0x20] sm:$0xff]
        %v5084 = vld [vmem:[%s19 + $0x28] sm:$0xff]
        %v5085 = vld [vmem:[%s19 + $0x30] sm:$0xff]
        %v5086 = vld [vmem:[%s19 + $0x38] sm:$0xff]
        %v5087 = vld [vmem:[%s19 + $0x40] sm:$0xff]
        %v5088 = vld [vmem:[%s19 + $0x48] sm:$0xff]
        %v5089 = vld [vmem:[%s19 + $0x50] sm:$0xff]
        %v5090 = vld [vmem:[%s19 + $0x58] sm:$0xff]
        %v5091 = vld [vmem:[%s19 + $0x60] sm:$0xff]
        %v5092 = vld [vmem:[%s19 + $0x68] sm:$0xff]
        %v5093 = vld [vmem:[%s19 + $0x70] sm:$0xff]
        %v5094 = vld [vmem:[%s19 + $0x78] sm:$0xff]
        %v5095 = vld [vmem:[%s19 + $0x80] sm:$0xff]
        %v5096 = vld [vmem:[%s19 + $0x88] sm:$0xff]
        %v5097 = vld [vmem:[%s19 + $0x90] sm:$0xff]
        %v5098 = vld [vmem:[%s19 + $0x98] sm:$0xff]
        %v5099 = vld [vmem:[%s19 + $0xa0] sm:$0xff]
        %v5100 = vld [vmem:[%s19 + $0xa8] sm:$0xff]
        %v5101 = vld [vmem:[%s19 + $0xb0] sm:$0xff]
        %v5102 = vld [vmem:[%s19 + $0xb8] sm:$0xff]
        %v5103 = vld [vmem:[%s19 + $0xc0] sm:$0xff]
        %v5104 = vld [vmem:[%s19 + $0xc8] sm:$0xff]
        %v5105 = vld [vmem:[%s19 + $0xd0] sm:$0xff]
        %v5106 = vld [vmem:[%s19 + $0xd8] sm:$0xff]
        %v5107 = vld [vmem:[%s19 + $0xe0] sm:$0xff]
        %v5108 = vld [vmem:[%s19 + $0xe8] sm:$0xff]
        %v5109 = vld [vmem:[%s19 + $0xf0] sm:$0xff]
        %v5110 = vld [vmem:[%s19 + $0xf8] sm:$0xff]
        %v5111 = vld [vmem:[%s20] sm:$0x1]
        %5112 = vadd.xlane.f32.xlu0 %v5043
        %v5113 = vpop.xlane.xlu0 %5112
        %v5114 = vmul.f32 %v5113, %v777
        %v5115 = vsub.f32 %v5043, %v5114
        %v5116 = vmul.f32 %v5115, %v5115
        %5117 = vadd.xlane.f32.xlu0 %v5116
        %v5118 = vpop.xlane.xlu0 %5117
        %v5119 = vmul.f32 %v5118, %v777
        %v5120 = vadd.f32 %v5119, 1e-05
        %v5121 = vrsqrt.pop %v5120
        %v5122 = vmul.f32 %v5115, %v5121
        %v5124 = vlaneseq
        %v5125 = vshrl.u32 %v5124, 7
        %v5126 = vsub.s32 0, %v5125
        %v5127 = vrot.slane %v5044, %v5126
        %v5129 = vmul.f32 %v5122, %v5127
        %v5131 = vlaneseq
        %v5132 = vshrl.u32 %v5131, 7
        %v5133 = vsub.s32 0, %v5132
        %v5134 = vrot.slane %v5045, %v5133
        %v5136 = vadd.f32 %v5129, %v5134
        %v5138 = vlaneseq
        %v5139 = vshrl.u32 %v5138, 7
        %v5140 = vsub.s32 0, %v5139
        %v5141 = vrot.slane %v5078, %v5140
        %v5142 = vlaneseq
        %v5143 = vshrl.u32 %v5142, 7
        %v5144 = vsub.s32 1, %v5143
        %v5145 = vrot.slane %v5078, %v5144
        %5148 = vmatprep.subr.mxu0 %v5047
        %5149 = vmatpush1.msra.mxu0 %v5046
        %5150 = vmatprep.subr.mxu0 %v5049
        %5151 = vmatpush1.msra.mxu0 %v5048
        %5152 = vmatprep.subr.mxu0 %v5051
        %5153 = vmatpush1.msra.mxu0 %v5050
        %5154 = vmatprep.subr.mxu0 %v5053
        %5155 = vmatpush1.msra.mxu0 %v5052
        %5156 = vmatprep.subr.mxu0 %v5055
        %5157 = vmatpush1.msra.mxu0 %v5054
        %5158 = vmatprep.subr.mxu0 %v5057
        %5159 = vmatpush1.msra.mxu0 %v5056
        %5160 = vmatprep.subr.mxu0 %v5059
        %5161 = vmatpush1.msra.mxu0 %v5058
        %5162 = vmatprep.subr.mxu0 %v5061
        %5163 = vmatpush1.msra.mxu0 %v5060
        %5164 = vmatprep.subr.mxu0 %v5063
        %5165 = vmatpush1.msra.mxu0 %v5062
        %5166 = vmatprep.subr.mxu0 %v5065
        %5167 = vmatpush1.msra.mxu0 %v5064
        %5168 = vmatprep.subr.mxu0 %v5067
        %5169 = vmatpush1.msra.mxu0 %v5066
        %5170 = vmatprep.subr.mxu0 %v5069
        %5171 = vmatpush1.msra.mxu0 %v5068
        %5172 = vmatprep.subr.mxu0 %v5071
        %5173 = vmatpush1.msra.mxu0 %v5070
        %5174 = vmatprep.subr.mxu0 %v5073
        %5175 = vmatpush1.msra.mxu0 %v5072
        %5176 = vmatprep.subr.mxu0 %v5075
        %5177 = vmatpush1.msra.mxu0 %v5074
        %5178 = vmatprep.subr.mxu0 %v5077
        %5179 = vmatpush1.msra.mxu0 %v5076
        %5180 = vmatprep.subr.mxu0 0.0
        %5181 = vmatpush1.msra.mxu0 0.0
        %5182 = vmatprep.subr.mxu0 0.0
        %5183 = vmatpush1.msra.mxu0 0.0
        %5184 = vmatprep.subr.mxu0 0.0
        %5185 = vmatpush1.msra.mxu0 0.0
        %5186 = vmatprep.subr.mxu0 0.0
        %5187 = vmatpush1.msra.mxu0 0.0
        %5188 = vmatprep.subr.mxu0 0.0
        %5189 = vmatpush1.msra.mxu0 0.0
        %5190 = vmatprep.subr.mxu0 0.0
        %5191 = vmatpush1.msra.mxu0 0.0
        %5192 = vmatprep.subr.mxu0 0.0
        %5193 = vmatpush1.msra.mxu0 0.0
        %5194 = vmatprep.subr.mxu0 0.0
        %5195 = vmatpush1.msra.mxu0 0.0
        %5196 = vmatprep.subr.mxu0 0.0
        %5197 = vmatpush1.msra.mxu0 0.0
        %5198 = vmatprep.subr.mxu0 0.0
        %5199 = vmatpush1.msra.mxu0 0.0
        %5200 = vmatprep.subr.mxu0 0.0
        %5201 = vmatpush1.msra.mxu0 0.0
        %5202 = vmatprep.subr.mxu0 0.0
        %5203 = vmatpush1.msra.mxu0 0.0
        %5204 = vmatprep.subr.mxu0 0.0
        %5205 = vmatpush1.msra.mxu0 0.0
        %5206 = vmatprep.subr.mxu0 0.0
        %5207 = vmatpush1.msra.mxu0 0.0
        %5208 = vmatprep.subr.mxu0 0.0
        %5209 = vmatpush1.msra.mxu0 0.0
        %5210 = vmatprep.subr.mxu0 0.0
        %5211 = vmatpush1.msra.mxu0 0.0
        %5212 = vmatprep.mubr.f32.mxu0 0.0
        %5213 = vmatmul.mubr.f32.gmra.mrb[0].mxu0 %v5136
        %v5214 = vpop.f32.mrb[0].mxu0
        %v5215 = vadd.f32 %v5141, %v5214
        %v5216 = vpop.f32.mrb[0].mxu0
        %v5217 = vadd.f32 %v5145, %v5216
        %5218 = vdwg.mxu0
        %v5219 = vmul.f32 %v5215, 0.5
        %v5220 = vmul.f32 %v5217, 0.5
        %v5221 = vmul.f32 %v5215, 0.044715
        %v5222 = vmul.f32 %v5217, 0.044715
        %v5223 = vmul.f32 %v5221, %v5215
        %v5224 = vmul.f32 %v5222, %v5217
        %v5225 = vmul.f32 %v5223, %v5215
        %v5226 = vmul.f32 %v5224, %v5217
        %v5227 = vadd.f32 %v5215, %v5225
        %v5228 = vadd.f32 %v5217, %v5226
        %v5229 = vmul.f32 %v5227, 0.7978846
        %v5230 = vmul.f32 %v5228, 0.7978846
        %v5231 = vtanh.pop %v5229
        %v5232 = vtanh.pop %v5230
        %v5233 = vadd.f32 %v5231, 1.0
        %v5234 = vadd.f32 %v5232, 1.0
        %v5235 = vmul.f32 %v5219, %v5233
        %v5236 = vmul.f32 %v5220, %v5234
        %5237 = vmatprep.subr.mxu0 0.0
        %5238 = vmatpush1.msra.mxu0 %v5079
        %5239 = vmatprep.subr.mxu0 0.0
        %5240 = vmatpush1.msra.mxu0 %v5080
        %5241 = vmatprep.subr.mxu0 0.0
        %5242 = vmatpush1.msra.mxu0 %v5081
        %5243 = vmatprep.subr.mxu0 0.0
        %5244 = vmatpush1.msra.mxu0 %v5082
        %5245 = vmatprep.subr.mxu0 0.0
        %5246 = vmatpush1.msra.mxu0 %v5083
        %5247 = vmatprep.subr.mxu0 0.0
        %5248 = vmatpush1.msra.mxu0 %v5084
        %5249 = vmatprep.subr.mxu0 0.0
        %5250 = vmatpush1.msra.mxu0 %v5085
        %5251 = vmatprep.subr.mxu0 0.0
        %5252 = vmatpush1.msra.mxu0 %v5086
        %5253 = vmatprep.subr.mxu0 0.0
        %5254 = vmatpush1.msra.mxu0 %v5087
        %5255 = vmatprep.subr.mxu0 0.0
        %5256 = vmatpush1.msra.mxu0 %v5088
        %5257 = vmatprep.subr.mxu0 0.0
        %5258 = vmatpush1.msra.mxu0 %v5089
        %5259 = vmatprep.subr.mxu0 0.0
        %5260 = vmatpush1.msra.mxu0 %v5090
        %5261 = vmatprep.subr.mxu0 0.0
        %5262 = vmatpush1.msra.mxu0 %v5091
        %5263 = vmatprep.subr.mxu0 0.0
        %5264 = vmatpush1.msra.mxu0 %v5092
        %5265 = vmatprep.subr.mxu0 0.0
        %5266 = vmatpush1.msra.mxu0 %v5093
        %5267 = vmatprep.subr.mxu0 0.0
        %5268 = vmatpush1.msra.mxu0 %v5094
        %5269 = vmatprep.subr.mxu0 0.0
        %5270 = vmatpush1.msra.mxu0 %v5095
        %5271 = vmatprep.subr.mxu0 0.0
        %5272 = vmatpush1.msra.mxu0 %v5096
        %5273 = vmatprep.subr.mxu0 0.0
        %5274 = vmatpush1.msra.mxu0 %v5097
        %5275 = vmatprep.subr.mxu0 0.0
        %5276 = vmatpush1.msra.mxu0 %v5098
        %5277 = vmatprep.subr.mxu0 0.0
        %5278 = vmatpush1.msra.mxu0 %v5099
        %5279 = vmatprep.subr.mxu0 0.0
        %5280 = vmatpush1.msra.mxu0 %v5100
        %5281 = vmatprep.subr.mxu0 0.0
        %5282 = vmatpush1.msra.mxu0 %v5101
        %5283 = vmatprep.subr.mxu0 0.0
        %5284 = vmatpush1.msra.mxu0 %v5102
        %5285 = vmatprep.subr.mxu0 0.0
        %5286 = vmatpush1.msra.mxu0 %v5103
        %5287 = vmatprep.subr.mxu0 0.0
        %5288 = vmatpush1.msra.mxu0 %v5104
        %5289 = vmatprep.subr.mxu0 0.0
        %5290 = vmatpush1.msra.mxu0 %v5105
        %5291 = vmatprep.subr.mxu0 0.0
        %5292 = vmatpush1.msra.mxu0 %v5106
        %5293 = vmatprep.subr.mxu0 0.0
        %5294 = vmatpush1.msra.mxu0 %v5107
        %5295 = vmatprep.subr.mxu0 0.0
        %5296 = vmatpush1.msra.mxu0 %v5108
        %5297 = vmatprep.subr.mxu0 0.0
        %5298 = vmatpush1.msra.mxu0 %v5109
        %5299 = vmatprep.subr.mxu0 0.0
        %5300 = vmatpush1.msra.mxu0 %v5110
        %5301 = vmatprep.mubr.f32.mxu0 %v5236
        %5302 = vmatmul.mubr.f32.gmra.mrb[0].mxu0 %v5235
        %v5303 = vpop.f32.mrb[0].mxu0
        %v5304 = vadd.f32 0.0, %v5303
        %v5305 = vpop.f32.mrb[0].mxu0
        %5306 = vdwg.mxu0
        %v5307 = vadd.f32 %v5043, %v5304
        %v5309 = vlaneseq
        %v5310 = vshrl.u32 %v5309, 7
        %v5311 = vsub.s32 0, %v5310
        %v5312 = vrot.slane %v5111, %v5311
        %v5314 = vadd.f32 %v5307, %v5312
        %v5315 = vld [vmem:[%s21] sm:$0x1]
        %v5316 = vld [vmem:[%s22] sm:$0x1]
        %5317 = vadd.xlane.f32.xlu0 %v5314
        %v5318 = vpop.xlane.xlu0 %5317
        %v5319 = vmul.f32 %v5318, %v777
        %v5320 = vsub.f32 %v5314, %v5319
        %v5321 = vmul.f32 %v5320, %v5320
        %5322 = vadd.xlane.f32.xlu0 %v5321
        %v5323 = vpop.xlane.xlu0 %5322
        %v5324 = vmul.f32 %v5323, %v777
        %v5325 = vadd.f32 %v5324, 1e-05
        %v5326 = vrsqrt.pop %v5325
        %v5327 = vmul.f32 %v5320, %v5326
        %v5329 = vlaneseq
        %v5330 = vshrl.u32 %v5329, 7
        %v5331 = vsub.s32 0, %v5330
        %v5332 = vrot.slane %v5315, %v5331
        %v5334 = vmul.f32 %v5327, %v5332
        %v5336 = vlaneseq
        %v5337 = vshrl.u32 %v5336, 7
        %v5338 = vsub.s32 0, %v5337
        %v5339 = vrot.slane %v5316, %v5338
        %v5341 = vadd.f32 %v5334, %v5339
        %v5342 = vld [vmem:[%s23] sm:$0xff]
        %v5343 = vld [vmem:[%s23 + $0x8] sm:$0xff]
        %v5344 = vld [vmem:[%s23 + $0x10] sm:$0xff]
        %v5345 = vld [vmem:[%s23 + $0x18] sm:$0xff]
        %v5346 = vld [vmem:[%s23 + $0x20] sm:$0xff]
        %v5347 = vld [vmem:[%s23 + $0x28] sm:$0xff]
        %v5348 = vld [vmem:[%s23 + $0x30] sm:$0xff]
        %v5349 = vld [vmem:[%s23 + $0x38] sm:$0xff]
        %v5350 = vld [vmem:[%s23 + $0x40] sm:$0xff]
        %v5351 = vld [vmem:[%s23 + $0x48] sm:$0xff]
        %v5352 = vld [vmem:[%s23 + $0x50] sm:$0xff]
        %v5353 = vld [vmem:[%s23 + $0x58] sm:$0xff]
        %v5354 = vld [vmem:[%s23 + $0x60] sm:$0xff]
        %v5355 = vld [vmem:[%s23 + $0x68] sm:$0xff]
        %v5356 = vld [vmem:[%s23 + $0x70] sm:$0xff]
        %v5357 = vld [vmem:[%s23 + $0x78] sm:$0xff]
        %5358 = vmatprep.subr.mxu0 0.0
        %5359 = vmatpush1.msra.mxu0 %v5342
        %5360 = vmatprep.subr.mxu0 0.0
        %5361 = vmatpush1.msra.mxu0 %v5343
        %5362 = vmatprep.subr.mxu0 0.0
        %5363 = vmatpush1.msra.mxu0 %v5344
        %5364 = vmatprep.subr.mxu0 0.0
        %5365 = vmatpush1.msra.mxu0 %v5345
        %5366 = vmatprep.subr.mxu0 0.0
        %5367 = vmatpush1.msra.mxu0 %v5346
        %5368 = vmatprep.subr.mxu0 0.0
        %5369 = vmatpush1.msra.mxu0 %v5347
        %5370 = vmatprep.subr.mxu0 0.0
        %5371 = vmatpush1.msra.mxu0 %v5348
        %5372 = vmatprep.subr.mxu0 0.0
        %5373 = vmatpush1.msra.mxu0 %v5349
        %5374 = vmatprep.subr.mxu0 0.0
        %5375 = vmatpush1.msra.mxu0 %v5350
        %5376 = vmatprep.subr.mxu0 0.0
        %5377 = vmatpush1.msra.mxu0 %v5351
        %5378 = vmatprep.subr.mxu0 0.0
        %5379 = vmatpush1.msra.mxu0 %v5352
        %5380 = vmatprep.subr.mxu0 0.0
        %5381 = vmatpush1.msra.mxu0 %v5353
        %5382 = vmatprep.subr.mxu0 0.0
        %5383 = vmatpush1.msra.mxu0 %v5354
        %5384 = vmatprep.subr.mxu0 0.0
        %5385 = vmatpush1.msra.mxu0 %v5355
        %5386 = vmatprep.subr.mxu0 0.0
        %5387 = vmatpush1.msra.mxu0 %v5356
        %5388 = vmatprep.subr.mxu0 0.0
        %5389 = vmatpush1.msra.mxu0 %v5357
        %5390 = vmatprep.subr.mxu0 0.0
        %5391 = vmatpush1.msra.mxu0 0.0
        %5392 = vmatprep.subr.mxu0 0.0
        %5393 = vmatpush1.msra.mxu0 0.0
        %5394 = vmatprep.subr.mxu0 0.0
        %5395 = vmatpush1.msra.mxu0 0.0
        %5396 = vmatprep.subr.mxu0 0.0
        %5397 = vmatpush1.msra.mxu0 0.0
        %5398 = vmatprep.subr.mxu0 0.0
        %5399 = vmatpush1.msra.mxu0 0.0
        %5400 = vmatprep.subr.mxu0 0.0
        %5401 = vmatpush1.msra.mxu0 0.0
        %5402 = vmatprep.subr.mxu0 0.0
        %5403 = vmatpush1.msra.mxu0 0.0
        %5404 = vmatprep.subr.mxu0 0.0
        %5405 = vmatpush1.msra.mxu0 0.0
        %5406 = vmatprep.subr.mxu0 0.0
        %5407 = vmatpush1.msra.mxu0 0.0
        %5408 = vmatprep.subr.mxu0 0.0
        %5409 = vmatpush1.msra.mxu0 0.0
        %5410 = vmatprep.subr.mxu0 0.0
        %5411 = vmatpush1.msra.mxu0 0.0
        %5412 = vmatprep.subr.mxu0 0.0
        %5413 = vmatpush1.msra.mxu0 0.0
        %5414 = vmatprep.subr.mxu0 0.0
        %5415 = vmatpush1.msra.mxu0 0.0
        %5416 = vmatprep.subr.mxu0 0.0
        %5417 = vmatpush1.msra.mxu0 0.0
        %5418 = vmatprep.subr.mxu0 0.0
        %5419 = vmatpush1.msra.mxu0 0.0
        %5420 = vmatprep.subr.mxu0 0.0
        %5421 = vmatpush1.msra.mxu0 0.0
        %5422 = vmatprep.mubr.f32.mxu0 0.0
        %5423 = vmatmul.mubr.f32.gmra.mrb[0].mxu0 %v5341
        %v5424 = vpop.f32.mrb[0].mxu0
        %v5425 = vadd.f32 0.0, %v5424
        %v5426 = vpop.f32.mrb[0].mxu0
        %5427 = vdwg.mxu0
        %5428 = vst [vmem:[%s752] sm:$0xff] %v5425
        %s5429 = sand.u32 %s565, 1
        %s5430 = scalar_lea.sflag [#allocation3], %s5429
        %s5431 = sand.u32 %s565, 1
        %s5432 = smul.addr %s5431, 8
        %s5433 = scalar_lea.vmem [#allocation2], %s5432
        // Predicated region
        $region117: #{pegasus_forward.3} parent=115 // pred_check
          %p5434 = pneg %p575
        $region118: #{pegasus_forward.3} parent=115 // pred_check_branch
          %5436 = sbr.rel (%p5434) target = $region120
        $region119: #{pegasus_forward.3} parent=115 // pred_region
          %s5438 = ssub.s32 128, 128
          %5439 = vsyncadd %s5430, %s5438
          %s5440 = smul.addr %s38, 128
          %s5441 = scalar_lea.hbm %s24, %s5440
          %s5443 = sshll.u32 %s5433, 4
          %s5444 = int_to_ptr.vmem [resolvable:$true] %s5443
          %5446 = dma.vmem_to_hbm [thread:$0]  %s5444, 128, %s5441, %s5430
        $region120: #{pegasus_forward.3} parent=115 // pred_fallthru
          _
      $region116: #{pegasus_forward.3} parent=5 // pred_fallthru
        _
      %p5447 = scmp.le.s32.totalorder 2, %s33
      // Predicated region
      $region121: #{pegasus_forward.3} parent=5 // pred_check
        %p5448 = pneg %p5447
      $region122: #{pegasus_forward.3} parent=5 // pred_check_branch
        %5450 = sbr.rel (%p5448) target = $region124
      $region123: #{pegasus_forward.3} parent=5 // pred_region
        %s5451 = ssub.s32 %s33, 2
        // Predicated region
        $region125: #{pegasus_forward.3} parent=123 // pred_check
          %p5452 = pneg %p581
        $region126: #{pegasus_forward.3} parent=123 // pred_check_branch
          %5454 = sbr.rel (%p5452) target = $region128
        $region127: #{pegasus_forward.3} parent=123 // pred_region
          %s5455 = sand.u32 %s566, 1
          %s5456 = scalar_lea.sflag [#allocation3], %s5455
          %s5457 = sand.u32 %s566, 1
          %s5458 = smul.addr %s5457, 8
          %s5459 = scalar_lea.vmem [#allocation2], %s5458
          %5460 = dma.done %s5456, 128
        $region128: #{pegasus_forward.3} parent=123 // pred_fallthru
          _
      $region124: #{pegasus_forward.3} parent=5 // pred_fallthru
        _
    $region6: #{pegasus_forward.3} parent=1 // loop_footer
      %s37 = sadd.s32 1, %s33
    $region7: #{pegasus_forward.3} parent=1 // loop_footer_branch
      %32 = sbr.rel target = $region3
    $region8: #{pegasus_forward.3} parent=1 // loop_exit
      _
    %5461 = vsyncpa [#allocation3], 1
    %s5462 = scalar_lea.sflag [#allocation3], 1
    %5463 = vsyncpa %s5462, 1

</llo_original>
